<compile_context>
chip_gen: v5e
topology: v5e:2x2
jax: 0.10.0
libtpu: 0.0.40
codegen_flags: <defaults>
</compile_context>

<pallas_src>
import jax
import jax.numpy as jnp
from jax.experimental import pallas as pl
from jax.experimental.pallas import tpu as pltpu

HIDDEN = 32
INPUT_SIZE = 5
GROUP_SIZES = (6, 6, 5, 5, 9, 9, 5, 5, 2, 2)        # channels per group (sum=54)
NUM_GROUPS = len(GROUP_SIZES)
NUM_CHANNELS = sum(GROUP_SIZES)                      # 54
T_MAX = max(GROUP_SIZES)                             # 9
NP = 384                                             # 10*32 packed lanes -> pad to 3*128
IN_P = 64                                            # 10*5 packed input lanes -> pad to 64
NT = 64                                              # tail packed width (l | r)
T_TAIL = 5

_offs, _acc = [], 0
for _s in GROUP_SIZES:
    _offs.append(_acc)
    _acc += _s
GROUP_OFFS = tuple(_offs)
L_ORDER = (0, 4, 2, 6, 8)                            # out1, out5, out3, out7, out9
R_ORDER = (1, 5, 3, 7, 9)                            # out2, out6, out4, out8, out10


# ---------------------------------------------------------------------------
# The fused forward kernel (one batch tile per grid step).
# ---------------------------------------------------------------------------
def _rrnn_kernel(x_ref,                                        # (1, T_MAX*B, IN_P)
                 wih1_ref, b1_ref, whh1_ref, wih2_ref, whh2_ref, b2_ref,
                 fcw_ref, fcb_ref,                             # fc1..fc10 packed
                 twin_ref, twhh1_ref, twih2_ref, twhh2_ref, tb1_ref, tb2_ref,
                 wlr_ref, blr_ref, wf_ref, bf_ref,             # fc_l/fc_r/fc
                 out_ref,                                      # (B, 4)
                 pre_ref, fcacc_ref):                          # VMEM scratch
    f32 = jnp.float32
    bf16 = jnp.bfloat16
    B = out_ref.shape[0]

    # ---- hoisted input projection: ONE (T_MAX*B, 64)@(64, 384) bf16 dot ----
    x_all = x_ref[0].astype(bf16)                              # (T_MAX*B, IN_P)
    pre_ref[...] = (jnp.dot(x_all, wih1_ref[...], preferred_element_type=f32)
                    + jnp.broadcast_to(b1_ref[...], (T_MAX * B, NP)))

    whh1 = whh1_ref[...]                                       # bf16 block-diag
    wih2 = wih2_ref[...]
    whh2 = whh2_ref[...]
    b2v = jnp.broadcast_to(b2_ref[...], (B, NP))               # hoisted broadcasts
    fcacc_ref[...] = jnp.broadcast_to(fcb_ref[...], (B, NP))   # fc bias seed

    # ---- skewed group recurrence: iteration t computes h1[t] and h2[t-1] ---
    # Both only depend on h1[t-1] / h2[t-2], so the two layer chains and the
    # block-diagonal fc accumulation overlap on the MXU/EUP.
    h1 = jnp.zeros((B, NP), bf16)
    h2 = jnp.zeros((B, NP), bf16)
    for t in range(T_MAX + 1):                                 # fully unrolled
        h1_new = None
        if t < T_MAX:
            pre_t = pre_ref[pl.ds(t * B, B), :]                # f32 slice
            h1_new = jnp.tanh(
                pre_t + jnp.dot(h1, whh1, preferred_element_type=f32)
            ).astype(bf16)
        if t >= 1:
            h2 = jnp.tanh(
                jnp.dot(h1, wih2, preferred_element_type=f32)
                + jnp.dot(h2, whh2, preferred_element_type=f32)
                + b2v
            ).astype(bf16)
            # consolidated fc1..fc10 step: one (B,384)@(384,384) block-diag dot
            # (zero blocks for groups whose sequence already ended).
            fcacc_ref[...] = fcacc_ref[...] + jnp.dot(
                h2, fcw_ref[t - 1], preferred_element_type=f32)
        if t < T_MAX:
            h1 = h1_new

    # fc1..fc10 outputs, lane-packed (B, 384), ReLU in f32, bf16 for tail dots
    fcout = jnp.maximum(fcacc_ref[...], 0.0).astype(bf16)

    # ---- tail: rnn_l / rnn_r lane-packed (l=[0:32], r=[32:64]) -------------
    twhh1 = twhh1_ref[...]
    twih2 = twih2_ref[...]
    twhh2 = twhh2_ref[...]
    tb1v = jnp.broadcast_to(tb1_ref[...], (B, NT))
    tb2v = jnp.broadcast_to(tb2_ref[...], (B, NT))

    # hoisted tail input projections (independent of the tail recurrence)
    tpre = [jnp.dot(fcout, twin_ref[s], preferred_element_type=f32) + tb1v
            for s in range(T_TAIL)]

    acc = jnp.broadcast_to(blr_ref[...], (B, 256))             # fc_l | fc_r preacts
    g1 = jnp.zeros((B, NT), bf16)
    g2 = jnp.zeros((B, NT), bf16)
    for s in range(T_TAIL + 1):                                # skewed, unrolled
        g1_new = None
        if s < T_TAIL:
            g1_new = jnp.tanh(
                tpre[s] + jnp.dot(g1, twhh1, preferred_element_type=f32)
            ).astype(bf16)
        if s >= 1:
            g2 = jnp.tanh(
                jnp.dot(g1, twih2, preferred_element_type=f32)
                + jnp.dot(g2, twhh2, preferred_element_type=f32)
                + tb2v
            ).astype(bf16)
            # fc_l / fc_r accumulation folded into the step (flatten == sum over s)
            acc = acc + jnp.dot(g2, wlr_ref[s - 1], preferred_element_type=f32)
        if s < T_TAIL:
            g1 = g1_new

    y = jnp.maximum(acc, 0.0)                                  # ReLU(fc_l)|ReLU(fc_r)
    xs = y[:, :128] + y[:, 128:]                               # x_l + x_r (cols 96.. are 0)
    # final fc kept in f32 (tiny; off the critical path)
    out_ref[...] = (jnp.dot(xs, wf_ref[...], preferred_element_type=f32)
                    + jnp.broadcast_to(bf_ref[...], (B, 4)))


# ---------------------------------------------------------------------------
# Input packing: (B, 54, 5) -> (n_tiles, T_MAX*b_tile, IN_P), zero padded.
# Row order inside a tile is (t, b): row = t * b_tile + b.
# ---------------------------------------------------------------------------
def pack_inputs(x, b_pad, b_tile):
    B = x.shape[0]
    blocks = []
    for g in range(NUM_GROUPS):
        off, T = GROUP_OFFS[g], GROUP_SIZES[g]
        xg = jnp.transpose(x[:, off:off + T, :], (1, 0, 2))      # (T, B, 5)
        xg = jnp.pad(xg, ((0, T_MAX - T), (0, 0), (0, 0)))       # (9, B, 5)
        blocks.append(xg)
    xp = jnp.concatenate(blocks, axis=-1)                        # (9, B, 50)
    xp = jnp.pad(xp, ((0, 0), (0, b_pad - B),
                      (0, IN_P - NUM_GROUPS * INPUT_SIZE)))      # (9, b_pad, 64)
    n_tiles = b_pad // b_tile
    xp = xp.reshape(T_MAX, n_tiles, b_tile, IN_P)
    xp = jnp.transpose(xp, (1, 0, 2, 3)).reshape(n_tiles, T_MAX * b_tile, IN_P)
    return xp


def _round_up(n, m):
    return ((n + m - 1) // m) * m


@jax.jit
def rrnn_forward(x, packed):
    B = x.shape[0]
    b_tile = min(128, _round_up(B, 8))       # sublane fill (>=8); cap per-tile work
    b_pad = _round_up(B, b_tile)
    n_tiles = b_pad // b_tile
    xp = pack_inputs(x, b_pad, b_tile)       # (n_tiles, T_MAX*b_tile, IN_P)

    def _const_spec(a):
        return pl.BlockSpec(a.shape, lambda i, _nd=a.ndim: (0,) * _nd)

    in_specs = [pl.BlockSpec((1, T_MAX * b_tile, IN_P), lambda i: (i, 0, 0))]
    in_specs += [_const_spec(a) for a in packed]

    out = pl.pallas_call(
        _rrnn_kernel,
        out_shape=jax.ShapeDtypeStruct((b_pad, 4), jnp.float32),
        grid=(n_tiles,),
        in_specs=in_specs,
        out_specs=pl.BlockSpec((b_tile, 4), lambda i: (i, 0)),
        scratch_shapes=[pltpu.VMEM((T_MAX * b_tile, NP), jnp.float32),   # pre
                        pltpu.VMEM((b_tile, NP), jnp.float32)],          # fc acc
        compiler_params=pltpu.CompilerParams(
            dimension_semantics=("parallel",),
            vmem_limit_bytes=32 * 1024 * 1024),
    )(xp, *packed)
    return out[:B]


# ---------------------------------------------------------------------------
# Raw (PyTorch-layout) parameters + packing into kernel-friendly layouts.
# ---------------------------------------------------------------------------
def _uniform(key, shape, fan):
    bound = 1.0 / (fan ** 0.5)
    return jax.random.uniform(key, shape, jnp.float32, -bound, bound)


def _init_rnn_raw(key, input_size, hidden):
    ks = jax.random.split(key, 8)
    return dict(
        wih1=_uniform(ks[0], (hidden, input_size), hidden),
        whh1=_uniform(ks[1], (hidden, hidden), hidden),
        bih1=_uniform(ks[2], (hidden,), hidden),
        bhh1=_uniform(ks[3], (hidden,), hidden),
        wih2=_uniform(ks[4], (hidden, hidden), hidden),
        whh2=_uniform(ks[5], (hidden, hidden), hidden),
        bih2=_uniform(ks[6], (hidden,), hidden),
        bhh2=_uniform(ks[7], (hidden,), hidden),
    )


def _init_fc_raw(key, in_f, out_f):
    k1, k2 = jax.random.split(key)
    return dict(w=_uniform(k1, (out_f, in_f), in_f),
                b=_uniform(k2, (out_f,), in_f))


def init_raw_params(key):
    keys = jax.random.split(key, 25)
    raw = {}
    ki = 0
    for g in range(NUM_GROUPS):
        raw[f"rnn{g + 1}"] = _init_rnn_raw(keys[ki], INPUT_SIZE, HIDDEN); ki += 1
        raw[f"fc{g + 1}"] = _init_fc_raw(keys[ki], GROUP_SIZES[g] * HIDDEN, HIDDEN); ki += 1
    raw["rnn_l"] = _init_rnn_raw(keys[ki], HIDDEN, HIDDEN); ki += 1
    raw["rnn_r"] = _init_rnn_raw(keys[ki], HIDDEN, HIDDEN); ki += 1
    raw["fc_l"] = _init_fc_raw(keys[ki], 5 * HIDDEN, 96); ki += 1
    raw["fc_r"] = _init_fc_raw(keys[ki], 5 * HIDDEN, 96); ki += 1
    raw["fc"] = _init_fc_raw(keys[ki], 96, 4); ki += 1
    return raw


def pack_params(raw):
    """Pack PyTorch-layout params into lane-packed / block-diagonal bf16 layouts."""
    f32 = jnp.float32
    bf16 = jnp.bfloat16
    H, I = HIDDEN, INPUT_SIZE

    wih1_bd = jnp.zeros((IN_P, NP), f32)
    whh1_bd = jnp.zeros((NP, NP), f32)
    wih2_bd = jnp.zeros((NP, NP), f32)
    whh2_bd = jnp.zeros((NP, NP), f32)
    b1p = jnp.zeros((1, NP), f32)
    b2p = jnp.zeros((1, NP), f32)
    fcw_bd = jnp.zeros((T_MAX, NP, NP), f32)      # per-timestep block-diag fc weight
    fcb_p = jnp.zeros((1, NP), f32)
    for g in range(NUM_GROUPS):
        r = raw[f"rnn{g + 1}"]
        c = H * g
        i0 = I * g
        wih1_bd = wih1_bd.at[i0:i0 + I, c:c + H].set(r["wih1"].T)
        whh1_bd = whh1_bd.at[c:c + H, c:c + H].set(r["whh1"].T)
        wih2_bd = wih2_bd.at[c:c + H, c:c + H].set(r["wih2"].T)
        whh2_bd = whh2_bd.at[c:c + H, c:c + H].set(r["whh2"].T)
        b1p = b1p.at[0, c:c + H].set(r["bih1"] + r["bhh1"])
        b2p = b2p.at[0, c:c + H].set(r["bih2"] + r["bhh2"])
        fc = raw[f"fc{g + 1}"]
        for t in range(GROUP_SIZES[g]):           # zero blocks for finished steps
            fcw_bd = fcw_bd.at[t, c:c + H, c:c + H].set(fc["w"][:, H * t:H * (t + 1)].T)
        fcb_p = fcb_p.at[0, c:c + H].set(fc["b"])

    rl, rr = raw["rnn_l"], raw["rnn_r"]

    def _pair_bd(a, b):
        m = jnp.zeros((NT, NT), f32)
        m = m.at[:H, :H].set(a.T)
        m = m.at[H:, H:].set(b.T)
        return m

    # per-step combined input-projection weight for the lane-packed fcout (B,384)
    twin = jnp.zeros((T_TAIL, NP, NT), f32)
    for s in range(T_TAIL):
        cl, cr = L_ORDER[s] * H, R_ORDER[s] * H
        twin = twin.at[s, cl:cl + H, 0:H].set(rl["wih1"].T)
        twin = twin.at[s, cr:cr + H, H:NT].set(rr["wih1"].T)
    twhh1 = _pair_bd(rl["whh1"], rr["whh1"])
    twih2 = _pair_bd(rl["wih2"], rr["wih2"])
    twhh2 = _pair_bd(rl["whh2"], rr["whh2"])
    tb1 = jnp.concatenate([rl["bih1"] + rl["bhh1"],
                           rr["bih1"] + rr["bhh1"]])[None, :]    # (1, 64)
    tb2 = jnp.concatenate([rl["bih2"] + rl["bhh2"],
                           rr["bih2"] + rr["bhh2"]])[None, :]

    wl, bl = raw["fc_l"]["w"], raw["fc_l"]["b"]                  # (96,160), (96,)
    wr, br = raw["fc_r"]["w"], raw["fc_r"]["b"]
    wlr = jnp.zeros((T_TAIL, NT, 256), f32)
    for s in range(T_TAIL):
        wlr = wlr.at[s, 0:H, 0:96].set(wl[:, H * s:H * (s + 1)].T)
        wlr = wlr.at[s, H:NT, 128:224].set(wr[:, H * s:H * (s + 1)].T)
    blr = jnp.zeros((1, 256), f32).at[0, 0:96].set(bl).at[0, 128:224].set(br)

    wfp = jnp.zeros((128, 4), f32).at[:96, :].set(raw["fc"]["w"].T)
    bfp = raw["fc"]["b"][None, :]

    # bf16 dot operands (MXU-native), f32 biases / accumulators / final fc.
    tobf = lambda a: a.astype(bf16)
    return (tobf(wih1_bd), b1p, tobf(whh1_bd), tobf(wih2_bd), tobf(whh2_bd), b2p,
            tobf(fcw_bd), fcb_p,
            tobf(twin), tobf(twhh1), tobf(twih2), tobf(twhh2), tb1, tb2,
            tobf(wlr), blr, wfp, bfp)


# ---------------------------------------------------------------------------
# Plain-JAX reference (mirrors the PyTorch module), for a numerical check.
# ---------------------------------------------------------------------------
def _mm(a, b):
    return jax.lax.dot(a, b, precision=jax.lax.Precision.HIGHEST)


def _rnn2_ref(xseq, p):
    B = xseq.shape[1]
    h1 = jnp.zeros((B, HIDDEN), jnp.float32)
    h2 = jnp.zeros((B, HIDDEN), jnp.float32)
    outs = []
    for t in range(xseq.shape[0]):
        h1 = jnp.tanh(_mm(xseq[t], p["wih1"].T) + p["bih1"]
                      + _mm(h1, p["whh1"].T) + p["bhh1"])
        h2 = jnp.tanh(_mm(h1, p["wih2"].T) + p["bih2"]
                      + _mm(h2, p["whh2"].T) + p["bhh2"])
        outs.append(h2)
    return jnp.stack(outs, axis=0)


def rrnn_reference(x, raw):
    B = x.shape[0]
    outs = []
    for g in range(NUM_GROUPS):
        off, T = GROUP_OFFS[g], GROUP_SIZES[g]
        xseq = jnp.transpose(x[:, off:off + T, :], (1, 0, 2))
        o = _rnn2_ref(xseq, raw[f"rnn{g + 1}"])
        flat = jnp.transpose(o, (1, 0, 2)).reshape(B, -1)
        fc = raw[f"fc{g + 1}"]
        outs.append(jax.nn.relu(_mm(flat, fc["w"].T) + fc["b"]))
    xl = jnp.stack([outs[i] for i in L_ORDER], axis=0)
    xr = jnp.stack([outs[i] for i in R_ORDER], axis=0)
    ol = _rnn2_ref(xl, raw["rnn_l"])
    orr = _rnn2_ref(xr, raw["rnn_r"])
    fl = jnp.transpose(ol, (1, 0, 2)).reshape(B, -1)
    fr = jnp.transpose(orr, (1, 0, 2)).reshape(B, -1)
    yl = jax.nn.relu(_mm(fl, raw["fc_l"]["w"].T) + raw["fc_l"]["b"])
    yr = jax.nn.relu(_mm(fr, raw["fc_r"]["w"].T) + raw["fc_r"]["b"])
    xs = yl + yr
    return _mm(xs, raw["fc"]["w"].T) + raw["fc"]["b"]


if __name__ == "__main__":
    key = jax.random.PRNGKey(0)
    kx, kp = jax.random.split(key)
    B = 2
    x = jax.random.normal(kx, (B, NUM_CHANNELS, INPUT_SIZE), jnp.float32)
    raw = init_raw_params(kp)
    packed = pack_params(raw)

    out = jax.block_until_ready(rrnn_forward(x, packed))
    assert out.shape == (B, 4) and out.dtype == jnp.float32

    # correctness check against the plain-JAX f32 reference of the same module;
    # tolerance accounts for bf16 matmul operands (f32 accumulation) in-kernel.
    ref = jax.block_until_ready(rrnn_reference(x, raw))
    err = float(jnp.max(jnp.abs(out - ref)))
    assert err < 5e-2, f"mismatch vs reference: max abs err {err}"

    print("KERNEL_OK")
</pallas_src>

<mosaic_0001>
module attributes {stable_mosaic.version = 11 : i64} {
  func.func @_rrnn_kernel(%arg0: i32, %arg1: memref<1x72x64xf32, #tpu.memory_space<vmem>>, %arg2: memref<64x384xbf16, #tpu.memory_space<vmem>>, %arg3: memref<1x384xf32, #tpu.memory_space<vmem>>, %arg4: memref<384x384xbf16, #tpu.memory_space<vmem>>, %arg5: memref<384x384xbf16, #tpu.memory_space<vmem>>, %arg6: memref<384x384xbf16, #tpu.memory_space<vmem>>, %arg7: memref<1x384xf32, #tpu.memory_space<vmem>>, %arg8: memref<9x384x384xbf16, #tpu.memory_space<vmem>>, %arg9: memref<1x384xf32, #tpu.memory_space<vmem>>, %arg10: memref<5x384x64xbf16, #tpu.memory_space<vmem>>, %arg11: memref<64x64xbf16, #tpu.memory_space<vmem>>, %arg12: memref<64x64xbf16, #tpu.memory_space<vmem>>, %arg13: memref<64x64xbf16, #tpu.memory_space<vmem>>, %arg14: memref<1x64xf32, #tpu.memory_space<vmem>>, %arg15: memref<1x64xf32, #tpu.memory_space<vmem>>, %arg16: memref<5x64x256xbf16, #tpu.memory_space<vmem>>, %arg17: memref<1x256xf32, #tpu.memory_space<vmem>>, %arg18: memref<128x4xf32, #tpu.memory_space<vmem>>, %arg19: memref<1x4xf32, #tpu.memory_space<vmem>>, %arg20: memref<8x4xf32, #tpu.memory_space<vmem>>, %arg21: memref<72x384xf32, #tpu.memory_space<vmem>>, %arg22: memref<8x384xf32, #tpu.memory_space<vmem>>) attributes {dimension_semantics = [#tpu.dimension_semantics<parallel>], iteration_bounds = array<i64: 1>, scalar_prefetch = 0 : i64, scratch_operands = 2 : i64, tpu.core_type = #tpu.core_type<tc>, window_params = [{transform_indices = @transform_0, window_bounds = array<i64: 1, 72, 64>}, {pipeline_mode = #tpu.pipeline_mode<synchronous>, transform_indices = @transform_1, window_bounds = array<i64: 64, 384>}, {pipeline_mode = #tpu.pipeline_mode<synchronous>, transform_indices = @transform_2, window_bounds = array<i64: 1, 384>}, {pipeline_mode = #tpu.pipeline_mode<synchronous>, transform_indices = @transform_3, window_bounds = array<i64: 384, 384>}, {pipeline_mode = #tpu.pipeline_mode<synchronous>, transform_indices = @transform_4, window_bounds = array<i64: 384, 384>}, {pipeline_mode = #tpu.pipeline_mode<synchronous>, transform_indices = @transform_5, window_bounds = array<i64: 384, 384>}, {pipeline_mode = #tpu.pipeline_mode<synchronous>, transform_indices = @transform_6, window_bounds = array<i64: 1, 384>}, {pipeline_mode = #tpu.pipeline_mode<synchronous>, transform_indices = @transform_7, window_bounds = array<i64: 9, 384, 384>}, {pipeline_mode = #tpu.pipeline_mode<synchronous>, transform_indices = @transform_8, window_bounds = array<i64: 1, 384>}, {pipeline_mode = #tpu.pipeline_mode<synchronous>, transform_indices = @transform_9, window_bounds = array<i64: 5, 384, 64>}, {pipeline_mode = #tpu.pipeline_mode<synchronous>, transform_indices = @transform_10, window_bounds = array<i64: 64, 64>}, {pipeline_mode = #tpu.pipeline_mode<synchronous>, transform_indices = @transform_11, window_bounds = array<i64: 64, 64>}, {pipeline_mode = #tpu.pipeline_mode<synchronous>, transform_indices = @transform_12, window_bounds = array<i64: 64, 64>}, {pipeline_mode = #tpu.pipeline_mode<synchronous>, transform_indices = @transform_13, window_bounds = array<i64: 1, 64>}, {pipeline_mode = #tpu.pipeline_mode<synchronous>, transform_indices = @transform_14, window_bounds = array<i64: 1, 64>}, {pipeline_mode = #tpu.pipeline_mode<synchronous>, transform_indices = @transform_15, window_bounds = array<i64: 5, 64, 256>}, {pipeline_mode = #tpu.pipeline_mode<synchronous>, transform_indices = @transform_16, window_bounds = array<i64: 1, 256>}, {pipeline_mode = #tpu.pipeline_mode<synchronous>, transform_indices = @transform_17, window_bounds = array<i64: 128, 4>}, {pipeline_mode = #tpu.pipeline_mode<synchronous>, transform_indices = @transform_18, window_bounds = array<i64: 1, 4>}, {transform_indices = @transform_19, window_bounds = array<i64: 8, 4>}]} {
    %c0 = arith.constant 0 : index
    %c0_0 = arith.constant 0 : index
    %c0_1 = arith.constant 0 : index
    %0 = vector.load %arg1[%c0, %c0_0, %c0_1] : memref<1x72x64xf32, #tpu.memory_space<vmem>>, vector<1x72x64xf32>
    %1 = vector.shape_cast %0 : vector<1x72x64xf32> to vector<72x64xf32>
    %2 = arith.truncf %1 : vector<72x64xf32> to vector<72x64xbf16>
    %c0_2 = arith.constant 0 : index
    %c0_3 = arith.constant 0 : index
    %3 = vector.load %arg2[%c0_2, %c0_3] : memref<64x384xbf16, #tpu.memory_space<vmem>>, vector<64x384xbf16>
    %cst = arith.constant dense<0.000000e+00> : vector<72x384xf32>
    %4 = tpu.matmul %2, %3, %cst {dimension_numbers = #tpu.dot_dimension_numbers<[1], [0], [0], [1], [0, 0, 1, 1], [], []>} : vector<72x64xbf16>, vector<64x384xbf16>, vector<72x384xf32> -> vector<72x384xf32>
    %c0_4 = arith.constant 0 : index
    %c0_5 = arith.constant 0 : index
    %5 = vector.load %arg3[%c0_4, %c0_5] : memref<1x384xf32, #tpu.memory_space<vmem>>, vector<1x384xf32>
    %6 = vector.shape_cast %5 : vector<1x384xf32> to vector<1x384xf32>
    %7 = vector.broadcast %6 : vector<1x384xf32> to vector<72x384xf32>
    %8 = arith.addf %4, %7 : vector<72x384xf32>
    %c0_6 = arith.constant 0 : index
    %c0_7 = arith.constant 0 : index
    %9 = vector.load %arg21[%c0_6, %c0_7] : memref<72x384xf32, #tpu.memory_space<vmem>>, vector<72x384xf32>
    tpu.vector_store %arg21[%c0_6, %c0_7], %8 {strides = array<i32>} : memref<72x384xf32, #tpu.memory_space<vmem>>, vector<72x384xf32>,
    %c0_8 = arith.constant 0 : index
    %c0_9 = arith.constant 0 : index
    %10 = vector.load %arg4[%c0_8, %c0_9] : memref<384x384xbf16, #tpu.memory_space<vmem>>, vector<384x384xbf16>
    %c0_10 = arith.constant 0 : index
    %c0_11 = arith.constant 0 : index
    %11 = vector.load %arg5[%c0_10, %c0_11] : memref<384x384xbf16, #tpu.memory_space<vmem>>, vector<384x384xbf16>
    %c0_12 = arith.constant 0 : index
    %c0_13 = arith.constant 0 : index
    %12 = vector.load %arg6[%c0_12, %c0_13] : memref<384x384xbf16, #tpu.memory_space<vmem>>, vector<384x384xbf16>
    %c0_14 = arith.constant 0 : index
    %c0_15 = arith.constant 0 : index
    %13 = vector.load %arg7[%c0_14, %c0_15] : memref<1x384xf32, #tpu.memory_space<vmem>>, vector<1x384xf32>
    %14 = vector.shape_cast %13 : vector<1x384xf32> to vector<1x384xf32>
    %15 = vector.broadcast %14 : vector<1x384xf32> to vector<8x384xf32>
    %c0_16 = arith.constant 0 : index
    %c0_17 = arith.constant 0 : index
    %16 = vector.load %arg9[%c0_16, %c0_17] : memref<1x384xf32, #tpu.memory_space<vmem>>, vector<1x384xf32>
    %17 = vector.shape_cast %16 : vector<1x384xf32> to vector<1x384xf32>
    %18 = vector.broadcast %17 : vector<1x384xf32> to vector<8x384xf32>
    %c0_18 = arith.constant 0 : index
    %c0_19 = arith.constant 0 : index
    %19 = vector.load %arg22[%c0_18, %c0_19] : memref<8x384xf32, #tpu.memory_space<vmem>>, vector<8x384xf32>
    tpu.vector_store %arg22[%c0_18, %c0_19], %18 {strides = array<i32>} : memref<8x384xf32, #tpu.memory_space<vmem>>, vector<8x384xf32>,
    %cst_20 = arith.constant 0.000000e+00 : bf16
    %20 = vector.broadcast %cst_20 : bf16 to vector<8x384xbf16>
    %cst_21 = arith.constant 0.000000e+00 : bf16
    %21 = vector.broadcast %cst_21 : bf16 to vector<8x384xbf16>
    %c0_22 = arith.constant 0 : index
    %c0_23 = arith.constant 0 : index
    %22 = vector.load %arg21[%c0_22, %c0_23] : memref<72x384xf32, #tpu.memory_space<vmem>>, vector<8x384xf32>
    %cst_24 = arith.constant dense<0.000000e+00> : vector<8x384xf32>
    %23 = tpu.matmul %20, %10, %cst_24 {dimension_numbers = #tpu.dot_dimension_numbers<[1], [0], [0], [1], [0, 0, 1, 1], [], []>} : vector<8x384xbf16>, vector<384x384xbf16>, vector<8x384xf32> -> vector<8x384xf32>
    %24 = arith.addf %22, %23 : vector<8x384xf32>
    %25 = math.tanh %24 : vector<8x384xf32>
    %26 = arith.truncf %25 : vector<8x384xf32> to vector<8x384xbf16>
    %c8 = arith.constant 8 : index
    %c0_25 = arith.constant 0 : index
    %27 = vector.load %arg21[%c8, %c0_25] : memref<72x384xf32, #tpu.memory_space<vmem>>, vector<8x384xf32>
    %cst_26 = arith.constant dense<0.000000e+00> : vector<8x384xf32>
    %28 = tpu.matmul %26, %10, %cst_26 {dimension_numbers = #tpu.dot_dimension_numbers<[1], [0], [0], [1], [0, 0, 1, 1], [], []>} : vector<8x384xbf16>, vector<384x384xbf16>, vector<8x384xf32> -> vector<8x384xf32>
    %29 = arith.addf %27, %28 : vector<8x384xf32>
    %30 = math.tanh %29 : vector<8x384xf32>
    %31 = arith.truncf %30 : vector<8x384xf32> to vector<8x384xbf16>
    %cst_27 = arith.constant dense<0.000000e+00> : vector<8x384xf32>
    %32 = tpu.matmul %26, %11, %cst_27 {dimension_numbers = #tpu.dot_dimension_numbers<[1], [0], [0], [1], [0, 0, 1, 1], [], []>} : vector<8x384xbf16>, vector<384x384xbf16>, vector<8x384xf32> -> vector<8x384xf32>
    %cst_28 = arith.constant dense<0.000000e+00> : vector<8x384xf32>
    %33 = tpu.matmul %21, %12, %cst_28 {dimension_numbers = #tpu.dot_dimension_numbers<[1], [0], [0], [1], [0, 0, 1, 1], [], []>} : vector<8x384xbf16>, vector<384x384xbf16>, vector<8x384xf32> -> vector<8x384xf32>
    %34 = arith.addf %32, %33 : vector<8x384xf32>
    %35 = arith.addf %34, %15 : vector<8x384xf32>
    %36 = math.tanh %35 : vector<8x384xf32>
    %37 = arith.truncf %36 : vector<8x384xf32> to vector<8x384xbf16>
    %c0_29 = arith.constant 0 : index
    %c0_30 = arith.constant 0 : index
    %38 = vector.load %arg22[%c0_29, %c0_30] : memref<8x384xf32, #tpu.memory_space<vmem>>, vector<8x384xf32>
    %c0_31 = arith.constant 0 : index
    %c0_32 = arith.constant 0 : index
    %c0_33 = arith.constant 0 : index
    %39 = vector.load %arg8[%c0_31, %c0_32, %c0_33] : memref<9x384x384xbf16, #tpu.memory_space<vmem>>, vector<1x384x384xbf16>
    %40 = vector.shape_cast %39 : vector<1x384x384xbf16> to vector<384x384xbf16>
    %cst_34 = arith.constant dense<0.000000e+00> : vector<8x384xf32>
    %41 = tpu.matmul %37, %40, %cst_34 {dimension_numbers = #tpu.dot_dimension_numbers<[1], [0], [0], [1], [0, 0, 1, 1], [], []>} : vector<8x384xbf16>, vector<384x384xbf16>, vector<8x384xf32> -> vector<8x384xf32>
    %42 = arith.addf %38, %41 : vector<8x384xf32>
    %c0_35 = arith.constant 0 : index
    %c0_36 = arith.constant 0 : index
    %43 = vector.load %arg22[%c0_35, %c0_36] : memref<8x384xf32, #tpu.memory_space<vmem>>, vector<8x384xf32>
    tpu.vector_store %arg22[%c0_35, %c0_36], %42 {strides = array<i32>} : memref<8x384xf32, #tpu.memory_space<vmem>>, vector<8x384xf32>,
    %c16 = arith.constant 16 : index
    %c0_37 = arith.constant 0 : index
    %44 = vector.load %arg21[%c16, %c0_37] : memref<72x384xf32, #tpu.memory_space<vmem>>, vector<8x384xf32>
    %cst_38 = arith.constant dense<0.000000e+00> : vector<8x384xf32>
    %45 = tpu.matmul %31, %10, %cst_38 {dimension_numbers = #tpu.dot_dimension_numbers<[1], [0], [0], [1], [0, 0, 1, 1], [], []>} : vector<8x384xbf16>, vector<384x384xbf16>, vector<8x384xf32> -> vector<8x384xf32>
    %46 = arith.addf %44, %45 : vector<8x384xf32>
    %47 = math.tanh %46 : vector<8x384xf32>
    %48 = arith.truncf %47 : vector<8x384xf32> to vector<8x384xbf16>
    %cst_39 = arith.constant dense<0.000000e+00> : vector<8x384xf32>
    %49 = tpu.matmul %31, %11, %cst_39 {dimension_numbers = #tpu.dot_dimension_numbers<[1], [0], [0], [1], [0, 0, 1, 1], [], []>} : vector<8x384xbf16>, vector<384x384xbf16>, vector<8x384xf32> -> vector<8x384xf32>
    %cst_40 = arith.constant dense<0.000000e+00> : vector<8x384xf32>
    %50 = tpu.matmul %37, %12, %cst_40 {dimension_numbers = #tpu.dot_dimension_numbers<[1], [0], [0], [1], [0, 0, 1, 1], [], []>} : vector<8x384xbf16>, vector<384x384xbf16>, vector<8x384xf32> -> vector<8x384xf32>
    %51 = arith.addf %49, %50 : vector<8x384xf32>
    %52 = arith.addf %51, %15 : vector<8x384xf32>
    %53 = math.tanh %52 : vector<8x384xf32>
    %54 = arith.truncf %53 : vector<8x384xf32> to vector<8x384xbf16>
    %c0_41 = arith.constant 0 : index
    %c0_42 = arith.constant 0 : index
    %55 = vector.load %arg22[%c0_41, %c0_42] : memref<8x384xf32, #tpu.memory_space<vmem>>, vector<8x384xf32>
    %c1 = arith.constant 1 : index
    %c0_43 = arith.constant 0 : index
    %c0_44 = arith.constant 0 : index
    %56 = vector.load %arg8[%c1, %c0_43, %c0_44] : memref<9x384x384xbf16, #tpu.memory_space<vmem>>, vector<1x384x384xbf16>
    %57 = vector.shape_cast %56 : vector<1x384x384xbf16> to vector<384x384xbf16>
    %cst_45 = arith.constant dense<0.000000e+00> : vector<8x384xf32>
    %58 = tpu.matmul %54, %57, %cst_45 {dimension_numbers = #tpu.dot_dimension_numbers<[1], [0], [0], [1], [0, 0, 1, 1], [], []>} : vector<8x384xbf16>, vector<384x384xbf16>, vector<8x384xf32> -> vector<8x384xf32>
    %59 = arith.addf %55, %58 : vector<8x384xf32>
    %c0_46 = arith.constant 0 : index
    %c0_47 = arith.constant 0 : index
    %60 = vector.load %arg22[%c0_46, %c0_47] : memref<8x384xf32, #tpu.memory_space<vmem>>, vector<8x384xf32>
    tpu.vector_store %arg22[%c0_46, %c0_47], %59 {strides = array<i32>} : memref<8x384xf32, #tpu.memory_space<vmem>>, vector<8x384xf32>,
    %c24 = arith.constant 24 : index
    %c0_48 = arith.constant 0 : index
    %61 = vector.load %arg21[%c24, %c0_48] : memref<72x384xf32, #tpu.memory_space<vmem>>, vector<8x384xf32>
    %cst_49 = arith.constant dense<0.000000e+00> : vector<8x384xf32>
    %62 = tpu.matmul %48, %10, %cst_49 {dimension_numbers = #tpu.dot_dimension_numbers<[1], [0], [0], [1], [0, 0, 1, 1], [], []>} : vector<8x384xbf16>, vector<384x384xbf16>, vector<8x384xf32> -> vector<8x384xf32>
    %63 = arith.addf %61, %62 : vector<8x384xf32>
    %64 = math.tanh %63 : vector<8x384xf32>
    %65 = arith.truncf %64 : vector<8x384xf32> to vector<8x384xbf16>
    %cst_50 = arith.constant dense<0.000000e+00> : vector<8x384xf32>
    %66 = tpu.matmul %48, %11, %cst_50 {dimension_numbers = #tpu.dot_dimension_numbers<[1], [0], [0], [1], [0, 0, 1, 1], [], []>} : vector<8x384xbf16>, vector<384x384xbf16>, vector<8x384xf32> -> vector<8x384xf32>
    %cst_51 = arith.constant dense<0.000000e+00> : vector<8x384xf32>
    %67 = tpu.matmul %54, %12, %cst_51 {dimension_numbers = #tpu.dot_dimension_numbers<[1], [0], [0], [1], [0, 0, 1, 1], [], []>} : vector<8x384xbf16>, vector<384x384xbf16>, vector<8x384xf32> -> vector<8x384xf32>
    %68 = arith.addf %66, %67 : vector<8x384xf32>
    %69 = arith.addf %68, %15 : vector<8x384xf32>
    %70 = math.tanh %69 : vector<8x384xf32>
    %71 = arith.truncf %70 : vector<8x384xf32> to vector<8x384xbf16>
    %c0_52 = arith.constant 0 : index
    %c0_53 = arith.constant 0 : index
    %72 = vector.load %arg22[%c0_52, %c0_53] : memref<8x384xf32, #tpu.memory_space<vmem>>, vector<8x384xf32>
    %c2 = arith.constant 2 : index
    %c0_54 = arith.constant 0 : index
    %c0_55 = arith.constant 0 : index
    %73 = vector.load %arg8[%c2, %c0_54, %c0_55] : memref<9x384x384xbf16, #tpu.memory_space<vmem>>, vector<1x384x384xbf16>
    %74 = vector.shape_cast %73 : vector<1x384x384xbf16> to vector<384x384xbf16>
    %cst_56 = arith.constant dense<0.000000e+00> : vector<8x384xf32>
    %75 = tpu.matmul %71, %74, %cst_56 {dimension_numbers = #tpu.dot_dimension_numbers<[1], [0], [0], [1], [0, 0, 1, 1], [], []>} : vector<8x384xbf16>, vector<384x384xbf16>, vector<8x384xf32> -> vector<8x384xf32>
    %76 = arith.addf %72, %75 : vector<8x384xf32>
    %c0_57 = arith.constant 0 : index
    %c0_58 = arith.constant 0 : index
    %77 = vector.load %arg22[%c0_57, %c0_58] : memref<8x384xf32, #tpu.memory_space<vmem>>, vector<8x384xf32>
    tpu.vector_store %arg22[%c0_57, %c0_58], %76 {strides = array<i32>} : memref<8x384xf32, #tpu.memory_space<vmem>>, vector<8x384xf32>,
    %c32 = arith.constant 32 : index
    %c0_59 = arith.constant 0 : index
    %78 = vector.load %arg21[%c32, %c0_59] : memref<72x384xf32, #tpu.memory_space<vmem>>, vector<8x384xf32>
    %cst_60 = arith.constant dense<0.000000e+00> : vector<8x384xf32>
    %79 = tpu.matmul %65, %10, %cst_60 {dimension_numbers = #tpu.dot_dimension_numbers<[1], [0], [0], [1], [0, 0, 1, 1], [], []>} : vector<8x384xbf16>, vector<384x384xbf16>, vector<8x384xf32> -> vector<8x384xf32>
    %80 = arith.addf %78, %79 : vector<8x384xf32>
    %81 = math.tanh %80 : vector<8x384xf32>
    %82 = arith.truncf %81 : vector<8x384xf32> to vector<8x384xbf16>
    %cst_61 = arith.constant dense<0.000000e+00> : vector<8x384xf32>
    %83 = tpu.matmul %65, %11, %cst_61 {dimension_numbers = #tpu.dot_dimension_numbers<[1], [0], [0], [1], [0, 0, 1, 1], [], []>} : vector<8x384xbf16>, vector<384x384xbf16>, vector<8x384xf32> -> vector<8x384xf32>
    %cst_62 = arith.constant dense<0.000000e+00> : vector<8x384xf32>
    %84 = tpu.matmul %71, %12, %cst_62 {dimension_numbers = #tpu.dot_dimension_numbers<[1], [0], [0], [1], [0, 0, 1, 1], [], []>} : vector<8x384xbf16>, vector<384x384xbf16>, vector<8x384xf32> -> vector<8x384xf32>
    %85 = arith.addf %83, %84 : vector<8x384xf32>
    %86 = arith.addf %85, %15 : vector<8x384xf32>
    %87 = math.tanh %86 : vector<8x384xf32>
    %88 = arith.truncf %87 : vector<8x384xf32> to vector<8x384xbf16>
    %c0_63 = arith.constant 0 : index
    %c0_64 = arith.constant 0 : index
    %89 = vector.load %arg22[%c0_63, %c0_64] : memref<8x384xf32, #tpu.memory_space<vmem>>, vector<8x384xf32>
    %c3 = arith.constant 3 : index
    %c0_65 = arith.constant 0 : index
    %c0_66 = arith.constant 0 : index
    %90 = vector.load %arg8[%c3, %c0_65, %c0_66] : memref<9x384x384xbf16, #tpu.memory_space<vmem>>, vector<1x384x384xbf16>
    %91 = vector.shape_cast %90 : vector<1x384x384xbf16> to vector<384x384xbf16>
    %cst_67 = arith.constant dense<0.000000e+00> : vector<8x384xf32>
    %92 = tpu.matmul %88, %91, %cst_67 {dimension_numbers = #tpu.dot_dimension_numbers<[1], [0], [0], [1], [0, 0, 1, 1], [], []>} : vector<8x384xbf16>, vector<384x384xbf16>, vector<8x384xf32> -> vector<8x384xf32>
    %93 = arith.addf %89, %92 : vector<8x384xf32>
    %c0_68 = arith.constant 0 : index
    %c0_69 = arith.constant 0 : index
    %94 = vector.load %arg22[%c0_68, %c0_69] : memref<8x384xf32, #tpu.memory_space<vmem>>, vector<8x384xf32>
    tpu.vector_store %arg22[%c0_68, %c0_69], %93 {strides = array<i32>} : memref<8x384xf32, #tpu.memory_space<vmem>>, vector<8x384xf32>,
    %c40 = arith.constant 40 : index
    %c0_70 = arith.constant 0 : index
    %95 = vector.load %arg21[%c40, %c0_70] : memref<72x384xf32, #tpu.memory_space<vmem>>, vector<8x384xf32>
    %cst_71 = arith.constant dense<0.000000e+00> : vector<8x384xf32>
    %96 = tpu.matmul %82, %10, %cst_71 {dimension_numbers = #tpu.dot_dimension_numbers<[1], [0], [0], [1], [0, 0, 1, 1], [], []>} : vector<8x384xbf16>, vector<384x384xbf16>, vector<8x384xf32> -> vector<8x384xf32>
    %97 = arith.addf %95, %96 : vector<8x384xf32>
    %98 = math.tanh %97 : vector<8x384xf32>
    %99 = arith.truncf %98 : vector<8x384xf32> to vector<8x384xbf16>
    %cst_72 = arith.constant dense<0.000000e+00> : vector<8x384xf32>
    %100 = tpu.matmul %82, %11, %cst_72 {dimension_numbers = #tpu.dot_dimension_numbers<[1], [0], [0], [1], [0, 0, 1, 1], [], []>} : vector<8x384xbf16>, vector<384x384xbf16>, vector<8x384xf32> -> vector<8x384xf32>
    %cst_73 = arith.constant dense<0.000000e+00> : vector<8x384xf32>
    %101 = tpu.matmul %88, %12, %cst_73 {dimension_numbers = #tpu.dot_dimension_numbers<[1], [0], [0], [1], [0, 0, 1, 1], [], []>} : vector<8x384xbf16>, vector<384x384xbf16>, vector<8x384xf32> -> vector<8x384xf32>
    %102 = arith.addf %100, %101 : vector<8x384xf32>
    %103 = arith.addf %102, %15 : vector<8x384xf32>
    %104 = math.tanh %103 : vector<8x384xf32>
    %105 = arith.truncf %104 : vector<8x384xf32> to vector<8x384xbf16>
    %c0_74 = arith.constant 0 : index
    %c0_75 = arith.constant 0 : index
    %106 = vector.load %arg22[%c0_74, %c0_75] : memref<8x384xf32, #tpu.memory_space<vmem>>, vector<8x384xf32>
    %c4 = arith.constant 4 : index
    %c0_76 = arith.constant 0 : index
    %c0_77 = arith.constant 0 : index
    %107 = vector.load %arg8[%c4, %c0_76, %c0_77] : memref<9x384x384xbf16, #tpu.memory_space<vmem>>, vector<1x384x384xbf16>
    %108 = vector.shape_cast %107 : vector<1x384x384xbf16> to vector<384x384xbf16>
    %cst_78 = arith.constant dense<0.000000e+00> : vector<8x384xf32>
    %109 = tpu.matmul %105, %108, %cst_78 {dimension_numbers = #tpu.dot_dimension_numbers<[1], [0], [0], [1], [0, 0, 1, 1], [], []>} : vector<8x384xbf16>, vector<384x384xbf16>, vector<8x384xf32> -> vector<8x384xf32>
    %110 = arith.addf %106, %109 : vector<8x384xf32>
    %c0_79 = arith.constant 0 : index
    %c0_80 = arith.constant 0 : index
    %111 = vector.load %arg22[%c0_79, %c0_80] : memref<8x384xf32, #tpu.memory_space<vmem>>, vector<8x384xf32>
    tpu.vector_store %arg22[%c0_79, %c0_80], %110 {strides = array<i32>} : memref<8x384xf32, #tpu.memory_space<vmem>>, vector<8x384xf32>,
    %c48 = arith.constant 48 : index
    %c0_81 = arith.constant 0 : index
    %112 = vector.load %arg21[%c48, %c0_81] : memref<72x384xf32, #tpu.memory_space<vmem>>, vector<8x384xf32>
    %cst_82 = arith.constant dense<0.000000e+00> : vector<8x384xf32>
    %113 = tpu.matmul %99, %10, %cst_82 {dimension_numbers = #tpu.dot_dimension_numbers<[1], [0], [0], [1], [0, 0, 1, 1], [], []>} : vector<8x384xbf16>, vector<384x384xbf16>, vector<8x384xf32> -> vector<8x384xf32>
    %114 = arith.addf %112, %113 : vector<8x384xf32>
    %115 = math.tanh %114 : vector<8x384xf32>
    %116 = arith.truncf %115 : vector<8x384xf32> to vector<8x384xbf16>
    %cst_83 = arith.constant dense<0.000000e+00> : vector<8x384xf32>
    %117 = tpu.matmul %99, %11, %cst_83 {dimension_numbers = #tpu.dot_dimension_numbers<[1], [0], [0], [1], [0, 0, 1, 1], [], []>} : vector<8x384xbf16>, vector<384x384xbf16>, vector<8x384xf32> -> vector<8x384xf32>
    %cst_84 = arith.constant dense<0.000000e+00> : vector<8x384xf32>
    %118 = tpu.matmul %105, %12, %cst_84 {dimension_numbers = #tpu.dot_dimension_numbers<[1], [0], [0], [1], [0, 0, 1, 1], [], []>} : vector<8x384xbf16>, vector<384x384xbf16>, vector<8x384xf32> -> vector<8x384xf32>
    %119 = arith.addf %117, %118 : vector<8x384xf32>
    %120 = arith.addf %119, %15 : vector<8x384xf32>
    %121 = math.tanh %120 : vector<8x384xf32>
    %122 = arith.truncf %121 : vector<8x384xf32> to vector<8x384xbf16>
    %c0_85 = arith.constant 0 : index
    %c0_86 = arith.constant 0 : index
    %123 = vector.load %arg22[%c0_85, %c0_86] : memref<8x384xf32, #tpu.memory_space<vmem>>, vector<8x384xf32>
    %c5 = arith.constant 5 : index
    %c0_87 = arith.constant 0 : index
    %c0_88 = arith.constant 0 : index
    %124 = vector.load %arg8[%c5, %c0_87, %c0_88] : memref<9x384x384xbf16, #tpu.memory_space<vmem>>, vector<1x384x384xbf16>
    %125 = vector.shape_cast %124 : vector<1x384x384xbf16> to vector<384x384xbf16>
    %cst_89 = arith.constant dense<0.000000e+00> : vector<8x384xf32>
    %126 = tpu.matmul %122, %125, %cst_89 {dimension_numbers = #tpu.dot_dimension_numbers<[1], [0], [0], [1], [0, 0, 1, 1], [], []>} : vector<8x384xbf16>, vector<384x384xbf16>, vector<8x384xf32> -> vector<8x384xf32>
    %127 = arith.addf %123, %126 : vector<8x384xf32>
    %c0_90 = arith.constant 0 : index
    %c0_91 = arith.constant 0 : index
    %128 = vector.load %arg22[%c0_90, %c0_91] : memref<8x384xf32, #tpu.memory_space<vmem>>, vector<8x384xf32>
    tpu.vector_store %arg22[%c0_90, %c0_91], %127 {strides = array<i32>} : memref<8x384xf32, #tpu.memory_space<vmem>>, vector<8x384xf32>,
    %c56 = arith.constant 56 : index
    %c0_92 = arith.constant 0 : index
    %129 = vector.load %arg21[%c56, %c0_92] : memref<72x384xf32, #tpu.memory_space<vmem>>, vector<8x384xf32>
    %cst_93 = arith.constant dense<0.000000e+00> : vector<8x384xf32>
    %130 = tpu.matmul %116, %10, %cst_93 {dimension_numbers = #tpu.dot_dimension_numbers<[1], [0], [0], [1], [0, 0, 1, 1], [], []>} : vector<8x384xbf16>, vector<384x384xbf16>, vector<8x384xf32> -> vector<8x384xf32>
    %131 = arith.addf %129, %130 : vector<8x384xf32>
    %132 = math.tanh %131 : vector<8x384xf32>
    %133 = arith.truncf %132 : vector<8x384xf32> to vector<8x384xbf16>
    %cst_94 = arith.constant dense<0.000000e+00> : vector<8x384xf32>
    %134 = tpu.matmul %116, %11, %cst_94 {dimension_numbers = #tpu.dot_dimension_numbers<[1], [0], [0], [1], [0, 0, 1, 1], [], []>} : vector<8x384xbf16>, vector<384x384xbf16>, vector<8x384xf32> -> vector<8x384xf32>
    %cst_95 = arith.constant dense<0.000000e+00> : vector<8x384xf32>
    %135 = tpu.matmul %122, %12, %cst_95 {dimension_numbers = #tpu.dot_dimension_numbers<[1], [0], [0], [1], [0, 0, 1, 1], [], []>} : vector<8x384xbf16>, vector<384x384xbf16>, vector<8x384xf32> -> vector<8x384xf32>
    %136 = arith.addf %134, %135 : vector<8x384xf32>
    %137 = arith.addf %136, %15 : vector<8x384xf32>
    %138 = math.tanh %137 : vector<8x384xf32>
    %139 = arith.truncf %138 : vector<8x384xf32> to vector<8x384xbf16>
    %c0_96 = arith.constant 0 : index
    %c0_97 = arith.constant 0 : index
    %140 = vector.load %arg22[%c0_96, %c0_97] : memref<8x384xf32, #tpu.memory_space<vmem>>, vector<8x384xf32>
    %c6 = arith.constant 6 : index
    %c0_98 = arith.constant 0 : index
    %c0_99 = arith.constant 0 : index
    %141 = vector.load %arg8[%c6, %c0_98, %c0_99] : memref<9x384x384xbf16, #tpu.memory_space<vmem>>, vector<1x384x384xbf16>
    %142 = vector.shape_cast %141 : vector<1x384x384xbf16> to vector<384x384xbf16>
    %cst_100 = arith.constant dense<0.000000e+00> : vector<8x384xf32>
    %143 = tpu.matmul %139, %142, %cst_100 {dimension_numbers = #tpu.dot_dimension_numbers<[1], [0], [0], [1], [0, 0, 1, 1], [], []>} : vector<8x384xbf16>, vector<384x384xbf16>, vector<8x384xf32> -> vector<8x384xf32>
    %144 = arith.addf %140, %143 : vector<8x384xf32>
    %c0_101 = arith.constant 0 : index
    %c0_102 = arith.constant 0 : index
    %145 = vector.load %arg22[%c0_101, %c0_102] : memref<8x384xf32, #tpu.memory_space<vmem>>, vector<8x384xf32>
    tpu.vector_store %arg22[%c0_101, %c0_102], %144 {strides = array<i32>} : memref<8x384xf32, #tpu.memory_space<vmem>>, vector<8x384xf32>,
    %c64 = arith.constant 64 : index
    %c0_103 = arith.constant 0 : index
    %146 = vector.load %arg21[%c64, %c0_103] : memref<72x384xf32, #tpu.memory_space<vmem>>, vector<8x384xf32>
    %cst_104 = arith.constant dense<0.000000e+00> : vector<8x384xf32>
    %147 = tpu.matmul %133, %10, %cst_104 {dimension_numbers = #tpu.dot_dimension_numbers<[1], [0], [0], [1], [0, 0, 1, 1], [], []>} : vector<8x384xbf16>, vector<384x384xbf16>, vector<8x384xf32> -> vector<8x384xf32>
    %148 = arith.addf %146, %147 : vector<8x384xf32>
    %149 = math.tanh %148 : vector<8x384xf32>
    %150 = arith.truncf %149 : vector<8x384xf32> to vector<8x384xbf16>
    %cst_105 = arith.constant dense<0.000000e+00> : vector<8x384xf32>
    %151 = tpu.matmul %133, %11, %cst_105 {dimension_numbers = #tpu.dot_dimension_numbers<[1], [0], [0], [1], [0, 0, 1, 1], [], []>} : vector<8x384xbf16>, vector<384x384xbf16>, vector<8x384xf32> -> vector<8x384xf32>
    %cst_106 = arith.constant dense<0.000000e+00> : vector<8x384xf32>
    %152 = tpu.matmul %139, %12, %cst_106 {dimension_numbers = #tpu.dot_dimension_numbers<[1], [0], [0], [1], [0, 0, 1, 1], [], []>} : vector<8x384xbf16>, vector<384x384xbf16>, vector<8x384xf32> -> vector<8x384xf32>
    %153 = arith.addf %151, %152 : vector<8x384xf32>
    %154 = arith.addf %153, %15 : vector<8x384xf32>
    %155 = math.tanh %154 : vector<8x384xf32>
    %156 = arith.truncf %155 : vector<8x384xf32> to vector<8x384xbf16>
    %c0_107 = arith.constant 0 : index
    %c0_108 = arith.constant 0 : index
    %157 = vector.load %arg22[%c0_107, %c0_108] : memref<8x384xf32, #tpu.memory_space<vmem>>, vector<8x384xf32>
    %c7 = arith.constant 7 : index
    %c0_109 = arith.constant 0 : index
    %c0_110 = arith.constant 0 : index
    %158 = vector.load %arg8[%c7, %c0_109, %c0_110] : memref<9x384x384xbf16, #tpu.memory_space<vmem>>, vector<1x384x384xbf16>
    %159 = vector.shape_cast %158 : vector<1x384x384xbf16> to vector<384x384xbf16>
    %cst_111 = arith.constant dense<0.000000e+00> : vector<8x384xf32>
    %160 = tpu.matmul %156, %159, %cst_111 {dimension_numbers = #tpu.dot_dimension_numbers<[1], [0], [0], [1], [0, 0, 1, 1], [], []>} : vector<8x384xbf16>, vector<384x384xbf16>, vector<8x384xf32> -> vector<8x384xf32>
    %161 = arith.addf %157, %160 : vector<8x384xf32>
    %c0_112 = arith.constant 0 : index
    %c0_113 = arith.constant 0 : index
    %162 = vector.load %arg22[%c0_112, %c0_113] : memref<8x384xf32, #tpu.memory_space<vmem>>, vector<8x384xf32>
    tpu.vector_store %arg22[%c0_112, %c0_113], %161 {strides = array<i32>} : memref<8x384xf32, #tpu.memory_space<vmem>>, vector<8x384xf32>,
    %cst_114 = arith.constant dense<0.000000e+00> : vector<8x384xf32>
    %163 = tpu.matmul %150, %11, %cst_114 {dimension_numbers = #tpu.dot_dimension_numbers<[1], [0], [0], [1], [0, 0, 1, 1], [], []>} : vector<8x384xbf16>, vector<384x384xbf16>, vector<8x384xf32> -> vector<8x384xf32>
    %cst_115 = arith.constant dense<0.000000e+00> : vector<8x384xf32>
    %164 = tpu.matmul %156, %12, %cst_115 {dimension_numbers = #tpu.dot_dimension_numbers<[1], [0], [0], [1], [0, 0, 1, 1], [], []>} : vector<8x384xbf16>, vector<384x384xbf16>, vector<8x384xf32> -> vector<8x384xf32>
    %165 = arith.addf %163, %164 : vector<8x384xf32>
    %166 = arith.addf %165, %15 : vector<8x384xf32>
    %167 = math.tanh %166 : vector<8x384xf32>
    %168 = arith.truncf %167 : vector<8x384xf32> to vector<8x384xbf16>
    %c0_116 = arith.constant 0 : index
    %c0_117 = arith.constant 0 : index
    %169 = vector.load %arg22[%c0_116, %c0_117] : memref<8x384xf32, #tpu.memory_space<vmem>>, vector<8x384xf32>
    %c8_118 = arith.constant 8 : index
    %c0_119 = arith.constant 0 : index
    %c0_120 = arith.constant 0 : index
    %170 = vector.load %arg8[%c8_118, %c0_119, %c0_120] : memref<9x384x384xbf16, #tpu.memory_space<vmem>>, vector<1x384x384xbf16>
    %171 = vector.shape_cast %170 : vector<1x384x384xbf16> to vector<384x384xbf16>
    %cst_121 = arith.constant dense<0.000000e+00> : vector<8x384xf32>
    %172 = tpu.matmul %168, %171, %cst_121 {dimension_numbers = #tpu.dot_dimension_numbers<[1], [0], [0], [1], [0, 0, 1, 1], [], []>} : vector<8x384xbf16>, vector<384x384xbf16>, vector<8x384xf32> -> vector<8x384xf32>
    %173 = arith.addf %169, %172 : vector<8x384xf32>
    %c0_122 = arith.constant 0 : index
    %c0_123 = arith.constant 0 : index
    %174 = vector.load %arg22[%c0_122, %c0_123] : memref<8x384xf32, #tpu.memory_space<vmem>>, vector<8x384xf32>
    tpu.vector_store %arg22[%c0_122, %c0_123], %173 {strides = array<i32>} : memref<8x384xf32, #tpu.memory_space<vmem>>, vector<8x384xf32>,
    %c0_124 = arith.constant 0 : index
    %c0_125 = arith.constant 0 : index
    %175 = vector.load %arg22[%c0_124, %c0_125] : memref<8x384xf32, #tpu.memory_space<vmem>>, vector<8x384xf32>
    %cst_126 = arith.constant 0.000000e+00 : f32
    %176 = vector.broadcast %cst_126 : f32 to vector<8x384xf32>
    %177 = arith.maximumf %175, %176 : vector<8x384xf32>
    %178 = arith.truncf %177 : vector<8x384xf32> to vector<8x384xbf16>
    %c0_127 = arith.constant 0 : index
    %c0_128 = arith.constant 0 : index
    %179 = vector.load %arg11[%c0_127, %c0_128] : memref<64x64xbf16, #tpu.memory_space<vmem>>, vector<64x64xbf16>
    %c0_129 = arith.constant 0 : index
    %c0_130 = arith.constant 0 : index
    %180 = vector.load %arg12[%c0_129, %c0_130] : memref<64x64xbf16, #tpu.memory_space<vmem>>, vector<64x64xbf16>
    %c0_131 = arith.constant 0 : index
    %c0_132 = arith.constant 0 : index
    %181 = vector.load %arg13[%c0_131, %c0_132] : memref<64x64xbf16, #tpu.memory_space<vmem>>, vector<64x64xbf16>
    %c0_133 = arith.constant 0 : index
    %c0_134 = arith.constant 0 : index
    %182 = vector.load %arg14[%c0_133, %c0_134] : memref<1x64xf32, #tpu.memory_space<vmem>>, vector<1x64xf32>
    %183 = vector.shape_cast %182 : vector<1x64xf32> to vector<1x64xf32>
    %184 = vector.broadcast %183 : vector<1x64xf32> to vector<8x64xf32>
    %c0_135 = arith.constant 0 : index
    %c0_136 = arith.constant 0 : index
    %185 = vector.load %arg15[%c0_135, %c0_136] : memref<1x64xf32, #tpu.memory_space<vmem>>, vector<1x64xf32>
    %186 = vector.shape_cast %185 : vector<1x64xf32> to vector<1x64xf32>
    %187 = vector.broadcast %186 : vector<1x64xf32> to vector<8x64xf32>
    %c0_137 = arith.constant 0 : index
    %c0_138 = arith.constant 0 : index
    %c0_139 = arith.constant 0 : index
    %188 = vector.load %arg10[%c0_137, %c0_138, %c0_139] : memref<5x384x64xbf16, #tpu.memory_space<vmem>>, vector<1x384x64xbf16>
    %189 = vector.shape_cast %188 : vector<1x384x64xbf16> to vector<384x64xbf16>
    %cst_140 = arith.constant dense<0.000000e+00> : vector<8x64xf32>
    %190 = tpu.matmul %178, %189, %cst_140 {dimension_numbers = #tpu.dot_dimension_numbers<[1], [0], [0], [1], [0, 0, 1, 1], [], []>} : vector<8x384xbf16>, vector<384x64xbf16>, vector<8x64xf32> -> vector<8x64xf32>
    %191 = arith.addf %190, %184 : vector<8x64xf32>
    %c1_141 = arith.constant 1 : index
    %c0_142 = arith.constant 0 : index
    %c0_143 = arith.constant 0 : index
    %192 = vector.load %arg10[%c1_141, %c0_142, %c0_143] : memref<5x384x64xbf16, #tpu.memory_space<vmem>>, vector<1x384x64xbf16>
    %193 = vector.shape_cast %192 : vector<1x384x64xbf16> to vector<384x64xbf16>
    %cst_144 = arith.constant dense<0.000000e+00> : vector<8x64xf32>
    %194 = tpu.matmul %178, %193, %cst_144 {dimension_numbers = #tpu.dot_dimension_numbers<[1], [0], [0], [1], [0, 0, 1, 1], [], []>} : vector<8x384xbf16>, vector<384x64xbf16>, vector<8x64xf32> -> vector<8x64xf32>
    %195 = arith.addf %194, %184 : vector<8x64xf32>
    %c2_145 = arith.constant 2 : index
    %c0_146 = arith.constant 0 : index
    %c0_147 = arith.constant 0 : index
    %196 = vector.load %arg10[%c2_145, %c0_146, %c0_147] : memref<5x384x64xbf16, #tpu.memory_space<vmem>>, vector<1x384x64xbf16>
    %197 = vector.shape_cast %196 : vector<1x384x64xbf16> to vector<384x64xbf16>
    %cst_148 = arith.constant dense<0.000000e+00> : vector<8x64xf32>
    %198 = tpu.matmul %178, %197, %cst_148 {dimension_numbers = #tpu.dot_dimension_numbers<[1], [0], [0], [1], [0, 0, 1, 1], [], []>} : vector<8x384xbf16>, vector<384x64xbf16>, vector<8x64xf32> -> vector<8x64xf32>
    %199 = arith.addf %198, %184 : vector<8x64xf32>
    %c3_149 = arith.constant 3 : index
    %c0_150 = arith.constant 0 : index
    %c0_151 = arith.constant 0 : index
    %200 = vector.load %arg10[%c3_149, %c0_150, %c0_151] : memref<5x384x64xbf16, #tpu.memory_space<vmem>>, vector<1x384x64xbf16>
    %201 = vector.shape_cast %200 : vector<1x384x64xbf16> to vector<384x64xbf16>
    %cst_152 = arith.constant dense<0.000000e+00> : vector<8x64xf32>
    %202 = tpu.matmul %178, %201, %cst_152 {dimension_numbers = #tpu.dot_dimension_numbers<[1], [0], [0], [1], [0, 0, 1, 1], [], []>} : vector<8x384xbf16>, vector<384x64xbf16>, vector<8x64xf32> -> vector<8x64xf32>
    %203 = arith.addf %202, %184 : vector<8x64xf32>
    %c4_153 = arith.constant 4 : index
    %c0_154 = arith.constant 0 : index
    %c0_155 = arith.constant 0 : index
    %204 = vector.load %arg10[%c4_153, %c0_154, %c0_155] : memref<5x384x64xbf16, #tpu.memory_space<vmem>>, vector<1x384x64xbf16>
    %205 = vector.shape_cast %204 : vector<1x384x64xbf16> to vector<384x64xbf16>
    %cst_156 = arith.constant dense<0.000000e+00> : vector<8x64xf32>
    %206 = tpu.matmul %178, %205, %cst_156 {dimension_numbers = #tpu.dot_dimension_numbers<[1], [0], [0], [1], [0, 0, 1, 1], [], []>} : vector<8x384xbf16>, vector<384x64xbf16>, vector<8x64xf32> -> vector<8x64xf32>
    %207 = arith.addf %206, %184 : vector<8x64xf32>
    %c0_157 = arith.constant 0 : index
    %c0_158 = arith.constant 0 : index
    %208 = vector.load %arg17[%c0_157, %c0_158] : memref<1x256xf32, #tpu.memory_space<vmem>>, vector<1x256xf32>
    %209 = vector.shape_cast %208 : vector<1x256xf32> to vector<1x256xf32>
    %210 = vector.broadcast %209 : vector<1x256xf32> to vector<8x256xf32>
    %cst_159 = arith.constant 0.000000e+00 : bf16
    %211 = vector.broadcast %cst_159 : bf16 to vector<8x64xbf16>
    %cst_160 = arith.constant 0.000000e+00 : bf16
    %212 = vector.broadcast %cst_160 : bf16 to vector<8x64xbf16>
    %cst_161 = arith.constant dense<0.000000e+00> : vector<8x64xf32>
    %213 = tpu.matmul %211, %179, %cst_161 {dimension_numbers = #tpu.dot_dimension_numbers<[1], [0], [0], [1], [0, 0, 1, 1], [], []>} : vector<8x64xbf16>, vector<64x64xbf16>, vector<8x64xf32> -> vector<8x64xf32>
    %214 = arith.addf %191, %213 : vector<8x64xf32>
    %215 = math.tanh %214 : vector<8x64xf32>
    %216 = arith.truncf %215 : vector<8x64xf32> to vector<8x64xbf16>
    %cst_162 = arith.constant dense<0.000000e+00> : vector<8x64xf32>
    %217 = tpu.matmul %216, %179, %cst_162 {dimension_numbers = #tpu.dot_dimension_numbers<[1], [0], [0], [1], [0, 0, 1, 1], [], []>} : vector<8x64xbf16>, vector<64x64xbf16>, vector<8x64xf32> -> vector<8x64xf32>
    %218 = arith.addf %195, %217 : vector<8x64xf32>
    %219 = math.tanh %218 : vector<8x64xf32>
    %220 = arith.truncf %219 : vector<8x64xf32> to vector<8x64xbf16>
    %cst_163 = arith.constant dense<0.000000e+00> : vector<8x64xf32>
    %221 = tpu.matmul %216, %180, %cst_163 {dimension_numbers = #tpu.dot_dimension_numbers<[1], [0], [0], [1], [0, 0, 1, 1], [], []>} : vector<8x64xbf16>, vector<64x64xbf16>, vector<8x64xf32> -> vector<8x64xf32>
    %cst_164 = arith.constant dense<0.000000e+00> : vector<8x64xf32>
    %222 = tpu.matmul %212, %181, %cst_164 {dimension_numbers = #tpu.dot_dimension_numbers<[1], [0], [0], [1], [0, 0, 1, 1], [], []>} : vector<8x64xbf16>, vector<64x64xbf16>, vector<8x64xf32> -> vector<8x64xf32>
    %223 = arith.addf %221, %222 : vector<8x64xf32>
    %224 = arith.addf %223, %187 : vector<8x64xf32>
    %225 = math.tanh %224 : vector<8x64xf32>
    %226 = arith.truncf %225 : vector<8x64xf32> to vector<8x64xbf16>
    %c0_165 = arith.constant 0 : index
    %c0_166 = arith.constant 0 : index
    %c0_167 = arith.constant 0 : index
    %227 = vector.load %arg16[%c0_165, %c0_166, %c0_167] : memref<5x64x256xbf16, #tpu.memory_space<vmem>>, vector<1x64x256xbf16>
    %228 = vector.shape_cast %227 : vector<1x64x256xbf16> to vector<64x256xbf16>
    %cst_168 = arith.constant dense<0.000000e+00> : vector<8x256xf32>
    %229 = tpu.matmul %226, %228, %cst_168 {dimension_numbers = #tpu.dot_dimension_numbers<[1], [0], [0], [1], [0, 0, 1, 1], [], []>} : vector<8x64xbf16>, vector<64x256xbf16>, vector<8x256xf32> -> vector<8x256xf32>
    %230 = arith.addf %210, %229 : vector<8x256xf32>
    %cst_169 = arith.constant dense<0.000000e+00> : vector<8x64xf32>
    %231 = tpu.matmul %220, %179, %cst_169 {dimension_numbers = #tpu.dot_dimension_numbers<[1], [0], [0], [1], [0, 0, 1, 1], [], []>} : vector<8x64xbf16>, vector<64x64xbf16>, vector<8x64xf32> -> vector<8x64xf32>
    %232 = arith.addf %199, %231 : vector<8x64xf32>
    %233 = math.tanh %232 : vector<8x64xf32>
    %234 = arith.truncf %233 : vector<8x64xf32> to vector<8x64xbf16>
    %cst_170 = arith.constant dense<0.000000e+00> : vector<8x64xf32>
    %235 = tpu.matmul %220, %180, %cst_170 {dimension_numbers = #tpu.dot_dimension_numbers<[1], [0], [0], [1], [0, 0, 1, 1], [], []>} : vector<8x64xbf16>, vector<64x64xbf16>, vector<8x64xf32> -> vector<8x64xf32>
    %cst_171 = arith.constant dense<0.000000e+00> : vector<8x64xf32>
    %236 = tpu.matmul %226, %181, %cst_171 {dimension_numbers = #tpu.dot_dimension_numbers<[1], [0], [0], [1], [0, 0, 1, 1], [], []>} : vector<8x64xbf16>, vector<64x64xbf16>, vector<8x64xf32> -> vector<8x64xf32>
    %237 = arith.addf %235, %236 : vector<8x64xf32>
    %238 = arith.addf %237, %187 : vector<8x64xf32>
    %239 = math.tanh %238 : vector<8x64xf32>
    %240 = arith.truncf %239 : vector<8x64xf32> to vector<8x64xbf16>
    %c1_172 = arith.constant 1 : index
    %c0_173 = arith.constant 0 : index
    %c0_174 = arith.constant 0 : index
    %241 = vector.load %arg16[%c1_172, %c0_173, %c0_174] : memref<5x64x256xbf16, #tpu.memory_space<vmem>>, vector<1x64x256xbf16>
    %242 = vector.shape_cast %241 : vector<1x64x256xbf16> to vector<64x256xbf16>
    %cst_175 = arith.constant dense<0.000000e+00> : vector<8x256xf32>
    %243 = tpu.matmul %240, %242, %cst_175 {dimension_numbers = #tpu.dot_dimension_numbers<[1], [0], [0], [1], [0, 0, 1, 1], [], []>} : vector<8x64xbf16>, vector<64x256xbf16>, vector<8x256xf32> -> vector<8x256xf32>
    %244 = arith.addf %230, %243 : vector<8x256xf32>
    %cst_176 = arith.constant dense<0.000000e+00> : vector<8x64xf32>
    %245 = tpu.matmul %234, %179, %cst_176 {dimension_numbers = #tpu.dot_dimension_numbers<[1], [0], [0], [1], [0, 0, 1, 1], [], []>} : vector<8x64xbf16>, vector<64x64xbf16>, vector<8x64xf32> -> vector<8x64xf32>
    %246 = arith.addf %203, %245 : vector<8x64xf32>
    %247 = math.tanh %246 : vector<8x64xf32>
    %248 = arith.truncf %247 : vector<8x64xf32> to vector<8x64xbf16>
    %cst_177 = arith.constant dense<0.000000e+00> : vector<8x64xf32>
    %249 = tpu.matmul %234, %180, %cst_177 {dimension_numbers = #tpu.dot_dimension_numbers<[1], [0], [0], [1], [0, 0, 1, 1], [], []>} : vector<8x64xbf16>, vector<64x64xbf16>, vector<8x64xf32> -> vector<8x64xf32>
    %cst_178 = arith.constant dense<0.000000e+00> : vector<8x64xf32>
    %250 = tpu.matmul %240, %181, %cst_178 {dimension_numbers = #tpu.dot_dimension_numbers<[1], [0], [0], [1], [0, 0, 1, 1], [], []>} : vector<8x64xbf16>, vector<64x64xbf16>, vector<8x64xf32> -> vector<8x64xf32>
    %251 = arith.addf %249, %250 : vector<8x64xf32>
    %252 = arith.addf %251, %187 : vector<8x64xf32>
    %253 = math.tanh %252 : vector<8x64xf32>
    %254 = arith.truncf %253 : vector<8x64xf32> to vector<8x64xbf16>
    %c2_179 = arith.constant 2 : index
    %c0_180 = arith.constant 0 : index
    %c0_181 = arith.constant 0 : index
    %255 = vector.load %arg16[%c2_179, %c0_180, %c0_181] : memref<5x64x256xbf16, #tpu.memory_space<vmem>>, vector<1x64x256xbf16>
    %256 = vector.shape_cast %255 : vector<1x64x256xbf16> to vector<64x256xbf16>
    %cst_182 = arith.constant dense<0.000000e+00> : vector<8x256xf32>
    %257 = tpu.matmul %254, %256, %cst_182 {dimension_numbers = #tpu.dot_dimension_numbers<[1], [0], [0], [1], [0, 0, 1, 1], [], []>} : vector<8x64xbf16>, vector<64x256xbf16>, vector<8x256xf32> -> vector<8x256xf32>
    %258 = arith.addf %244, %257 : vector<8x256xf32>
    %cst_183 = arith.constant dense<0.000000e+00> : vector<8x64xf32>
    %259 = tpu.matmul %248, %179, %cst_183 {dimension_numbers = #tpu.dot_dimension_numbers<[1], [0], [0], [1], [0, 0, 1, 1], [], []>} : vector<8x64xbf16>, vector<64x64xbf16>, vector<8x64xf32> -> vector<8x64xf32>
    %260 = arith.addf %207, %259 : vector<8x64xf32>
    %261 = math.tanh %260 : vector<8x64xf32>
    %262 = arith.truncf %261 : vector<8x64xf32> to vector<8x64xbf16>
    %cst_184 = arith.constant dense<0.000000e+00> : vector<8x64xf32>
    %263 = tpu.matmul %248, %180, %cst_184 {dimension_numbers = #tpu.dot_dimension_numbers<[1], [0], [0], [1], [0, 0, 1, 1], [], []>} : vector<8x64xbf16>, vector<64x64xbf16>, vector<8x64xf32> -> vector<8x64xf32>
    %cst_185 = arith.constant dense<0.000000e+00> : vector<8x64xf32>
    %264 = tpu.matmul %254, %181, %cst_185 {dimension_numbers = #tpu.dot_dimension_numbers<[1], [0], [0], [1], [0, 0, 1, 1], [], []>} : vector<8x64xbf16>, vector<64x64xbf16>, vector<8x64xf32> -> vector<8x64xf32>
    %265 = arith.addf %263, %264 : vector<8x64xf32>
    %266 = arith.addf %265, %187 : vector<8x64xf32>
    %267 = math.tanh %266 : vector<8x64xf32>
    %268 = arith.truncf %267 : vector<8x64xf32> to vector<8x64xbf16>
    %c3_186 = arith.constant 3 : index
    %c0_187 = arith.constant 0 : index
    %c0_188 = arith.constant 0 : index
    %269 = vector.load %arg16[%c3_186, %c0_187, %c0_188] : memref<5x64x256xbf16, #tpu.memory_space<vmem>>, vector<1x64x256xbf16>
    %270 = vector.shape_cast %269 : vector<1x64x256xbf16> to vector<64x256xbf16>
    %cst_189 = arith.constant dense<0.000000e+00> : vector<8x256xf32>
    %271 = tpu.matmul %268, %270, %cst_189 {dimension_numbers = #tpu.dot_dimension_numbers<[1], [0], [0], [1], [0, 0, 1, 1], [], []>} : vector<8x64xbf16>, vector<64x256xbf16>, vector<8x256xf32> -> vector<8x256xf32>
    %272 = arith.addf %258, %271 : vector<8x256xf32>
    %cst_190 = arith.constant dense<0.000000e+00> : vector<8x64xf32>
    %273 = tpu.matmul %262, %180, %cst_190 {dimension_numbers = #tpu.dot_dimension_numbers<[1], [0], [0], [1], [0, 0, 1, 1], [], []>} : vector<8x64xbf16>, vector<64x64xbf16>, vector<8x64xf32> -> vector<8x64xf32>
    %cst_191 = arith.constant dense<0.000000e+00> : vector<8x64xf32>
    %274 = tpu.matmul %268, %181, %cst_191 {dimension_numbers = #tpu.dot_dimension_numbers<[1], [0], [0], [1], [0, 0, 1, 1], [], []>} : vector<8x64xbf16>, vector<64x64xbf16>, vector<8x64xf32> -> vector<8x64xf32>
    %275 = arith.addf %273, %274 : vector<8x64xf32>
    %276 = arith.addf %275, %187 : vector<8x64xf32>
    %277 = math.tanh %276 : vector<8x64xf32>
    %278 = arith.truncf %277 : vector<8x64xf32> to vector<8x64xbf16>
    %c4_192 = arith.constant 4 : index
    %c0_193 = arith.constant 0 : index
    %c0_194 = arith.constant 0 : index
    %279 = vector.load %arg16[%c4_192, %c0_193, %c0_194] : memref<5x64x256xbf16, #tpu.memory_space<vmem>>, vector<1x64x256xbf16>
    %280 = vector.shape_cast %279 : vector<1x64x256xbf16> to vector<64x256xbf16>
    %cst_195 = arith.constant dense<0.000000e+00> : vector<8x256xf32>
    %281 = tpu.matmul %278, %280, %cst_195 {dimension_numbers = #tpu.dot_dimension_numbers<[1], [0], [0], [1], [0, 0, 1, 1], [], []>} : vector<8x64xbf16>, vector<64x256xbf16>, vector<8x256xf32> -> vector<8x256xf32>
    %282 = arith.addf %272, %281 : vector<8x256xf32>
    %cst_196 = arith.constant 0.000000e+00 : f32
    %283 = vector.broadcast %cst_196 : f32 to vector<8x256xf32>
    %284 = arith.maximumf %282, %283 : vector<8x256xf32>
    %285 = vector.extract_strided_slice %284 {offsets = [0, 0], sizes = [8, 128], strides = [1, 1]} : vector<8x256xf32> to vector<8x128xf32>
    %286 = vector.extract_strided_slice %284 {offsets = [0, 128], sizes = [8, 128], strides = [1, 1]} : vector<8x256xf32> to vector<8x128xf32>
    %287 = arith.addf %285, %286 : vector<8x128xf32>
    %c0_197 = arith.constant 0 : index
    %c0_198 = arith.constant 0 : index
    %288 = vector.load %arg18[%c0_197, %c0_198] : memref<128x4xf32, #tpu.memory_space<vmem>>, vector<128x4xf32>
    %cst_199 = arith.constant dense<0.000000e+00> : vector<8x4xf32>
    %289 = tpu.matmul %287, %288, %cst_199 {dimension_numbers = #tpu.dot_dimension_numbers<[1], [0], [0], [1], [0, 0, 1, 1], [], []>} : vector<8x128xf32>, vector<128x4xf32>, vector<8x4xf32> -> vector<8x4xf32>
    %c0_200 = arith.constant 0 : index
    %c0_201 = arith.constant 0 : index
    %290 = vector.load %arg19[%c0_200, %c0_201] : memref<1x4xf32, #tpu.memory_space<vmem>>, vector<1x4xf32>
    %291 = vector.shape_cast %290 : vector<1x4xf32> to vector<1x4xf32>
    %292 = vector.broadcast %291 : vector<1x4xf32> to vector<8x4xf32>
    %293 = arith.addf %289, %292 : vector<8x4xf32>
    %c0_202 = arith.constant 0 : index
    %c0_203 = arith.constant 0 : index
    %294 = vector.load %arg20[%c0_202, %c0_203] : memref<8x4xf32, #tpu.memory_space<vmem>>, vector<8x4xf32>
    tpu.vector_store %arg20[%c0_202, %c0_203], %293 {strides = array<i32>} : memref<8x4xf32, #tpu.memory_space<vmem>>, vector<8x4xf32>,
    return
  }
  func.func @transform_0(%arg0: i32) -> (i32, i32, i32) {
    %c0_i32 = arith.constant 0 : i32
    %c0_i32_0 = arith.constant 0 : i32
    %c0_i32_1 = arith.constant 0 : i32
    return %arg0, %c0_i32, %c0_i32_0 : i32, i32, i32
  }
  func.func @transform_1(%arg0: i32) -> (i32, i32) {
    %c0_i32 = arith.constant 0 : i32
    %c0_i32_0 = arith.constant 0 : i32
    %c0_i32_1 = arith.constant 0 : i32
    return %c0_i32, %c0_i32_0 : i32, i32
  }
  func.func @transform_2(%arg0: i32) -> (i32, i32) {
    %c0_i32 = arith.constant 0 : i32
    %c0_i32_0 = arith.constant 0 : i32
    %c0_i32_1 = arith.constant 0 : i32
    return %c0_i32, %c0_i32_0 : i32, i32
  }
  func.func @transform_3(%arg0: i32) -> (i32, i32) {
    %c0_i32 = arith.constant 0 : i32
    %c0_i32_0 = arith.constant 0 : i32
    %c0_i32_1 = arith.constant 0 : i32
    return %c0_i32, %c0_i32_0 : i32, i32
  }
  func.func @transform_4(%arg0: i32) -> (i32, i32) {
    %c0_i32 = arith.constant 0 : i32
    %c0_i32_0 = arith.constant 0 : i32
    %c0_i32_1 = arith.constant 0 : i32
    return %c0_i32, %c0_i32_0 : i32, i32
  }
  func.func @transform_5(%arg0: i32) -> (i32, i32) {
    %c0_i32 = arith.constant 0 : i32
    %c0_i32_0 = arith.constant 0 : i32
    %c0_i32_1 = arith.constant 0 : i32
    return %c0_i32, %c0_i32_0 : i32, i32
  }
  func.func @transform_6(%arg0: i32) -> (i32, i32) {
    %c0_i32 = arith.constant 0 : i32
    %c0_i32_0 = arith.constant 0 : i32
    %c0_i32_1 = arith.constant 0 : i32
    return %c0_i32, %c0_i32_0 : i32, i32
  }
  func.func @transform_7(%arg0: i32) -> (i32, i32, i32) {
    %c0_i32 = arith.constant 0 : i32
    %c0_i32_0 = arith.constant 0 : i32
    %c0_i32_1 = arith.constant 0 : i32
    %c0_i32_2 = arith.constant 0 : i32
    return %c0_i32, %c0_i32_0, %c0_i32_1 : i32, i32, i32
  }
  func.func @transform_8(%arg0: i32) -> (i32, i32) {
    %c0_i32 = arith.constant 0 : i32
    %c0_i32_0 = arith.constant 0 : i32
    %c0_i32_1 = arith.constant 0 : i32
    return %c0_i32, %c0_i32_0 : i32, i32
  }
  func.func @transform_9(%arg0: i32) -> (i32, i32, i32) {
    %c0_i32 = arith.constant 0 : i32
    %c0_i32_0 = arith.constant 0 : i32
    %c0_i32_1 = arith.constant 0 : i32
    %c0_i32_2 = arith.constant 0 : i32
    return %c0_i32, %c0_i32_0, %c0_i32_1 : i32, i32, i32
  }
  func.func @transform_10(%arg0: i32) -> (i32, i32) {
    %c0_i32 = arith.constant 0 : i32
    %c0_i32_0 = arith.constant 0 : i32
    %c0_i32_1 = arith.constant 0 : i32
    return %c0_i32, %c0_i32_0 : i32, i32
  }
  func.func @transform_11(%arg0: i32) -> (i32, i32) {
    %c0_i32 = arith.constant 0 : i32
    %c0_i32_0 = arith.constant 0 : i32
    %c0_i32_1 = arith.constant 0 : i32
    return %c0_i32, %c0_i32_0 : i32, i32
  }
  func.func @transform_12(%arg0: i32) -> (i32, i32) {
    %c0_i32 = arith.constant 0 : i32
    %c0_i32_0 = arith.constant 0 : i32
    %c0_i32_1 = arith.constant 0 : i32
    return %c0_i32, %c0_i32_0 : i32, i32
  }
  func.func @transform_13(%arg0: i32) -> (i32, i32) {
    %c0_i32 = arith.constant 0 : i32
    %c0_i32_0 = arith.constant 0 : i32
    %c0_i32_1 = arith.constant 0 : i32
    return %c0_i32, %c0_i32_0 : i32, i32
  }
  func.func @transform_14(%arg0: i32) -> (i32, i32) {
    %c0_i32 = arith.constant 0 : i32
    %c0_i32_0 = arith.constant 0 : i32
    %c0_i32_1 = arith.constant 0 : i32
    return %c0_i32, %c0_i32_0 : i32, i32
  }
  func.func @transform_15(%arg0: i32) -> (i32, i32, i32) {
    %c0_i32 = arith.constant 0 : i32
    %c0_i32_0 = arith.constant 0 : i32
    %c0_i32_1 = arith.constant 0 : i32
    %c0_i32_2 = arith.constant 0 : i32
    return %c0_i32, %c0_i32_0, %c0_i32_1 : i32, i32, i32
  }
  func.func @transform_16(%arg0: i32) -> (i32, i32) {
    %c0_i32 = arith.constant 0 : i32
    %c0_i32_0 = arith.constant 0 : i32
    %c0_i32_1 = arith.constant 0 : i32
    return %c0_i32, %c0_i32_0 : i32, i32
  }
  func.func @transform_17(%arg0: i32) -> (i32, i32) {
    %c0_i32 = arith.constant 0 : i32
    %c0_i32_0 = arith.constant 0 : i32
    %c0_i32_1 = arith.constant 0 : i32
    return %c0_i32, %c0_i32_0 : i32, i32
  }
  func.func @transform_18(%arg0: i32) -> (i32, i32) {
    %c0_i32 = arith.constant 0 : i32
    %c0_i32_0 = arith.constant 0 : i32
    %c0_i32_1 = arith.constant 0 : i32
    return %c0_i32, %c0_i32_0 : i32, i32
  }
  func.func @transform_19(%arg0: i32) -> (i32, i32) {
    %c0_i32 = arith.constant 0 : i32
    %c0_i32_0 = arith.constant 0 : i32
    return %arg0, %c0_i32 : i32, i32
  }
}

</mosaic_0001>

<llo_original>
// kernel: rrnn_forward.1
$region0: #{rrnn_forward.1}
  #allocation0 [shape = 'u32[]', space=smem, size = 0x4, offset = 0x4, fixed_abs, tag = 'smem constant byte address 0x4 - core index']
  #allocation1 [shape = 'u32[72,128]{1,0:T(1,128)}', space=vmem, size = 0x9000, scoped, tag = 'internal scratch']
  #allocation2 [shape = 'f32[72,384]{1,0:T(8,128)}', space=vmem, size = 0x1b000, scoped, tag = 'scratch operand']
  #allocation3 [shape = 'f32[8,384]{1,0:T(8,128)}', space=vmem, size = 0x3000, scoped, tag = 'scratch operand']
  %s0 = inlined_call_operand.vmem [shape: f32[1,72,64], index: 0, kind: input, shape index: {}]
  %s1 = inlined_call_operand.hbm [shape: bf16[64,384], index: 1, kind: input, shape index: {}]
  %s2 = inlined_call_operand.hbm [shape: f32[1,384], index: 2, kind: input, shape index: {}]
  %s3 = inlined_call_operand.hbm [shape: bf16[384,384], index: 3, kind: input, shape index: {}]
  %s4 = inlined_call_operand.hbm [shape: bf16[384,384], index: 4, kind: input, shape index: {}]
  %s5 = inlined_call_operand.hbm [shape: bf16[384,384], index: 5, kind: input, shape index: {}]
  %s6 = inlined_call_operand.hbm [shape: f32[1,384], index: 6, kind: input, shape index: {}]
  %s7 = inlined_call_operand.hbm [shape: bf16[9,384,384], index: 7, kind: input, shape index: {}]
  %s8 = inlined_call_operand.hbm [shape: f32[1,384], index: 8, kind: input, shape index: {}]
  %s9 = inlined_call_operand.vmem [shape: bf16[5,384,64], index: 9, kind: input, shape index: {}]
  %s10 = inlined_call_operand.hbm [shape: bf16[64,64], index: 10, kind: input, shape index: {}]
  %s11 = inlined_call_operand.hbm [shape: bf16[64,64], index: 11, kind: input, shape index: {}]
  %s12 = inlined_call_operand.hbm [shape: bf16[64,64], index: 12, kind: input, shape index: {}]
  %s13 = inlined_call_operand.hbm [shape: f32[1,64], index: 13, kind: input, shape index: {}]
  %s14 = inlined_call_operand.hbm [shape: f32[1,64], index: 14, kind: input, shape index: {}]
  %s15 = inlined_call_operand.hbm [shape: bf16[5,64,256], index: 15, kind: input, shape index: {}]
  %s16 = inlined_call_operand.hbm [shape: f32[1,256], index: 16, kind: input, shape index: {}]
  %s17 = inlined_call_operand.vmem [shape: f32[128,4], index: 17, kind: input, shape index: {}]
  %s18 = inlined_call_operand.hbm [shape: f32[1,4], index: 18, kind: input, shape index: {}]
  %s19 = inlined_call_operand.vmem [shape: f32[8,4], index: 19, kind: output, shape index: {}]
  %s20 = sld [smem:[#allocation0]]
  $region150: #{rrnn_forward.1} parent=0
    _
  %s22 = ssub.s32 1, %s20
  %s23 = scalar_select 0, %s22, %s20
  $region1: #{rrnn_forward.1} parent=0
    #allocation4 [shape = 'u8[49152]{0}', space=vmem, size = 0xc000, scoped, tag = 'input window, operand 1, single buffered']
    #allocation5 [shape = 's32[1]{0}', space=sflag, size = 0x4, scoped, tag = 'scoped memory for rrnn_forward.1']
    #allocation6 [shape = 'u8[1536]{0}', space=vmem, size = 0x800, scoped, tag = 'input window, operand 2, single buffered']
    #allocation7 [shape = 's32[1]{0}', space=sflag, size = 0x4, scoped, tag = 'scoped memory for rrnn_forward.1']
    #allocation8 [shape = 'u8[294912]{0}', space=vmem, size = 0x48000, scoped, tag = 'input window, operand 3, single buffered']
    #allocation9 [shape = 'u8[294912]{0}', space=vmem, size = 0x48000, scoped, tag = 'input window, operand 4, single buffered']
    #allocation10 [shape = 's32[1]{0}', space=sflag, size = 0x4, scoped, tag = 'scoped memory for rrnn_forward.1']
    #allocation11 [shape = 'u8[294912]{0}', space=vmem, size = 0x48000, scoped, tag = 'input window, operand 5, single buffered']
    #allocation12 [shape = 'u8[1536]{0}', space=vmem, size = 0x800, scoped, tag = 'input window, operand 6, single buffered']
    #allocation13 [shape = 's32[1]{0}', space=sflag, size = 0x4, scoped, tag = 'scoped memory for rrnn_forward.1']
    #allocation14 [shape = 'u8[2654208]{0}', space=vmem, size = 0x288000, scoped, tag = 'input window, operand 7, single buffered']
    #allocation15 [shape = 'u8[1536]{0}', space=vmem, size = 0x800, scoped, tag = 'input window, operand 8, single buffered']
    #allocation16 [shape = 's32[1]{0}', space=sflag, size = 0x4, scoped, tag = 'scoped memory for rrnn_forward.1']
    #allocation17 [shape = 'u8[16384]{0}', space=vmem, size = 0x4000, scoped, tag = 'input window, operand 10, single buffered']
    #allocation18 [shape = 'u8[16384]{0}', space=vmem, size = 0x4000, scoped, tag = 'input window, operand 11, single buffered']
    #allocation19 [shape = 's32[1]{0}', space=sflag, size = 0x4, scoped, tag = 'scoped memory for rrnn_forward.1']
    #allocation20 [shape = 'u8[16384]{0}', space=vmem, size = 0x4000, scoped, tag = 'input window, operand 12, single buffered']
    #allocation21 [shape = 'u8[512]{0}', space=vmem, size = 0x400, scoped, tag = 'input window, operand 13, single buffered']
    #allocation22 [shape = 's32[1]{0}', space=sflag, size = 0x4, scoped, tag = 'scoped memory for rrnn_forward.1']
    #allocation23 [shape = 'u8[512]{0}', space=vmem, size = 0x400, scoped, tag = 'input window, operand 14, single buffered']
    #allocation24 [shape = 'u8[163840]{0}', space=vmem, size = 0x28000, scoped, tag = 'input window, operand 15, single buffered']
    #allocation25 [shape = 's32[1]{0}', space=sflag, size = 0x4, scoped, tag = 'scoped memory for rrnn_forward.1']
    #allocation26 [shape = 'u8[1024]{0}', space=vmem, size = 0x400, scoped, tag = 'input window, operand 16, single buffered']
    #allocation27 [shape = 'u8[512]{0}', space=vmem, size = 0x400, scoped, tag = 'input window, operand 18, single buffered']
    #allocation28 [shape = 's32[1]{0}', space=sflag, size = 0x4, scoped, tag = 'scoped memory for rrnn_forward.1']
    %24 = vsyncpa [#allocation5], 0
    %25 = vsyncpa [#allocation7], 0
    %26 = vsyncpa [#allocation10], 0
    %27 = vsyncpa [#allocation13], 0
    %28 = vsyncpa [#allocation16], 0
    %29 = vsyncpa [#allocation19], 0
    %30 = vsyncpa [#allocation22], 0
    %31 = vsyncpa [#allocation25], 0
    %32 = vsyncpa [#allocation28], 0
    // Predicated region
    $region2: #{rrnn_forward.1} parent=1 // pred_check
      _
    $region3: #{rrnn_forward.1} parent=1 // pred_check_branch
      %34 = sbr.rel (0) target = $region5
    $region4: #{rrnn_forward.1} parent=1 // pred_region
      _
    $region5: #{rrnn_forward.1} parent=1 // pred_fallthru
      _
    // Predicated region
    $region6: #{rrnn_forward.1} parent=1 // pred_check
      _
    $region7: #{rrnn_forward.1} parent=1 // pred_check_branch
      %36 = sbr.rel (0) target = $region9
    $region8: #{rrnn_forward.1} parent=1 // pred_region
      %38 = vsyncadd [#allocation5], 0
      %s39 = sshll.u32 %s1, 4
      %s40 = int_to_ptr.hbm [resolvable:$true] %s39
      %s41 = sshll.u32 [#allocation4], 4
      %s42 = int_to_ptr.vmem [resolvable:$true] %s41
      %47 = dma.hbm_to_vmem [thread:$0]  %s40, 1536, %s42, [#allocation5], 192, 192, 12
    $region9: #{rrnn_forward.1} parent=1 // pred_fallthru
      _
    // Predicated region
    $region10: #{rrnn_forward.1} parent=1 // pred_check
      _
    $region11: #{rrnn_forward.1} parent=1 // pred_check_branch
      %49 = sbr.rel (0) target = $region13
    $region12: #{rrnn_forward.1} parent=1 // pred_region
      %51 = vsyncadd [#allocation7], 0
      %s53 = sshll.u32 %s2, 4
      %s54 = int_to_ptr.hbm [resolvable:$true] %s53
      %s55 = sshll.u32 [#allocation6], 4
      %s56 = int_to_ptr.vmem [resolvable:$true] %s55
      %58 = dma.hbm_to_vmem [thread:$0]  %s54, 48, %s56, [#allocation7]
    $region13: #{rrnn_forward.1} parent=1 // pred_fallthru
      _
    // Predicated region
    $region14: #{rrnn_forward.1} parent=1 // pred_check
      _
    $region15: #{rrnn_forward.1} parent=1 // pred_check_branch
      %60 = sbr.rel (0) target = $region17
    $region16: #{rrnn_forward.1} parent=1 // pred_region
      %62 = vsyncadd [#allocation7], 0
      %s63 = sshll.u32 %s3, 4
      %s64 = int_to_ptr.hbm [resolvable:$true] %s63
      %s65 = sshll.u32 [#allocation8], 4
      %s66 = int_to_ptr.vmem [resolvable:$true] %s65
      %71 = dma.hbm_to_vmem [thread:$0]  %s64, 9216, %s66, [#allocation7], 192, 192, 12
    $region17: #{rrnn_forward.1} parent=1 // pred_fallthru
      _
    // Predicated region
    $region18: #{rrnn_forward.1} parent=1 // pred_check
      _
    $region19: #{rrnn_forward.1} parent=1 // pred_check_branch
      %73 = sbr.rel (0) target = $region21
    $region20: #{rrnn_forward.1} parent=1 // pred_region
      %75 = vsyncadd [#allocation10], 0
      %s76 = sshll.u32 %s4, 4
      %s77 = int_to_ptr.hbm [resolvable:$true] %s76
      %s78 = sshll.u32 [#allocation9], 4
      %s79 = int_to_ptr.vmem [resolvable:$true] %s78
      %84 = dma.hbm_to_vmem [thread:$0]  %s77, 9216, %s79, [#allocation10], 192, 192, 12
    $region21: #{rrnn_forward.1} parent=1 // pred_fallthru
      _
    // Predicated region
    $region22: #{rrnn_forward.1} parent=1 // pred_check
      _
    $region23: #{rrnn_forward.1} parent=1 // pred_check_branch
      %86 = sbr.rel (0) target = $region25
    $region24: #{rrnn_forward.1} parent=1 // pred_region
      %88 = vsyncadd [#allocation10], 0
      %s89 = sshll.u32 %s5, 4
      %s90 = int_to_ptr.hbm [resolvable:$true] %s89
      %s91 = sshll.u32 [#allocation11], 4
      %s92 = int_to_ptr.vmem [resolvable:$true] %s91
      %97 = dma.hbm_to_vmem [thread:$0]  %s90, 9216, %s92, [#allocation10], 192, 192, 12
    $region25: #{rrnn_forward.1} parent=1 // pred_fallthru
      _
    // Predicated region
    $region26: #{rrnn_forward.1} parent=1 // pred_check
      _
    $region27: #{rrnn_forward.1} parent=1 // pred_check_branch
      %99 = sbr.rel (0) target = $region29
    $region28: #{rrnn_forward.1} parent=1 // pred_region
      %101 = vsyncadd [#allocation13], 0
      %s103 = sshll.u32 %s6, 4
      %s104 = int_to_ptr.hbm [resolvable:$true] %s103
      %s105 = sshll.u32 [#allocation12], 4
      %s106 = int_to_ptr.vmem [resolvable:$true] %s105
      %108 = dma.hbm_to_vmem [thread:$0]  %s104, 48, %s106, [#allocation13]
    $region29: #{rrnn_forward.1} parent=1 // pred_fallthru
      _
    // Predicated region
    $region30: #{rrnn_forward.1} parent=1 // pred_check
      _
    $region31: #{rrnn_forward.1} parent=1 // pred_check_branch
      %110 = sbr.rel (0) target = $region33
    $region32: #{rrnn_forward.1} parent=1 // pred_region
      %112 = vsyncadd [#allocation13], 0
      %s113 = sshll.u32 %s7, 4
      %s114 = int_to_ptr.hbm [resolvable:$true] %s113
      %s115 = sshll.u32 [#allocation14], 4
      %s116 = int_to_ptr.vmem [resolvable:$true] %s115
      %121 = dma.hbm_to_vmem [thread:$0]  %s114, 82944, %s116, [#allocation13], 192, 192, 12
    $region33: #{rrnn_forward.1} parent=1 // pred_fallthru
      _
    // Predicated region
    $region34: #{rrnn_forward.1} parent=1 // pred_check
      _
    $region35: #{rrnn_forward.1} parent=1 // pred_check_branch
      %123 = sbr.rel (0) target = $region37
    $region36: #{rrnn_forward.1} parent=1 // pred_region
      %125 = vsyncadd [#allocation16], 0
      %s127 = sshll.u32 %s8, 4
      %s128 = int_to_ptr.hbm [resolvable:$true] %s127
      %s129 = sshll.u32 [#allocation15], 4
      %s130 = int_to_ptr.vmem [resolvable:$true] %s129
      %132 = dma.hbm_to_vmem [thread:$0]  %s128, 48, %s130, [#allocation16]
    $region37: #{rrnn_forward.1} parent=1 // pred_fallthru
      _
    // Predicated region
    $region38: #{rrnn_forward.1} parent=1 // pred_check
      _
    $region39: #{rrnn_forward.1} parent=1 // pred_check_branch
      %134 = sbr.rel (0) target = $region41
    $region40: #{rrnn_forward.1} parent=1 // pred_region
      _
    $region41: #{rrnn_forward.1} parent=1 // pred_fallthru
      _
    // Predicated region
    $region42: #{rrnn_forward.1} parent=1 // pred_check
      _
    $region43: #{rrnn_forward.1} parent=1 // pred_check_branch
      %136 = sbr.rel (0) target = $region45
    $region44: #{rrnn_forward.1} parent=1 // pred_region
      %138 = vsyncadd [#allocation16], 0
      %s139 = sshll.u32 %s10, 4
      %s140 = int_to_ptr.hbm [resolvable:$true] %s139
      %s141 = sshll.u32 [#allocation17], 4
      %s142 = int_to_ptr.vmem [resolvable:$true] %s141
      %147 = dma.hbm_to_vmem [thread:$0]  %s140, 512, %s142, [#allocation16], 64, 64, 4
    $region45: #{rrnn_forward.1} parent=1 // pred_fallthru
      _
    // Predicated region
    $region46: #{rrnn_forward.1} parent=1 // pred_check
      _
    $region47: #{rrnn_forward.1} parent=1 // pred_check_branch
      %149 = sbr.rel (0) target = $region49
    $region48: #{rrnn_forward.1} parent=1 // pred_region
      %151 = vsyncadd [#allocation19], 0
      %s152 = sshll.u32 %s11, 4
      %s153 = int_to_ptr.hbm [resolvable:$true] %s152
      %s154 = sshll.u32 [#allocation18], 4
      %s155 = int_to_ptr.vmem [resolvable:$true] %s154
      %160 = dma.hbm_to_vmem [thread:$0]  %s153, 512, %s155, [#allocation19], 64, 64, 4
    $region49: #{rrnn_forward.1} parent=1 // pred_fallthru
      _
    // Predicated region
    $region50: #{rrnn_forward.1} parent=1 // pred_check
      _
    $region51: #{rrnn_forward.1} parent=1 // pred_check_branch
      %162 = sbr.rel (0) target = $region53
    $region52: #{rrnn_forward.1} parent=1 // pred_region
      %164 = vsyncadd [#allocation19], 0
      %s165 = sshll.u32 %s12, 4
      %s166 = int_to_ptr.hbm [resolvable:$true] %s165
      %s167 = sshll.u32 [#allocation20], 4
      %s168 = int_to_ptr.vmem [resolvable:$true] %s167
      %173 = dma.hbm_to_vmem [thread:$0]  %s166, 512, %s168, [#allocation19], 64, 64, 4
    $region53: #{rrnn_forward.1} parent=1 // pred_fallthru
      _
    // Predicated region
    $region54: #{rrnn_forward.1} parent=1 // pred_check
      _
    $region55: #{rrnn_forward.1} parent=1 // pred_check_branch
      %175 = sbr.rel (0) target = $region57
    $region56: #{rrnn_forward.1} parent=1 // pred_region
      %177 = vsyncadd [#allocation22], 0
      %s179 = sshll.u32 %s13, 4
      %s180 = int_to_ptr.hbm [resolvable:$true] %s179
      %s181 = sshll.u32 [#allocation21], 4
      %s182 = int_to_ptr.vmem [resolvable:$true] %s181
      %184 = dma.hbm_to_vmem [thread:$0]  %s180, 16, %s182, [#allocation22]
    $region57: #{rrnn_forward.1} parent=1 // pred_fallthru
      _
    // Predicated region
    $region58: #{rrnn_forward.1} parent=1 // pred_check
      _
    $region59: #{rrnn_forward.1} parent=1 // pred_check_branch
      %186 = sbr.rel (0) target = $region61
    $region60: #{rrnn_forward.1} parent=1 // pred_region
      %188 = vsyncadd [#allocation22], 0
      %s190 = sshll.u32 %s14, 4
      %s191 = int_to_ptr.hbm [resolvable:$true] %s190
      %s192 = sshll.u32 [#allocation23], 4
      %s193 = int_to_ptr.vmem [resolvable:$true] %s192
      %195 = dma.hbm_to_vmem [thread:$0]  %s191, 16, %s193, [#allocation22]
    $region61: #{rrnn_forward.1} parent=1 // pred_fallthru
      _
    // Predicated region
    $region62: #{rrnn_forward.1} parent=1 // pred_check
      _
    $region63: #{rrnn_forward.1} parent=1 // pred_check_branch
      %197 = sbr.rel (0) target = $region65
    $region64: #{rrnn_forward.1} parent=1 // pred_region
      %199 = vsyncadd [#allocation25], 0
      %s200 = sshll.u32 %s15, 4
      %s201 = int_to_ptr.hbm [resolvable:$true] %s200
      %s202 = sshll.u32 [#allocation24], 4
      %s203 = int_to_ptr.vmem [resolvable:$true] %s202
      %208 = dma.hbm_to_vmem [thread:$0]  %s201, 5120, %s203, [#allocation25], 128, 128, 8
    $region65: #{rrnn_forward.1} parent=1 // pred_fallthru
      _
    // Predicated region
    $region66: #{rrnn_forward.1} parent=1 // pred_check
      _
    $region67: #{rrnn_forward.1} parent=1 // pred_check_branch
      %210 = sbr.rel (0) target = $region69
    $region68: #{rrnn_forward.1} parent=1 // pred_region
      %212 = vsyncadd [#allocation25], 0
      %s214 = sshll.u32 %s16, 4
      %s215 = int_to_ptr.hbm [resolvable:$true] %s214
      %s216 = sshll.u32 [#allocation26], 4
      %s217 = int_to_ptr.vmem [resolvable:$true] %s216
      %219 = dma.hbm_to_vmem [thread:$0]  %s215, 32, %s217, [#allocation25]
    $region69: #{rrnn_forward.1} parent=1 // pred_fallthru
      _
    // Predicated region
    $region70: #{rrnn_forward.1} parent=1 // pred_check
      _
    $region71: #{rrnn_forward.1} parent=1 // pred_check_branch
      %221 = sbr.rel (0) target = $region73
    $region72: #{rrnn_forward.1} parent=1 // pred_region
      _
    $region73: #{rrnn_forward.1} parent=1 // pred_fallthru
      _
    // Predicated region
    $region74: #{rrnn_forward.1} parent=1 // pred_check
      _
    $region75: #{rrnn_forward.1} parent=1 // pred_check_branch
      %223 = sbr.rel (0) target = $region77
    $region76: #{rrnn_forward.1} parent=1 // pred_region
      %225 = vsyncadd [#allocation28], 0
      %s227 = sshll.u32 %s18, 4
      %s228 = int_to_ptr.hbm [resolvable:$true] %s227
      %s229 = sshll.u32 [#allocation27], 4
      %s230 = int_to_ptr.vmem [resolvable:$true] %s229
      %232 = dma.hbm_to_vmem [thread:$0]  %s228, 16, %s230, [#allocation28]
    $region77: #{rrnn_forward.1} parent=1 // pred_fallthru
      _
    // Predicated region
    $region78: #{rrnn_forward.1} parent=1 // pred_check
      _
    $region79: #{rrnn_forward.1} parent=1 // pred_check_branch
      %234 = sbr.rel (0) target = $region81
    $region80: #{rrnn_forward.1} parent=1 // pred_region
      %236 = dma.done [#allocation5], 1536
    $region81: #{rrnn_forward.1} parent=1 // pred_fallthru
      _
    // Predicated region
    $region82: #{rrnn_forward.1} parent=1 // pred_check
      _
    $region83: #{rrnn_forward.1} parent=1 // pred_check_branch
      %238 = sbr.rel (0) target = $region85
    $region84: #{rrnn_forward.1} parent=1 // pred_region
      %240 = dma.done [#allocation7], 48
    $region85: #{rrnn_forward.1} parent=1 // pred_fallthru
      _
    // Predicated region
    $region86: #{rrnn_forward.1} parent=1 // pred_check
      _
    $region87: #{rrnn_forward.1} parent=1 // pred_check_branch
      %242 = sbr.rel (0) target = $region89
    $region88: #{rrnn_forward.1} parent=1 // pred_region
      %244 = dma.done [#allocation7], 9216
    $region89: #{rrnn_forward.1} parent=1 // pred_fallthru
      _
    // Predicated region
    $region90: #{rrnn_forward.1} parent=1 // pred_check
      _
    $region91: #{rrnn_forward.1} parent=1 // pred_check_branch
      %246 = sbr.rel (0) target = $region93
    $region92: #{rrnn_forward.1} parent=1 // pred_region
      %248 = dma.done [#allocation10], 9216
    $region93: #{rrnn_forward.1} parent=1 // pred_fallthru
      _
    // Predicated region
    $region94: #{rrnn_forward.1} parent=1 // pred_check
      _
    $region95: #{rrnn_forward.1} parent=1 // pred_check_branch
      %250 = sbr.rel (0) target = $region97
    $region96: #{rrnn_forward.1} parent=1 // pred_region
      %252 = dma.done [#allocation10], 9216
    $region97: #{rrnn_forward.1} parent=1 // pred_fallthru
      _
    // Predicated region
    $region98: #{rrnn_forward.1} parent=1 // pred_check
      _
    $region99: #{rrnn_forward.1} parent=1 // pred_check_branch
      %254 = sbr.rel (0) target = $region101
    $region100: #{rrnn_forward.1} parent=1 // pred_region
      %256 = dma.done [#allocation13], 48
    $region101: #{rrnn_forward.1} parent=1 // pred_fallthru
      _
    // Predicated region
    $region102: #{rrnn_forward.1} parent=1 // pred_check
      _
    $region103: #{rrnn_forward.1} parent=1 // pred_check_branch
      %258 = sbr.rel (0) target = $region105
    $region104: #{rrnn_forward.1} parent=1 // pred_region
      %260 = dma.done [#allocation13], 82944
    $region105: #{rrnn_forward.1} parent=1 // pred_fallthru
      _
    // Predicated region
    $region106: #{rrnn_forward.1} parent=1 // pred_check
      _
    $region107: #{rrnn_forward.1} parent=1 // pred_check_branch
      %262 = sbr.rel (0) target = $region109
    $region108: #{rrnn_forward.1} parent=1 // pred_region
      %264 = dma.done [#allocation16], 48
    $region109: #{rrnn_forward.1} parent=1 // pred_fallthru
      _
    // Predicated region
    $region110: #{rrnn_forward.1} parent=1 // pred_check
      _
    $region111: #{rrnn_forward.1} parent=1 // pred_check_branch
      %266 = sbr.rel (0) target = $region113
    $region112: #{rrnn_forward.1} parent=1 // pred_region
      %268 = dma.done [#allocation16], 512
    $region113: #{rrnn_forward.1} parent=1 // pred_fallthru
      _
    // Predicated region
    $region114: #{rrnn_forward.1} parent=1 // pred_check
      _
    $region115: #{rrnn_forward.1} parent=1 // pred_check_branch
      %270 = sbr.rel (0) target = $region117
    $region116: #{rrnn_forward.1} parent=1 // pred_region
      %272 = dma.done [#allocation19], 512
    $region117: #{rrnn_forward.1} parent=1 // pred_fallthru
      _
    // Predicated region
    $region118: #{rrnn_forward.1} parent=1 // pred_check
      _
    $region119: #{rrnn_forward.1} parent=1 // pred_check_branch
      %274 = sbr.rel (0) target = $region121
    $region120: #{rrnn_forward.1} parent=1 // pred_region
      %276 = dma.done [#allocation19], 512
    $region121: #{rrnn_forward.1} parent=1 // pred_fallthru
      _
    // Predicated region
    $region122: #{rrnn_forward.1} parent=1 // pred_check
      _
    $region123: #{rrnn_forward.1} parent=1 // pred_check_branch
      %278 = sbr.rel (0) target = $region125
    $region124: #{rrnn_forward.1} parent=1 // pred_region
      %280 = dma.done [#allocation22], 16
    $region125: #{rrnn_forward.1} parent=1 // pred_fallthru
      _
    // Predicated region
    $region126: #{rrnn_forward.1} parent=1 // pred_check
      _
    $region127: #{rrnn_forward.1} parent=1 // pred_check_branch
      %282 = sbr.rel (0) target = $region129
    $region128: #{rrnn_forward.1} parent=1 // pred_region
      %284 = dma.done [#allocation22], 16
    $region129: #{rrnn_forward.1} parent=1 // pred_fallthru
      _
    // Predicated region
    $region130: #{rrnn_forward.1} parent=1 // pred_check
      _
    $region131: #{rrnn_forward.1} parent=1 // pred_check_branch
      %286 = sbr.rel (0) target = $region133
    $region132: #{rrnn_forward.1} parent=1 // pred_region
      %288 = dma.done [#allocation25], 5120
    $region133: #{rrnn_forward.1} parent=1 // pred_fallthru
      _
    // Predicated region
    $region134: #{rrnn_forward.1} parent=1 // pred_check
      _
    $region135: #{rrnn_forward.1} parent=1 // pred_check_branch
      %290 = sbr.rel (0) target = $region137
    $region136: #{rrnn_forward.1} parent=1 // pred_region
      %292 = dma.done [#allocation25], 32
    $region137: #{rrnn_forward.1} parent=1 // pred_fallthru
      _
    // Predicated region
    $region138: #{rrnn_forward.1} parent=1 // pred_check
      _
    $region139: #{rrnn_forward.1} parent=1 // pred_check_branch
      %294 = sbr.rel (0) target = $region141
    $region140: #{rrnn_forward.1} parent=1 // pred_region
      %296 = dma.done [#allocation28], 16
    $region141: #{rrnn_forward.1} parent=1 // pred_fallthru
      _
    %v298 = vld [vmem:[%s0] sm:$0xff]
    %v299 = vld [vmem:[%s0 + $0x8] sm:$0xff]
    %v300 = vld [vmem:[%s0 + $0x10] sm:$0xff]
    %v301 = vld [vmem:[%s0 + $0x18] sm:$0xff]
    %v302 = vld [vmem:[%s0 + $0x20] sm:$0xff]
    %v303 = vld [vmem:[%s0 + $0x28] sm:$0xff]
    %v304 = vld [vmem:[%s0 + $0x30] sm:$0xff]
    %v305 = vld [vmem:[%s0 + $0x38] sm:$0xff]
    %v306 = vld [vmem:[%s0 + $0x40] sm:$0xff]
    %v307 = vpack.c.bf16 %v299, %v298
    %v308 = vpack.c.bf16 %v301, %v300
    %v309 = vpack.c.bf16 %v303, %v302
    %v310 = vpack.c.bf16 %v305, %v304
    %v311 = vpack.c.bf16 %v306, %v306
    %v312 = vld [vmem:[#allocation4] sm:$0xff]
    %v313 = vld [vmem:[#allocation4 + $0x8] sm:$0xf]
    %v314 = vld [vmem:[#allocation4 + $0xc] sm:$0xff]
    %v315 = vld [vmem:[#allocation4 + $0x14] sm:$0xf]
    %v316 = vld [vmem:[#allocation4 + $0x18] sm:$0xff]
    %v317 = vld [vmem:[#allocation4 + $0x20] sm:$0xf]
    %v318 = vld [vmem:[#allocation4 + $0x24] sm:$0xff]
    %v319 = vld [vmem:[#allocation4 + $0x2c] sm:$0xf]
    %v320 = vld [vmem:[#allocation4 + $0x30] sm:$0xff]
    %v321 = vld [vmem:[#allocation4 + $0x38] sm:$0xf]
    %v322 = vld [vmem:[#allocation4 + $0x3c] sm:$0xff]
    %v323 = vld [vmem:[#allocation4 + $0x44] sm:$0xf]
    %v324 = vld [vmem:[#allocation4 + $0x48] sm:$0xff]
    %v325 = vld [vmem:[#allocation4 + $0x50] sm:$0xf]
    %v326 = vld [vmem:[#allocation4 + $0x54] sm:$0xff]
    %v327 = vld [vmem:[#allocation4 + $0x5c] sm:$0xf]
    %v328 = vld [vmem:[#allocation6] sm:$0x7]
    %v330 = vperm.slane %v328, 0
    %v331 = vperm.slane %v328, 1
    %v332 = vperm.slane %v328, 2
    %v352 = vunpack.c.l.b16 %v312
    %v353 = vunpack.c.h.b16 %v312
    %v354 = vunpack.c.l.b16 %v313
    %v355 = vunpack.c.l.b16 %v314
    %v356 = vunpack.c.h.b16 %v314
    %v357 = vunpack.c.l.b16 %v315
    %v358 = vunpack.c.l.b16 %v316
    %v359 = vunpack.c.h.b16 %v316
    %v360 = vunpack.c.l.b16 %v317
    %v361 = vunpack.c.l.b16 %v318
    %v362 = vunpack.c.h.b16 %v318
    %v363 = vunpack.c.l.b16 %v319
    %v364 = vunpack.c.l.b16 %v320
    %v365 = vunpack.c.h.b16 %v320
    %v366 = vunpack.c.l.b16 %v321
    %v367 = vunpack.c.l.b16 %v322
    %v368 = vunpack.c.h.b16 %v322
    %v369 = vunpack.c.l.b16 %v323
    %v370 = vunpack.c.l.b16 %v324
    %v371 = vunpack.c.h.b16 %v324
    %v372 = vunpack.c.l.b16 %v325
    %v373 = vunpack.c.l.b16 %v326
    %v374 = vunpack.c.h.b16 %v326
    %v375 = vunpack.c.l.b16 %v327
    %v376 = vpack.c.b16 %v355, %v352
    %v377 = vpack.c.b16 %v356, %v353
    %v378 = vpack.c.b16 %v357, %v354
    %v379 = vpack.c.b16 %v361, %v358
    %v380 = vpack.c.b16 %v362, %v359
    %v381 = vpack.c.b16 %v363, %v360
    %v382 = vpack.c.b16 %v367, %v364
    %v383 = vpack.c.b16 %v368, %v365
    %v384 = vpack.c.b16 %v369, %v366
    %v385 = vpack.c.b16 %v373, %v370
    %v386 = vpack.c.b16 %v374, %v371
    %v387 = vpack.c.b16 %v375, %v372
    %vm400 = vcmask 523264
    %v402 = vsel %vm400, %v307, 0
    %v405 = vsel %vm400, %v308, 0
    %v408 = vsel %vm400, %v309, 0
    %v411 = vsel %vm400, %v310, 0
    %v414 = vsel %vm400, %v311, 0
    %416 = vmatpush.bf16.msra.mxu0 0
    %417 = vmatpush.bf16.msra.mxu0 0
    %418 = vmatpush.bf16.msra.mxu0 0
    %419 = vmatpush.bf16.msra.mxu0 0
    %420 = vmatpush.bf16.msra.mxu0 %v385
    %421 = vmatpush.bf16.msra.mxu0 %v382
    %422 = vmatpush.bf16.msra.mxu0 %v379
    %423 = vmatpush.bf16.msra.mxu0 %v376
    %424 = vmatmul.bf16.gmra.mxu0 %v402
    %v425 = vpop.f32.mrf.mxu0
    %v426 = vadd.f32 %v330, %v425
    %v427 = vpop.f32.mrf.mxu0
    %v428 = vadd.f32 %v330, %v427
    %429 = vmatmul.bf16.gmra.mxu0 %v405
    %v430 = vpop.f32.mrf.mxu0
    %v431 = vadd.f32 %v330, %v430
    %v432 = vpop.f32.mrf.mxu0
    %v433 = vadd.f32 %v330, %v432
    %434 = vmatmul.bf16.gmra.mxu0 %v408
    %v435 = vpop.f32.mrf.mxu0
    %v436 = vadd.f32 %v330, %v435
    %v437 = vpop.f32.mrf.mxu0
    %v438 = vadd.f32 %v330, %v437
    %439 = vmatmul.bf16.gmra.mxu0 %v411
    %v440 = vpop.f32.mrf.mxu0
    %v441 = vadd.f32 %v330, %v440
    %v442 = vpop.f32.mrf.mxu0
    %v443 = vadd.f32 %v330, %v442
    %444 = vmatmul.bf16.gmra.mxu0 %v414
    %v445 = vpop.f32.mrf.mxu0
    %v446 = vadd.f32 %v330, %v445
    %v447 = vpop.f32.mrf.mxu0
    %448 = vdwg.mxu0
    %449 = vmatpush.bf16.msra.mxu0 0
    %450 = vmatpush.bf16.msra.mxu0 0
    %451 = vmatpush.bf16.msra.mxu0 0
    %452 = vmatpush.bf16.msra.mxu0 0
    %453 = vmatpush.bf16.msra.mxu0 %v386
    %454 = vmatpush.bf16.msra.mxu0 %v383
    %455 = vmatpush.bf16.msra.mxu0 %v380
    %456 = vmatpush.bf16.msra.mxu0 %v377
    %457 = vmatmul.bf16.gmra.mxu0 %v402
    %v458 = vpop.f32.mrf.mxu0
    %v459 = vadd.f32 %v331, %v458
    %v460 = vpop.f32.mrf.mxu0
    %v461 = vadd.f32 %v331, %v460
    %462 = vmatmul.bf16.gmra.mxu0 %v405
    %v463 = vpop.f32.mrf.mxu0
    %v464 = vadd.f32 %v331, %v463
    %v465 = vpop.f32.mrf.mxu0
    %v466 = vadd.f32 %v331, %v465
    %467 = vmatmul.bf16.gmra.mxu0 %v408
    %v468 = vpop.f32.mrf.mxu0
    %v469 = vadd.f32 %v331, %v468
    %v470 = vpop.f32.mrf.mxu0
    %v471 = vadd.f32 %v331, %v470
    %472 = vmatmul.bf16.gmra.mxu0 %v411
    %v473 = vpop.f32.mrf.mxu0
    %v474 = vadd.f32 %v331, %v473
    %v475 = vpop.f32.mrf.mxu0
    %v476 = vadd.f32 %v331, %v475
    %477 = vmatmul.bf16.gmra.mxu0 %v414
    %v478 = vpop.f32.mrf.mxu0
    %v479 = vadd.f32 %v331, %v478
    %v480 = vpop.f32.mrf.mxu0
    %481 = vdwg.mxu0
    %482 = vmatpush.bf16.msra.mxu0 0
    %483 = vmatpush.bf16.msra.mxu0 0
    %484 = vmatpush.bf16.msra.mxu0 0
    %485 = vmatpush.bf16.msra.mxu0 0
    %486 = vmatpush.bf16.msra.mxu0 %v387
    %487 = vmatpush.bf16.msra.mxu0 %v384
    %488 = vmatpush.bf16.msra.mxu0 %v381
    %489 = vmatpush.bf16.msra.mxu0 %v378
    %490 = vmatmul.bf16.gmra.mxu0 %v402
    %v491 = vpop.f32.mrf.mxu0
    %v492 = vadd.f32 %v332, %v491
    %v493 = vpop.f32.mrf.mxu0
    %v494 = vadd.f32 %v332, %v493
    %495 = vmatmul.bf16.gmra.mxu0 %v405
    %v496 = vpop.f32.mrf.mxu0
    %v497 = vadd.f32 %v332, %v496
    %v498 = vpop.f32.mrf.mxu0
    %v499 = vadd.f32 %v332, %v498
    %500 = vmatmul.bf16.gmra.mxu0 %v408
    %v501 = vpop.f32.mrf.mxu0
    %v502 = vadd.f32 %v332, %v501
    %v503 = vpop.f32.mrf.mxu0
    %v504 = vadd.f32 %v332, %v503
    %505 = vmatmul.bf16.gmra.mxu0 %v411
    %v506 = vpop.f32.mrf.mxu0
    %v507 = vadd.f32 %v332, %v506
    %v508 = vpop.f32.mrf.mxu0
    %v509 = vadd.f32 %v332, %v508
    %510 = vmatmul.bf16.gmra.mxu0 %v414
    %v511 = vpop.f32.mrf.mxu0
    %v512 = vadd.f32 %v332, %v511
    %v513 = vpop.f32.mrf.mxu0
    %514 = vdwg.mxu0
    %515 = vst [vmem:[#allocation2] sm:$0xff] %v426
    %516 = vst [vmem:[#allocation2 + $0x8] sm:$0xff] %v459
    %517 = vst [vmem:[#allocation2 + $0x10] sm:$0xff] %v492
    %518 = vst [vmem:[#allocation2 + $0x18] sm:$0xff] %v428
    %519 = vst [vmem:[#allocation2 + $0x20] sm:$0xff] %v461
    %520 = vst [vmem:[#allocation2 + $0x28] sm:$0xff] %v494
    %521 = vst [vmem:[#allocation2 + $0x30] sm:$0xff] %v431
    %522 = vst [vmem:[#allocation2 + $0x38] sm:$0xff] %v464
    %523 = vst [vmem:[#allocation2 + $0x40] sm:$0xff] %v497
    %524 = vst [vmem:[#allocation2 + $0x48] sm:$0xff] %v433
    %525 = vst [vmem:[#allocation2 + $0x50] sm:$0xff] %v466
    %526 = vst [vmem:[#allocation2 + $0x58] sm:$0xff] %v499
    %527 = vst [vmem:[#allocation2 + $0x60] sm:$0xff] %v436
    %528 = vst [vmem:[#allocation2 + $0x68] sm:$0xff] %v469
    %529 = vst [vmem:[#allocation2 + $0x70] sm:$0xff] %v502
    %530 = vst [vmem:[#allocation2 + $0x78] sm:$0xff] %v438
    %531 = vst [vmem:[#allocation2 + $0x80] sm:$0xff] %v471
    %532 = vst [vmem:[#allocation2 + $0x88] sm:$0xff] %v504
    %533 = vst [vmem:[#allocation2 + $0x90] sm:$0xff] %v441
    %534 = vst [vmem:[#allocation2 + $0x98] sm:$0xff] %v474
    %535 = vst [vmem:[#allocation2 + $0xa0] sm:$0xff] %v507
    %536 = vst [vmem:[#allocation2 + $0xa8] sm:$0xff] %v443
    %537 = vst [vmem:[#allocation2 + $0xb0] sm:$0xff] %v476
    %538 = vst [vmem:[#allocation2 + $0xb8] sm:$0xff] %v509
    %539 = vst [vmem:[#allocation2 + $0xc0] sm:$0xff] %v446
    %540 = vst [vmem:[#allocation2 + $0xc8] sm:$0xff] %v479
    %541 = vst [vmem:[#allocation2 + $0xd0] sm:$0xff] %v512
    %v542 = vld [vmem:[#allocation8] sm:$0xff]
    %v543 = vld [vmem:[#allocation8 + $0x8] sm:$0xf]
    %v544 = vld [vmem:[#allocation8 + $0xc] sm:$0xff]
    %v545 = vld [vmem:[#allocation8 + $0x14] sm:$0xf]
    %v546 = vld [vmem:[#allocation8 + $0x18] sm:$0xff]
    %v547 = vld [vmem:[#allocation8 + $0x20] sm:$0xf]
    %v548 = vld [vmem:[#allocation8 + $0x24] sm:$0xff]
    %v549 = vld [vmem:[#allocation8 + $0x2c] sm:$0xf]
    %v550 = vld [vmem:[#allocation8 + $0x30] sm:$0xff]
    %v551 = vld [vmem:[#allocation8 + $0x38] sm:$0xf]
    %v552 = vld [vmem:[#allocation8 + $0x3c] sm:$0xff]
    %v553 = vld [vmem:[#allocation8 + $0x44] sm:$0xf]
    %v554 = vld [vmem:[#allocation8 + $0x48] sm:$0xff]
    %v555 = vld [vmem:[#allocation8 + $0x50] sm:$0xf]
    %v556 = vld [vmem:[#allocation8 + $0x54] sm:$0xff]
    %v557 = vld [vmem:[#allocation8 + $0x5c] sm:$0xf]
    %v558 = vld [vmem:[#allocation8 + $0x60] sm:$0xff]
    %v559 = vld [vmem:[#allocation8 + $0x68] sm:$0xf]
    %v560 = vld [vmem:[#allocation8 + $0x6c] sm:$0xff]
    %v561 = vld [vmem:[#allocation8 + $0x74] sm:$0xf]
    %v562 = vld [vmem:[#allocation8 + $0x78] sm:$0xff]
    %v563 = vld [vmem:[#allocation8 + $0x80] sm:$0xf]
    %v564 = vld [vmem:[#allocation8 + $0x84] sm:$0xff]
    %v565 = vld [vmem:[#allocation8 + $0x8c] sm:$0xf]
    %v566 = vld [vmem:[#allocation8 + $0x90] sm:$0xff]
    %v567 = vld [vmem:[#allocation8 + $0x98] sm:$0xf]
    %v568 = vld [vmem:[#allocation8 + $0x9c] sm:$0xff]
    %v569 = vld [vmem:[#allocation8 + $0xa4] sm:$0xf]
    %v570 = vld [vmem:[#allocation8 + $0xa8] sm:$0xff]
    %v571 = vld [vmem:[#allocation8 + $0xb0] sm:$0xf]
    %v572 = vld [vmem:[#allocation8 + $0xb4] sm:$0xff]
    %v573 = vld [vmem:[#allocation8 + $0xbc] sm:$0xf]
    %v574 = vld [vmem:[#allocation8 + $0xc0] sm:$0xff]
    %v575 = vld [vmem:[#allocation8 + $0xc8] sm:$0xf]
    %v576 = vld [vmem:[#allocation8 + $0xcc] sm:$0xff]
    %v577 = vld [vmem:[#allocation8 + $0xd4] sm:$0xf]
    %v578 = vld [vmem:[#allocation8 + $0xd8] sm:$0xff]
    %v579 = vld [vmem:[#allocation8 + $0xe0] sm:$0xf]
    %v580 = vld [vmem:[#allocation8 + $0xe4] sm:$0xff]
    %v581 = vld [vmem:[#allocation8 + $0xec] sm:$0xf]
    %v582 = vld [vmem:[#allocation8 + $0xf0] sm:$0xff]
    %v583 = vld [vmem:[#allocation8 + $0xf8] sm:$0xf]
    %v584 = vld [vmem:[#allocation8 + $0xfc] sm:$0xff]
    %v585 = vld [vmem:[#allocation8 + $0x104] sm:$0xf]
    %v586 = vld [vmem:[#allocation8 + $0x108] sm:$0xff]
    %v587 = vld [vmem:[#allocation8 + $0x110] sm:$0xf]
    %v588 = vld [vmem:[#allocation8 + $0x114] sm:$0xff]
    %v589 = vld [vmem:[#allocation8 + $0x11c] sm:$0xf]
    %v590 = vld [vmem:[#allocation8 + $0x120] sm:$0xff]
    %v591 = vld [vmem:[#allocation8 + $0x128] sm:$0xf]
    %v592 = vld [vmem:[#allocation8 + $0x12c] sm:$0xff]
    %v593 = vld [vmem:[#allocation8 + $0x134] sm:$0xf]
    %v594 = vld [vmem:[#allocation8 + $0x138] sm:$0xff]
    %v595 = vld [vmem:[#allocation8 + $0x140] sm:$0xf]
    %v596 = vld [vmem:[#allocation8 + $0x144] sm:$0xff]
    %v597 = vld [vmem:[#allocation8 + $0x14c] sm:$0xf]
    %v598 = vld [vmem:[#allocation8 + $0x150] sm:$0xff]
    %v599 = vld [vmem:[#allocation8 + $0x158] sm:$0xf]
    %v600 = vld [vmem:[#allocation8 + $0x15c] sm:$0xff]
    %v601 = vld [vmem:[#allocation8 + $0x164] sm:$0xf]
    %v602 = vld [vmem:[#allocation8 + $0x168] sm:$0xff]
    %v603 = vld [vmem:[#allocation8 + $0x170] sm:$0xf]
    %v604 = vld [vmem:[#allocation8 + $0x174] sm:$0xff]
    %v605 = vld [vmem:[#allocation8 + $0x17c] sm:$0xf]
    %v606 = vld [vmem:[#allocation8 + $0x180] sm:$0xff]
    %v607 = vld [vmem:[#allocation8 + $0x188] sm:$0xf]
    %v608 = vld [vmem:[#allocation8 + $0x18c] sm:$0xff]
    %v609 = vld [vmem:[#allocation8 + $0x194] sm:$0xf]
    %v610 = vld [vmem:[#allocation8 + $0x198] sm:$0xff]
    %v611 = vld [vmem:[#allocation8 + $0x1a0] sm:$0xf]
    %v612 = vld [vmem:[#allocation8 + $0x1a4] sm:$0xff]
    %v613 = vld [vmem:[#allocation8 + $0x1ac] sm:$0xf]
    %v614 = vld [vmem:[#allocation8 + $0x1b0] sm:$0xff]
    %v615 = vld [vmem:[#allocation8 + $0x1b8] sm:$0xf]
    %v616 = vld [vmem:[#allocation8 + $0x1bc] sm:$0xff]
    %v617 = vld [vmem:[#allocation8 + $0x1c4] sm:$0xf]
    %v618 = vld [vmem:[#allocation8 + $0x1c8] sm:$0xff]
    %v619 = vld [vmem:[#allocation8 + $0x1d0] sm:$0xf]
    %v620 = vld [vmem:[#allocation8 + $0x1d4] sm:$0xff]
    %v621 = vld [vmem:[#allocation8 + $0x1dc] sm:$0xf]
    %v622 = vld [vmem:[#allocation8 + $0x1e0] sm:$0xff]
    %v623 = vld [vmem:[#allocation8 + $0x1e8] sm:$0xf]
    %v624 = vld [vmem:[#allocation8 + $0x1ec] sm:$0xff]
    %v625 = vld [vmem:[#allocation8 + $0x1f4] sm:$0xf]
    %v626 = vld [vmem:[#allocation8 + $0x1f8] sm:$0xff]
    %v627 = vld [vmem:[#allocation8 + $0x200] sm:$0xf]
    %v628 = vld [vmem:[#allocation8 + $0x204] sm:$0xff]
    %v629 = vld [vmem:[#allocation8 + $0x20c] sm:$0xf]
    %v630 = vld [vmem:[#allocation8 + $0x210] sm:$0xff]
    %v631 = vld [vmem:[#allocation8 + $0x218] sm:$0xf]
    %v632 = vld [vmem:[#allocation8 + $0x21c] sm:$0xff]
    %v633 = vld [vmem:[#allocation8 + $0x224] sm:$0xf]
    %v634 = vld [vmem:[#allocation8 + $0x228] sm:$0xff]
    %v635 = vld [vmem:[#allocation8 + $0x230] sm:$0xf]
    %v636 = vld [vmem:[#allocation8 + $0x234] sm:$0xff]
    %v637 = vld [vmem:[#allocation8 + $0x23c] sm:$0xf]
    %v638 = vld [vmem:[#allocation9] sm:$0xff]
    %v639 = vld [vmem:[#allocation9 + $0x8] sm:$0xf]
    %v640 = vld [vmem:[#allocation9 + $0xc] sm:$0xff]
    %v641 = vld [vmem:[#allocation9 + $0x14] sm:$0xf]
    %v642 = vld [vmem:[#allocation9 + $0x18] sm:$0xff]
    %v643 = vld [vmem:[#allocation9 + $0x20] sm:$0xf]
    %v644 = vld [vmem:[#allocation9 + $0x24] sm:$0xff]
    %v645 = vld [vmem:[#allocation9 + $0x2c] sm:$0xf]
    %v646 = vld [vmem:[#allocation9 + $0x30] sm:$0xff]
    %v647 = vld [vmem:[#allocation9 + $0x38] sm:$0xf]
    %v648 = vld [vmem:[#allocation9 + $0x3c] sm:$0xff]
    %v649 = vld [vmem:[#allocation9 + $0x44] sm:$0xf]
    %v650 = vld [vmem:[#allocation9 + $0x48] sm:$0xff]
    %v651 = vld [vmem:[#allocation9 + $0x50] sm:$0xf]
    %v652 = vld [vmem:[#allocation9 + $0x54] sm:$0xff]
    %v653 = vld [vmem:[#allocation9 + $0x5c] sm:$0xf]
    %v654 = vld [vmem:[#allocation9 + $0x60] sm:$0xff]
    %v655 = vld [vmem:[#allocation9 + $0x68] sm:$0xf]
    %v656 = vld [vmem:[#allocation9 + $0x6c] sm:$0xff]
    %v657 = vld [vmem:[#allocation9 + $0x74] sm:$0xf]
    %v658 = vld [vmem:[#allocation9 + $0x78] sm:$0xff]
    %v659 = vld [vmem:[#allocation9 + $0x80] sm:$0xf]
    %v660 = vld [vmem:[#allocation9 + $0x84] sm:$0xff]
    %v661 = vld [vmem:[#allocation9 + $0x8c] sm:$0xf]
    %v662 = vld [vmem:[#allocation9 + $0x90] sm:$0xff]
    %v663 = vld [vmem:[#allocation9 + $0x98] sm:$0xf]
    %v664 = vld [vmem:[#allocation9 + $0x9c] sm:$0xff]
    %v665 = vld [vmem:[#allocation9 + $0xa4] sm:$0xf]
    %v666 = vld [vmem:[#allocation9 + $0xa8] sm:$0xff]
    %v667 = vld [vmem:[#allocation9 + $0xb0] sm:$0xf]
    %v668 = vld [vmem:[#allocation9 + $0xb4] sm:$0xff]
    %v669 = vld [vmem:[#allocation9 + $0xbc] sm:$0xf]
    %v670 = vld [vmem:[#allocation9 + $0xc0] sm:$0xff]
    %v671 = vld [vmem:[#allocation9 + $0xc8] sm:$0xf]
    %v672 = vld [vmem:[#allocation9 + $0xcc] sm:$0xff]
    %v673 = vld [vmem:[#allocation9 + $0xd4] sm:$0xf]
    %v674 = vld [vmem:[#allocation9 + $0xd8] sm:$0xff]
    %v675 = vld [vmem:[#allocation9 + $0xe0] sm:$0xf]
    %v676 = vld [vmem:[#allocation9 + $0xe4] sm:$0xff]
    %v677 = vld [vmem:[#allocation9 + $0xec] sm:$0xf]
    %v678 = vld [vmem:[#allocation9 + $0xf0] sm:$0xff]
    %v679 = vld [vmem:[#allocation9 + $0xf8] sm:$0xf]
    %v680 = vld [vmem:[#allocation9 + $0xfc] sm:$0xff]
    %v681 = vld [vmem:[#allocation9 + $0x104] sm:$0xf]
    %v682 = vld [vmem:[#allocation9 + $0x108] sm:$0xff]
    %v683 = vld [vmem:[#allocation9 + $0x110] sm:$0xf]
    %v684 = vld [vmem:[#allocation9 + $0x114] sm:$0xff]
    %v685 = vld [vmem:[#allocation9 + $0x11c] sm:$0xf]
    %v686 = vld [vmem:[#allocation9 + $0x120] sm:$0xff]
    %v687 = vld [vmem:[#allocation9 + $0x128] sm:$0xf]
    %v688 = vld [vmem:[#allocation9 + $0x12c] sm:$0xff]
    %v689 = vld [vmem:[#allocation9 + $0x134] sm:$0xf]
    %v690 = vld [vmem:[#allocation9 + $0x138] sm:$0xff]
    %v691 = vld [vmem:[#allocation9 + $0x140] sm:$0xf]
    %v692 = vld [vmem:[#allocation9 + $0x144] sm:$0xff]
    %v693 = vld [vmem:[#allocation9 + $0x14c] sm:$0xf]
    %v694 = vld [vmem:[#allocation9 + $0x150] sm:$0xff]
    %v695 = vld [vmem:[#allocation9 + $0x158] sm:$0xf]
    %v696 = vld [vmem:[#allocation9 + $0x15c] sm:$0xff]
    %v697 = vld [vmem:[#allocation9 + $0x164] sm:$0xf]
    %v698 = vld [vmem:[#allocation9 + $0x168] sm:$0xff]
    %v699 = vld [vmem:[#allocation9 + $0x170] sm:$0xf]
    %v700 = vld [vmem:[#allocation9 + $0x174] sm:$0xff]
    %v701 = vld [vmem:[#allocation9 + $0x17c] sm:$0xf]
    %v702 = vld [vmem:[#allocation9 + $0x180] sm:$0xff]
    %v703 = vld [vmem:[#allocation9 + $0x188] sm:$0xf]
    %v704 = vld [vmem:[#allocation9 + $0x18c] sm:$0xff]
    %v705 = vld [vmem:[#allocation9 + $0x194] sm:$0xf]
    %v706 = vld [vmem:[#allocation9 + $0x198] sm:$0xff]
    %v707 = vld [vmem:[#allocation9 + $0x1a0] sm:$0xf]
    %v708 = vld [vmem:[#allocation9 + $0x1a4] sm:$0xff]
    %v709 = vld [vmem:[#allocation9 + $0x1ac] sm:$0xf]
    %v710 = vld [vmem:[#allocation9 + $0x1b0] sm:$0xff]
    %v711 = vld [vmem:[#allocation9 + $0x1b8] sm:$0xf]
    %v712 = vld [vmem:[#allocation9 + $0x1bc] sm:$0xff]
    %v713 = vld [vmem:[#allocation9 + $0x1c4] sm:$0xf]
    %v714 = vld [vmem:[#allocation9 + $0x1c8] sm:$0xff]
    %v715 = vld [vmem:[#allocation9 + $0x1d0] sm:$0xf]
    %v716 = vld [vmem:[#allocation9 + $0x1d4] sm:$0xff]
    %v717 = vld [vmem:[#allocation9 + $0x1dc] sm:$0xf]
    %v718 = vld [vmem:[#allocation9 + $0x1e0] sm:$0xff]
    %v719 = vld [vmem:[#allocation9 + $0x1e8] sm:$0xf]
    %v720 = vld [vmem:[#allocation9 + $0x1ec] sm:$0xff]
    %v721 = vld [vmem:[#allocation9 + $0x1f4] sm:$0xf]
    %v722 = vld [vmem:[#allocation9 + $0x1f8] sm:$0xff]
    %v723 = vld [vmem:[#allocation9 + $0x200] sm:$0xf]
    %v724 = vld [vmem:[#allocation9 + $0x204] sm:$0xff]
    %v725 = vld [vmem:[#allocation9 + $0x20c] sm:$0xf]
    %v726 = vld [vmem:[#allocation9 + $0x210] sm:$0xff]
    %v727 = vld [vmem:[#allocation9 + $0x218] sm:$0xf]
    %v728 = vld [vmem:[#allocation9 + $0x21c] sm:$0xff]
    %v729 = vld [vmem:[#allocation9 + $0x224] sm:$0xf]
    %v730 = vld [vmem:[#allocation9 + $0x228] sm:$0xff]
    %v731 = vld [vmem:[#allocation9 + $0x230] sm:$0xf]
    %v732 = vld [vmem:[#allocation9 + $0x234] sm:$0xff]
    %v733 = vld [vmem:[#allocation9 + $0x23c] sm:$0xf]
    %v734 = vld [vmem:[#allocation11] sm:$0xff]
    %v735 = vld [vmem:[#allocation11 + $0x8] sm:$0xf]
    %v736 = vld [vmem:[#allocation11 + $0xc] sm:$0xff]
    %v737 = vld [vmem:[#allocation11 + $0x14] sm:$0xf]
    %v738 = vld [vmem:[#allocation11 + $0x18] sm:$0xff]
    %v739 = vld [vmem:[#allocation11 + $0x20] sm:$0xf]
    %v740 = vld [vmem:[#allocation11 + $0x24] sm:$0xff]
    %v741 = vld [vmem:[#allocation11 + $0x2c] sm:$0xf]
    %v742 = vld [vmem:[#allocation11 + $0x30] sm:$0xff]
    %v743 = vld [vmem:[#allocation11 + $0x38] sm:$0xf]
    %v744 = vld [vmem:[#allocation11 + $0x3c] sm:$0xff]
    %v745 = vld [vmem:[#allocation11 + $0x44] sm:$0xf]
    %v746 = vld [vmem:[#allocation11 + $0x48] sm:$0xff]
    %v747 = vld [vmem:[#allocation11 + $0x50] sm:$0xf]
    %v748 = vld [vmem:[#allocation11 + $0x54] sm:$0xff]
    %v749 = vld [vmem:[#allocation11 + $0x5c] sm:$0xf]
    %v750 = vld [vmem:[#allocation11 + $0x60] sm:$0xff]
    %v751 = vld [vmem:[#allocation11 + $0x68] sm:$0xf]
    %v752 = vld [vmem:[#allocation11 + $0x6c] sm:$0xff]
    %v753 = vld [vmem:[#allocation11 + $0x74] sm:$0xf]
    %v754 = vld [vmem:[#allocation11 + $0x78] sm:$0xff]
    %v755 = vld [vmem:[#allocation11 + $0x80] sm:$0xf]
    %v756 = vld [vmem:[#allocation11 + $0x84] sm:$0xff]
    %v757 = vld [vmem:[#allocation11 + $0x8c] sm:$0xf]
    %v758 = vld [vmem:[#allocation11 + $0x90] sm:$0xff]
    %v759 = vld [vmem:[#allocation11 + $0x98] sm:$0xf]
    %v760 = vld [vmem:[#allocation11 + $0x9c] sm:$0xff]
    %v761 = vld [vmem:[#allocation11 + $0xa4] sm:$0xf]
    %v762 = vld [vmem:[#allocation11 + $0xa8] sm:$0xff]
    %v763 = vld [vmem:[#allocation11 + $0xb0] sm:$0xf]
    %v764 = vld [vmem:[#allocation11 + $0xb4] sm:$0xff]
    %v765 = vld [vmem:[#allocation11 + $0xbc] sm:$0xf]
    %v766 = vld [vmem:[#allocation11 + $0xc0] sm:$0xff]
    %v767 = vld [vmem:[#allocation11 + $0xc8] sm:$0xf]
    %v768 = vld [vmem:[#allocation11 + $0xcc] sm:$0xff]
    %v769 = vld [vmem:[#allocation11 + $0xd4] sm:$0xf]
    %v770 = vld [vmem:[#allocation11 + $0xd8] sm:$0xff]
    %v771 = vld [vmem:[#allocation11 + $0xe0] sm:$0xf]
    %v772 = vld [vmem:[#allocation11 + $0xe4] sm:$0xff]
    %v773 = vld [vmem:[#allocation11 + $0xec] sm:$0xf]
    %v774 = vld [vmem:[#allocation11 + $0xf0] sm:$0xff]
    %v775 = vld [vmem:[#allocation11 + $0xf8] sm:$0xf]
    %v776 = vld [vmem:[#allocation11 + $0xfc] sm:$0xff]
    %v777 = vld [vmem:[#allocation11 + $0x104] sm:$0xf]
    %v778 = vld [vmem:[#allocation11 + $0x108] sm:$0xff]
    %v779 = vld [vmem:[#allocation11 + $0x110] sm:$0xf]
    %v780 = vld [vmem:[#allocation11 + $0x114] sm:$0xff]
    %v781 = vld [vmem:[#allocation11 + $0x11c] sm:$0xf]
    %v782 = vld [vmem:[#allocation11 + $0x120] sm:$0xff]
    %v783 = vld [vmem:[#allocation11 + $0x128] sm:$0xf]
    %v784 = vld [vmem:[#allocation11 + $0x12c] sm:$0xff]
    %v785 = vld [vmem:[#allocation11 + $0x134] sm:$0xf]
    %v786 = vld [vmem:[#allocation11 + $0x138] sm:$0xff]
    %v787 = vld [vmem:[#allocation11 + $0x140] sm:$0xf]
    %v788 = vld [vmem:[#allocation11 + $0x144] sm:$0xff]
    %v789 = vld [vmem:[#allocation11 + $0x14c] sm:$0xf]
    %v790 = vld [vmem:[#allocation11 + $0x150] sm:$0xff]
    %v791 = vld [vmem:[#allocation11 + $0x158] sm:$0xf]
    %v792 = vld [vmem:[#allocation11 + $0x15c] sm:$0xff]
    %v793 = vld [vmem:[#allocation11 + $0x164] sm:$0xf]
    %v794 = vld [vmem:[#allocation11 + $0x168] sm:$0xff]
    %v795 = vld [vmem:[#allocation11 + $0x170] sm:$0xf]
    %v796 = vld [vmem:[#allocation11 + $0x174] sm:$0xff]
    %v797 = vld [vmem:[#allocation11 + $0x17c] sm:$0xf]
    %v798 = vld [vmem:[#allocation11 + $0x180] sm:$0xff]
    %v799 = vld [vmem:[#allocation11 + $0x188] sm:$0xf]
    %v800 = vld [vmem:[#allocation11 + $0x18c] sm:$0xff]
    %v801 = vld [vmem:[#allocation11 + $0x194] sm:$0xf]
    %v802 = vld [vmem:[#allocation11 + $0x198] sm:$0xff]
    %v803 = vld [vmem:[#allocation11 + $0x1a0] sm:$0xf]
    %v804 = vld [vmem:[#allocation11 + $0x1a4] sm:$0xff]
    %v805 = vld [vmem:[#allocation11 + $0x1ac] sm:$0xf]
    %v806 = vld [vmem:[#allocation11 + $0x1b0] sm:$0xff]
    %v807 = vld [vmem:[#allocation11 + $0x1b8] sm:$0xf]
    %v808 = vld [vmem:[#allocation11 + $0x1bc] sm:$0xff]
    %v809 = vld [vmem:[#allocation11 + $0x1c4] sm:$0xf]
    %v810 = vld [vmem:[#allocation11 + $0x1c8] sm:$0xff]
    %v811 = vld [vmem:[#allocation11 + $0x1d0] sm:$0xf]
    %v812 = vld [vmem:[#allocation11 + $0x1d4] sm:$0xff]
    %v813 = vld [vmem:[#allocation11 + $0x1dc] sm:$0xf]
    %v814 = vld [vmem:[#allocation11 + $0x1e0] sm:$0xff]
    %v815 = vld [vmem:[#allocation11 + $0x1e8] sm:$0xf]
    %v816 = vld [vmem:[#allocation11 + $0x1ec] sm:$0xff]
    %v817 = vld [vmem:[#allocation11 + $0x1f4] sm:$0xf]
    %v818 = vld [vmem:[#allocation11 + $0x1f8] sm:$0xff]
    %v819 = vld [vmem:[#allocation11 + $0x200] sm:$0xf]
    %v820 = vld [vmem:[#allocation11 + $0x204] sm:$0xff]
    %v821 = vld [vmem:[#allocation11 + $0x20c] sm:$0xf]
    %v822 = vld [vmem:[#allocation11 + $0x210] sm:$0xff]
    %v823 = vld [vmem:[#allocation11 + $0x218] sm:$0xf]
    %v824 = vld [vmem:[#allocation11 + $0x21c] sm:$0xff]
    %v825 = vld [vmem:[#allocation11 + $0x224] sm:$0xf]
    %v826 = vld [vmem:[#allocation11 + $0x228] sm:$0xff]
    %v827 = vld [vmem:[#allocation11 + $0x230] sm:$0xf]
    %v828 = vld [vmem:[#allocation11 + $0x234] sm:$0xff]
    %v829 = vld [vmem:[#allocation11 + $0x23c] sm:$0xf]
    %v830 = vld [vmem:[#allocation12] sm:$0x7]
    %v832 = vperm.slane %v830, 0
    %v833 = vperm.slane %v830, 1
    %v834 = vperm.slane %v830, 2
    %v838 = vld [vmem:[#allocation15] sm:$0x7]
    %v840 = vperm.slane %v838, 0
    %v841 = vperm.slane %v838, 1
    %v842 = vperm.slane %v838, 2
    %846 = vst [vmem:[#allocation3] sm:$0xff] %v840
    %847 = vst [vmem:[#allocation3 + $0x8] sm:$0xff] %v841
    %848 = vst [vmem:[#allocation3 + $0x10] sm:$0xff] %v842
    %v849 = vld [vmem:[#allocation2] sm:$0xff]
    %v850 = vld [vmem:[#allocation2 + $0x8] sm:$0xff]
    %v851 = vld [vmem:[#allocation2 + $0x10] sm:$0xff]
    %v948 = vunpack.c.l.b16 %v542
    %v949 = vunpack.c.h.b16 %v542
    %v950 = vunpack.c.l.b16 %v543
    %v951 = vunpack.c.l.b16 %v544
    %v952 = vunpack.c.h.b16 %v544
    %v953 = vunpack.c.l.b16 %v545
    %v954 = vunpack.c.l.b16 %v546
    %v955 = vunpack.c.h.b16 %v546
    %v956 = vunpack.c.l.b16 %v547
    %v957 = vunpack.c.l.b16 %v548
    %v958 = vunpack.c.h.b16 %v548
    %v959 = vunpack.c.l.b16 %v549
    %v960 = vunpack.c.l.b16 %v550
    %v961 = vunpack.c.h.b16 %v550
    %v962 = vunpack.c.l.b16 %v551
    %v963 = vunpack.c.l.b16 %v552
    %v964 = vunpack.c.h.b16 %v552
    %v965 = vunpack.c.l.b16 %v553
    %v966 = vunpack.c.l.b16 %v554
    %v967 = vunpack.c.h.b16 %v554
    %v968 = vunpack.c.l.b16 %v555
    %v969 = vunpack.c.l.b16 %v556
    %v970 = vunpack.c.h.b16 %v556
    %v971 = vunpack.c.l.b16 %v557
    %v972 = vunpack.c.l.b16 %v558
    %v973 = vunpack.c.h.b16 %v558
    %v974 = vunpack.c.l.b16 %v559
    %v975 = vunpack.c.l.b16 %v560
    %v976 = vunpack.c.h.b16 %v560
    %v977 = vunpack.c.l.b16 %v561
    %v978 = vunpack.c.l.b16 %v562
    %v979 = vunpack.c.h.b16 %v562
    %v980 = vunpack.c.l.b16 %v563
    %v981 = vunpack.c.l.b16 %v564
    %v982 = vunpack.c.h.b16 %v564
    %v983 = vunpack.c.l.b16 %v565
    %v984 = vunpack.c.l.b16 %v566
    %v985 = vunpack.c.h.b16 %v566
    %v986 = vunpack.c.l.b16 %v567
    %v987 = vunpack.c.l.b16 %v568
    %v988 = vunpack.c.h.b16 %v568
    %v989 = vunpack.c.l.b16 %v569
    %v990 = vunpack.c.l.b16 %v570
    %v991 = vunpack.c.h.b16 %v570
    %v992 = vunpack.c.l.b16 %v571
    %v993 = vunpack.c.l.b16 %v572
    %v994 = vunpack.c.h.b16 %v572
    %v995 = vunpack.c.l.b16 %v573
    %v996 = vunpack.c.l.b16 %v574
    %v997 = vunpack.c.h.b16 %v574
    %v998 = vunpack.c.l.b16 %v575
    %v999 = vunpack.c.l.b16 %v576
    %v1000 = vunpack.c.h.b16 %v576
    %v1001 = vunpack.c.l.b16 %v577
    %v1002 = vunpack.c.l.b16 %v578
    %v1003 = vunpack.c.h.b16 %v578
    %v1004 = vunpack.c.l.b16 %v579
    %v1005 = vunpack.c.l.b16 %v580
    %v1006 = vunpack.c.h.b16 %v580
    %v1007 = vunpack.c.l.b16 %v581
    %v1008 = vunpack.c.l.b16 %v582
    %v1009 = vunpack.c.h.b16 %v582
    %v1010 = vunpack.c.l.b16 %v583
    %v1011 = vunpack.c.l.b16 %v584
    %v1012 = vunpack.c.h.b16 %v584
    %v1013 = vunpack.c.l.b16 %v585
    %v1014 = vunpack.c.l.b16 %v586
    %v1015 = vunpack.c.h.b16 %v586
    %v1016 = vunpack.c.l.b16 %v587
    %v1017 = vunpack.c.l.b16 %v588
    %v1018 = vunpack.c.h.b16 %v588
    %v1019 = vunpack.c.l.b16 %v589
    %v1020 = vunpack.c.l.b16 %v590
    %v1021 = vunpack.c.h.b16 %v590
    %v1022 = vunpack.c.l.b16 %v591
    %v1023 = vunpack.c.l.b16 %v592
    %v1024 = vunpack.c.h.b16 %v592
    %v1025 = vunpack.c.l.b16 %v593
    %v1026 = vunpack.c.l.b16 %v594
    %v1027 = vunpack.c.h.b16 %v594
    %v1028 = vunpack.c.l.b16 %v595
    %v1029 = vunpack.c.l.b16 %v596
    %v1030 = vunpack.c.h.b16 %v596
    %v1031 = vunpack.c.l.b16 %v597
    %v1032 = vunpack.c.l.b16 %v598
    %v1033 = vunpack.c.h.b16 %v598
    %v1034 = vunpack.c.l.b16 %v599
    %v1035 = vunpack.c.l.b16 %v600
    %v1036 = vunpack.c.h.b16 %v600
    %v1037 = vunpack.c.l.b16 %v601
    %v1038 = vunpack.c.l.b16 %v602
    %v1039 = vunpack.c.h.b16 %v602
    %v1040 = vunpack.c.l.b16 %v603
    %v1041 = vunpack.c.l.b16 %v604
    %v1042 = vunpack.c.h.b16 %v604
    %v1043 = vunpack.c.l.b16 %v605
    %v1044 = vunpack.c.l.b16 %v606
    %v1045 = vunpack.c.h.b16 %v606
    %v1046 = vunpack.c.l.b16 %v607
    %v1047 = vunpack.c.l.b16 %v608
    %v1048 = vunpack.c.h.b16 %v608
    %v1049 = vunpack.c.l.b16 %v609
    %v1050 = vunpack.c.l.b16 %v610
    %v1051 = vunpack.c.h.b16 %v610
    %v1052 = vunpack.c.l.b16 %v611
    %v1053 = vunpack.c.l.b16 %v612
    %v1054 = vunpack.c.h.b16 %v612
    %v1055 = vunpack.c.l.b16 %v613
    %v1056 = vunpack.c.l.b16 %v614
    %v1057 = vunpack.c.h.b16 %v614
    %v1058 = vunpack.c.l.b16 %v615
    %v1059 = vunpack.c.l.b16 %v616
    %v1060 = vunpack.c.h.b16 %v616
    %v1061 = vunpack.c.l.b16 %v617
    %v1062 = vunpack.c.l.b16 %v618
    %v1063 = vunpack.c.h.b16 %v618
    %v1064 = vunpack.c.l.b16 %v619
    %v1065 = vunpack.c.l.b16 %v620
    %v1066 = vunpack.c.h.b16 %v620
    %v1067 = vunpack.c.l.b16 %v621
    %v1068 = vunpack.c.l.b16 %v622
    %v1069 = vunpack.c.h.b16 %v622
    %v1070 = vunpack.c.l.b16 %v623
    %v1071 = vunpack.c.l.b16 %v624
    %v1072 = vunpack.c.h.b16 %v624
    %v1073 = vunpack.c.l.b16 %v625
    %v1074 = vunpack.c.l.b16 %v626
    %v1075 = vunpack.c.h.b16 %v626
    %v1076 = vunpack.c.l.b16 %v627
    %v1077 = vunpack.c.l.b16 %v628
    %v1078 = vunpack.c.h.b16 %v628
    %v1079 = vunpack.c.l.b16 %v629
    %v1080 = vunpack.c.l.b16 %v630
    %v1081 = vunpack.c.h.b16 %v630
    %v1082 = vunpack.c.l.b16 %v631
    %v1083 = vunpack.c.l.b16 %v632
    %v1084 = vunpack.c.h.b16 %v632
    %v1085 = vunpack.c.l.b16 %v633
    %v1086 = vunpack.c.l.b16 %v634
    %v1087 = vunpack.c.h.b16 %v634
    %v1088 = vunpack.c.l.b16 %v635
    %v1089 = vunpack.c.l.b16 %v636
    %v1090 = vunpack.c.h.b16 %v636
    %v1091 = vunpack.c.l.b16 %v637
    %v1092 = vpack.c.b16 %v951, %v948
    %v1093 = vpack.c.b16 %v952, %v949
    %v1094 = vpack.c.b16 %v953, %v950
    %v1095 = vpack.c.b16 %v957, %v954
    %v1096 = vpack.c.b16 %v958, %v955
    %v1097 = vpack.c.b16 %v959, %v956
    %v1098 = vpack.c.b16 %v963, %v960
    %v1099 = vpack.c.b16 %v964, %v961
    %v1100 = vpack.c.b16 %v965, %v962
    %v1101 = vpack.c.b16 %v969, %v966
    %v1102 = vpack.c.b16 %v970, %v967
    %v1103 = vpack.c.b16 %v971, %v968
    %v1104 = vpack.c.b16 %v975, %v972
    %v1105 = vpack.c.b16 %v976, %v973
    %v1106 = vpack.c.b16 %v977, %v974
    %v1107 = vpack.c.b16 %v981, %v978
    %v1108 = vpack.c.b16 %v982, %v979
    %v1109 = vpack.c.b16 %v983, %v980
    %v1110 = vpack.c.b16 %v987, %v984
    %v1111 = vpack.c.b16 %v988, %v985
    %v1112 = vpack.c.b16 %v989, %v986
    %v1113 = vpack.c.b16 %v993, %v990
    %v1114 = vpack.c.b16 %v994, %v991
    %v1115 = vpack.c.b16 %v995, %v992
    %v1116 = vpack.c.b16 %v999, %v996
    %v1117 = vpack.c.b16 %v1000, %v997
    %v1118 = vpack.c.b16 %v1001, %v998
    %v1119 = vpack.c.b16 %v1005, %v1002
    %v1120 = vpack.c.b16 %v1006, %v1003
    %v1121 = vpack.c.b16 %v1007, %v1004
    %v1122 = vpack.c.b16 %v1011, %v1008
    %v1123 = vpack.c.b16 %v1012, %v1009
    %v1124 = vpack.c.b16 %v1013, %v1010
    %v1125 = vpack.c.b16 %v1017, %v1014
    %v1126 = vpack.c.b16 %v1018, %v1015
    %v1127 = vpack.c.b16 %v1019, %v1016
    %v1128 = vpack.c.b16 %v1023, %v1020
    %v1129 = vpack.c.b16 %v1024, %v1021
    %v1130 = vpack.c.b16 %v1025, %v1022
    %v1131 = vpack.c.b16 %v1029, %v1026
    %v1132 = vpack.c.b16 %v1030, %v1027
    %v1133 = vpack.c.b16 %v1031, %v1028
    %v1134 = vpack.c.b16 %v1035, %v1032
    %v1135 = vpack.c.b16 %v1036, %v1033
    %v1136 = vpack.c.b16 %v1037, %v1034
    %v1137 = vpack.c.b16 %v1041, %v1038
    %v1138 = vpack.c.b16 %v1042, %v1039
    %v1139 = vpack.c.b16 %v1043, %v1040
    %v1140 = vpack.c.b16 %v1047, %v1044
    %v1141 = vpack.c.b16 %v1048, %v1045
    %v1142 = vpack.c.b16 %v1049, %v1046
    %v1143 = vpack.c.b16 %v1053, %v1050
    %v1144 = vpack.c.b16 %v1054, %v1051
    %v1145 = vpack.c.b16 %v1055, %v1052
    %v1146 = vpack.c.b16 %v1059, %v1056
    %v1147 = vpack.c.b16 %v1060, %v1057
    %v1148 = vpack.c.b16 %v1061, %v1058
    %v1149 = vpack.c.b16 %v1065, %v1062
    %v1150 = vpack.c.b16 %v1066, %v1063
    %v1151 = vpack.c.b16 %v1067, %v1064
    %v1152 = vpack.c.b16 %v1071, %v1068
    %v1153 = vpack.c.b16 %v1072, %v1069
    %v1154 = vpack.c.b16 %v1073, %v1070
    %v1155 = vpack.c.b16 %v1077, %v1074
    %v1156 = vpack.c.b16 %v1078, %v1075
    %v1157 = vpack.c.b16 %v1079, %v1076
    %v1158 = vpack.c.b16 %v1083, %v1080
    %v1159 = vpack.c.b16 %v1084, %v1081
    %v1160 = vpack.c.b16 %v1085, %v1082
    %v1161 = vpack.c.b16 %v1089, %v1086
    %v1162 = vpack.c.b16 %v1090, %v1087
    %v1163 = vpack.c.b16 %v1091, %v1088
    %1236 = vmatpush.bf16.msra.mxu0 %v1113
    %1237 = vmatpush.bf16.msra.mxu0 %v1110
    %1238 = vmatpush.bf16.msra.mxu0 %v1107
    %1239 = vmatpush.bf16.msra.mxu0 %v1104
    %1240 = vmatpush.bf16.msra.mxu0 %v1101
    %1241 = vmatpush.bf16.msra.mxu0 %v1098
    %1242 = vmatpush.bf16.msra.mxu0 %v1095
    %1243 = vmatpush.bf16.msra.mxu0 %v1092
    %1244 = vmatmul.bf16.gmra.mxu0 0
    %v1245 = vpop.f32.mrf.mxu0
    %v1246 = vadd.f32 0.0, %v1245
    %v1247 = vpop.f32.mrf.mxu0
    %1248 = vdwg.mxu0
    %1249 = vmatpush.bf16.msra.mxu0 %v1137
    %1250 = vmatpush.bf16.msra.mxu0 %v1134
    %1251 = vmatpush.bf16.msra.mxu0 %v1131
    %1252 = vmatpush.bf16.msra.mxu0 %v1128
    %1253 = vmatpush.bf16.msra.mxu0 %v1125
    %1254 = vmatpush.bf16.msra.mxu0 %v1122
    %1255 = vmatpush.bf16.msra.mxu0 %v1119
    %1256 = vmatpush.bf16.msra.mxu0 %v1116
    %1257 = vmatmul.bf16.gmra.mxu0 0
    %v1258 = vpop.f32.mrf.mxu0
    %v1259 = vadd.f32 %v1246, %v1258
    %v1260 = vpop.f32.mrf.mxu0
    %1261 = vdwg.mxu0
    %1262 = vmatpush.bf16.msra.mxu0 %v1161
    %1263 = vmatpush.bf16.msra.mxu0 %v1158
    %1264 = vmatpush.bf16.msra.mxu0 %v1155
    %1265 = vmatpush.bf16.msra.mxu0 %v1152
    %1266 = vmatpush.bf16.msra.mxu0 %v1149
    %1267 = vmatpush.bf16.msra.mxu0 %v1146
    %1268 = vmatpush.bf16.msra.mxu0 %v1143
    %1269 = vmatpush.bf16.msra.mxu0 %v1140
    %1270 = vmatmul.bf16.gmra.mxu0 0
    %v1271 = vpop.f32.mrf.mxu0
    %v1272 = vadd.f32 %v1259, %v1271
    %v1273 = vpop.f32.mrf.mxu0
    %1274 = vdwg.mxu0
    %1275 = vmatpush.bf16.msra.mxu0 %v1114
    %1276 = vmatpush.bf16.msra.mxu0 %v1111
    %1277 = vmatpush.bf16.msra.mxu0 %v1108
    %1278 = vmatpush.bf16.msra.mxu0 %v1105
    %1279 = vmatpush.bf16.msra.mxu0 %v1102
    %1280 = vmatpush.bf16.msra.mxu0 %v1099
    %1281 = vmatpush.bf16.msra.mxu0 %v1096
    %1282 = vmatpush.bf16.msra.mxu0 %v1093
    %1283 = vmatmul.bf16.gmra.mxu0 0
    %v1284 = vpop.f32.mrf.mxu0
    %v1285 = vadd.f32 0.0, %v1284
    %v1286 = vpop.f32.mrf.mxu0
    %1287 = vdwg.mxu0
    %1288 = vmatpush.bf16.msra.mxu0 %v1138
    %1289 = vmatpush.bf16.msra.mxu0 %v1135
    %1290 = vmatpush.bf16.msra.mxu0 %v1132
    %1291 = vmatpush.bf16.msra.mxu0 %v1129
    %1292 = vmatpush.bf16.msra.mxu0 %v1126
    %1293 = vmatpush.bf16.msra.mxu0 %v1123
    %1294 = vmatpush.bf16.msra.mxu0 %v1120
    %1295 = vmatpush.bf16.msra.mxu0 %v1117
    %1296 = vmatmul.bf16.gmra.mxu0 0
    %v1297 = vpop.f32.mrf.mxu0
    %v1298 = vadd.f32 %v1285, %v1297
    %v1299 = vpop.f32.mrf.mxu0
    %1300 = vdwg.mxu0
    %1301 = vmatpush.bf16.msra.mxu0 %v1162
    %1302 = vmatpush.bf16.msra.mxu0 %v1159
    %1303 = vmatpush.bf16.msra.mxu0 %v1156
    %1304 = vmatpush.bf16.msra.mxu0 %v1153
    %1305 = vmatpush.bf16.msra.mxu0 %v1150
    %1306 = vmatpush.bf16.msra.mxu0 %v1147
    %1307 = vmatpush.bf16.msra.mxu0 %v1144
    %1308 = vmatpush.bf16.msra.mxu0 %v1141
    %1309 = vmatmul.bf16.gmra.mxu0 0
    %v1310 = vpop.f32.mrf.mxu0
    %v1311 = vadd.f32 %v1298, %v1310
    %v1312 = vpop.f32.mrf.mxu0
    %1313 = vdwg.mxu0
    %1314 = vmatpush.bf16.msra.mxu0 %v1115
    %1315 = vmatpush.bf16.msra.mxu0 %v1112
    %1316 = vmatpush.bf16.msra.mxu0 %v1109
    %1317 = vmatpush.bf16.msra.mxu0 %v1106
    %1318 = vmatpush.bf16.msra.mxu0 %v1103
    %1319 = vmatpush.bf16.msra.mxu0 %v1100
    %1320 = vmatpush.bf16.msra.mxu0 %v1097
    %1321 = vmatpush.bf16.msra.mxu0 %v1094
    %1322 = vmatmul.bf16.gmra.mxu0 0
    %v1323 = vpop.f32.mrf.mxu0
    %v1324 = vadd.f32 0.0, %v1323
    %v1325 = vpop.f32.mrf.mxu0
    %1326 = vdwg.mxu0
    %1327 = vmatpush.bf16.msra.mxu0 %v1139
    %1328 = vmatpush.bf16.msra.mxu0 %v1136
    %1329 = vmatpush.bf16.msra.mxu0 %v1133
    %1330 = vmatpush.bf16.msra.mxu0 %v1130
    %1331 = vmatpush.bf16.msra.mxu0 %v1127
    %1332 = vmatpush.bf16.msra.mxu0 %v1124
    %1333 = vmatpush.bf16.msra.mxu0 %v1121
    %1334 = vmatpush.bf16.msra.mxu0 %v1118
    %1335 = vmatmul.bf16.gmra.mxu0 0
    %v1336 = vpop.f32.mrf.mxu0
    %v1337 = vadd.f32 %v1324, %v1336
    %v1338 = vpop.f32.mrf.mxu0
    %1339 = vdwg.mxu0
    %1340 = vmatpush.bf16.msra.mxu0 %v1163
    %1341 = vmatpush.bf16.msra.mxu0 %v1160
    %1342 = vmatpush.bf16.msra.mxu0 %v1157
    %1343 = vmatpush.bf16.msra.mxu0 %v1154
    %1344 = vmatpush.bf16.msra.mxu0 %v1151
    %1345 = vmatpush.bf16.msra.mxu0 %v1148
    %1346 = vmatpush.bf16.msra.mxu0 %v1145
    %1347 = vmatpush.bf16.msra.mxu0 %v1142
    %1348 = vmatmul.bf16.gmra.mxu0 0
    %v1349 = vpop.f32.mrf.mxu0
    %v1350 = vadd.f32 %v1337, %v1349
    %v1351 = vpop.f32.mrf.mxu0
    %1352 = vdwg.mxu0
    %v1353 = vadd.f32 %v849, %v1272
    %v1354 = vadd.f32 %v850, %v1311
    %v1355 = vadd.f32 %v851, %v1350
    %v1356 = vtanh.pop %v1353
    %v1357 = vtanh.pop %v1354
    %v1358 = vtanh.pop %v1355
    %v1359 = vpack.c.bf16 %v1356, %v1356
    %v1360 = vpack.c.bf16 %v1357, %v1357
    %v1361 = vpack.c.bf16 %v1358, %v1358
    %v1362 = vld [vmem:[#allocation2 + $0x18] sm:$0xff]
    %v1363 = vld [vmem:[#allocation2 + $0x20] sm:$0xff]
    %v1364 = vld [vmem:[#allocation2 + $0x28] sm:$0xff]
    %1365 = vmatpush.bf16.msra.mxu0 %v1113
    %1366 = vmatpush.bf16.msra.mxu0 %v1110
    %1367 = vmatpush.bf16.msra.mxu0 %v1107
    %1368 = vmatpush.bf16.msra.mxu0 %v1104
    %1369 = vmatpush.bf16.msra.mxu0 %v1101
    %1370 = vmatpush.bf16.msra.mxu0 %v1098
    %1371 = vmatpush.bf16.msra.mxu0 %v1095
    %1372 = vmatpush.bf16.msra.mxu0 %v1092
    %1373 = vmatmul.bf16.gmra.mxu0 %v1359
    %v1374 = vpop.f32.mrf.mxu0
    %v1375 = vadd.f32 0.0, %v1374
    %v1376 = vpop.f32.mrf.mxu0
    %1377 = vdwg.mxu0
    %1378 = vmatpush.bf16.msra.mxu0 %v1137
    %1379 = vmatpush.bf16.msra.mxu0 %v1134
    %1380 = vmatpush.bf16.msra.mxu0 %v1131
    %1381 = vmatpush.bf16.msra.mxu0 %v1128
    %1382 = vmatpush.bf16.msra.mxu0 %v1125
    %1383 = vmatpush.bf16.msra.mxu0 %v1122
    %1384 = vmatpush.bf16.msra.mxu0 %v1119
    %1385 = vmatpush.bf16.msra.mxu0 %v1116
    %1386 = vmatmul.bf16.gmra.mxu0 %v1360
    %v1387 = vpop.f32.mrf.mxu0
    %v1388 = vadd.f32 %v1375, %v1387
    %v1389 = vpop.f32.mrf.mxu0
    %1390 = vdwg.mxu0
    %1391 = vmatpush.bf16.msra.mxu0 %v1161
    %1392 = vmatpush.bf16.msra.mxu0 %v1158
    %1393 = vmatpush.bf16.msra.mxu0 %v1155
    %1394 = vmatpush.bf16.msra.mxu0 %v1152
    %1395 = vmatpush.bf16.msra.mxu0 %v1149
    %1396 = vmatpush.bf16.msra.mxu0 %v1146
    %1397 = vmatpush.bf16.msra.mxu0 %v1143
    %1398 = vmatpush.bf16.msra.mxu0 %v1140
    %1399 = vmatmul.bf16.gmra.mxu0 %v1361
    %v1400 = vpop.f32.mrf.mxu0
    %v1401 = vadd.f32 %v1388, %v1400
    %v1402 = vpop.f32.mrf.mxu0
    %1403 = vdwg.mxu0
    %1404 = vmatpush.bf16.msra.mxu0 %v1114
    %1405 = vmatpush.bf16.msra.mxu0 %v1111
    %1406 = vmatpush.bf16.msra.mxu0 %v1108
    %1407 = vmatpush.bf16.msra.mxu0 %v1105
    %1408 = vmatpush.bf16.msra.mxu0 %v1102
    %1409 = vmatpush.bf16.msra.mxu0 %v1099
    %1410 = vmatpush.bf16.msra.mxu0 %v1096
    %1411 = vmatpush.bf16.msra.mxu0 %v1093
    %1412 = vmatmul.bf16.gmra.mxu0 %v1359
    %v1413 = vpop.f32.mrf.mxu0
    %v1414 = vadd.f32 0.0, %v1413
    %v1415 = vpop.f32.mrf.mxu0
    %1416 = vdwg.mxu0
    %1417 = vmatpush.bf16.msra.mxu0 %v1138
    %1418 = vmatpush.bf16.msra.mxu0 %v1135
    %1419 = vmatpush.bf16.msra.mxu0 %v1132
    %1420 = vmatpush.bf16.msra.mxu0 %v1129
    %1421 = vmatpush.bf16.msra.mxu0 %v1126
    %1422 = vmatpush.bf16.msra.mxu0 %v1123
    %1423 = vmatpush.bf16.msra.mxu0 %v1120
    %1424 = vmatpush.bf16.msra.mxu0 %v1117
    %1425 = vmatmul.bf16.gmra.mxu0 %v1360
    %v1426 = vpop.f32.mrf.mxu0
    %v1427 = vadd.f32 %v1414, %v1426
    %v1428 = vpop.f32.mrf.mxu0
    %1429 = vdwg.mxu0
    %1430 = vmatpush.bf16.msra.mxu0 %v1162
    %1431 = vmatpush.bf16.msra.mxu0 %v1159
    %1432 = vmatpush.bf16.msra.mxu0 %v1156
    %1433 = vmatpush.bf16.msra.mxu0 %v1153
    %1434 = vmatpush.bf16.msra.mxu0 %v1150
    %1435 = vmatpush.bf16.msra.mxu0 %v1147
    %1436 = vmatpush.bf16.msra.mxu0 %v1144
    %1437 = vmatpush.bf16.msra.mxu0 %v1141
    %1438 = vmatmul.bf16.gmra.mxu0 %v1361
    %v1439 = vpop.f32.mrf.mxu0
    %v1440 = vadd.f32 %v1427, %v1439
    %v1441 = vpop.f32.mrf.mxu0
    %1442 = vdwg.mxu0
    %1443 = vmatpush.bf16.msra.mxu0 %v1115
    %1444 = vmatpush.bf16.msra.mxu0 %v1112
    %1445 = vmatpush.bf16.msra.mxu0 %v1109
    %1446 = vmatpush.bf16.msra.mxu0 %v1106
    %1447 = vmatpush.bf16.msra.mxu0 %v1103
    %1448 = vmatpush.bf16.msra.mxu0 %v1100
    %1449 = vmatpush.bf16.msra.mxu0 %v1097
    %1450 = vmatpush.bf16.msra.mxu0 %v1094
    %1451 = vmatmul.bf16.gmra.mxu0 %v1359
    %v1452 = vpop.f32.mrf.mxu0
    %v1453 = vadd.f32 0.0, %v1452
    %v1454 = vpop.f32.mrf.mxu0
    %1455 = vdwg.mxu0
    %1456 = vmatpush.bf16.msra.mxu0 %v1139
    %1457 = vmatpush.bf16.msra.mxu0 %v1136
    %1458 = vmatpush.bf16.msra.mxu0 %v1133
    %1459 = vmatpush.bf16.msra.mxu0 %v1130
    %1460 = vmatpush.bf16.msra.mxu0 %v1127
    %1461 = vmatpush.bf16.msra.mxu0 %v1124
    %1462 = vmatpush.bf16.msra.mxu0 %v1121
    %1463 = vmatpush.bf16.msra.mxu0 %v1118
    %1464 = vmatmul.bf16.gmra.mxu0 %v1360
    %v1465 = vpop.f32.mrf.mxu0
    %v1466 = vadd.f32 %v1453, %v1465
    %v1467 = vpop.f32.mrf.mxu0
    %1468 = vdwg.mxu0
    %1469 = vmatpush.bf16.msra.mxu0 %v1163
    %1470 = vmatpush.bf16.msra.mxu0 %v1160
    %1471 = vmatpush.bf16.msra.mxu0 %v1157
    %1472 = vmatpush.bf16.msra.mxu0 %v1154
    %1473 = vmatpush.bf16.msra.mxu0 %v1151
    %1474 = vmatpush.bf16.msra.mxu0 %v1148
    %1475 = vmatpush.bf16.msra.mxu0 %v1145
    %1476 = vmatpush.bf16.msra.mxu0 %v1142
    %1477 = vmatmul.bf16.gmra.mxu0 %v1361
    %v1478 = vpop.f32.mrf.mxu0
    %v1479 = vadd.f32 %v1466, %v1478
    %v1480 = vpop.f32.mrf.mxu0
    %1481 = vdwg.mxu0
    %v1482 = vadd.f32 %v1362, %v1401
    %v1483 = vadd.f32 %v1363, %v1440
    %v1484 = vadd.f32 %v1364, %v1479
    %v1485 = vtanh.pop %v1482
    %v1486 = vtanh.pop %v1483
    %v1487 = vtanh.pop %v1484
    %v1488 = vpack.c.bf16 %v1485, %v1485
    %v1489 = vpack.c.bf16 %v1486, %v1486
    %v1490 = vpack.c.bf16 %v1487, %v1487
    %v1587 = vunpack.c.l.b16 %v734
    %v1588 = vunpack.c.h.b16 %v734
    %v1589 = vunpack.c.l.b16 %v735
    %v1590 = vunpack.c.l.b16 %v736
    %v1591 = vunpack.c.h.b16 %v736
    %v1592 = vunpack.c.l.b16 %v737
    %v1593 = vunpack.c.l.b16 %v738
    %v1594 = vunpack.c.h.b16 %v738
    %v1595 = vunpack.c.l.b16 %v739
    %v1596 = vunpack.c.l.b16 %v740
    %v1597 = vunpack.c.h.b16 %v740
    %v1598 = vunpack.c.l.b16 %v741
    %v1599 = vunpack.c.l.b16 %v742
    %v1600 = vunpack.c.h.b16 %v742
    %v1601 = vunpack.c.l.b16 %v743
    %v1602 = vunpack.c.l.b16 %v744
    %v1603 = vunpack.c.h.b16 %v744
    %v1604 = vunpack.c.l.b16 %v745
    %v1605 = vunpack.c.l.b16 %v746
    %v1606 = vunpack.c.h.b16 %v746
    %v1607 = vunpack.c.l.b16 %v747
    %v1608 = vunpack.c.l.b16 %v748
    %v1609 = vunpack.c.h.b16 %v748
    %v1610 = vunpack.c.l.b16 %v749
    %v1611 = vunpack.c.l.b16 %v750
    %v1612 = vunpack.c.h.b16 %v750
    %v1613 = vunpack.c.l.b16 %v751
    %v1614 = vunpack.c.l.b16 %v752
    %v1615 = vunpack.c.h.b16 %v752
    %v1616 = vunpack.c.l.b16 %v753
    %v1617 = vunpack.c.l.b16 %v754
    %v1618 = vunpack.c.h.b16 %v754
    %v1619 = vunpack.c.l.b16 %v755
    %v1620 = vunpack.c.l.b16 %v756
    %v1621 = vunpack.c.h.b16 %v756
    %v1622 = vunpack.c.l.b16 %v757
    %v1623 = vunpack.c.l.b16 %v758
    %v1624 = vunpack.c.h.b16 %v758
    %v1625 = vunpack.c.l.b16 %v759
    %v1626 = vunpack.c.l.b16 %v760
    %v1627 = vunpack.c.h.b16 %v760
    %v1628 = vunpack.c.l.b16 %v761
    %v1629 = vunpack.c.l.b16 %v762
    %v1630 = vunpack.c.h.b16 %v762
    %v1631 = vunpack.c.l.b16 %v763
    %v1632 = vunpack.c.l.b16 %v764
    %v1633 = vunpack.c.h.b16 %v764
    %v1634 = vunpack.c.l.b16 %v765
    %v1635 = vunpack.c.l.b16 %v766
    %v1636 = vunpack.c.h.b16 %v766
    %v1637 = vunpack.c.l.b16 %v767
    %v1638 = vunpack.c.l.b16 %v768
    %v1639 = vunpack.c.h.b16 %v768
    %v1640 = vunpack.c.l.b16 %v769
    %v1641 = vunpack.c.l.b16 %v770
    %v1642 = vunpack.c.h.b16 %v770
    %v1643 = vunpack.c.l.b16 %v771
    %v1644 = vunpack.c.l.b16 %v772
    %v1645 = vunpack.c.h.b16 %v772
    %v1646 = vunpack.c.l.b16 %v773
    %v1647 = vunpack.c.l.b16 %v774
    %v1648 = vunpack.c.h.b16 %v774
    %v1649 = vunpack.c.l.b16 %v775
    %v1650 = vunpack.c.l.b16 %v776
    %v1651 = vunpack.c.h.b16 %v776
    %v1652 = vunpack.c.l.b16 %v777
    %v1653 = vunpack.c.l.b16 %v778
    %v1654 = vunpack.c.h.b16 %v778
    %v1655 = vunpack.c.l.b16 %v779
    %v1656 = vunpack.c.l.b16 %v780
    %v1657 = vunpack.c.h.b16 %v780
    %v1658 = vunpack.c.l.b16 %v781
    %v1659 = vunpack.c.l.b16 %v782
    %v1660 = vunpack.c.h.b16 %v782
    %v1661 = vunpack.c.l.b16 %v783
    %v1662 = vunpack.c.l.b16 %v784
    %v1663 = vunpack.c.h.b16 %v784
    %v1664 = vunpack.c.l.b16 %v785
    %v1665 = vunpack.c.l.b16 %v786
    %v1666 = vunpack.c.h.b16 %v786
    %v1667 = vunpack.c.l.b16 %v787
    %v1668 = vunpack.c.l.b16 %v788
    %v1669 = vunpack.c.h.b16 %v788
    %v1670 = vunpack.c.l.b16 %v789
    %v1671 = vunpack.c.l.b16 %v790
    %v1672 = vunpack.c.h.b16 %v790
    %v1673 = vunpack.c.l.b16 %v791
    %v1674 = vunpack.c.l.b16 %v792
    %v1675 = vunpack.c.h.b16 %v792
    %v1676 = vunpack.c.l.b16 %v793
    %v1677 = vunpack.c.l.b16 %v794
    %v1678 = vunpack.c.h.b16 %v794
    %v1679 = vunpack.c.l.b16 %v795
    %v1680 = vunpack.c.l.b16 %v796
    %v1681 = vunpack.c.h.b16 %v796
    %v1682 = vunpack.c.l.b16 %v797
    %v1683 = vunpack.c.l.b16 %v798
    %v1684 = vunpack.c.h.b16 %v798
    %v1685 = vunpack.c.l.b16 %v799
    %v1686 = vunpack.c.l.b16 %v800
    %v1687 = vunpack.c.h.b16 %v800
    %v1688 = vunpack.c.l.b16 %v801
    %v1689 = vunpack.c.l.b16 %v802
    %v1690 = vunpack.c.h.b16 %v802
    %v1691 = vunpack.c.l.b16 %v803
    %v1692 = vunpack.c.l.b16 %v804
    %v1693 = vunpack.c.h.b16 %v804
    %v1694 = vunpack.c.l.b16 %v805
    %v1695 = vunpack.c.l.b16 %v806
    %v1696 = vunpack.c.h.b16 %v806
    %v1697 = vunpack.c.l.b16 %v807
    %v1698 = vunpack.c.l.b16 %v808
    %v1699 = vunpack.c.h.b16 %v808
    %v1700 = vunpack.c.l.b16 %v809
    %v1701 = vunpack.c.l.b16 %v810
    %v1702 = vunpack.c.h.b16 %v810
    %v1703 = vunpack.c.l.b16 %v811
    %v1704 = vunpack.c.l.b16 %v812
    %v1705 = vunpack.c.h.b16 %v812
    %v1706 = vunpack.c.l.b16 %v813
    %v1707 = vunpack.c.l.b16 %v814
    %v1708 = vunpack.c.h.b16 %v814
    %v1709 = vunpack.c.l.b16 %v815
    %v1710 = vunpack.c.l.b16 %v816
    %v1711 = vunpack.c.h.b16 %v816
    %v1712 = vunpack.c.l.b16 %v817
    %v1713 = vunpack.c.l.b16 %v818
    %v1714 = vunpack.c.h.b16 %v818
    %v1715 = vunpack.c.l.b16 %v819
    %v1716 = vunpack.c.l.b16 %v820
    %v1717 = vunpack.c.h.b16 %v820
    %v1718 = vunpack.c.l.b16 %v821
    %v1719 = vunpack.c.l.b16 %v822
    %v1720 = vunpack.c.h.b16 %v822
    %v1721 = vunpack.c.l.b16 %v823
    %v1722 = vunpack.c.l.b16 %v824
    %v1723 = vunpack.c.h.b16 %v824
    %v1724 = vunpack.c.l.b16 %v825
    %v1725 = vunpack.c.l.b16 %v826
    %v1726 = vunpack.c.h.b16 %v826
    %v1727 = vunpack.c.l.b16 %v827
    %v1728 = vunpack.c.l.b16 %v828
    %v1729 = vunpack.c.h.b16 %v828
    %v1730 = vunpack.c.l.b16 %v829
    %v1731 = vpack.c.b16 %v1590, %v1587
    %v1732 = vpack.c.b16 %v1591, %v1588
    %v1733 = vpack.c.b16 %v1592, %v1589
    %v1734 = vpack.c.b16 %v1596, %v1593
    %v1735 = vpack.c.b16 %v1597, %v1594
    %v1736 = vpack.c.b16 %v1598, %v1595
    %v1737 = vpack.c.b16 %v1602, %v1599
    %v1738 = vpack.c.b16 %v1603, %v1600
    %v1739 = vpack.c.b16 %v1604, %v1601
    %v1740 = vpack.c.b16 %v1608, %v1605
    %v1741 = vpack.c.b16 %v1609, %v1606
    %v1742 = vpack.c.b16 %v1610, %v1607
    %v1743 = vpack.c.b16 %v1614, %v1611
    %v1744 = vpack.c.b16 %v1615, %v1612
    %v1745 = vpack.c.b16 %v1616, %v1613
    %v1746 = vpack.c.b16 %v1620, %v1617
    %v1747 = vpack.c.b16 %v1621, %v1618
    %v1748 = vpack.c.b16 %v1622, %v1619
    %v1749 = vpack.c.b16 %v1626, %v1623
    %v1750 = vpack.c.b16 %v1627, %v1624
    %v1751 = vpack.c.b16 %v1628, %v1625
    %v1752 = vpack.c.b16 %v1632, %v1629
    %v1753 = vpack.c.b16 %v1633, %v1630
    %v1754 = vpack.c.b16 %v1634, %v1631
    %v1755 = vpack.c.b16 %v1638, %v1635
    %v1756 = vpack.c.b16 %v1639, %v1636
    %v1757 = vpack.c.b16 %v1640, %v1637
    %v1758 = vpack.c.b16 %v1644, %v1641
    %v1759 = vpack.c.b16 %v1645, %v1642
    %v1760 = vpack.c.b16 %v1646, %v1643
    %v1761 = vpack.c.b16 %v1650, %v1647
    %v1762 = vpack.c.b16 %v1651, %v1648
    %v1763 = vpack.c.b16 %v1652, %v1649
    %v1764 = vpack.c.b16 %v1656, %v1653
    %v1765 = vpack.c.b16 %v1657, %v1654
    %v1766 = vpack.c.b16 %v1658, %v1655
    %v1767 = vpack.c.b16 %v1662, %v1659
    %v1768 = vpack.c.b16 %v1663, %v1660
    %v1769 = vpack.c.b16 %v1664, %v1661
    %v1770 = vpack.c.b16 %v1668, %v1665
    %v1771 = vpack.c.b16 %v1669, %v1666
    %v1772 = vpack.c.b16 %v1670, %v1667
    %v1773 = vpack.c.b16 %v1674, %v1671
    %v1774 = vpack.c.b16 %v1675, %v1672
    %v1775 = vpack.c.b16 %v1676, %v1673
    %v1776 = vpack.c.b16 %v1680, %v1677
    %v1777 = vpack.c.b16 %v1681, %v1678
    %v1778 = vpack.c.b16 %v1682, %v1679
    %v1779 = vpack.c.b16 %v1686, %v1683
    %v1780 = vpack.c.b16 %v1687, %v1684
    %v1781 = vpack.c.b16 %v1688, %v1685
    %v1782 = vpack.c.b16 %v1692, %v1689
    %v1783 = vpack.c.b16 %v1693, %v1690
    %v1784 = vpack.c.b16 %v1694, %v1691
    %v1785 = vpack.c.b16 %v1698, %v1695
    %v1786 = vpack.c.b16 %v1699, %v1696
    %v1787 = vpack.c.b16 %v1700, %v1697
    %v1788 = vpack.c.b16 %v1704, %v1701
    %v1789 = vpack.c.b16 %v1705, %v1702
    %v1790 = vpack.c.b16 %v1706, %v1703
    %v1791 = vpack.c.b16 %v1710, %v1707
    %v1792 = vpack.c.b16 %v1711, %v1708
    %v1793 = vpack.c.b16 %v1712, %v1709
    %v1794 = vpack.c.b16 %v1716, %v1713
    %v1795 = vpack.c.b16 %v1717, %v1714
    %v1796 = vpack.c.b16 %v1718, %v1715
    %v1797 = vpack.c.b16 %v1722, %v1719
    %v1798 = vpack.c.b16 %v1723, %v1720
    %v1799 = vpack.c.b16 %v1724, %v1721
    %v1800 = vpack.c.b16 %v1728, %v1725
    %v1801 = vpack.c.b16 %v1729, %v1726
    %v1802 = vpack.c.b16 %v1730, %v1727
    %1875 = vmatpush.bf16.msra.mxu0 %v1752
    %1876 = vmatpush.bf16.msra.mxu0 %v1749
    %1877 = vmatpush.bf16.msra.mxu0 %v1746
    %1878 = vmatpush.bf16.msra.mxu0 %v1743
    %1879 = vmatpush.bf16.msra.mxu0 %v1740
    %1880 = vmatpush.bf16.msra.mxu0 %v1737
    %1881 = vmatpush.bf16.msra.mxu0 %v1734
    %1882 = vmatpush.bf16.msra.mxu0 %v1731
    %1883 = vmatmul.bf16.gmra.mxu0 0
    %v1884 = vpop.f32.mrf.mxu0
    %v1885 = vadd.f32 0.0, %v1884
    %v1886 = vpop.f32.mrf.mxu0
    %1887 = vdwg.mxu0
    %1888 = vmatpush.bf16.msra.mxu0 %v1776
    %1889 = vmatpush.bf16.msra.mxu0 %v1773
    %1890 = vmatpush.bf16.msra.mxu0 %v1770
    %1891 = vmatpush.bf16.msra.mxu0 %v1767
    %1892 = vmatpush.bf16.msra.mxu0 %v1764
    %1893 = vmatpush.bf16.msra.mxu0 %v1761
    %1894 = vmatpush.bf16.msra.mxu0 %v1758
    %1895 = vmatpush.bf16.msra.mxu0 %v1755
    %1896 = vmatmul.bf16.gmra.mxu0 0
    %v1897 = vpop.f32.mrf.mxu0
    %v1898 = vadd.f32 %v1885, %v1897
    %v1899 = vpop.f32.mrf.mxu0
    %1900 = vdwg.mxu0
    %1901 = vmatpush.bf16.msra.mxu0 %v1800
    %1902 = vmatpush.bf16.msra.mxu0 %v1797
    %1903 = vmatpush.bf16.msra.mxu0 %v1794
    %1904 = vmatpush.bf16.msra.mxu0 %v1791
    %1905 = vmatpush.bf16.msra.mxu0 %v1788
    %1906 = vmatpush.bf16.msra.mxu0 %v1785
    %1907 = vmatpush.bf16.msra.mxu0 %v1782
    %1908 = vmatpush.bf16.msra.mxu0 %v1779
    %1909 = vmatmul.bf16.gmra.mxu0 0
    %v1910 = vpop.f32.mrf.mxu0
    %v1911 = vadd.f32 %v1898, %v1910
    %v1912 = vpop.f32.mrf.mxu0
    %1913 = vdwg.mxu0
    %1914 = vmatpush.bf16.msra.mxu0 %v1753
    %1915 = vmatpush.bf16.msra.mxu0 %v1750
    %1916 = vmatpush.bf16.msra.mxu0 %v1747
    %1917 = vmatpush.bf16.msra.mxu0 %v1744
    %1918 = vmatpush.bf16.msra.mxu0 %v1741
    %1919 = vmatpush.bf16.msra.mxu0 %v1738
    %1920 = vmatpush.bf16.msra.mxu0 %v1735
    %1921 = vmatpush.bf16.msra.mxu0 %v1732
    %1922 = vmatmul.bf16.gmra.mxu0 0
    %v1923 = vpop.f32.mrf.mxu0
    %v1924 = vadd.f32 0.0, %v1923
    %v1925 = vpop.f32.mrf.mxu0
    %1926 = vdwg.mxu0
    %1927 = vmatpush.bf16.msra.mxu0 %v1777
    %1928 = vmatpush.bf16.msra.mxu0 %v1774
    %1929 = vmatpush.bf16.msra.mxu0 %v1771
    %1930 = vmatpush.bf16.msra.mxu0 %v1768
    %1931 = vmatpush.bf16.msra.mxu0 %v1765
    %1932 = vmatpush.bf16.msra.mxu0 %v1762
    %1933 = vmatpush.bf16.msra.mxu0 %v1759
    %1934 = vmatpush.bf16.msra.mxu0 %v1756
    %1935 = vmatmul.bf16.gmra.mxu0 0
    %v1936 = vpop.f32.mrf.mxu0
    %v1937 = vadd.f32 %v1924, %v1936
    %v1938 = vpop.f32.mrf.mxu0
    %1939 = vdwg.mxu0
    %1940 = vmatpush.bf16.msra.mxu0 %v1801
    %1941 = vmatpush.bf16.msra.mxu0 %v1798
    %1942 = vmatpush.bf16.msra.mxu0 %v1795
    %1943 = vmatpush.bf16.msra.mxu0 %v1792
    %1944 = vmatpush.bf16.msra.mxu0 %v1789
    %1945 = vmatpush.bf16.msra.mxu0 %v1786
    %1946 = vmatpush.bf16.msra.mxu0 %v1783
    %1947 = vmatpush.bf16.msra.mxu0 %v1780
    %1948 = vmatmul.bf16.gmra.mxu0 0
    %v1949 = vpop.f32.mrf.mxu0
    %v1950 = vadd.f32 %v1937, %v1949
    %v1951 = vpop.f32.mrf.mxu0
    %1952 = vdwg.mxu0
    %1953 = vmatpush.bf16.msra.mxu0 %v1754
    %1954 = vmatpush.bf16.msra.mxu0 %v1751
    %1955 = vmatpush.bf16.msra.mxu0 %v1748
    %1956 = vmatpush.bf16.msra.mxu0 %v1745
    %1957 = vmatpush.bf16.msra.mxu0 %v1742
    %1958 = vmatpush.bf16.msra.mxu0 %v1739
    %1959 = vmatpush.bf16.msra.mxu0 %v1736
    %1960 = vmatpush.bf16.msra.mxu0 %v1733
    %1961 = vmatmul.bf16.gmra.mxu0 0
    %v1962 = vpop.f32.mrf.mxu0
    %v1963 = vadd.f32 0.0, %v1962
    %v1964 = vpop.f32.mrf.mxu0
    %1965 = vdwg.mxu0
    %1966 = vmatpush.bf16.msra.mxu0 %v1778
    %1967 = vmatpush.bf16.msra.mxu0 %v1775
    %1968 = vmatpush.bf16.msra.mxu0 %v1772
    %1969 = vmatpush.bf16.msra.mxu0 %v1769
    %1970 = vmatpush.bf16.msra.mxu0 %v1766
    %1971 = vmatpush.bf16.msra.mxu0 %v1763
    %1972 = vmatpush.bf16.msra.mxu0 %v1760
    %1973 = vmatpush.bf16.msra.mxu0 %v1757
    %1974 = vmatmul.bf16.gmra.mxu0 0
    %v1975 = vpop.f32.mrf.mxu0
    %v1976 = vadd.f32 %v1963, %v1975
    %v1977 = vpop.f32.mrf.mxu0
    %1978 = vdwg.mxu0
    %1979 = vmatpush.bf16.msra.mxu0 %v1802
    %1980 = vmatpush.bf16.msra.mxu0 %v1799
    %1981 = vmatpush.bf16.msra.mxu0 %v1796
    %1982 = vmatpush.bf16.msra.mxu0 %v1793
    %1983 = vmatpush.bf16.msra.mxu0 %v1790
    %1984 = vmatpush.bf16.msra.mxu0 %v1787
    %1985 = vmatpush.bf16.msra.mxu0 %v1784
    %1986 = vmatpush.bf16.msra.mxu0 %v1781
    %1987 = vmatmul.bf16.gmra.mxu0 0
    %v1988 = vpop.f32.mrf.mxu0
    %v1989 = vadd.f32 %v1976, %v1988
    %v1990 = vpop.f32.mrf.mxu0
    %1991 = vdwg.mxu0
    %v2088 = vunpack.c.l.b16 %v638
    %v2089 = vunpack.c.h.b16 %v638
    %v2090 = vunpack.c.l.b16 %v639
    %v2091 = vunpack.c.l.b16 %v640
    %v2092 = vunpack.c.h.b16 %v640
    %v2093 = vunpack.c.l.b16 %v641
    %v2094 = vunpack.c.l.b16 %v642
    %v2095 = vunpack.c.h.b16 %v642
    %v2096 = vunpack.c.l.b16 %v643
    %v2097 = vunpack.c.l.b16 %v644
    %v2098 = vunpack.c.h.b16 %v644
    %v2099 = vunpack.c.l.b16 %v645
    %v2100 = vunpack.c.l.b16 %v646
    %v2101 = vunpack.c.h.b16 %v646
    %v2102 = vunpack.c.l.b16 %v647
    %v2103 = vunpack.c.l.b16 %v648
    %v2104 = vunpack.c.h.b16 %v648
    %v2105 = vunpack.c.l.b16 %v649
    %v2106 = vunpack.c.l.b16 %v650
    %v2107 = vunpack.c.h.b16 %v650
    %v2108 = vunpack.c.l.b16 %v651
    %v2109 = vunpack.c.l.b16 %v652
    %v2110 = vunpack.c.h.b16 %v652
    %v2111 = vunpack.c.l.b16 %v653
    %v2112 = vunpack.c.l.b16 %v654
    %v2113 = vunpack.c.h.b16 %v654
    %v2114 = vunpack.c.l.b16 %v655
    %v2115 = vunpack.c.l.b16 %v656
    %v2116 = vunpack.c.h.b16 %v656
    %v2117 = vunpack.c.l.b16 %v657
    %v2118 = vunpack.c.l.b16 %v658
    %v2119 = vunpack.c.h.b16 %v658
    %v2120 = vunpack.c.l.b16 %v659
    %v2121 = vunpack.c.l.b16 %v660
    %v2122 = vunpack.c.h.b16 %v660
    %v2123 = vunpack.c.l.b16 %v661
    %v2124 = vunpack.c.l.b16 %v662
    %v2125 = vunpack.c.h.b16 %v662
    %v2126 = vunpack.c.l.b16 %v663
    %v2127 = vunpack.c.l.b16 %v664
    %v2128 = vunpack.c.h.b16 %v664
    %v2129 = vunpack.c.l.b16 %v665
    %v2130 = vunpack.c.l.b16 %v666
    %v2131 = vunpack.c.h.b16 %v666
    %v2132 = vunpack.c.l.b16 %v667
    %v2133 = vunpack.c.l.b16 %v668
    %v2134 = vunpack.c.h.b16 %v668
    %v2135 = vunpack.c.l.b16 %v669
    %v2136 = vunpack.c.l.b16 %v670
    %v2137 = vunpack.c.h.b16 %v670
    %v2138 = vunpack.c.l.b16 %v671
    %v2139 = vunpack.c.l.b16 %v672
    %v2140 = vunpack.c.h.b16 %v672
    %v2141 = vunpack.c.l.b16 %v673
    %v2142 = vunpack.c.l.b16 %v674
    %v2143 = vunpack.c.h.b16 %v674
    %v2144 = vunpack.c.l.b16 %v675
    %v2145 = vunpack.c.l.b16 %v676
    %v2146 = vunpack.c.h.b16 %v676
    %v2147 = vunpack.c.l.b16 %v677
    %v2148 = vunpack.c.l.b16 %v678
    %v2149 = vunpack.c.h.b16 %v678
    %v2150 = vunpack.c.l.b16 %v679
    %v2151 = vunpack.c.l.b16 %v680
    %v2152 = vunpack.c.h.b16 %v680
    %v2153 = vunpack.c.l.b16 %v681
    %v2154 = vunpack.c.l.b16 %v682
    %v2155 = vunpack.c.h.b16 %v682
    %v2156 = vunpack.c.l.b16 %v683
    %v2157 = vunpack.c.l.b16 %v684
    %v2158 = vunpack.c.h.b16 %v684
    %v2159 = vunpack.c.l.b16 %v685
    %v2160 = vunpack.c.l.b16 %v686
    %v2161 = vunpack.c.h.b16 %v686
    %v2162 = vunpack.c.l.b16 %v687
    %v2163 = vunpack.c.l.b16 %v688
    %v2164 = vunpack.c.h.b16 %v688
    %v2165 = vunpack.c.l.b16 %v689
    %v2166 = vunpack.c.l.b16 %v690
    %v2167 = vunpack.c.h.b16 %v690
    %v2168 = vunpack.c.l.b16 %v691
    %v2169 = vunpack.c.l.b16 %v692
    %v2170 = vunpack.c.h.b16 %v692
    %v2171 = vunpack.c.l.b16 %v693
    %v2172 = vunpack.c.l.b16 %v694
    %v2173 = vunpack.c.h.b16 %v694
    %v2174 = vunpack.c.l.b16 %v695
    %v2175 = vunpack.c.l.b16 %v696
    %v2176 = vunpack.c.h.b16 %v696
    %v2177 = vunpack.c.l.b16 %v697
    %v2178 = vunpack.c.l.b16 %v698
    %v2179 = vunpack.c.h.b16 %v698
    %v2180 = vunpack.c.l.b16 %v699
    %v2181 = vunpack.c.l.b16 %v700
    %v2182 = vunpack.c.h.b16 %v700
    %v2183 = vunpack.c.l.b16 %v701
    %v2184 = vunpack.c.l.b16 %v702
    %v2185 = vunpack.c.h.b16 %v702
    %v2186 = vunpack.c.l.b16 %v703
    %v2187 = vunpack.c.l.b16 %v704
    %v2188 = vunpack.c.h.b16 %v704
    %v2189 = vunpack.c.l.b16 %v705
    %v2190 = vunpack.c.l.b16 %v706
    %v2191 = vunpack.c.h.b16 %v706
    %v2192 = vunpack.c.l.b16 %v707
    %v2193 = vunpack.c.l.b16 %v708
    %v2194 = vunpack.c.h.b16 %v708
    %v2195 = vunpack.c.l.b16 %v709
    %v2196 = vunpack.c.l.b16 %v710
    %v2197 = vunpack.c.h.b16 %v710
    %v2198 = vunpack.c.l.b16 %v711
    %v2199 = vunpack.c.l.b16 %v712
    %v2200 = vunpack.c.h.b16 %v712
    %v2201 = vunpack.c.l.b16 %v713
    %v2202 = vunpack.c.l.b16 %v714
    %v2203 = vunpack.c.h.b16 %v714
    %v2204 = vunpack.c.l.b16 %v715
    %v2205 = vunpack.c.l.b16 %v716
    %v2206 = vunpack.c.h.b16 %v716
    %v2207 = vunpack.c.l.b16 %v717
    %v2208 = vunpack.c.l.b16 %v718
    %v2209 = vunpack.c.h.b16 %v718
    %v2210 = vunpack.c.l.b16 %v719
    %v2211 = vunpack.c.l.b16 %v720
    %v2212 = vunpack.c.h.b16 %v720
    %v2213 = vunpack.c.l.b16 %v721
    %v2214 = vunpack.c.l.b16 %v722
    %v2215 = vunpack.c.h.b16 %v722
    %v2216 = vunpack.c.l.b16 %v723
    %v2217 = vunpack.c.l.b16 %v724
    %v2218 = vunpack.c.h.b16 %v724
    %v2219 = vunpack.c.l.b16 %v725
    %v2220 = vunpack.c.l.b16 %v726
    %v2221 = vunpack.c.h.b16 %v726
    %v2222 = vunpack.c.l.b16 %v727
    %v2223 = vunpack.c.l.b16 %v728
    %v2224 = vunpack.c.h.b16 %v728
    %v2225 = vunpack.c.l.b16 %v729
    %v2226 = vunpack.c.l.b16 %v730
    %v2227 = vunpack.c.h.b16 %v730
    %v2228 = vunpack.c.l.b16 %v731
    %v2229 = vunpack.c.l.b16 %v732
    %v2230 = vunpack.c.h.b16 %v732
    %v2231 = vunpack.c.l.b16 %v733
    %v2232 = vpack.c.b16 %v2091, %v2088
    %v2233 = vpack.c.b16 %v2092, %v2089
    %v2234 = vpack.c.b16 %v2093, %v2090
    %v2235 = vpack.c.b16 %v2097, %v2094
    %v2236 = vpack.c.b16 %v2098, %v2095
    %v2237 = vpack.c.b16 %v2099, %v2096
    %v2238 = vpack.c.b16 %v2103, %v2100
    %v2239 = vpack.c.b16 %v2104, %v2101
    %v2240 = vpack.c.b16 %v2105, %v2102
    %v2241 = vpack.c.b16 %v2109, %v2106
    %v2242 = vpack.c.b16 %v2110, %v2107
    %v2243 = vpack.c.b16 %v2111, %v2108
    %v2244 = vpack.c.b16 %v2115, %v2112
    %v2245 = vpack.c.b16 %v2116, %v2113
    %v2246 = vpack.c.b16 %v2117, %v2114
    %v2247 = vpack.c.b16 %v2121, %v2118
    %v2248 = vpack.c.b16 %v2122, %v2119
    %v2249 = vpack.c.b16 %v2123, %v2120
    %v2250 = vpack.c.b16 %v2127, %v2124
    %v2251 = vpack.c.b16 %v2128, %v2125
    %v2252 = vpack.c.b16 %v2129, %v2126
    %v2253 = vpack.c.b16 %v2133, %v2130
    %v2254 = vpack.c.b16 %v2134, %v2131
    %v2255 = vpack.c.b16 %v2135, %v2132
    %v2256 = vpack.c.b16 %v2139, %v2136
    %v2257 = vpack.c.b16 %v2140, %v2137
    %v2258 = vpack.c.b16 %v2141, %v2138
    %v2259 = vpack.c.b16 %v2145, %v2142
    %v2260 = vpack.c.b16 %v2146, %v2143
    %v2261 = vpack.c.b16 %v2147, %v2144
    %v2262 = vpack.c.b16 %v2151, %v2148
    %v2263 = vpack.c.b16 %v2152, %v2149
    %v2264 = vpack.c.b16 %v2153, %v2150
    %v2265 = vpack.c.b16 %v2157, %v2154
    %v2266 = vpack.c.b16 %v2158, %v2155
    %v2267 = vpack.c.b16 %v2159, %v2156
    %v2268 = vpack.c.b16 %v2163, %v2160
    %v2269 = vpack.c.b16 %v2164, %v2161
    %v2270 = vpack.c.b16 %v2165, %v2162
    %v2271 = vpack.c.b16 %v2169, %v2166
    %v2272 = vpack.c.b16 %v2170, %v2167
    %v2273 = vpack.c.b16 %v2171, %v2168
    %v2274 = vpack.c.b16 %v2175, %v2172
    %v2275 = vpack.c.b16 %v2176, %v2173
    %v2276 = vpack.c.b16 %v2177, %v2174
    %v2277 = vpack.c.b16 %v2181, %v2178
    %v2278 = vpack.c.b16 %v2182, %v2179
    %v2279 = vpack.c.b16 %v2183, %v2180
    %v2280 = vpack.c.b16 %v2187, %v2184
    %v2281 = vpack.c.b16 %v2188, %v2185
    %v2282 = vpack.c.b16 %v2189, %v2186
    %v2283 = vpack.c.b16 %v2193, %v2190
    %v2284 = vpack.c.b16 %v2194, %v2191
    %v2285 = vpack.c.b16 %v2195, %v2192
    %v2286 = vpack.c.b16 %v2199, %v2196
    %v2287 = vpack.c.b16 %v2200, %v2197
    %v2288 = vpack.c.b16 %v2201, %v2198
    %v2289 = vpack.c.b16 %v2205, %v2202
    %v2290 = vpack.c.b16 %v2206, %v2203
    %v2291 = vpack.c.b16 %v2207, %v2204
    %v2292 = vpack.c.b16 %v2211, %v2208
    %v2293 = vpack.c.b16 %v2212, %v2209
    %v2294 = vpack.c.b16 %v2213, %v2210
    %v2295 = vpack.c.b16 %v2217, %v2214
    %v2296 = vpack.c.b16 %v2218, %v2215
    %v2297 = vpack.c.b16 %v2219, %v2216
    %v2298 = vpack.c.b16 %v2223, %v2220
    %v2299 = vpack.c.b16 %v2224, %v2221
    %v2300 = vpack.c.b16 %v2225, %v2222
    %v2301 = vpack.c.b16 %v2229, %v2226
    %v2302 = vpack.c.b16 %v2230, %v2227
    %v2303 = vpack.c.b16 %v2231, %v2228
    %2376 = vmatpush.bf16.msra.mxu0 %v2253
    %2377 = vmatpush.bf16.msra.mxu0 %v2250
    %2378 = vmatpush.bf16.msra.mxu0 %v2247
    %2379 = vmatpush.bf16.msra.mxu0 %v2244
    %2380 = vmatpush.bf16.msra.mxu0 %v2241
    %2381 = vmatpush.bf16.msra.mxu0 %v2238
    %2382 = vmatpush.bf16.msra.mxu0 %v2235
    %2383 = vmatpush.bf16.msra.mxu0 %v2232
    %2384 = vmatmul.bf16.gmra.mxu0 %v1359
    %v2385 = vpop.f32.mrf.mxu0
    %v2386 = vadd.f32 %v1911, %v2385
    %v2387 = vpop.f32.mrf.mxu0
    %2388 = vdwg.mxu0
    %2389 = vmatpush.bf16.msra.mxu0 %v2277
    %2390 = vmatpush.bf16.msra.mxu0 %v2274
    %2391 = vmatpush.bf16.msra.mxu0 %v2271
    %2392 = vmatpush.bf16.msra.mxu0 %v2268
    %2393 = vmatpush.bf16.msra.mxu0 %v2265
    %2394 = vmatpush.bf16.msra.mxu0 %v2262
    %2395 = vmatpush.bf16.msra.mxu0 %v2259
    %2396 = vmatpush.bf16.msra.mxu0 %v2256
    %2397 = vmatmul.bf16.gmra.mxu0 %v1360
    %v2398 = vpop.f32.mrf.mxu0
    %v2399 = vadd.f32 %v2386, %v2398
    %v2400 = vpop.f32.mrf.mxu0
    %2401 = vdwg.mxu0
    %2402 = vmatpush.bf16.msra.mxu0 %v2301
    %2403 = vmatpush.bf16.msra.mxu0 %v2298
    %2404 = vmatpush.bf16.msra.mxu0 %v2295
    %2405 = vmatpush.bf16.msra.mxu0 %v2292
    %2406 = vmatpush.bf16.msra.mxu0 %v2289
    %2407 = vmatpush.bf16.msra.mxu0 %v2286
    %2408 = vmatpush.bf16.msra.mxu0 %v2283
    %2409 = vmatpush.bf16.msra.mxu0 %v2280
    %2410 = vmatmul.bf16.gmra.mxu0 %v1361
    %v2411 = vpop.f32.mrf.mxu0
    %v2412 = vadd.f32 %v2399, %v2411
    %v2413 = vpop.f32.mrf.mxu0
    %2414 = vdwg.mxu0
    %2415 = vmatpush.bf16.msra.mxu0 %v2254
    %2416 = vmatpush.bf16.msra.mxu0 %v2251
    %2417 = vmatpush.bf16.msra.mxu0 %v2248
    %2418 = vmatpush.bf16.msra.mxu0 %v2245
    %2419 = vmatpush.bf16.msra.mxu0 %v2242
    %2420 = vmatpush.bf16.msra.mxu0 %v2239
    %2421 = vmatpush.bf16.msra.mxu0 %v2236
    %2422 = vmatpush.bf16.msra.mxu0 %v2233
    %2423 = vmatmul.bf16.gmra.mxu0 %v1359
    %v2424 = vpop.f32.mrf.mxu0
    %v2425 = vadd.f32 %v1950, %v2424
    %v2426 = vpop.f32.mrf.mxu0
    %2427 = vdwg.mxu0
    %2428 = vmatpush.bf16.msra.mxu0 %v2278
    %2429 = vmatpush.bf16.msra.mxu0 %v2275
    %2430 = vmatpush.bf16.msra.mxu0 %v2272
    %2431 = vmatpush.bf16.msra.mxu0 %v2269
    %2432 = vmatpush.bf16.msra.mxu0 %v2266
    %2433 = vmatpush.bf16.msra.mxu0 %v2263
    %2434 = vmatpush.bf16.msra.mxu0 %v2260
    %2435 = vmatpush.bf16.msra.mxu0 %v2257
    %2436 = vmatmul.bf16.gmra.mxu0 %v1360
    %v2437 = vpop.f32.mrf.mxu0
    %v2438 = vadd.f32 %v2425, %v2437
    %v2439 = vpop.f32.mrf.mxu0
    %2440 = vdwg.mxu0
    %2441 = vmatpush.bf16.msra.mxu0 %v2302
    %2442 = vmatpush.bf16.msra.mxu0 %v2299
    %2443 = vmatpush.bf16.msra.mxu0 %v2296
    %2444 = vmatpush.bf16.msra.mxu0 %v2293
    %2445 = vmatpush.bf16.msra.mxu0 %v2290
    %2446 = vmatpush.bf16.msra.mxu0 %v2287
    %2447 = vmatpush.bf16.msra.mxu0 %v2284
    %2448 = vmatpush.bf16.msra.mxu0 %v2281
    %2449 = vmatmul.bf16.gmra.mxu0 %v1361
    %v2450 = vpop.f32.mrf.mxu0
    %v2451 = vadd.f32 %v2438, %v2450
    %v2452 = vpop.f32.mrf.mxu0
    %2453 = vdwg.mxu0
    %2454 = vmatpush.bf16.msra.mxu0 %v2255
    %2455 = vmatpush.bf16.msra.mxu0 %v2252
    %2456 = vmatpush.bf16.msra.mxu0 %v2249
    %2457 = vmatpush.bf16.msra.mxu0 %v2246
    %2458 = vmatpush.bf16.msra.mxu0 %v2243
    %2459 = vmatpush.bf16.msra.mxu0 %v2240
    %2460 = vmatpush.bf16.msra.mxu0 %v2237
    %2461 = vmatpush.bf16.msra.mxu0 %v2234
    %2462 = vmatmul.bf16.gmra.mxu0 %v1359
    %v2463 = vpop.f32.mrf.mxu0
    %v2464 = vadd.f32 %v1989, %v2463
    %v2465 = vpop.f32.mrf.mxu0
    %2466 = vdwg.mxu0
    %2467 = vmatpush.bf16.msra.mxu0 %v2279
    %2468 = vmatpush.bf16.msra.mxu0 %v2276
    %2469 = vmatpush.bf16.msra.mxu0 %v2273
    %2470 = vmatpush.bf16.msra.mxu0 %v2270
    %2471 = vmatpush.bf16.msra.mxu0 %v2267
    %2472 = vmatpush.bf16.msra.mxu0 %v2264
    %2473 = vmatpush.bf16.msra.mxu0 %v2261
    %2474 = vmatpush.bf16.msra.mxu0 %v2258
    %2475 = vmatmul.bf16.gmra.mxu0 %v1360
    %v2476 = vpop.f32.mrf.mxu0
    %v2477 = vadd.f32 %v2464, %v2476
    %v2478 = vpop.f32.mrf.mxu0
    %2479 = vdwg.mxu0
    %2480 = vmatpush.bf16.msra.mxu0 %v2303
    %2481 = vmatpush.bf16.msra.mxu0 %v2300
    %2482 = vmatpush.bf16.msra.mxu0 %v2297
    %2483 = vmatpush.bf16.msra.mxu0 %v2294
    %2484 = vmatpush.bf16.msra.mxu0 %v2291
    %2485 = vmatpush.bf16.msra.mxu0 %v2288
    %2486 = vmatpush.bf16.msra.mxu0 %v2285
    %2487 = vmatpush.bf16.msra.mxu0 %v2282
    %2488 = vmatmul.bf16.gmra.mxu0 %v1361
    %v2489 = vpop.f32.mrf.mxu0
    %v2490 = vadd.f32 %v2477, %v2489
    %v2491 = vpop.f32.mrf.mxu0
    %2492 = vdwg.mxu0
    %v2493 = vadd.f32 %v2412, %v832
    %v2494 = vadd.f32 %v2451, %v833
    %v2495 = vadd.f32 %v2490, %v834
    %v2496 = vtanh.pop %v2493
    %v2497 = vtanh.pop %v2494
    %v2498 = vtanh.pop %v2495
    %v2499 = vpack.c.bf16 %v2496, %v2496
    %v2500 = vpack.c.bf16 %v2497, %v2497
    %v2501 = vpack.c.bf16 %v2498, %v2498
    %v2502 = vld [vmem:[#allocation3] sm:$0xff]
    %v2503 = vld [vmem:[#allocation3 + $0x8] sm:$0xff]
    %v2504 = vld [vmem:[#allocation3 + $0x10] sm:$0xff]
    %v2505 = vld [vmem:[#allocation14] sm:$0xff]
    %v2506 = vld [vmem:[#allocation14 + $0x8] sm:$0xf]
    %v2507 = vld [vmem:[#allocation14 + $0xc] sm:$0xff]
    %v2508 = vld [vmem:[#allocation14 + $0x14] sm:$0xf]
    %v2509 = vld [vmem:[#allocation14 + $0x18] sm:$0xff]
    %v2510 = vld [vmem:[#allocation14 + $0x20] sm:$0xf]
    %v2511 = vld [vmem:[#allocation14 + $0x24] sm:$0xff]
    %v2512 = vld [vmem:[#allocation14 + $0x2c] sm:$0xf]
    %v2513 = vld [vmem:[#allocation14 + $0x30] sm:$0xff]
    %v2514 = vld [vmem:[#allocation14 + $0x38] sm:$0xf]
    %v2515 = vld [vmem:[#allocation14 + $0x3c] sm:$0xff]
    %v2516 = vld [vmem:[#allocation14 + $0x44] sm:$0xf]
    %v2517 = vld [vmem:[#allocation14 + $0x48] sm:$0xff]
    %v2518 = vld [vmem:[#allocation14 + $0x50] sm:$0xf]
    %v2519 = vld [vmem:[#allocation14 + $0x54] sm:$0xff]
    %v2520 = vld [vmem:[#allocation14 + $0x5c] sm:$0xf]
    %v2521 = vld [vmem:[#allocation14 + $0x60] sm:$0xff]
    %v2522 = vld [vmem:[#allocation14 + $0x68] sm:$0xf]
    %v2523 = vld [vmem:[#allocation14 + $0x6c] sm:$0xff]
    %v2524 = vld [vmem:[#allocation14 + $0x74] sm:$0xf]
    %v2525 = vld [vmem:[#allocation14 + $0x78] sm:$0xff]
    %v2526 = vld [vmem:[#allocation14 + $0x80] sm:$0xf]
    %v2527 = vld [vmem:[#allocation14 + $0x84] sm:$0xff]
    %v2528 = vld [vmem:[#allocation14 + $0x8c] sm:$0xf]
    %v2529 = vld [vmem:[#allocation14 + $0x90] sm:$0xff]
    %v2530 = vld [vmem:[#allocation14 + $0x98] sm:$0xf]
    %v2531 = vld [vmem:[#allocation14 + $0x9c] sm:$0xff]
    %v2532 = vld [vmem:[#allocation14 + $0xa4] sm:$0xf]
    %v2533 = vld [vmem:[#allocation14 + $0xa8] sm:$0xff]
    %v2534 = vld [vmem:[#allocation14 + $0xb0] sm:$0xf]
    %v2535 = vld [vmem:[#allocation14 + $0xb4] sm:$0xff]
    %v2536 = vld [vmem:[#allocation14 + $0xbc] sm:$0xf]
    %v2537 = vld [vmem:[#allocation14 + $0xc0] sm:$0xff]
    %v2538 = vld [vmem:[#allocation14 + $0xc8] sm:$0xf]
    %v2539 = vld [vmem:[#allocation14 + $0xcc] sm:$0xff]
    %v2540 = vld [vmem:[#allocation14 + $0xd4] sm:$0xf]
    %v2541 = vld [vmem:[#allocation14 + $0xd8] sm:$0xff]
    %v2542 = vld [vmem:[#allocation14 + $0xe0] sm:$0xf]
    %v2543 = vld [vmem:[#allocation14 + $0xe4] sm:$0xff]
    %v2544 = vld [vmem:[#allocation14 + $0xec] sm:$0xf]
    %v2545 = vld [vmem:[#allocation14 + $0xf0] sm:$0xff]
    %v2546 = vld [vmem:[#allocation14 + $0xf8] sm:$0xf]
    %v2547 = vld [vmem:[#allocation14 + $0xfc] sm:$0xff]
    %v2548 = vld [vmem:[#allocation14 + $0x104] sm:$0xf]
    %v2549 = vld [vmem:[#allocation14 + $0x108] sm:$0xff]
    %v2550 = vld [vmem:[#allocation14 + $0x110] sm:$0xf]
    %v2551 = vld [vmem:[#allocation14 + $0x114] sm:$0xff]
    %v2552 = vld [vmem:[#allocation14 + $0x11c] sm:$0xf]
    %v2553 = vld [vmem:[#allocation14 + $0x120] sm:$0xff]
    %v2554 = vld [vmem:[#allocation14 + $0x128] sm:$0xf]
    %v2555 = vld [vmem:[#allocation14 + $0x12c] sm:$0xff]
    %v2556 = vld [vmem:[#allocation14 + $0x134] sm:$0xf]
    %v2557 = vld [vmem:[#allocation14 + $0x138] sm:$0xff]
    %v2558 = vld [vmem:[#allocation14 + $0x140] sm:$0xf]
    %v2559 = vld [vmem:[#allocation14 + $0x144] sm:$0xff]
    %v2560 = vld [vmem:[#allocation14 + $0x14c] sm:$0xf]
    %v2561 = vld [vmem:[#allocation14 + $0x150] sm:$0xff]
    %v2562 = vld [vmem:[#allocation14 + $0x158] sm:$0xf]
    %v2563 = vld [vmem:[#allocation14 + $0x15c] sm:$0xff]
    %v2564 = vld [vmem:[#allocation14 + $0x164] sm:$0xf]
    %v2565 = vld [vmem:[#allocation14 + $0x168] sm:$0xff]
    %v2566 = vld [vmem:[#allocation14 + $0x170] sm:$0xf]
    %v2567 = vld [vmem:[#allocation14 + $0x174] sm:$0xff]
    %v2568 = vld [vmem:[#allocation14 + $0x17c] sm:$0xf]
    %v2569 = vld [vmem:[#allocation14 + $0x180] sm:$0xff]
    %v2570 = vld [vmem:[#allocation14 + $0x188] sm:$0xf]
    %v2571 = vld [vmem:[#allocation14 + $0x18c] sm:$0xff]
    %v2572 = vld [vmem:[#allocation14 + $0x194] sm:$0xf]
    %v2573 = vld [vmem:[#allocation14 + $0x198] sm:$0xff]
    %v2574 = vld [vmem:[#allocation14 + $0x1a0] sm:$0xf]
    %v2575 = vld [vmem:[#allocation14 + $0x1a4] sm:$0xff]
    %v2576 = vld [vmem:[#allocation14 + $0x1ac] sm:$0xf]
    %v2577 = vld [vmem:[#allocation14 + $0x1b0] sm:$0xff]
    %v2578 = vld [vmem:[#allocation14 + $0x1b8] sm:$0xf]
    %v2579 = vld [vmem:[#allocation14 + $0x1bc] sm:$0xff]
    %v2580 = vld [vmem:[#allocation14 + $0x1c4] sm:$0xf]
    %v2581 = vld [vmem:[#allocation14 + $0x1c8] sm:$0xff]
    %v2582 = vld [vmem:[#allocation14 + $0x1d0] sm:$0xf]
    %v2583 = vld [vmem:[#allocation14 + $0x1d4] sm:$0xff]
    %v2584 = vld [vmem:[#allocation14 + $0x1dc] sm:$0xf]
    %v2585 = vld [vmem:[#allocation14 + $0x1e0] sm:$0xff]
    %v2586 = vld [vmem:[#allocation14 + $0x1e8] sm:$0xf]
    %v2587 = vld [vmem:[#allocation14 + $0x1ec] sm:$0xff]
    %v2588 = vld [vmem:[#allocation14 + $0x1f4] sm:$0xf]
    %v2589 = vld [vmem:[#allocation14 + $0x1f8] sm:$0xff]
    %v2590 = vld [vmem:[#allocation14 + $0x200] sm:$0xf]
    %v2591 = vld [vmem:[#allocation14 + $0x204] sm:$0xff]
    %v2592 = vld [vmem:[#allocation14 + $0x20c] sm:$0xf]
    %v2593 = vld [vmem:[#allocation14 + $0x210] sm:$0xff]
    %v2594 = vld [vmem:[#allocation14 + $0x218] sm:$0xf]
    %v2595 = vld [vmem:[#allocation14 + $0x21c] sm:$0xff]
    %v2596 = vld [vmem:[#allocation14 + $0x224] sm:$0xf]
    %v2597 = vld [vmem:[#allocation14 + $0x228] sm:$0xff]
    %v2598 = vld [vmem:[#allocation14 + $0x230] sm:$0xf]
    %v2599 = vld [vmem:[#allocation14 + $0x234] sm:$0xff]
    %v2600 = vld [vmem:[#allocation14 + $0x23c] sm:$0xf]
    %v2697 = vunpack.c.l.b16 %v2505
    %v2698 = vunpack.c.h.b16 %v2505
    %v2699 = vunpack.c.l.b16 %v2506
    %v2700 = vunpack.c.l.b16 %v2507
    %v2701 = vunpack.c.h.b16 %v2507
    %v2702 = vunpack.c.l.b16 %v2508
    %v2703 = vunpack.c.l.b16 %v2509
    %v2704 = vunpack.c.h.b16 %v2509
    %v2705 = vunpack.c.l.b16 %v2510
    %v2706 = vunpack.c.l.b16 %v2511
    %v2707 = vunpack.c.h.b16 %v2511
    %v2708 = vunpack.c.l.b16 %v2512
    %v2709 = vunpack.c.l.b16 %v2513
    %v2710 = vunpack.c.h.b16 %v2513
    %v2711 = vunpack.c.l.b16 %v2514
    %v2712 = vunpack.c.l.b16 %v2515
    %v2713 = vunpack.c.h.b16 %v2515
    %v2714 = vunpack.c.l.b16 %v2516
    %v2715 = vunpack.c.l.b16 %v2517
    %v2716 = vunpack.c.h.b16 %v2517
    %v2717 = vunpack.c.l.b16 %v2518
    %v2718 = vunpack.c.l.b16 %v2519
    %v2719 = vunpack.c.h.b16 %v2519
    %v2720 = vunpack.c.l.b16 %v2520
    %v2721 = vunpack.c.l.b16 %v2521
    %v2722 = vunpack.c.h.b16 %v2521
    %v2723 = vunpack.c.l.b16 %v2522
    %v2724 = vunpack.c.l.b16 %v2523
    %v2725 = vunpack.c.h.b16 %v2523
    %v2726 = vunpack.c.l.b16 %v2524
    %v2727 = vunpack.c.l.b16 %v2525
    %v2728 = vunpack.c.h.b16 %v2525
    %v2729 = vunpack.c.l.b16 %v2526
    %v2730 = vunpack.c.l.b16 %v2527
    %v2731 = vunpack.c.h.b16 %v2527
    %v2732 = vunpack.c.l.b16 %v2528
    %v2733 = vunpack.c.l.b16 %v2529
    %v2734 = vunpack.c.h.b16 %v2529
    %v2735 = vunpack.c.l.b16 %v2530
    %v2736 = vunpack.c.l.b16 %v2531
    %v2737 = vunpack.c.h.b16 %v2531
    %v2738 = vunpack.c.l.b16 %v2532
    %v2739 = vunpack.c.l.b16 %v2533
    %v2740 = vunpack.c.h.b16 %v2533
    %v2741 = vunpack.c.l.b16 %v2534
    %v2742 = vunpack.c.l.b16 %v2535
    %v2743 = vunpack.c.h.b16 %v2535
    %v2744 = vunpack.c.l.b16 %v2536
    %v2745 = vunpack.c.l.b16 %v2537
    %v2746 = vunpack.c.h.b16 %v2537
    %v2747 = vunpack.c.l.b16 %v2538
    %v2748 = vunpack.c.l.b16 %v2539
    %v2749 = vunpack.c.h.b16 %v2539
    %v2750 = vunpack.c.l.b16 %v2540
    %v2751 = vunpack.c.l.b16 %v2541
    %v2752 = vunpack.c.h.b16 %v2541
    %v2753 = vunpack.c.l.b16 %v2542
    %v2754 = vunpack.c.l.b16 %v2543
    %v2755 = vunpack.c.h.b16 %v2543
    %v2756 = vunpack.c.l.b16 %v2544
    %v2757 = vunpack.c.l.b16 %v2545
    %v2758 = vunpack.c.h.b16 %v2545
    %v2759 = vunpack.c.l.b16 %v2546
    %v2760 = vunpack.c.l.b16 %v2547
    %v2761 = vunpack.c.h.b16 %v2547
    %v2762 = vunpack.c.l.b16 %v2548
    %v2763 = vunpack.c.l.b16 %v2549
    %v2764 = vunpack.c.h.b16 %v2549
    %v2765 = vunpack.c.l.b16 %v2550
    %v2766 = vunpack.c.l.b16 %v2551
    %v2767 = vunpack.c.h.b16 %v2551
    %v2768 = vunpack.c.l.b16 %v2552
    %v2769 = vunpack.c.l.b16 %v2553
    %v2770 = vunpack.c.h.b16 %v2553
    %v2771 = vunpack.c.l.b16 %v2554
    %v2772 = vunpack.c.l.b16 %v2555
    %v2773 = vunpack.c.h.b16 %v2555
    %v2774 = vunpack.c.l.b16 %v2556
    %v2775 = vunpack.c.l.b16 %v2557
    %v2776 = vunpack.c.h.b16 %v2557
    %v2777 = vunpack.c.l.b16 %v2558
    %v2778 = vunpack.c.l.b16 %v2559
    %v2779 = vunpack.c.h.b16 %v2559
    %v2780 = vunpack.c.l.b16 %v2560
    %v2781 = vunpack.c.l.b16 %v2561
    %v2782 = vunpack.c.h.b16 %v2561
    %v2783 = vunpack.c.l.b16 %v2562
    %v2784 = vunpack.c.l.b16 %v2563
    %v2785 = vunpack.c.h.b16 %v2563
    %v2786 = vunpack.c.l.b16 %v2564
    %v2787 = vunpack.c.l.b16 %v2565
    %v2788 = vunpack.c.h.b16 %v2565
    %v2789 = vunpack.c.l.b16 %v2566
    %v2790 = vunpack.c.l.b16 %v2567
    %v2791 = vunpack.c.h.b16 %v2567
    %v2792 = vunpack.c.l.b16 %v2568
    %v2793 = vunpack.c.l.b16 %v2569
    %v2794 = vunpack.c.h.b16 %v2569
    %v2795 = vunpack.c.l.b16 %v2570
    %v2796 = vunpack.c.l.b16 %v2571
    %v2797 = vunpack.c.h.b16 %v2571
    %v2798 = vunpack.c.l.b16 %v2572
    %v2799 = vunpack.c.l.b16 %v2573
    %v2800 = vunpack.c.h.b16 %v2573
    %v2801 = vunpack.c.l.b16 %v2574
    %v2802 = vunpack.c.l.b16 %v2575
    %v2803 = vunpack.c.h.b16 %v2575
    %v2804 = vunpack.c.l.b16 %v2576
    %v2805 = vunpack.c.l.b16 %v2577
    %v2806 = vunpack.c.h.b16 %v2577
    %v2807 = vunpack.c.l.b16 %v2578
    %v2808 = vunpack.c.l.b16 %v2579
    %v2809 = vunpack.c.h.b16 %v2579
    %v2810 = vunpack.c.l.b16 %v2580
    %v2811 = vunpack.c.l.b16 %v2581
    %v2812 = vunpack.c.h.b16 %v2581
    %v2813 = vunpack.c.l.b16 %v2582
    %v2814 = vunpack.c.l.b16 %v2583
    %v2815 = vunpack.c.h.b16 %v2583
    %v2816 = vunpack.c.l.b16 %v2584
    %v2817 = vunpack.c.l.b16 %v2585
    %v2818 = vunpack.c.h.b16 %v2585
    %v2819 = vunpack.c.l.b16 %v2586
    %v2820 = vunpack.c.l.b16 %v2587
    %v2821 = vunpack.c.h.b16 %v2587
    %v2822 = vunpack.c.l.b16 %v2588
    %v2823 = vunpack.c.l.b16 %v2589
    %v2824 = vunpack.c.h.b16 %v2589
    %v2825 = vunpack.c.l.b16 %v2590
    %v2826 = vunpack.c.l.b16 %v2591
    %v2827 = vunpack.c.h.b16 %v2591
    %v2828 = vunpack.c.l.b16 %v2592
    %v2829 = vunpack.c.l.b16 %v2593
    %v2830 = vunpack.c.h.b16 %v2593
    %v2831 = vunpack.c.l.b16 %v2594
    %v2832 = vunpack.c.l.b16 %v2595
    %v2833 = vunpack.c.h.b16 %v2595
    %v2834 = vunpack.c.l.b16 %v2596
    %v2835 = vunpack.c.l.b16 %v2597
    %v2836 = vunpack.c.h.b16 %v2597
    %v2837 = vunpack.c.l.b16 %v2598
    %v2838 = vunpack.c.l.b16 %v2599
    %v2839 = vunpack.c.h.b16 %v2599
    %v2840 = vunpack.c.l.b16 %v2600
    %v2841 = vpack.c.b16 %v2700, %v2697
    %v2842 = vpack.c.b16 %v2701, %v2698
    %v2843 = vpack.c.b16 %v2702, %v2699
    %v2844 = vpack.c.b16 %v2706, %v2703
    %v2845 = vpack.c.b16 %v2707, %v2704
    %v2846 = vpack.c.b16 %v2708, %v2705
    %v2847 = vpack.c.b16 %v2712, %v2709
    %v2848 = vpack.c.b16 %v2713, %v2710
    %v2849 = vpack.c.b16 %v2714, %v2711
    %v2850 = vpack.c.b16 %v2718, %v2715
    %v2851 = vpack.c.b16 %v2719, %v2716
    %v2852 = vpack.c.b16 %v2720, %v2717
    %v2853 = vpack.c.b16 %v2724, %v2721
    %v2854 = vpack.c.b16 %v2725, %v2722
    %v2855 = vpack.c.b16 %v2726, %v2723
    %v2856 = vpack.c.b16 %v2730, %v2727
    %v2857 = vpack.c.b16 %v2731, %v2728
    %v2858 = vpack.c.b16 %v2732, %v2729
    %v2859 = vpack.c.b16 %v2736, %v2733
    %v2860 = vpack.c.b16 %v2737, %v2734
    %v2861 = vpack.c.b16 %v2738, %v2735
    %v2862 = vpack.c.b16 %v2742, %v2739
    %v2863 = vpack.c.b16 %v2743, %v2740
    %v2864 = vpack.c.b16 %v2744, %v2741
    %v2865 = vpack.c.b16 %v2748, %v2745
    %v2866 = vpack.c.b16 %v2749, %v2746
    %v2867 = vpack.c.b16 %v2750, %v2747
    %v2868 = vpack.c.b16 %v2754, %v2751
    %v2869 = vpack.c.b16 %v2755, %v2752
    %v2870 = vpack.c.b16 %v2756, %v2753
    %v2871 = vpack.c.b16 %v2760, %v2757
    %v2872 = vpack.c.b16 %v2761, %v2758
    %v2873 = vpack.c.b16 %v2762, %v2759
    %v2874 = vpack.c.b16 %v2766, %v2763
    %v2875 = vpack.c.b16 %v2767, %v2764
    %v2876 = vpack.c.b16 %v2768, %v2765
    %v2877 = vpack.c.b16 %v2772, %v2769
    %v2878 = vpack.c.b16 %v2773, %v2770
    %v2879 = vpack.c.b16 %v2774, %v2771
    %v2880 = vpack.c.b16 %v2778, %v2775
    %v2881 = vpack.c.b16 %v2779, %v2776
    %v2882 = vpack.c.b16 %v2780, %v2777
    %v2883 = vpack.c.b16 %v2784, %v2781
    %v2884 = vpack.c.b16 %v2785, %v2782
    %v2885 = vpack.c.b16 %v2786, %v2783
    %v2886 = vpack.c.b16 %v2790, %v2787
    %v2887 = vpack.c.b16 %v2791, %v2788
    %v2888 = vpack.c.b16 %v2792, %v2789
    %v2889 = vpack.c.b16 %v2796, %v2793
    %v2890 = vpack.c.b16 %v2797, %v2794
    %v2891 = vpack.c.b16 %v2798, %v2795
    %v2892 = vpack.c.b16 %v2802, %v2799
    %v2893 = vpack.c.b16 %v2803, %v2800
    %v2894 = vpack.c.b16 %v2804, %v2801
    %v2895 = vpack.c.b16 %v2808, %v2805
    %v2896 = vpack.c.b16 %v2809, %v2806
    %v2897 = vpack.c.b16 %v2810, %v2807
    %v2898 = vpack.c.b16 %v2814, %v2811
    %v2899 = vpack.c.b16 %v2815, %v2812
    %v2900 = vpack.c.b16 %v2816, %v2813
    %v2901 = vpack.c.b16 %v2820, %v2817
    %v2902 = vpack.c.b16 %v2821, %v2818
    %v2903 = vpack.c.b16 %v2822, %v2819
    %v2904 = vpack.c.b16 %v2826, %v2823
    %v2905 = vpack.c.b16 %v2827, %v2824
    %v2906 = vpack.c.b16 %v2828, %v2825
    %v2907 = vpack.c.b16 %v2832, %v2829
    %v2908 = vpack.c.b16 %v2833, %v2830
    %v2909 = vpack.c.b16 %v2834, %v2831
    %v2910 = vpack.c.b16 %v2838, %v2835
    %v2911 = vpack.c.b16 %v2839, %v2836
    %v2912 = vpack.c.b16 %v2840, %v2837
    %2985 = vmatpush.bf16.msra.mxu0 %v2862
    %2986 = vmatpush.bf16.msra.mxu0 %v2859
    %2987 = vmatpush.bf16.msra.mxu0 %v2856
    %2988 = vmatpush.bf16.msra.mxu0 %v2853
    %2989 = vmatpush.bf16.msra.mxu0 %v2850
    %2990 = vmatpush.bf16.msra.mxu0 %v2847
    %2991 = vmatpush.bf16.msra.mxu0 %v2844
    %2992 = vmatpush.bf16.msra.mxu0 %v2841
    %2993 = vmatmul.bf16.gmra.mxu0 %v2499
    %v2994 = vpop.f32.mrf.mxu0
    %v2995 = vadd.f32 0.0, %v2994
    %v2996 = vpop.f32.mrf.mxu0
    %2997 = vdwg.mxu0
    %2998 = vmatpush.bf16.msra.mxu0 %v2886
    %2999 = vmatpush.bf16.msra.mxu0 %v2883
    %3000 = vmatpush.bf16.msra.mxu0 %v2880
    %3001 = vmatpush.bf16.msra.mxu0 %v2877
    %3002 = vmatpush.bf16.msra.mxu0 %v2874
    %3003 = vmatpush.bf16.msra.mxu0 %v2871
    %3004 = vmatpush.bf16.msra.mxu0 %v2868
    %3005 = vmatpush.bf16.msra.mxu0 %v2865
    %3006 = vmatmul.bf16.gmra.mxu0 %v2500
    %v3007 = vpop.f32.mrf.mxu0
    %v3008 = vadd.f32 %v2995, %v3007
    %v3009 = vpop.f32.mrf.mxu0
    %3010 = vdwg.mxu0
    %3011 = vmatpush.bf16.msra.mxu0 %v2910
    %3012 = vmatpush.bf16.msra.mxu0 %v2907
    %3013 = vmatpush.bf16.msra.mxu0 %v2904
    %3014 = vmatpush.bf16.msra.mxu0 %v2901
    %3015 = vmatpush.bf16.msra.mxu0 %v2898
    %3016 = vmatpush.bf16.msra.mxu0 %v2895
    %3017 = vmatpush.bf16.msra.mxu0 %v2892
    %3018 = vmatpush.bf16.msra.mxu0 %v2889
    %3019 = vmatmul.bf16.gmra.mxu0 %v2501
    %v3020 = vpop.f32.mrf.mxu0
    %v3021 = vadd.f32 %v3008, %v3020
    %v3022 = vpop.f32.mrf.mxu0
    %3023 = vdwg.mxu0
    %3024 = vmatpush.bf16.msra.mxu0 %v2863
    %3025 = vmatpush.bf16.msra.mxu0 %v2860
    %3026 = vmatpush.bf16.msra.mxu0 %v2857
    %3027 = vmatpush.bf16.msra.mxu0 %v2854
    %3028 = vmatpush.bf16.msra.mxu0 %v2851
    %3029 = vmatpush.bf16.msra.mxu0 %v2848
    %3030 = vmatpush.bf16.msra.mxu0 %v2845
    %3031 = vmatpush.bf16.msra.mxu0 %v2842
    %3032 = vmatmul.bf16.gmra.mxu0 %v2499
    %v3033 = vpop.f32.mrf.mxu0
    %v3034 = vadd.f32 0.0, %v3033
    %v3035 = vpop.f32.mrf.mxu0
    %3036 = vdwg.mxu0
    %3037 = vmatpush.bf16.msra.mxu0 %v2887
    %3038 = vmatpush.bf16.msra.mxu0 %v2884
    %3039 = vmatpush.bf16.msra.mxu0 %v2881
    %3040 = vmatpush.bf16.msra.mxu0 %v2878
    %3041 = vmatpush.bf16.msra.mxu0 %v2875
    %3042 = vmatpush.bf16.msra.mxu0 %v2872
    %3043 = vmatpush.bf16.msra.mxu0 %v2869
    %3044 = vmatpush.bf16.msra.mxu0 %v2866
    %3045 = vmatmul.bf16.gmra.mxu0 %v2500
    %v3046 = vpop.f32.mrf.mxu0
    %v3047 = vadd.f32 %v3034, %v3046
    %v3048 = vpop.f32.mrf.mxu0
    %3049 = vdwg.mxu0
    %3050 = vmatpush.bf16.msra.mxu0 %v2911
    %3051 = vmatpush.bf16.msra.mxu0 %v2908
    %3052 = vmatpush.bf16.msra.mxu0 %v2905
    %3053 = vmatpush.bf16.msra.mxu0 %v2902
    %3054 = vmatpush.bf16.msra.mxu0 %v2899
    %3055 = vmatpush.bf16.msra.mxu0 %v2896
    %3056 = vmatpush.bf16.msra.mxu0 %v2893
    %3057 = vmatpush.bf16.msra.mxu0 %v2890
    %3058 = vmatmul.bf16.gmra.mxu0 %v2501
    %v3059 = vpop.f32.mrf.mxu0
    %v3060 = vadd.f32 %v3047, %v3059
    %v3061 = vpop.f32.mrf.mxu0
    %3062 = vdwg.mxu0
    %3063 = vmatpush.bf16.msra.mxu0 %v2864
    %3064 = vmatpush.bf16.msra.mxu0 %v2861
    %3065 = vmatpush.bf16.msra.mxu0 %v2858
    %3066 = vmatpush.bf16.msra.mxu0 %v2855
    %3067 = vmatpush.bf16.msra.mxu0 %v2852
    %3068 = vmatpush.bf16.msra.mxu0 %v2849
    %3069 = vmatpush.bf16.msra.mxu0 %v2846
    %3070 = vmatpush.bf16.msra.mxu0 %v2843
    %3071 = vmatmul.bf16.gmra.mxu0 %v2499
    %v3072 = vpop.f32.mrf.mxu0
    %v3073 = vadd.f32 0.0, %v3072
    %v3074 = vpop.f32.mrf.mxu0
    %3075 = vdwg.mxu0
    %3076 = vmatpush.bf16.msra.mxu0 %v2888
    %3077 = vmatpush.bf16.msra.mxu0 %v2885
    %3078 = vmatpush.bf16.msra.mxu0 %v2882
    %3079 = vmatpush.bf16.msra.mxu0 %v2879
    %3080 = vmatpush.bf16.msra.mxu0 %v2876
    %3081 = vmatpush.bf16.msra.mxu0 %v2873
    %3082 = vmatpush.bf16.msra.mxu0 %v2870
    %3083 = vmatpush.bf16.msra.mxu0 %v2867
    %3084 = vmatmul.bf16.gmra.mxu0 %v2500
    %v3085 = vpop.f32.mrf.mxu0
    %v3086 = vadd.f32 %v3073, %v3085
    %v3087 = vpop.f32.mrf.mxu0
    %3088 = vdwg.mxu0
    %3089 = vmatpush.bf16.msra.mxu0 %v2912
    %3090 = vmatpush.bf16.msra.mxu0 %v2909
    %3091 = vmatpush.bf16.msra.mxu0 %v2906
    %3092 = vmatpush.bf16.msra.mxu0 %v2903
    %3093 = vmatpush.bf16.msra.mxu0 %v2900
    %3094 = vmatpush.bf16.msra.mxu0 %v2897
    %3095 = vmatpush.bf16.msra.mxu0 %v2894
    %3096 = vmatpush.bf16.msra.mxu0 %v2891
    %3097 = vmatmul.bf16.gmra.mxu0 %v2501
    %v3098 = vpop.f32.mrf.mxu0
    %v3099 = vadd.f32 %v3086, %v3098
    %v3100 = vpop.f32.mrf.mxu0
    %3101 = vdwg.mxu0
    %v3102 = vadd.f32 %v2502, %v3021
    %v3103 = vadd.f32 %v2503, %v3060
    %v3104 = vadd.f32 %v2504, %v3099
    %3105 = vst [vmem:[#allocation3] sm:$0xff] %v3102
    %3106 = vst [vmem:[#allocation3 + $0x8] sm:$0xff] %v3103
    %3107 = vst [vmem:[#allocation3 + $0x10] sm:$0xff] %v3104
    %v3108 = vld [vmem:[#allocation2 + $0x30] sm:$0xff]
    %v3109 = vld [vmem:[#allocation2 + $0x38] sm:$0xff]
    %v3110 = vld [vmem:[#allocation2 + $0x40] sm:$0xff]
    %3111 = vmatpush.bf16.msra.mxu0 %v1113
    %3112 = vmatpush.bf16.msra.mxu0 %v1110
    %3113 = vmatpush.bf16.msra.mxu0 %v1107
    %3114 = vmatpush.bf16.msra.mxu0 %v1104
    %3115 = vmatpush.bf16.msra.mxu0 %v1101
    %3116 = vmatpush.bf16.msra.mxu0 %v1098
    %3117 = vmatpush.bf16.msra.mxu0 %v1095
    %3118 = vmatpush.bf16.msra.mxu0 %v1092
    %3119 = vmatmul.bf16.gmra.mxu0 %v1488
    %v3120 = vpop.f32.mrf.mxu0
    %v3121 = vadd.f32 0.0, %v3120
    %v3122 = vpop.f32.mrf.mxu0
    %3123 = vdwg.mxu0
    %3124 = vmatpush.bf16.msra.mxu0 %v1137
    %3125 = vmatpush.bf16.msra.mxu0 %v1134
    %3126 = vmatpush.bf16.msra.mxu0 %v1131
    %3127 = vmatpush.bf16.msra.mxu0 %v1128
    %3128 = vmatpush.bf16.msra.mxu0 %v1125
    %3129 = vmatpush.bf16.msra.mxu0 %v1122
    %3130 = vmatpush.bf16.msra.mxu0 %v1119
    %3131 = vmatpush.bf16.msra.mxu0 %v1116
    %3132 = vmatmul.bf16.gmra.mxu0 %v1489
    %v3133 = vpop.f32.mrf.mxu0
    %v3134 = vadd.f32 %v3121, %v3133
    %v3135 = vpop.f32.mrf.mxu0
    %3136 = vdwg.mxu0
    %3137 = vmatpush.bf16.msra.mxu0 %v1161
    %3138 = vmatpush.bf16.msra.mxu0 %v1158
    %3139 = vmatpush.bf16.msra.mxu0 %v1155
    %3140 = vmatpush.bf16.msra.mxu0 %v1152
    %3141 = vmatpush.bf16.msra.mxu0 %v1149
    %3142 = vmatpush.bf16.msra.mxu0 %v1146
    %3143 = vmatpush.bf16.msra.mxu0 %v1143
    %3144 = vmatpush.bf16.msra.mxu0 %v1140
    %3145 = vmatmul.bf16.gmra.mxu0 %v1490
    %v3146 = vpop.f32.mrf.mxu0
    %v3147 = vadd.f32 %v3134, %v3146
    %v3148 = vpop.f32.mrf.mxu0
    %3149 = vdwg.mxu0
    %3150 = vmatpush.bf16.msra.mxu0 %v1114
    %3151 = vmatpush.bf16.msra.mxu0 %v1111
    %3152 = vmatpush.bf16.msra.mxu0 %v1108
    %3153 = vmatpush.bf16.msra.mxu0 %v1105
    %3154 = vmatpush.bf16.msra.mxu0 %v1102
    %3155 = vmatpush.bf16.msra.mxu0 %v1099
    %3156 = vmatpush.bf16.msra.mxu0 %v1096
    %3157 = vmatpush.bf16.msra.mxu0 %v1093
    %3158 = vmatmul.bf16.gmra.mxu0 %v1488
    %v3159 = vpop.f32.mrf.mxu0
    %v3160 = vadd.f32 0.0, %v3159
    %v3161 = vpop.f32.mrf.mxu0
    %3162 = vdwg.mxu0
    %3163 = vmatpush.bf16.msra.mxu0 %v1138
    %3164 = vmatpush.bf16.msra.mxu0 %v1135
    %3165 = vmatpush.bf16.msra.mxu0 %v1132
    %3166 = vmatpush.bf16.msra.mxu0 %v1129
    %3167 = vmatpush.bf16.msra.mxu0 %v1126
    %3168 = vmatpush.bf16.msra.mxu0 %v1123
    %3169 = vmatpush.bf16.msra.mxu0 %v1120
    %3170 = vmatpush.bf16.msra.mxu0 %v1117
    %3171 = vmatmul.bf16.gmra.mxu0 %v1489
    %v3172 = vpop.f32.mrf.mxu0
    %v3173 = vadd.f32 %v3160, %v3172
    %v3174 = vpop.f32.mrf.mxu0
    %3175 = vdwg.mxu0
    %3176 = vmatpush.bf16.msra.mxu0 %v1162
    %3177 = vmatpush.bf16.msra.mxu0 %v1159
    %3178 = vmatpush.bf16.msra.mxu0 %v1156
    %3179 = vmatpush.bf16.msra.mxu0 %v1153
    %3180 = vmatpush.bf16.msra.mxu0 %v1150
    %3181 = vmatpush.bf16.msra.mxu0 %v1147
    %3182 = vmatpush.bf16.msra.mxu0 %v1144
    %3183 = vmatpush.bf16.msra.mxu0 %v1141
    %3184 = vmatmul.bf16.gmra.mxu0 %v1490
    %v3185 = vpop.f32.mrf.mxu0
    %v3186 = vadd.f32 %v3173, %v3185
    %v3187 = vpop.f32.mrf.mxu0
    %3188 = vdwg.mxu0
    %3189 = vmatpush.bf16.msra.mxu0 %v1115
    %3190 = vmatpush.bf16.msra.mxu0 %v1112
    %3191 = vmatpush.bf16.msra.mxu0 %v1109
    %3192 = vmatpush.bf16.msra.mxu0 %v1106
    %3193 = vmatpush.bf16.msra.mxu0 %v1103
    %3194 = vmatpush.bf16.msra.mxu0 %v1100
    %3195 = vmatpush.bf16.msra.mxu0 %v1097
    %3196 = vmatpush.bf16.msra.mxu0 %v1094
    %3197 = vmatmul.bf16.gmra.mxu0 %v1488
    %v3198 = vpop.f32.mrf.mxu0
    %v3199 = vadd.f32 0.0, %v3198
    %v3200 = vpop.f32.mrf.mxu0
    %3201 = vdwg.mxu0
    %3202 = vmatpush.bf16.msra.mxu0 %v1139
    %3203 = vmatpush.bf16.msra.mxu0 %v1136
    %3204 = vmatpush.bf16.msra.mxu0 %v1133
    %3205 = vmatpush.bf16.msra.mxu0 %v1130
    %3206 = vmatpush.bf16.msra.mxu0 %v1127
    %3207 = vmatpush.bf16.msra.mxu0 %v1124
    %3208 = vmatpush.bf16.msra.mxu0 %v1121
    %3209 = vmatpush.bf16.msra.mxu0 %v1118
    %3210 = vmatmul.bf16.gmra.mxu0 %v1489
    %v3211 = vpop.f32.mrf.mxu0
    %v3212 = vadd.f32 %v3199, %v3211
    %v3213 = vpop.f32.mrf.mxu0
    %3214 = vdwg.mxu0
    %3215 = vmatpush.bf16.msra.mxu0 %v1163
    %3216 = vmatpush.bf16.msra.mxu0 %v1160
    %3217 = vmatpush.bf16.msra.mxu0 %v1157
    %3218 = vmatpush.bf16.msra.mxu0 %v1154
    %3219 = vmatpush.bf16.msra.mxu0 %v1151
    %3220 = vmatpush.bf16.msra.mxu0 %v1148
    %3221 = vmatpush.bf16.msra.mxu0 %v1145
    %3222 = vmatpush.bf16.msra.mxu0 %v1142
    %3223 = vmatmul.bf16.gmra.mxu0 %v1490
    %v3224 = vpop.f32.mrf.mxu0
    %v3225 = vadd.f32 %v3212, %v3224
    %v3226 = vpop.f32.mrf.mxu0
    %3227 = vdwg.mxu0
    %v3228 = vadd.f32 %v3108, %v3147
    %v3229 = vadd.f32 %v3109, %v3186
    %v3230 = vadd.f32 %v3110, %v3225
    %v3231 = vtanh.pop %v3228
    %v3232 = vtanh.pop %v3229
    %v3233 = vtanh.pop %v3230
    %v3234 = vpack.c.bf16 %v3231, %v3231
    %v3235 = vpack.c.bf16 %v3232, %v3232
    %v3236 = vpack.c.bf16 %v3233, %v3233
    %3237 = vmatpush.bf16.msra.mxu0 %v1752
    %3238 = vmatpush.bf16.msra.mxu0 %v1749
    %3239 = vmatpush.bf16.msra.mxu0 %v1746
    %3240 = vmatpush.bf16.msra.mxu0 %v1743
    %3241 = vmatpush.bf16.msra.mxu0 %v1740
    %3242 = vmatpush.bf16.msra.mxu0 %v1737
    %3243 = vmatpush.bf16.msra.mxu0 %v1734
    %3244 = vmatpush.bf16.msra.mxu0 %v1731
    %3245 = vmatmul.bf16.gmra.mxu0 %v2499
    %v3246 = vpop.f32.mrf.mxu0
    %v3247 = vadd.f32 0.0, %v3246
    %v3248 = vpop.f32.mrf.mxu0
    %3249 = vdwg.mxu0
    %3250 = vmatpush.bf16.msra.mxu0 %v1776
    %3251 = vmatpush.bf16.msra.mxu0 %v1773
    %3252 = vmatpush.bf16.msra.mxu0 %v1770
    %3253 = vmatpush.bf16.msra.mxu0 %v1767
    %3254 = vmatpush.bf16.msra.mxu0 %v1764
    %3255 = vmatpush.bf16.msra.mxu0 %v1761
    %3256 = vmatpush.bf16.msra.mxu0 %v1758
    %3257 = vmatpush.bf16.msra.mxu0 %v1755
    %3258 = vmatmul.bf16.gmra.mxu0 %v2500
    %v3259 = vpop.f32.mrf.mxu0
    %v3260 = vadd.f32 %v3247, %v3259
    %v3261 = vpop.f32.mrf.mxu0
    %3262 = vdwg.mxu0
    %3263 = vmatpush.bf16.msra.mxu0 %v1800
    %3264 = vmatpush.bf16.msra.mxu0 %v1797
    %3265 = vmatpush.bf16.msra.mxu0 %v1794
    %3266 = vmatpush.bf16.msra.mxu0 %v1791
    %3267 = vmatpush.bf16.msra.mxu0 %v1788
    %3268 = vmatpush.bf16.msra.mxu0 %v1785
    %3269 = vmatpush.bf16.msra.mxu0 %v1782
    %3270 = vmatpush.bf16.msra.mxu0 %v1779
    %3271 = vmatmul.bf16.gmra.mxu0 %v2501
    %v3272 = vpop.f32.mrf.mxu0
    %v3273 = vadd.f32 %v3260, %v3272
    %v3274 = vpop.f32.mrf.mxu0
    %3275 = vdwg.mxu0
    %3276 = vmatpush.bf16.msra.mxu0 %v1753
    %3277 = vmatpush.bf16.msra.mxu0 %v1750
    %3278 = vmatpush.bf16.msra.mxu0 %v1747
    %3279 = vmatpush.bf16.msra.mxu0 %v1744
    %3280 = vmatpush.bf16.msra.mxu0 %v1741
    %3281 = vmatpush.bf16.msra.mxu0 %v1738
    %3282 = vmatpush.bf16.msra.mxu0 %v1735
    %3283 = vmatpush.bf16.msra.mxu0 %v1732
    %3284 = vmatmul.bf16.gmra.mxu0 %v2499
    %v3285 = vpop.f32.mrf.mxu0
    %v3286 = vadd.f32 0.0, %v3285
    %v3287 = vpop.f32.mrf.mxu0
    %3288 = vdwg.mxu0
    %3289 = vmatpush.bf16.msra.mxu0 %v1777
    %3290 = vmatpush.bf16.msra.mxu0 %v1774
    %3291 = vmatpush.bf16.msra.mxu0 %v1771
    %3292 = vmatpush.bf16.msra.mxu0 %v1768
    %3293 = vmatpush.bf16.msra.mxu0 %v1765
    %3294 = vmatpush.bf16.msra.mxu0 %v1762
    %3295 = vmatpush.bf16.msra.mxu0 %v1759
    %3296 = vmatpush.bf16.msra.mxu0 %v1756
    %3297 = vmatmul.bf16.gmra.mxu0 %v2500
    %v3298 = vpop.f32.mrf.mxu0
    %v3299 = vadd.f32 %v3286, %v3298
    %v3300 = vpop.f32.mrf.mxu0
    %3301 = vdwg.mxu0
    %3302 = vmatpush.bf16.msra.mxu0 %v1801
    %3303 = vmatpush.bf16.msra.mxu0 %v1798
    %3304 = vmatpush.bf16.msra.mxu0 %v1795
    %3305 = vmatpush.bf16.msra.mxu0 %v1792
    %3306 = vmatpush.bf16.msra.mxu0 %v1789
    %3307 = vmatpush.bf16.msra.mxu0 %v1786
    %3308 = vmatpush.bf16.msra.mxu0 %v1783
    %3309 = vmatpush.bf16.msra.mxu0 %v1780
    %3310 = vmatmul.bf16.gmra.mxu0 %v2501
    %v3311 = vpop.f32.mrf.mxu0
    %v3312 = vadd.f32 %v3299, %v3311
    %v3313 = vpop.f32.mrf.mxu0
    %3314 = vdwg.mxu0
    %3315 = vmatpush.bf16.msra.mxu0 %v1754
    %3316 = vmatpush.bf16.msra.mxu0 %v1751
    %3317 = vmatpush.bf16.msra.mxu0 %v1748
    %3318 = vmatpush.bf16.msra.mxu0 %v1745
    %3319 = vmatpush.bf16.msra.mxu0 %v1742
    %3320 = vmatpush.bf16.msra.mxu0 %v1739
    %3321 = vmatpush.bf16.msra.mxu0 %v1736
    %3322 = vmatpush.bf16.msra.mxu0 %v1733
    %3323 = vmatmul.bf16.gmra.mxu0 %v2499
    %v3324 = vpop.f32.mrf.mxu0
    %v3325 = vadd.f32 0.0, %v3324
    %v3326 = vpop.f32.mrf.mxu0
    %3327 = vdwg.mxu0
    %3328 = vmatpush.bf16.msra.mxu0 %v1778
    %3329 = vmatpush.bf16.msra.mxu0 %v1775
    %3330 = vmatpush.bf16.msra.mxu0 %v1772
    %3331 = vmatpush.bf16.msra.mxu0 %v1769
    %3332 = vmatpush.bf16.msra.mxu0 %v1766
    %3333 = vmatpush.bf16.msra.mxu0 %v1763
    %3334 = vmatpush.bf16.msra.mxu0 %v1760
    %3335 = vmatpush.bf16.msra.mxu0 %v1757
    %3336 = vmatmul.bf16.gmra.mxu0 %v2500
    %v3337 = vpop.f32.mrf.mxu0
    %v3338 = vadd.f32 %v3325, %v3337
    %v3339 = vpop.f32.mrf.mxu0
    %3340 = vdwg.mxu0
    %3341 = vmatpush.bf16.msra.mxu0 %v1802
    %3342 = vmatpush.bf16.msra.mxu0 %v1799
    %3343 = vmatpush.bf16.msra.mxu0 %v1796
    %3344 = vmatpush.bf16.msra.mxu0 %v1793
    %3345 = vmatpush.bf16.msra.mxu0 %v1790
    %3346 = vmatpush.bf16.msra.mxu0 %v1787
    %3347 = vmatpush.bf16.msra.mxu0 %v1784
    %3348 = vmatpush.bf16.msra.mxu0 %v1781
    %3349 = vmatmul.bf16.gmra.mxu0 %v2501
    %v3350 = vpop.f32.mrf.mxu0
    %v3351 = vadd.f32 %v3338, %v3350
    %v3352 = vpop.f32.mrf.mxu0
    %3353 = vdwg.mxu0
    %3354 = vmatpush.bf16.msra.mxu0 %v2253
    %3355 = vmatpush.bf16.msra.mxu0 %v2250
    %3356 = vmatpush.bf16.msra.mxu0 %v2247
    %3357 = vmatpush.bf16.msra.mxu0 %v2244
    %3358 = vmatpush.bf16.msra.mxu0 %v2241
    %3359 = vmatpush.bf16.msra.mxu0 %v2238
    %3360 = vmatpush.bf16.msra.mxu0 %v2235
    %3361 = vmatpush.bf16.msra.mxu0 %v2232
    %3362 = vmatmul.bf16.gmra.mxu0 %v1488
    %v3363 = vpop.f32.mrf.mxu0
    %v3364 = vadd.f32 %v3273, %v3363
    %v3365 = vpop.f32.mrf.mxu0
    %3366 = vdwg.mxu0
    %3367 = vmatpush.bf16.msra.mxu0 %v2277
    %3368 = vmatpush.bf16.msra.mxu0 %v2274
    %3369 = vmatpush.bf16.msra.mxu0 %v2271
    %3370 = vmatpush.bf16.msra.mxu0 %v2268
    %3371 = vmatpush.bf16.msra.mxu0 %v2265
    %3372 = vmatpush.bf16.msra.mxu0 %v2262
    %3373 = vmatpush.bf16.msra.mxu0 %v2259
    %3374 = vmatpush.bf16.msra.mxu0 %v2256
    %3375 = vmatmul.bf16.gmra.mxu0 %v1489
    %v3376 = vpop.f32.mrf.mxu0
    %v3377 = vadd.f32 %v3364, %v3376
    %v3378 = vpop.f32.mrf.mxu0
    %3379 = vdwg.mxu0
    %3380 = vmatpush.bf16.msra.mxu0 %v2301
    %3381 = vmatpush.bf16.msra.mxu0 %v2298
    %3382 = vmatpush.bf16.msra.mxu0 %v2295
    %3383 = vmatpush.bf16.msra.mxu0 %v2292
    %3384 = vmatpush.bf16.msra.mxu0 %v2289
    %3385 = vmatpush.bf16.msra.mxu0 %v2286
    %3386 = vmatpush.bf16.msra.mxu0 %v2283
    %3387 = vmatpush.bf16.msra.mxu0 %v2280
    %3388 = vmatmul.bf16.gmra.mxu0 %v1490
    %v3389 = vpop.f32.mrf.mxu0
    %v3390 = vadd.f32 %v3377, %v3389
    %v3391 = vpop.f32.mrf.mxu0
    %3392 = vdwg.mxu0
    %3393 = vmatpush.bf16.msra.mxu0 %v2254
    %3394 = vmatpush.bf16.msra.mxu0 %v2251
    %3395 = vmatpush.bf16.msra.mxu0 %v2248
    %3396 = vmatpush.bf16.msra.mxu0 %v2245
    %3397 = vmatpush.bf16.msra.mxu0 %v2242
    %3398 = vmatpush.bf16.msra.mxu0 %v2239
    %3399 = vmatpush.bf16.msra.mxu0 %v2236
    %3400 = vmatpush.bf16.msra.mxu0 %v2233
    %3401 = vmatmul.bf16.gmra.mxu0 %v1488
    %v3402 = vpop.f32.mrf.mxu0
    %v3403 = vadd.f32 %v3312, %v3402
    %v3404 = vpop.f32.mrf.mxu0
    %3405 = vdwg.mxu0
    %3406 = vmatpush.bf16.msra.mxu0 %v2278
    %3407 = vmatpush.bf16.msra.mxu0 %v2275
    %3408 = vmatpush.bf16.msra.mxu0 %v2272
    %3409 = vmatpush.bf16.msra.mxu0 %v2269
    %3410 = vmatpush.bf16.msra.mxu0 %v2266
    %3411 = vmatpush.bf16.msra.mxu0 %v2263
    %3412 = vmatpush.bf16.msra.mxu0 %v2260
    %3413 = vmatpush.bf16.msra.mxu0 %v2257
    %3414 = vmatmul.bf16.gmra.mxu0 %v1489
    %v3415 = vpop.f32.mrf.mxu0
    %v3416 = vadd.f32 %v3403, %v3415
    %v3417 = vpop.f32.mrf.mxu0
    %3418 = vdwg.mxu0
    %3419 = vmatpush.bf16.msra.mxu0 %v2302
    %3420 = vmatpush.bf16.msra.mxu0 %v2299
    %3421 = vmatpush.bf16.msra.mxu0 %v2296
    %3422 = vmatpush.bf16.msra.mxu0 %v2293
    %3423 = vmatpush.bf16.msra.mxu0 %v2290
    %3424 = vmatpush.bf16.msra.mxu0 %v2287
    %3425 = vmatpush.bf16.msra.mxu0 %v2284
    %3426 = vmatpush.bf16.msra.mxu0 %v2281
    %3427 = vmatmul.bf16.gmra.mxu0 %v1490
    %v3428 = vpop.f32.mrf.mxu0
    %v3429 = vadd.f32 %v3416, %v3428
    %v3430 = vpop.f32.mrf.mxu0
    %3431 = vdwg.mxu0
    %3432 = vmatpush.bf16.msra.mxu0 %v2255
    %3433 = vmatpush.bf16.msra.mxu0 %v2252
    %3434 = vmatpush.bf16.msra.mxu0 %v2249
    %3435 = vmatpush.bf16.msra.mxu0 %v2246
    %3436 = vmatpush.bf16.msra.mxu0 %v2243
    %3437 = vmatpush.bf16.msra.mxu0 %v2240
    %3438 = vmatpush.bf16.msra.mxu0 %v2237
    %3439 = vmatpush.bf16.msra.mxu0 %v2234
    %3440 = vmatmul.bf16.gmra.mxu0 %v1488
    %v3441 = vpop.f32.mrf.mxu0
    %v3442 = vadd.f32 %v3351, %v3441
    %v3443 = vpop.f32.mrf.mxu0
    %3444 = vdwg.mxu0
    %3445 = vmatpush.bf16.msra.mxu0 %v2279
    %3446 = vmatpush.bf16.msra.mxu0 %v2276
    %3447 = vmatpush.bf16.msra.mxu0 %v2273
    %3448 = vmatpush.bf16.msra.mxu0 %v2270
    %3449 = vmatpush.bf16.msra.mxu0 %v2267
    %3450 = vmatpush.bf16.msra.mxu0 %v2264
    %3451 = vmatpush.bf16.msra.mxu0 %v2261
    %3452 = vmatpush.bf16.msra.mxu0 %v2258
    %3453 = vmatmul.bf16.gmra.mxu0 %v1489
    %v3454 = vpop.f32.mrf.mxu0
    %v3455 = vadd.f32 %v3442, %v3454
    %v3456 = vpop.f32.mrf.mxu0
    %3457 = vdwg.mxu0
    %3458 = vmatpush.bf16.msra.mxu0 %v2303
    %3459 = vmatpush.bf16.msra.mxu0 %v2300
    %3460 = vmatpush.bf16.msra.mxu0 %v2297
    %3461 = vmatpush.bf16.msra.mxu0 %v2294
    %3462 = vmatpush.bf16.msra.mxu0 %v2291
    %3463 = vmatpush.bf16.msra.mxu0 %v2288
    %3464 = vmatpush.bf16.msra.mxu0 %v2285
    %3465 = vmatpush.bf16.msra.mxu0 %v2282
    %3466 = vmatmul.bf16.gmra.mxu0 %v1490
    %v3467 = vpop.f32.mrf.mxu0
    %v3468 = vadd.f32 %v3455, %v3467
    %v3469 = vpop.f32.mrf.mxu0
    %3470 = vdwg.mxu0
    %v3471 = vadd.f32 %v3390, %v832
    %v3472 = vadd.f32 %v3429, %v833
    %v3473 = vadd.f32 %v3468, %v834
    %v3474 = vtanh.pop %v3471
    %v3475 = vtanh.pop %v3472
    %v3476 = vtanh.pop %v3473
    %v3477 = vpack.c.bf16 %v3474, %v3474
    %v3478 = vpack.c.bf16 %v3475, %v3475
    %v3479 = vpack.c.bf16 %v3476, %v3476
    %v3480 = vld [vmem:[#allocation3] sm:$0xff]
    %v3481 = vld [vmem:[#allocation3 + $0x8] sm:$0xff]
    %v3482 = vld [vmem:[#allocation3 + $0x10] sm:$0xff]
    %s3483 = scalar_lea.vmem [#allocation14], 576
    %v3484 = vld [vmem:[%s3483] sm:$0xff]
    %v3485 = vld [vmem:[%s3483 + $0x8] sm:$0xf]
    %v3486 = vld [vmem:[%s3483 + $0xc] sm:$0xff]
    %v3487 = vld [vmem:[%s3483 + $0x14] sm:$0xf]
    %v3488 = vld [vmem:[%s3483 + $0x18] sm:$0xff]
    %v3489 = vld [vmem:[%s3483 + $0x20] sm:$0xf]
    %v3490 = vld [vmem:[%s3483 + $0x24] sm:$0xff]
    %v3491 = vld [vmem:[%s3483 + $0x2c] sm:$0xf]
    %v3492 = vld [vmem:[%s3483 + $0x30] sm:$0xff]
    %v3493 = vld [vmem:[%s3483 + $0x38] sm:$0xf]
    %v3494 = vld [vmem:[%s3483 + $0x3c] sm:$0xff]
    %v3495 = vld [vmem:[%s3483 + $0x44] sm:$0xf]
    %v3496 = vld [vmem:[%s3483 + $0x48] sm:$0xff]
    %v3497 = vld [vmem:[%s3483 + $0x50] sm:$0xf]
    %v3498 = vld [vmem:[%s3483 + $0x54] sm:$0xff]
    %v3499 = vld [vmem:[%s3483 + $0x5c] sm:$0xf]
    %v3500 = vld [vmem:[%s3483 + $0x60] sm:$0xff]
    %v3501 = vld [vmem:[%s3483 + $0x68] sm:$0xf]
    %v3502 = vld [vmem:[%s3483 + $0x6c] sm:$0xff]
    %v3503 = vld [vmem:[%s3483 + $0x74] sm:$0xf]
    %v3504 = vld [vmem:[%s3483 + $0x78] sm:$0xff]
    %v3505 = vld [vmem:[%s3483 + $0x80] sm:$0xf]
    %v3506 = vld [vmem:[%s3483 + $0x84] sm:$0xff]
    %v3507 = vld [vmem:[%s3483 + $0x8c] sm:$0xf]
    %v3508 = vld [vmem:[%s3483 + $0x90] sm:$0xff]
    %v3509 = vld [vmem:[%s3483 + $0x98] sm:$0xf]
    %v3510 = vld [vmem:[%s3483 + $0x9c] sm:$0xff]
    %v3511 = vld [vmem:[%s3483 + $0xa4] sm:$0xf]
    %v3512 = vld [vmem:[%s3483 + $0xa8] sm:$0xff]
    %v3513 = vld [vmem:[%s3483 + $0xb0] sm:$0xf]
    %v3514 = vld [vmem:[%s3483 + $0xb4] sm:$0xff]
    %v3515 = vld [vmem:[%s3483 + $0xbc] sm:$0xf]
    %v3516 = vld [vmem:[%s3483 + $0xc0] sm:$0xff]
    %v3517 = vld [vmem:[%s3483 + $0xc8] sm:$0xf]
    %v3518 = vld [vmem:[%s3483 + $0xcc] sm:$0xff]
    %v3519 = vld [vmem:[%s3483 + $0xd4] sm:$0xf]
    %v3520 = vld [vmem:[%s3483 + $0xd8] sm:$0xff]
    %v3521 = vld [vmem:[%s3483 + $0xe0] sm:$0xf]
    %v3522 = vld [vmem:[%s3483 + $0xe4] sm:$0xff]
    %v3523 = vld [vmem:[%s3483 + $0xec] sm:$0xf]
    %v3524 = vld [vmem:[%s3483 + $0xf0] sm:$0xff]
    %v3525 = vld [vmem:[%s3483 + $0xf8] sm:$0xf]
    %v3526 = vld [vmem:[%s3483 + $0xfc] sm:$0xff]
    %v3527 = vld [vmem:[%s3483 + $0x104] sm:$0xf]
    %v3528 = vld [vmem:[%s3483 + $0x108] sm:$0xff]
    %v3529 = vld [vmem:[%s3483 + $0x110] sm:$0xf]
    %v3530 = vld [vmem:[%s3483 + $0x114] sm:$0xff]
    %v3531 = vld [vmem:[%s3483 + $0x11c] sm:$0xf]
    %v3532 = vld [vmem:[%s3483 + $0x120] sm:$0xff]
    %v3533 = vld [vmem:[%s3483 + $0x128] sm:$0xf]
    %v3534 = vld [vmem:[%s3483 + $0x12c] sm:$0xff]
    %v3535 = vld [vmem:[%s3483 + $0x134] sm:$0xf]
    %v3536 = vld [vmem:[%s3483 + $0x138] sm:$0xff]
    %v3537 = vld [vmem:[%s3483 + $0x140] sm:$0xf]
    %v3538 = vld [vmem:[%s3483 + $0x144] sm:$0xff]
    %v3539 = vld [vmem:[%s3483 + $0x14c] sm:$0xf]
    %v3540 = vld [vmem:[%s3483 + $0x150] sm:$0xff]
    %v3541 = vld [vmem:[%s3483 + $0x158] sm:$0xf]
    %v3542 = vld [vmem:[%s3483 + $0x15c] sm:$0xff]
    %v3543 = vld [vmem:[%s3483 + $0x164] sm:$0xf]
    %v3544 = vld [vmem:[%s3483 + $0x168] sm:$0xff]
    %v3545 = vld [vmem:[%s3483 + $0x170] sm:$0xf]
    %v3546 = vld [vmem:[%s3483 + $0x174] sm:$0xff]
    %v3547 = vld [vmem:[%s3483 + $0x17c] sm:$0xf]
    %v3548 = vld [vmem:[%s3483 + $0x180] sm:$0xff]
    %v3549 = vld [vmem:[%s3483 + $0x188] sm:$0xf]
    %v3550 = vld [vmem:[%s3483 + $0x18c] sm:$0xff]
    %v3551 = vld [vmem:[%s3483 + $0x194] sm:$0xf]
    %v3552 = vld [vmem:[%s3483 + $0x198] sm:$0xff]
    %v3553 = vld [vmem:[%s3483 + $0x1a0] sm:$0xf]
    %v3554 = vld [vmem:[%s3483 + $0x1a4] sm:$0xff]
    %v3555 = vld [vmem:[%s3483 + $0x1ac] sm:$0xf]
    %v3556 = vld [vmem:[%s3483 + $0x1b0] sm:$0xff]
    %v3557 = vld [vmem:[%s3483 + $0x1b8] sm:$0xf]
    %v3558 = vld [vmem:[%s3483 + $0x1bc] sm:$0xff]
    %v3559 = vld [vmem:[%s3483 + $0x1c4] sm:$0xf]
    %v3560 = vld [vmem:[%s3483 + $0x1c8] sm:$0xff]
    %v3561 = vld [vmem:[%s3483 + $0x1d0] sm:$0xf]
    %v3562 = vld [vmem:[%s3483 + $0x1d4] sm:$0xff]
    %v3563 = vld [vmem:[%s3483 + $0x1dc] sm:$0xf]
    %v3564 = vld [vmem:[%s3483 + $0x1e0] sm:$0xff]
    %v3565 = vld [vmem:[%s3483 + $0x1e8] sm:$0xf]
    %v3566 = vld [vmem:[%s3483 + $0x1ec] sm:$0xff]
    %v3567 = vld [vmem:[%s3483 + $0x1f4] sm:$0xf]
    %v3568 = vld [vmem:[%s3483 + $0x1f8] sm:$0xff]
    %v3569 = vld [vmem:[%s3483 + $0x200] sm:$0xf]
    %v3570 = vld [vmem:[%s3483 + $0x204] sm:$0xff]
    %v3571 = vld [vmem:[%s3483 + $0x20c] sm:$0xf]
    %v3572 = vld [vmem:[%s3483 + $0x210] sm:$0xff]
    %v3573 = vld [vmem:[%s3483 + $0x218] sm:$0xf]
    %v3574 = vld [vmem:[%s3483 + $0x21c] sm:$0xff]
    %v3575 = vld [vmem:[%s3483 + $0x224] sm:$0xf]
    %v3576 = vld [vmem:[%s3483 + $0x228] sm:$0xff]
    %v3577 = vld [vmem:[%s3483 + $0x230] sm:$0xf]
    %v3578 = vld [vmem:[%s3483 + $0x234] sm:$0xff]
    %v3579 = vld [vmem:[%s3483 + $0x23c] sm:$0xf]
    %v3676 = vunpack.c.l.b16 %v3484
    %v3677 = vunpack.c.h.b16 %v3484
    %v3678 = vunpack.c.l.b16 %v3485
    %v3679 = vunpack.c.l.b16 %v3486
    %v3680 = vunpack.c.h.b16 %v3486
    %v3681 = vunpack.c.l.b16 %v3487
    %v3682 = vunpack.c.l.b16 %v3488
    %v3683 = vunpack.c.h.b16 %v3488
    %v3684 = vunpack.c.l.b16 %v3489
    %v3685 = vunpack.c.l.b16 %v3490
    %v3686 = vunpack.c.h.b16 %v3490
    %v3687 = vunpack.c.l.b16 %v3491
    %v3688 = vunpack.c.l.b16 %v3492
    %v3689 = vunpack.c.h.b16 %v3492
    %v3690 = vunpack.c.l.b16 %v3493
    %v3691 = vunpack.c.l.b16 %v3494
    %v3692 = vunpack.c.h.b16 %v3494
    %v3693 = vunpack.c.l.b16 %v3495
    %v3694 = vunpack.c.l.b16 %v3496
    %v3695 = vunpack.c.h.b16 %v3496
    %v3696 = vunpack.c.l.b16 %v3497
    %v3697 = vunpack.c.l.b16 %v3498
    %v3698 = vunpack.c.h.b16 %v3498
    %v3699 = vunpack.c.l.b16 %v3499
    %v3700 = vunpack.c.l.b16 %v3500
    %v3701 = vunpack.c.h.b16 %v3500
    %v3702 = vunpack.c.l.b16 %v3501
    %v3703 = vunpack.c.l.b16 %v3502
    %v3704 = vunpack.c.h.b16 %v3502
    %v3705 = vunpack.c.l.b16 %v3503
    %v3706 = vunpack.c.l.b16 %v3504
    %v3707 = vunpack.c.h.b16 %v3504
    %v3708 = vunpack.c.l.b16 %v3505
    %v3709 = vunpack.c.l.b16 %v3506
    %v3710 = vunpack.c.h.b16 %v3506
    %v3711 = vunpack.c.l.b16 %v3507
    %v3712 = vunpack.c.l.b16 %v3508
    %v3713 = vunpack.c.h.b16 %v3508
    %v3714 = vunpack.c.l.b16 %v3509
    %v3715 = vunpack.c.l.b16 %v3510
    %v3716 = vunpack.c.h.b16 %v3510
    %v3717 = vunpack.c.l.b16 %v3511
    %v3718 = vunpack.c.l.b16 %v3512
    %v3719 = vunpack.c.h.b16 %v3512
    %v3720 = vunpack.c.l.b16 %v3513
    %v3721 = vunpack.c.l.b16 %v3514
    %v3722 = vunpack.c.h.b16 %v3514
    %v3723 = vunpack.c.l.b16 %v3515
    %v3724 = vunpack.c.l.b16 %v3516
    %v3725 = vunpack.c.h.b16 %v3516
    %v3726 = vunpack.c.l.b16 %v3517
    %v3727 = vunpack.c.l.b16 %v3518
    %v3728 = vunpack.c.h.b16 %v3518
    %v3729 = vunpack.c.l.b16 %v3519
    %v3730 = vunpack.c.l.b16 %v3520
    %v3731 = vunpack.c.h.b16 %v3520
    %v3732 = vunpack.c.l.b16 %v3521
    %v3733 = vunpack.c.l.b16 %v3522
    %v3734 = vunpack.c.h.b16 %v3522
    %v3735 = vunpack.c.l.b16 %v3523
    %v3736 = vunpack.c.l.b16 %v3524
    %v3737 = vunpack.c.h.b16 %v3524
    %v3738 = vunpack.c.l.b16 %v3525
    %v3739 = vunpack.c.l.b16 %v3526
    %v3740 = vunpack.c.h.b16 %v3526
    %v3741 = vunpack.c.l.b16 %v3527
    %v3742 = vunpack.c.l.b16 %v3528
    %v3743 = vunpack.c.h.b16 %v3528
    %v3744 = vunpack.c.l.b16 %v3529
    %v3745 = vunpack.c.l.b16 %v3530
    %v3746 = vunpack.c.h.b16 %v3530
    %v3747 = vunpack.c.l.b16 %v3531
    %v3748 = vunpack.c.l.b16 %v3532
    %v3749 = vunpack.c.h.b16 %v3532
    %v3750 = vunpack.c.l.b16 %v3533
    %v3751 = vunpack.c.l.b16 %v3534
    %v3752 = vunpack.c.h.b16 %v3534
    %v3753 = vunpack.c.l.b16 %v3535
    %v3754 = vunpack.c.l.b16 %v3536
    %v3755 = vunpack.c.h.b16 %v3536
    %v3756 = vunpack.c.l.b16 %v3537
    %v3757 = vunpack.c.l.b16 %v3538
    %v3758 = vunpack.c.h.b16 %v3538
    %v3759 = vunpack.c.l.b16 %v3539
    %v3760 = vunpack.c.l.b16 %v3540
    %v3761 = vunpack.c.h.b16 %v3540
    %v3762 = vunpack.c.l.b16 %v3541
    %v3763 = vunpack.c.l.b16 %v3542
    %v3764 = vunpack.c.h.b16 %v3542
    %v3765 = vunpack.c.l.b16 %v3543
    %v3766 = vunpack.c.l.b16 %v3544
    %v3767 = vunpack.c.h.b16 %v3544
    %v3768 = vunpack.c.l.b16 %v3545
    %v3769 = vunpack.c.l.b16 %v3546
    %v3770 = vunpack.c.h.b16 %v3546
    %v3771 = vunpack.c.l.b16 %v3547
    %v3772 = vunpack.c.l.b16 %v3548
    %v3773 = vunpack.c.h.b16 %v3548
    %v3774 = vunpack.c.l.b16 %v3549
    %v3775 = vunpack.c.l.b16 %v3550
    %v3776 = vunpack.c.h.b16 %v3550
    %v3777 = vunpack.c.l.b16 %v3551
    %v3778 = vunpack.c.l.b16 %v3552
    %v3779 = vunpack.c.h.b16 %v3552
    %v3780 = vunpack.c.l.b16 %v3553
    %v3781 = vunpack.c.l.b16 %v3554
    %v3782 = vunpack.c.h.b16 %v3554
    %v3783 = vunpack.c.l.b16 %v3555
    %v3784 = vunpack.c.l.b16 %v3556
    %v3785 = vunpack.c.h.b16 %v3556
    %v3786 = vunpack.c.l.b16 %v3557
    %v3787 = vunpack.c.l.b16 %v3558
    %v3788 = vunpack.c.h.b16 %v3558
    %v3789 = vunpack.c.l.b16 %v3559
    %v3790 = vunpack.c.l.b16 %v3560
    %v3791 = vunpack.c.h.b16 %v3560
    %v3792 = vunpack.c.l.b16 %v3561
    %v3793 = vunpack.c.l.b16 %v3562
    %v3794 = vunpack.c.h.b16 %v3562
    %v3795 = vunpack.c.l.b16 %v3563
    %v3796 = vunpack.c.l.b16 %v3564
    %v3797 = vunpack.c.h.b16 %v3564
    %v3798 = vunpack.c.l.b16 %v3565
    %v3799 = vunpack.c.l.b16 %v3566
    %v3800 = vunpack.c.h.b16 %v3566
    %v3801 = vunpack.c.l.b16 %v3567
    %v3802 = vunpack.c.l.b16 %v3568
    %v3803 = vunpack.c.h.b16 %v3568
    %v3804 = vunpack.c.l.b16 %v3569
    %v3805 = vunpack.c.l.b16 %v3570
    %v3806 = vunpack.c.h.b16 %v3570
    %v3807 = vunpack.c.l.b16 %v3571
    %v3808 = vunpack.c.l.b16 %v3572
    %v3809 = vunpack.c.h.b16 %v3572
    %v3810 = vunpack.c.l.b16 %v3573
    %v3811 = vunpack.c.l.b16 %v3574
    %v3812 = vunpack.c.h.b16 %v3574
    %v3813 = vunpack.c.l.b16 %v3575
    %v3814 = vunpack.c.l.b16 %v3576
    %v3815 = vunpack.c.h.b16 %v3576
    %v3816 = vunpack.c.l.b16 %v3577
    %v3817 = vunpack.c.l.b16 %v3578
    %v3818 = vunpack.c.h.b16 %v3578
    %v3819 = vunpack.c.l.b16 %v3579
    %v3820 = vpack.c.b16 %v3679, %v3676
    %v3821 = vpack.c.b16 %v3680, %v3677
    %v3822 = vpack.c.b16 %v3681, %v3678
    %v3823 = vpack.c.b16 %v3685, %v3682
    %v3824 = vpack.c.b16 %v3686, %v3683
    %v3825 = vpack.c.b16 %v3687, %v3684
    %v3826 = vpack.c.b16 %v3691, %v3688
    %v3827 = vpack.c.b16 %v3692, %v3689
    %v3828 = vpack.c.b16 %v3693, %v3690
    %v3829 = vpack.c.b16 %v3697, %v3694
    %v3830 = vpack.c.b16 %v3698, %v3695
    %v3831 = vpack.c.b16 %v3699, %v3696
    %v3832 = vpack.c.b16 %v3703, %v3700
    %v3833 = vpack.c.b16 %v3704, %v3701
    %v3834 = vpack.c.b16 %v3705, %v3702
    %v3835 = vpack.c.b16 %v3709, %v3706
    %v3836 = vpack.c.b16 %v3710, %v3707
    %v3837 = vpack.c.b16 %v3711, %v3708
    %v3838 = vpack.c.b16 %v3715, %v3712
    %v3839 = vpack.c.b16 %v3716, %v3713
    %v3840 = vpack.c.b16 %v3717, %v3714
    %v3841 = vpack.c.b16 %v3721, %v3718
    %v3842 = vpack.c.b16 %v3722, %v3719
    %v3843 = vpack.c.b16 %v3723, %v3720
    %v3844 = vpack.c.b16 %v3727, %v3724
    %v3845 = vpack.c.b16 %v3728, %v3725
    %v3846 = vpack.c.b16 %v3729, %v3726
    %v3847 = vpack.c.b16 %v3733, %v3730
    %v3848 = vpack.c.b16 %v3734, %v3731
    %v3849 = vpack.c.b16 %v3735, %v3732
    %v3850 = vpack.c.b16 %v3739, %v3736
    %v3851 = vpack.c.b16 %v3740, %v3737
    %v3852 = vpack.c.b16 %v3741, %v3738
    %v3853 = vpack.c.b16 %v3745, %v3742
    %v3854 = vpack.c.b16 %v3746, %v3743
    %v3855 = vpack.c.b16 %v3747, %v3744
    %v3856 = vpack.c.b16 %v3751, %v3748
    %v3857 = vpack.c.b16 %v3752, %v3749
    %v3858 = vpack.c.b16 %v3753, %v3750
    %v3859 = vpack.c.b16 %v3757, %v3754
    %v3860 = vpack.c.b16 %v3758, %v3755
    %v3861 = vpack.c.b16 %v3759, %v3756
    %v3862 = vpack.c.b16 %v3763, %v3760
    %v3863 = vpack.c.b16 %v3764, %v3761
    %v3864 = vpack.c.b16 %v3765, %v3762
    %v3865 = vpack.c.b16 %v3769, %v3766
    %v3866 = vpack.c.b16 %v3770, %v3767
    %v3867 = vpack.c.b16 %v3771, %v3768
    %v3868 = vpack.c.b16 %v3775, %v3772
    %v3869 = vpack.c.b16 %v3776, %v3773
    %v3870 = vpack.c.b16 %v3777, %v3774
    %v3871 = vpack.c.b16 %v3781, %v3778
    %v3872 = vpack.c.b16 %v3782, %v3779
    %v3873 = vpack.c.b16 %v3783, %v3780
    %v3874 = vpack.c.b16 %v3787, %v3784
    %v3875 = vpack.c.b16 %v3788, %v3785
    %v3876 = vpack.c.b16 %v3789, %v3786
    %v3877 = vpack.c.b16 %v3793, %v3790
    %v3878 = vpack.c.b16 %v3794, %v3791
    %v3879 = vpack.c.b16 %v3795, %v3792
    %v3880 = vpack.c.b16 %v3799, %v3796
    %v3881 = vpack.c.b16 %v3800, %v3797
    %v3882 = vpack.c.b16 %v3801, %v3798
    %v3883 = vpack.c.b16 %v3805, %v3802
    %v3884 = vpack.c.b16 %v3806, %v3803
    %v3885 = vpack.c.b16 %v3807, %v3804
    %v3886 = vpack.c.b16 %v3811, %v3808
    %v3887 = vpack.c.b16 %v3812, %v3809
    %v3888 = vpack.c.b16 %v3813, %v3810
    %v3889 = vpack.c.b16 %v3817, %v3814
    %v3890 = vpack.c.b16 %v3818, %v3815
    %v3891 = vpack.c.b16 %v3819, %v3816
    %3964 = vmatpush.bf16.msra.mxu0 %v3841
    %3965 = vmatpush.bf16.msra.mxu0 %v3838
    %3966 = vmatpush.bf16.msra.mxu0 %v3835
    %3967 = vmatpush.bf16.msra.mxu0 %v3832
    %3968 = vmatpush.bf16.msra.mxu0 %v3829
    %3969 = vmatpush.bf16.msra.mxu0 %v3826
    %3970 = vmatpush.bf16.msra.mxu0 %v3823
    %3971 = vmatpush.bf16.msra.mxu0 %v3820
    %3972 = vmatmul.bf16.gmra.mxu0 %v3477
    %v3973 = vpop.f32.mrf.mxu0
    %v3974 = vadd.f32 0.0, %v3973
    %v3975 = vpop.f32.mrf.mxu0
    %3976 = vdwg.mxu0
    %3977 = vmatpush.bf16.msra.mxu0 %v3865
    %3978 = vmatpush.bf16.msra.mxu0 %v3862
    %3979 = vmatpush.bf16.msra.mxu0 %v3859
    %3980 = vmatpush.bf16.msra.mxu0 %v3856
    %3981 = vmatpush.bf16.msra.mxu0 %v3853
    %3982 = vmatpush.bf16.msra.mxu0 %v3850
    %3983 = vmatpush.bf16.msra.mxu0 %v3847
    %3984 = vmatpush.bf16.msra.mxu0 %v3844
    %3985 = vmatmul.bf16.gmra.mxu0 %v3478
    %v3986 = vpop.f32.mrf.mxu0
    %v3987 = vadd.f32 %v3974, %v3986
    %v3988 = vpop.f32.mrf.mxu0
    %3989 = vdwg.mxu0
    %3990 = vmatpush.bf16.msra.mxu0 %v3889
    %3991 = vmatpush.bf16.msra.mxu0 %v3886
    %3992 = vmatpush.bf16.msra.mxu0 %v3883
    %3993 = vmatpush.bf16.msra.mxu0 %v3880
    %3994 = vmatpush.bf16.msra.mxu0 %v3877
    %3995 = vmatpush.bf16.msra.mxu0 %v3874
    %3996 = vmatpush.bf16.msra.mxu0 %v3871
    %3997 = vmatpush.bf16.msra.mxu0 %v3868
    %3998 = vmatmul.bf16.gmra.mxu0 %v3479
    %v3999 = vpop.f32.mrf.mxu0
    %v4000 = vadd.f32 %v3987, %v3999
    %v4001 = vpop.f32.mrf.mxu0
    %4002 = vdwg.mxu0
    %4003 = vmatpush.bf16.msra.mxu0 %v3842
    %4004 = vmatpush.bf16.msra.mxu0 %v3839
    %4005 = vmatpush.bf16.msra.mxu0 %v3836
    %4006 = vmatpush.bf16.msra.mxu0 %v3833
    %4007 = vmatpush.bf16.msra.mxu0 %v3830
    %4008 = vmatpush.bf16.msra.mxu0 %v3827
    %4009 = vmatpush.bf16.msra.mxu0 %v3824
    %4010 = vmatpush.bf16.msra.mxu0 %v3821
    %4011 = vmatmul.bf16.gmra.mxu0 %v3477
    %v4012 = vpop.f32.mrf.mxu0
    %v4013 = vadd.f32 0.0, %v4012
    %v4014 = vpop.f32.mrf.mxu0
    %4015 = vdwg.mxu0
    %4016 = vmatpush.bf16.msra.mxu0 %v3866
    %4017 = vmatpush.bf16.msra.mxu0 %v3863
    %4018 = vmatpush.bf16.msra.mxu0 %v3860
    %4019 = vmatpush.bf16.msra.mxu0 %v3857
    %4020 = vmatpush.bf16.msra.mxu0 %v3854
    %4021 = vmatpush.bf16.msra.mxu0 %v3851
    %4022 = vmatpush.bf16.msra.mxu0 %v3848
    %4023 = vmatpush.bf16.msra.mxu0 %v3845
    %4024 = vmatmul.bf16.gmra.mxu0 %v3478
    %v4025 = vpop.f32.mrf.mxu0
    %v4026 = vadd.f32 %v4013, %v4025
    %v4027 = vpop.f32.mrf.mxu0
    %4028 = vdwg.mxu0
    %4029 = vmatpush.bf16.msra.mxu0 %v3890
    %4030 = vmatpush.bf16.msra.mxu0 %v3887
    %4031 = vmatpush.bf16.msra.mxu0 %v3884
    %4032 = vmatpush.bf16.msra.mxu0 %v3881
    %4033 = vmatpush.bf16.msra.mxu0 %v3878
    %4034 = vmatpush.bf16.msra.mxu0 %v3875
    %4035 = vmatpush.bf16.msra.mxu0 %v3872
    %4036 = vmatpush.bf16.msra.mxu0 %v3869
    %4037 = vmatmul.bf16.gmra.mxu0 %v3479
    %v4038 = vpop.f32.mrf.mxu0
    %v4039 = vadd.f32 %v4026, %v4038
    %v4040 = vpop.f32.mrf.mxu0
    %4041 = vdwg.mxu0
    %4042 = vmatpush.bf16.msra.mxu0 %v3843
    %4043 = vmatpush.bf16.msra.mxu0 %v3840
    %4044 = vmatpush.bf16.msra.mxu0 %v3837
    %4045 = vmatpush.bf16.msra.mxu0 %v3834
    %4046 = vmatpush.bf16.msra.mxu0 %v3831
    %4047 = vmatpush.bf16.msra.mxu0 %v3828
    %4048 = vmatpush.bf16.msra.mxu0 %v3825
    %4049 = vmatpush.bf16.msra.mxu0 %v3822
    %4050 = vmatmul.bf16.gmra.mxu0 %v3477
    %v4051 = vpop.f32.mrf.mxu0
    %v4052 = vadd.f32 0.0, %v4051
    %v4053 = vpop.f32.mrf.mxu0
    %4054 = vdwg.mxu0
    %4055 = vmatpush.bf16.msra.mxu0 %v3867
    %4056 = vmatpush.bf16.msra.mxu0 %v3864
    %4057 = vmatpush.bf16.msra.mxu0 %v3861
    %4058 = vmatpush.bf16.msra.mxu0 %v3858
    %4059 = vmatpush.bf16.msra.mxu0 %v3855
    %4060 = vmatpush.bf16.msra.mxu0 %v3852
    %4061 = vmatpush.bf16.msra.mxu0 %v3849
    %4062 = vmatpush.bf16.msra.mxu0 %v3846
    %4063 = vmatmul.bf16.gmra.mxu0 %v3478
    %v4064 = vpop.f32.mrf.mxu0
    %v4065 = vadd.f32 %v4052, %v4064
    %v4066 = vpop.f32.mrf.mxu0
    %4067 = vdwg.mxu0
    %4068 = vmatpush.bf16.msra.mxu0 %v3891
    %4069 = vmatpush.bf16.msra.mxu0 %v3888
    %4070 = vmatpush.bf16.msra.mxu0 %v3885
    %4071 = vmatpush.bf16.msra.mxu0 %v3882
    %4072 = vmatpush.bf16.msra.mxu0 %v3879
    %4073 = vmatpush.bf16.msra.mxu0 %v3876
    %4074 = vmatpush.bf16.msra.mxu0 %v3873
    %4075 = vmatpush.bf16.msra.mxu0 %v3870
    %4076 = vmatmul.bf16.gmra.mxu0 %v3479
    %v4077 = vpop.f32.mrf.mxu0
    %v4078 = vadd.f32 %v4065, %v4077
    %v4079 = vpop.f32.mrf.mxu0
    %4080 = vdwg.mxu0
    %v4081 = vadd.f32 %v3480, %v4000
    %v4082 = vadd.f32 %v3481, %v4039
    %v4083 = vadd.f32 %v3482, %v4078
    %4084 = vst [vmem:[#allocation3] sm:$0xff] %v4081
    %4085 = vst [vmem:[#allocation3 + $0x8] sm:$0xff] %v4082
    %4086 = vst [vmem:[#allocation3 + $0x10] sm:$0xff] %v4083
    %v4087 = vld [vmem:[#allocation2 + $0x48] sm:$0xff]
    %v4088 = vld [vmem:[#allocation2 + $0x50] sm:$0xff]
    %v4089 = vld [vmem:[#allocation2 + $0x58] sm:$0xff]
    %4090 = vmatpush.bf16.msra.mxu0 %v1113
    %4091 = vmatpush.bf16.msra.mxu0 %v1110
    %4092 = vmatpush.bf16.msra.mxu0 %v1107
    %4093 = vmatpush.bf16.msra.mxu0 %v1104
    %4094 = vmatpush.bf16.msra.mxu0 %v1101
    %4095 = vmatpush.bf16.msra.mxu0 %v1098
    %4096 = vmatpush.bf16.msra.mxu0 %v1095
    %4097 = vmatpush.bf16.msra.mxu0 %v1092
    %4098 = vmatmul.bf16.gmra.mxu0 %v3234
    %v4099 = vpop.f32.mrf.mxu0
    %v4100 = vadd.f32 0.0, %v4099
    %v4101 = vpop.f32.mrf.mxu0
    %4102 = vdwg.mxu0
    %4103 = vmatpush.bf16.msra.mxu0 %v1137
    %4104 = vmatpush.bf16.msra.mxu0 %v1134
    %4105 = vmatpush.bf16.msra.mxu0 %v1131
    %4106 = vmatpush.bf16.msra.mxu0 %v1128
    %4107 = vmatpush.bf16.msra.mxu0 %v1125
    %4108 = vmatpush.bf16.msra.mxu0 %v1122
    %4109 = vmatpush.bf16.msra.mxu0 %v1119
    %4110 = vmatpush.bf16.msra.mxu0 %v1116
    %4111 = vmatmul.bf16.gmra.mxu0 %v3235
    %v4112 = vpop.f32.mrf.mxu0
    %v4113 = vadd.f32 %v4100, %v4112
    %v4114 = vpop.f32.mrf.mxu0
    %4115 = vdwg.mxu0
    %4116 = vmatpush.bf16.msra.mxu0 %v1161
    %4117 = vmatpush.bf16.msra.mxu0 %v1158
    %4118 = vmatpush.bf16.msra.mxu0 %v1155
    %4119 = vmatpush.bf16.msra.mxu0 %v1152
    %4120 = vmatpush.bf16.msra.mxu0 %v1149
    %4121 = vmatpush.bf16.msra.mxu0 %v1146
    %4122 = vmatpush.bf16.msra.mxu0 %v1143
    %4123 = vmatpush.bf16.msra.mxu0 %v1140
    %4124 = vmatmul.bf16.gmra.mxu0 %v3236
    %v4125 = vpop.f32.mrf.mxu0
    %v4126 = vadd.f32 %v4113, %v4125
    %v4127 = vpop.f32.mrf.mxu0
    %4128 = vdwg.mxu0
    %4129 = vmatpush.bf16.msra.mxu0 %v1114
    %4130 = vmatpush.bf16.msra.mxu0 %v1111
    %4131 = vmatpush.bf16.msra.mxu0 %v1108
    %4132 = vmatpush.bf16.msra.mxu0 %v1105
    %4133 = vmatpush.bf16.msra.mxu0 %v1102
    %4134 = vmatpush.bf16.msra.mxu0 %v1099
    %4135 = vmatpush.bf16.msra.mxu0 %v1096
    %4136 = vmatpush.bf16.msra.mxu0 %v1093
    %4137 = vmatmul.bf16.gmra.mxu0 %v3234
    %v4138 = vpop.f32.mrf.mxu0
    %v4139 = vadd.f32 0.0, %v4138
    %v4140 = vpop.f32.mrf.mxu0
    %4141 = vdwg.mxu0
    %4142 = vmatpush.bf16.msra.mxu0 %v1138
    %4143 = vmatpush.bf16.msra.mxu0 %v1135
    %4144 = vmatpush.bf16.msra.mxu0 %v1132
    %4145 = vmatpush.bf16.msra.mxu0 %v1129
    %4146 = vmatpush.bf16.msra.mxu0 %v1126
    %4147 = vmatpush.bf16.msra.mxu0 %v1123
    %4148 = vmatpush.bf16.msra.mxu0 %v1120
    %4149 = vmatpush.bf16.msra.mxu0 %v1117
    %4150 = vmatmul.bf16.gmra.mxu0 %v3235
    %v4151 = vpop.f32.mrf.mxu0
    %v4152 = vadd.f32 %v4139, %v4151
    %v4153 = vpop.f32.mrf.mxu0
    %4154 = vdwg.mxu0
    %4155 = vmatpush.bf16.msra.mxu0 %v1162
    %4156 = vmatpush.bf16.msra.mxu0 %v1159
    %4157 = vmatpush.bf16.msra.mxu0 %v1156
    %4158 = vmatpush.bf16.msra.mxu0 %v1153
    %4159 = vmatpush.bf16.msra.mxu0 %v1150
    %4160 = vmatpush.bf16.msra.mxu0 %v1147
    %4161 = vmatpush.bf16.msra.mxu0 %v1144
    %4162 = vmatpush.bf16.msra.mxu0 %v1141
    %4163 = vmatmul.bf16.gmra.mxu0 %v3236
    %v4164 = vpop.f32.mrf.mxu0
    %v4165 = vadd.f32 %v4152, %v4164
    %v4166 = vpop.f32.mrf.mxu0
    %4167 = vdwg.mxu0
    %4168 = vmatpush.bf16.msra.mxu0 %v1115
    %4169 = vmatpush.bf16.msra.mxu0 %v1112
    %4170 = vmatpush.bf16.msra.mxu0 %v1109
    %4171 = vmatpush.bf16.msra.mxu0 %v1106
    %4172 = vmatpush.bf16.msra.mxu0 %v1103
    %4173 = vmatpush.bf16.msra.mxu0 %v1100
    %4174 = vmatpush.bf16.msra.mxu0 %v1097
    %4175 = vmatpush.bf16.msra.mxu0 %v1094
    %4176 = vmatmul.bf16.gmra.mxu0 %v3234
    %v4177 = vpop.f32.mrf.mxu0
    %v4178 = vadd.f32 0.0, %v4177
    %v4179 = vpop.f32.mrf.mxu0
    %4180 = vdwg.mxu0
    %4181 = vmatpush.bf16.msra.mxu0 %v1139
    %4182 = vmatpush.bf16.msra.mxu0 %v1136
    %4183 = vmatpush.bf16.msra.mxu0 %v1133
    %4184 = vmatpush.bf16.msra.mxu0 %v1130
    %4185 = vmatpush.bf16.msra.mxu0 %v1127
    %4186 = vmatpush.bf16.msra.mxu0 %v1124
    %4187 = vmatpush.bf16.msra.mxu0 %v1121
    %4188 = vmatpush.bf16.msra.mxu0 %v1118
    %4189 = vmatmul.bf16.gmra.mxu0 %v3235
    %v4190 = vpop.f32.mrf.mxu0
    %v4191 = vadd.f32 %v4178, %v4190
    %v4192 = vpop.f32.mrf.mxu0
    %4193 = vdwg.mxu0
    %4194 = vmatpush.bf16.msra.mxu0 %v1163
    %4195 = vmatpush.bf16.msra.mxu0 %v1160
    %4196 = vmatpush.bf16.msra.mxu0 %v1157
    %4197 = vmatpush.bf16.msra.mxu0 %v1154
    %4198 = vmatpush.bf16.msra.mxu0 %v1151
    %4199 = vmatpush.bf16.msra.mxu0 %v1148
    %4200 = vmatpush.bf16.msra.mxu0 %v1145
    %4201 = vmatpush.bf16.msra.mxu0 %v1142
    %4202 = vmatmul.bf16.gmra.mxu0 %v3236
    %v4203 = vpop.f32.mrf.mxu0
    %v4204 = vadd.f32 %v4191, %v4203
    %v4205 = vpop.f32.mrf.mxu0
    %4206 = vdwg.mxu0
    %v4207 = vadd.f32 %v4087, %v4126
    %v4208 = vadd.f32 %v4088, %v4165
    %v4209 = vadd.f32 %v4089, %v4204
    %v4210 = vtanh.pop %v4207
    %v4211 = vtanh.pop %v4208
    %v4212 = vtanh.pop %v4209
    %v4213 = vpack.c.bf16 %v4210, %v4210
    %v4214 = vpack.c.bf16 %v4211, %v4211
    %v4215 = vpack.c.bf16 %v4212, %v4212
    %4216 = vmatpush.bf16.msra.mxu0 %v1752
    %4217 = vmatpush.bf16.msra.mxu0 %v1749
    %4218 = vmatpush.bf16.msra.mxu0 %v1746
    %4219 = vmatpush.bf16.msra.mxu0 %v1743
    %4220 = vmatpush.bf16.msra.mxu0 %v1740
    %4221 = vmatpush.bf16.msra.mxu0 %v1737
    %4222 = vmatpush.bf16.msra.mxu0 %v1734
    %4223 = vmatpush.bf16.msra.mxu0 %v1731
    %4224 = vmatmul.bf16.gmra.mxu0 %v3477
    %v4225 = vpop.f32.mrf.mxu0
    %v4226 = vadd.f32 0.0, %v4225
    %v4227 = vpop.f32.mrf.mxu0
    %4228 = vdwg.mxu0
    %4229 = vmatpush.bf16.msra.mxu0 %v1776
    %4230 = vmatpush.bf16.msra.mxu0 %v1773
    %4231 = vmatpush.bf16.msra.mxu0 %v1770
    %4232 = vmatpush.bf16.msra.mxu0 %v1767
    %4233 = vmatpush.bf16.msra.mxu0 %v1764
    %4234 = vmatpush.bf16.msra.mxu0 %v1761
    %4235 = vmatpush.bf16.msra.mxu0 %v1758
    %4236 = vmatpush.bf16.msra.mxu0 %v1755
    %4237 = vmatmul.bf16.gmra.mxu0 %v3478
    %v4238 = vpop.f32.mrf.mxu0
    %v4239 = vadd.f32 %v4226, %v4238
    %v4240 = vpop.f32.mrf.mxu0
    %4241 = vdwg.mxu0
    %4242 = vmatpush.bf16.msra.mxu0 %v1800
    %4243 = vmatpush.bf16.msra.mxu0 %v1797
    %4244 = vmatpush.bf16.msra.mxu0 %v1794
    %4245 = vmatpush.bf16.msra.mxu0 %v1791
    %4246 = vmatpush.bf16.msra.mxu0 %v1788
    %4247 = vmatpush.bf16.msra.mxu0 %v1785
    %4248 = vmatpush.bf16.msra.mxu0 %v1782
    %4249 = vmatpush.bf16.msra.mxu0 %v1779
    %4250 = vmatmul.bf16.gmra.mxu0 %v3479
    %v4251 = vpop.f32.mrf.mxu0
    %v4252 = vadd.f32 %v4239, %v4251
    %v4253 = vpop.f32.mrf.mxu0
    %4254 = vdwg.mxu0
    %4255 = vmatpush.bf16.msra.mxu0 %v1753
    %4256 = vmatpush.bf16.msra.mxu0 %v1750
    %4257 = vmatpush.bf16.msra.mxu0 %v1747
    %4258 = vmatpush.bf16.msra.mxu0 %v1744
    %4259 = vmatpush.bf16.msra.mxu0 %v1741
    %4260 = vmatpush.bf16.msra.mxu0 %v1738
    %4261 = vmatpush.bf16.msra.mxu0 %v1735
    %4262 = vmatpush.bf16.msra.mxu0 %v1732
    %4263 = vmatmul.bf16.gmra.mxu0 %v3477
    %v4264 = vpop.f32.mrf.mxu0
    %v4265 = vadd.f32 0.0, %v4264
    %v4266 = vpop.f32.mrf.mxu0
    %4267 = vdwg.mxu0
    %4268 = vmatpush.bf16.msra.mxu0 %v1777
    %4269 = vmatpush.bf16.msra.mxu0 %v1774
    %4270 = vmatpush.bf16.msra.mxu0 %v1771
    %4271 = vmatpush.bf16.msra.mxu0 %v1768
    %4272 = vmatpush.bf16.msra.mxu0 %v1765
    %4273 = vmatpush.bf16.msra.mxu0 %v1762
    %4274 = vmatpush.bf16.msra.mxu0 %v1759
    %4275 = vmatpush.bf16.msra.mxu0 %v1756
    %4276 = vmatmul.bf16.gmra.mxu0 %v3478
    %v4277 = vpop.f32.mrf.mxu0
    %v4278 = vadd.f32 %v4265, %v4277
    %v4279 = vpop.f32.mrf.mxu0
    %4280 = vdwg.mxu0
    %4281 = vmatpush.bf16.msra.mxu0 %v1801
    %4282 = vmatpush.bf16.msra.mxu0 %v1798
    %4283 = vmatpush.bf16.msra.mxu0 %v1795
    %4284 = vmatpush.bf16.msra.mxu0 %v1792
    %4285 = vmatpush.bf16.msra.mxu0 %v1789
    %4286 = vmatpush.bf16.msra.mxu0 %v1786
    %4287 = vmatpush.bf16.msra.mxu0 %v1783
    %4288 = vmatpush.bf16.msra.mxu0 %v1780
    %4289 = vmatmul.bf16.gmra.mxu0 %v3479
    %v4290 = vpop.f32.mrf.mxu0
    %v4291 = vadd.f32 %v4278, %v4290
    %v4292 = vpop.f32.mrf.mxu0
    %4293 = vdwg.mxu0
    %4294 = vmatpush.bf16.msra.mxu0 %v1754
    %4295 = vmatpush.bf16.msra.mxu0 %v1751
    %4296 = vmatpush.bf16.msra.mxu0 %v1748
    %4297 = vmatpush.bf16.msra.mxu0 %v1745
    %4298 = vmatpush.bf16.msra.mxu0 %v1742
    %4299 = vmatpush.bf16.msra.mxu0 %v1739
    %4300 = vmatpush.bf16.msra.mxu0 %v1736
    %4301 = vmatpush.bf16.msra.mxu0 %v1733
    %4302 = vmatmul.bf16.gmra.mxu0 %v3477
    %v4303 = vpop.f32.mrf.mxu0
    %v4304 = vadd.f32 0.0, %v4303
    %v4305 = vpop.f32.mrf.mxu0
    %4306 = vdwg.mxu0
    %4307 = vmatpush.bf16.msra.mxu0 %v1778
    %4308 = vmatpush.bf16.msra.mxu0 %v1775
    %4309 = vmatpush.bf16.msra.mxu0 %v1772
    %4310 = vmatpush.bf16.msra.mxu0 %v1769
    %4311 = vmatpush.bf16.msra.mxu0 %v1766
    %4312 = vmatpush.bf16.msra.mxu0 %v1763
    %4313 = vmatpush.bf16.msra.mxu0 %v1760
    %4314 = vmatpush.bf16.msra.mxu0 %v1757
    %4315 = vmatmul.bf16.gmra.mxu0 %v3478
    %v4316 = vpop.f32.mrf.mxu0
    %v4317 = vadd.f32 %v4304, %v4316
    %v4318 = vpop.f32.mrf.mxu0
    %4319 = vdwg.mxu0
    %4320 = vmatpush.bf16.msra.mxu0 %v1802
    %4321 = vmatpush.bf16.msra.mxu0 %v1799
    %4322 = vmatpush.bf16.msra.mxu0 %v1796
    %4323 = vmatpush.bf16.msra.mxu0 %v1793
    %4324 = vmatpush.bf16.msra.mxu0 %v1790
    %4325 = vmatpush.bf16.msra.mxu0 %v1787
    %4326 = vmatpush.bf16.msra.mxu0 %v1784
    %4327 = vmatpush.bf16.msra.mxu0 %v1781
    %4328 = vmatmul.bf16.gmra.mxu0 %v3479
    %v4329 = vpop.f32.mrf.mxu0
    %v4330 = vadd.f32 %v4317, %v4329
    %v4331 = vpop.f32.mrf.mxu0
    %4332 = vdwg.mxu0
    %4333 = vmatpush.bf16.msra.mxu0 %v2253
    %4334 = vmatpush.bf16.msra.mxu0 %v2250
    %4335 = vmatpush.bf16.msra.mxu0 %v2247
    %4336 = vmatpush.bf16.msra.mxu0 %v2244
    %4337 = vmatpush.bf16.msra.mxu0 %v2241
    %4338 = vmatpush.bf16.msra.mxu0 %v2238
    %4339 = vmatpush.bf16.msra.mxu0 %v2235
    %4340 = vmatpush.bf16.msra.mxu0 %v2232
    %4341 = vmatmul.bf16.gmra.mxu0 %v3234
    %v4342 = vpop.f32.mrf.mxu0
    %v4343 = vadd.f32 %v4252, %v4342
    %v4344 = vpop.f32.mrf.mxu0
    %4345 = vdwg.mxu0
    %4346 = vmatpush.bf16.msra.mxu0 %v2277
    %4347 = vmatpush.bf16.msra.mxu0 %v2274
    %4348 = vmatpush.bf16.msra.mxu0 %v2271
    %4349 = vmatpush.bf16.msra.mxu0 %v2268
    %4350 = vmatpush.bf16.msra.mxu0 %v2265
    %4351 = vmatpush.bf16.msra.mxu0 %v2262
    %4352 = vmatpush.bf16.msra.mxu0 %v2259
    %4353 = vmatpush.bf16.msra.mxu0 %v2256
    %4354 = vmatmul.bf16.gmra.mxu0 %v3235
    %v4355 = vpop.f32.mrf.mxu0
    %v4356 = vadd.f32 %v4343, %v4355
    %v4357 = vpop.f32.mrf.mxu0
    %4358 = vdwg.mxu0
    %4359 = vmatpush.bf16.msra.mxu0 %v2301
    %4360 = vmatpush.bf16.msra.mxu0 %v2298
    %4361 = vmatpush.bf16.msra.mxu0 %v2295
    %4362 = vmatpush.bf16.msra.mxu0 %v2292
    %4363 = vmatpush.bf16.msra.mxu0 %v2289
    %4364 = vmatpush.bf16.msra.mxu0 %v2286
    %4365 = vmatpush.bf16.msra.mxu0 %v2283
    %4366 = vmatpush.bf16.msra.mxu0 %v2280
    %4367 = vmatmul.bf16.gmra.mxu0 %v3236
    %v4368 = vpop.f32.mrf.mxu0
    %v4369 = vadd.f32 %v4356, %v4368
    %v4370 = vpop.f32.mrf.mxu0
    %4371 = vdwg.mxu0
    %4372 = vmatpush.bf16.msra.mxu0 %v2254
    %4373 = vmatpush.bf16.msra.mxu0 %v2251
    %4374 = vmatpush.bf16.msra.mxu0 %v2248
    %4375 = vmatpush.bf16.msra.mxu0 %v2245
    %4376 = vmatpush.bf16.msra.mxu0 %v2242
    %4377 = vmatpush.bf16.msra.mxu0 %v2239
    %4378 = vmatpush.bf16.msra.mxu0 %v2236
    %4379 = vmatpush.bf16.msra.mxu0 %v2233
    %4380 = vmatmul.bf16.gmra.mxu0 %v3234
    %v4381 = vpop.f32.mrf.mxu0
    %v4382 = vadd.f32 %v4291, %v4381
    %v4383 = vpop.f32.mrf.mxu0
    %4384 = vdwg.mxu0
    %4385 = vmatpush.bf16.msra.mxu0 %v2278
    %4386 = vmatpush.bf16.msra.mxu0 %v2275
    %4387 = vmatpush.bf16.msra.mxu0 %v2272
    %4388 = vmatpush.bf16.msra.mxu0 %v2269
    %4389 = vmatpush.bf16.msra.mxu0 %v2266
    %4390 = vmatpush.bf16.msra.mxu0 %v2263
    %4391 = vmatpush.bf16.msra.mxu0 %v2260
    %4392 = vmatpush.bf16.msra.mxu0 %v2257
    %4393 = vmatmul.bf16.gmra.mxu0 %v3235
    %v4394 = vpop.f32.mrf.mxu0
    %v4395 = vadd.f32 %v4382, %v4394
    %v4396 = vpop.f32.mrf.mxu0
    %4397 = vdwg.mxu0
    %4398 = vmatpush.bf16.msra.mxu0 %v2302
    %4399 = vmatpush.bf16.msra.mxu0 %v2299
    %4400 = vmatpush.bf16.msra.mxu0 %v2296
    %4401 = vmatpush.bf16.msra.mxu0 %v2293
    %4402 = vmatpush.bf16.msra.mxu0 %v2290
    %4403 = vmatpush.bf16.msra.mxu0 %v2287
    %4404 = vmatpush.bf16.msra.mxu0 %v2284
    %4405 = vmatpush.bf16.msra.mxu0 %v2281
    %4406 = vmatmul.bf16.gmra.mxu0 %v3236
    %v4407 = vpop.f32.mrf.mxu0
    %v4408 = vadd.f32 %v4395, %v4407
    %v4409 = vpop.f32.mrf.mxu0
    %4410 = vdwg.mxu0
    %4411 = vmatpush.bf16.msra.mxu0 %v2255
    %4412 = vmatpush.bf16.msra.mxu0 %v2252
    %4413 = vmatpush.bf16.msra.mxu0 %v2249
    %4414 = vmatpush.bf16.msra.mxu0 %v2246
    %4415 = vmatpush.bf16.msra.mxu0 %v2243
    %4416 = vmatpush.bf16.msra.mxu0 %v2240
    %4417 = vmatpush.bf16.msra.mxu0 %v2237
    %4418 = vmatpush.bf16.msra.mxu0 %v2234
    %4419 = vmatmul.bf16.gmra.mxu0 %v3234
    %v4420 = vpop.f32.mrf.mxu0
    %v4421 = vadd.f32 %v4330, %v4420
    %v4422 = vpop.f32.mrf.mxu0
    %4423 = vdwg.mxu0
    %4424 = vmatpush.bf16.msra.mxu0 %v2279
    %4425 = vmatpush.bf16.msra.mxu0 %v2276
    %4426 = vmatpush.bf16.msra.mxu0 %v2273
    %4427 = vmatpush.bf16.msra.mxu0 %v2270
    %4428 = vmatpush.bf16.msra.mxu0 %v2267
    %4429 = vmatpush.bf16.msra.mxu0 %v2264
    %4430 = vmatpush.bf16.msra.mxu0 %v2261
    %4431 = vmatpush.bf16.msra.mxu0 %v2258
    %4432 = vmatmul.bf16.gmra.mxu0 %v3235
    %v4433 = vpop.f32.mrf.mxu0
    %v4434 = vadd.f32 %v4421, %v4433
    %v4435 = vpop.f32.mrf.mxu0
    %4436 = vdwg.mxu0
    %4437 = vmatpush.bf16.msra.mxu0 %v2303
    %4438 = vmatpush.bf16.msra.mxu0 %v2300
    %4439 = vmatpush.bf16.msra.mxu0 %v2297
    %4440 = vmatpush.bf16.msra.mxu0 %v2294
    %4441 = vmatpush.bf16.msra.mxu0 %v2291
    %4442 = vmatpush.bf16.msra.mxu0 %v2288
    %4443 = vmatpush.bf16.msra.mxu0 %v2285
    %4444 = vmatpush.bf16.msra.mxu0 %v2282
    %4445 = vmatmul.bf16.gmra.mxu0 %v3236
    %v4446 = vpop.f32.mrf.mxu0
    %v4447 = vadd.f32 %v4434, %v4446
    %v4448 = vpop.f32.mrf.mxu0
    %4449 = vdwg.mxu0
    %v4450 = vadd.f32 %v4369, %v832
    %v4451 = vadd.f32 %v4408, %v833
    %v4452 = vadd.f32 %v4447, %v834
    %v4453 = vtanh.pop %v4450
    %v4454 = vtanh.pop %v4451
    %v4455 = vtanh.pop %v4452
    %v4456 = vpack.c.bf16 %v4453, %v4453
    %v4457 = vpack.c.bf16 %v4454, %v4454
    %v4458 = vpack.c.bf16 %v4455, %v4455
    %v4459 = vld [vmem:[#allocation3] sm:$0xff]
    %v4460 = vld [vmem:[#allocation3 + $0x8] sm:$0xff]
    %v4461 = vld [vmem:[#allocation3 + $0x10] sm:$0xff]
    %s4462 = scalar_lea.vmem [#allocation14], 1152
    %v4463 = vld [vmem:[%s4462] sm:$0xff]
    %v4464 = vld [vmem:[%s4462 + $0x8] sm:$0xf]
    %v4465 = vld [vmem:[%s4462 + $0xc] sm:$0xff]
    %v4466 = vld [vmem:[%s4462 + $0x14] sm:$0xf]
    %v4467 = vld [vmem:[%s4462 + $0x18] sm:$0xff]
    %v4468 = vld [vmem:[%s4462 + $0x20] sm:$0xf]
    %v4469 = vld [vmem:[%s4462 + $0x24] sm:$0xff]
    %v4470 = vld [vmem:[%s4462 + $0x2c] sm:$0xf]
    %v4471 = vld [vmem:[%s4462 + $0x30] sm:$0xff]
    %v4472 = vld [vmem:[%s4462 + $0x38] sm:$0xf]
    %v4473 = vld [vmem:[%s4462 + $0x3c] sm:$0xff]
    %v4474 = vld [vmem:[%s4462 + $0x44] sm:$0xf]
    %v4475 = vld [vmem:[%s4462 + $0x48] sm:$0xff]
    %v4476 = vld [vmem:[%s4462 + $0x50] sm:$0xf]
    %v4477 = vld [vmem:[%s4462 + $0x54] sm:$0xff]
    %v4478 = vld [vmem:[%s4462 + $0x5c] sm:$0xf]
    %v4479 = vld [vmem:[%s4462 + $0x60] sm:$0xff]
    %v4480 = vld [vmem:[%s4462 + $0x68] sm:$0xf]
    %v4481 = vld [vmem:[%s4462 + $0x6c] sm:$0xff]
    %v4482 = vld [vmem:[%s4462 + $0x74] sm:$0xf]
    %v4483 = vld [vmem:[%s4462 + $0x78] sm:$0xff]
    %v4484 = vld [vmem:[%s4462 + $0x80] sm:$0xf]
    %v4485 = vld [vmem:[%s4462 + $0x84] sm:$0xff]
    %v4486 = vld [vmem:[%s4462 + $0x8c] sm:$0xf]
    %v4487 = vld [vmem:[%s4462 + $0x90] sm:$0xff]
    %v4488 = vld [vmem:[%s4462 + $0x98] sm:$0xf]
    %v4489 = vld [vmem:[%s4462 + $0x9c] sm:$0xff]
    %v4490 = vld [vmem:[%s4462 + $0xa4] sm:$0xf]
    %v4491 = vld [vmem:[%s4462 + $0xa8] sm:$0xff]
    %v4492 = vld [vmem:[%s4462 + $0xb0] sm:$0xf]
    %v4493 = vld [vmem:[%s4462 + $0xb4] sm:$0xff]
    %v4494 = vld [vmem:[%s4462 + $0xbc] sm:$0xf]
    %v4495 = vld [vmem:[%s4462 + $0xc0] sm:$0xff]
    %v4496 = vld [vmem:[%s4462 + $0xc8] sm:$0xf]
    %v4497 = vld [vmem:[%s4462 + $0xcc] sm:$0xff]
    %v4498 = vld [vmem:[%s4462 + $0xd4] sm:$0xf]
    %v4499 = vld [vmem:[%s4462 + $0xd8] sm:$0xff]
    %v4500 = vld [vmem:[%s4462 + $0xe0] sm:$0xf]
    %v4501 = vld [vmem:[%s4462 + $0xe4] sm:$0xff]
    %v4502 = vld [vmem:[%s4462 + $0xec] sm:$0xf]
    %v4503 = vld [vmem:[%s4462 + $0xf0] sm:$0xff]
    %v4504 = vld [vmem:[%s4462 + $0xf8] sm:$0xf]
    %v4505 = vld [vmem:[%s4462 + $0xfc] sm:$0xff]
    %v4506 = vld [vmem:[%s4462 + $0x104] sm:$0xf]
    %v4507 = vld [vmem:[%s4462 + $0x108] sm:$0xff]
    %v4508 = vld [vmem:[%s4462 + $0x110] sm:$0xf]
    %v4509 = vld [vmem:[%s4462 + $0x114] sm:$0xff]
    %v4510 = vld [vmem:[%s4462 + $0x11c] sm:$0xf]
    %v4511 = vld [vmem:[%s4462 + $0x120] sm:$0xff]
    %v4512 = vld [vmem:[%s4462 + $0x128] sm:$0xf]
    %v4513 = vld [vmem:[%s4462 + $0x12c] sm:$0xff]
    %v4514 = vld [vmem:[%s4462 + $0x134] sm:$0xf]
    %v4515 = vld [vmem:[%s4462 + $0x138] sm:$0xff]
    %v4516 = vld [vmem:[%s4462 + $0x140] sm:$0xf]
    %v4517 = vld [vmem:[%s4462 + $0x144] sm:$0xff]
    %v4518 = vld [vmem:[%s4462 + $0x14c] sm:$0xf]
    %v4519 = vld [vmem:[%s4462 + $0x150] sm:$0xff]
    %v4520 = vld [vmem:[%s4462 + $0x158] sm:$0xf]
    %v4521 = vld [vmem:[%s4462 + $0x15c] sm:$0xff]
    %v4522 = vld [vmem:[%s4462 + $0x164] sm:$0xf]
    %v4523 = vld [vmem:[%s4462 + $0x168] sm:$0xff]
    %v4524 = vld [vmem:[%s4462 + $0x170] sm:$0xf]
    %v4525 = vld [vmem:[%s4462 + $0x174] sm:$0xff]
    %v4526 = vld [vmem:[%s4462 + $0x17c] sm:$0xf]
    %v4527 = vld [vmem:[%s4462 + $0x180] sm:$0xff]
    %v4528 = vld [vmem:[%s4462 + $0x188] sm:$0xf]
    %v4529 = vld [vmem:[%s4462 + $0x18c] sm:$0xff]
    %v4530 = vld [vmem:[%s4462 + $0x194] sm:$0xf]
    %v4531 = vld [vmem:[%s4462 + $0x198] sm:$0xff]
    %v4532 = vld [vmem:[%s4462 + $0x1a0] sm:$0xf]
    %v4533 = vld [vmem:[%s4462 + $0x1a4] sm:$0xff]
    %v4534 = vld [vmem:[%s4462 + $0x1ac] sm:$0xf]
    %v4535 = vld [vmem:[%s4462 + $0x1b0] sm:$0xff]
    %v4536 = vld [vmem:[%s4462 + $0x1b8] sm:$0xf]
    %v4537 = vld [vmem:[%s4462 + $0x1bc] sm:$0xff]
    %v4538 = vld [vmem:[%s4462 + $0x1c4] sm:$0xf]
    %v4539 = vld [vmem:[%s4462 + $0x1c8] sm:$0xff]
    %v4540 = vld [vmem:[%s4462 + $0x1d0] sm:$0xf]
    %v4541 = vld [vmem:[%s4462 + $0x1d4] sm:$0xff]
    %v4542 = vld [vmem:[%s4462 + $0x1dc] sm:$0xf]
    %v4543 = vld [vmem:[%s4462 + $0x1e0] sm:$0xff]
    %v4544 = vld [vmem:[%s4462 + $0x1e8] sm:$0xf]
    %v4545 = vld [vmem:[%s4462 + $0x1ec] sm:$0xff]
    %v4546 = vld [vmem:[%s4462 + $0x1f4] sm:$0xf]
    %v4547 = vld [vmem:[%s4462 + $0x1f8] sm:$0xff]
    %v4548 = vld [vmem:[%s4462 + $0x200] sm:$0xf]
    %v4549 = vld [vmem:[%s4462 + $0x204] sm:$0xff]
    %v4550 = vld [vmem:[%s4462 + $0x20c] sm:$0xf]
    %v4551 = vld [vmem:[%s4462 + $0x210] sm:$0xff]
    %v4552 = vld [vmem:[%s4462 + $0x218] sm:$0xf]
    %v4553 = vld [vmem:[%s4462 + $0x21c] sm:$0xff]
    %v4554 = vld [vmem:[%s4462 + $0x224] sm:$0xf]
    %v4555 = vld [vmem:[%s4462 + $0x228] sm:$0xff]
    %v4556 = vld [vmem:[%s4462 + $0x230] sm:$0xf]
    %v4557 = vld [vmem:[%s4462 + $0x234] sm:$0xff]
    %v4558 = vld [vmem:[%s4462 + $0x23c] sm:$0xf]
    %v4655 = vunpack.c.l.b16 %v4463
    %v4656 = vunpack.c.h.b16 %v4463
    %v4657 = vunpack.c.l.b16 %v4464
    %v4658 = vunpack.c.l.b16 %v4465
    %v4659 = vunpack.c.h.b16 %v4465
    %v4660 = vunpack.c.l.b16 %v4466
    %v4661 = vunpack.c.l.b16 %v4467
    %v4662 = vunpack.c.h.b16 %v4467
    %v4663 = vunpack.c.l.b16 %v4468
    %v4664 = vunpack.c.l.b16 %v4469
    %v4665 = vunpack.c.h.b16 %v4469
    %v4666 = vunpack.c.l.b16 %v4470
    %v4667 = vunpack.c.l.b16 %v4471
    %v4668 = vunpack.c.h.b16 %v4471
    %v4669 = vunpack.c.l.b16 %v4472
    %v4670 = vunpack.c.l.b16 %v4473
    %v4671 = vunpack.c.h.b16 %v4473
    %v4672 = vunpack.c.l.b16 %v4474
    %v4673 = vunpack.c.l.b16 %v4475
    %v4674 = vunpack.c.h.b16 %v4475
    %v4675 = vunpack.c.l.b16 %v4476
    %v4676 = vunpack.c.l.b16 %v4477
    %v4677 = vunpack.c.h.b16 %v4477
    %v4678 = vunpack.c.l.b16 %v4478
    %v4679 = vunpack.c.l.b16 %v4479
    %v4680 = vunpack.c.h.b16 %v4479
    %v4681 = vunpack.c.l.b16 %v4480
    %v4682 = vunpack.c.l.b16 %v4481
    %v4683 = vunpack.c.h.b16 %v4481
    %v4684 = vunpack.c.l.b16 %v4482
    %v4685 = vunpack.c.l.b16 %v4483
    %v4686 = vunpack.c.h.b16 %v4483
    %v4687 = vunpack.c.l.b16 %v4484
    %v4688 = vunpack.c.l.b16 %v4485
    %v4689 = vunpack.c.h.b16 %v4485
    %v4690 = vunpack.c.l.b16 %v4486
    %v4691 = vunpack.c.l.b16 %v4487
    %v4692 = vunpack.c.h.b16 %v4487
    %v4693 = vunpack.c.l.b16 %v4488
    %v4694 = vunpack.c.l.b16 %v4489
    %v4695 = vunpack.c.h.b16 %v4489
    %v4696 = vunpack.c.l.b16 %v4490
    %v4697 = vunpack.c.l.b16 %v4491
    %v4698 = vunpack.c.h.b16 %v4491
    %v4699 = vunpack.c.l.b16 %v4492
    %v4700 = vunpack.c.l.b16 %v4493
    %v4701 = vunpack.c.h.b16 %v4493
    %v4702 = vunpack.c.l.b16 %v4494
    %v4703 = vunpack.c.l.b16 %v4495
    %v4704 = vunpack.c.h.b16 %v4495
    %v4705 = vunpack.c.l.b16 %v4496
    %v4706 = vunpack.c.l.b16 %v4497
    %v4707 = vunpack.c.h.b16 %v4497
    %v4708 = vunpack.c.l.b16 %v4498
    %v4709 = vunpack.c.l.b16 %v4499
    %v4710 = vunpack.c.h.b16 %v4499
    %v4711 = vunpack.c.l.b16 %v4500
    %v4712 = vunpack.c.l.b16 %v4501
    %v4713 = vunpack.c.h.b16 %v4501
    %v4714 = vunpack.c.l.b16 %v4502
    %v4715 = vunpack.c.l.b16 %v4503
    %v4716 = vunpack.c.h.b16 %v4503
    %v4717 = vunpack.c.l.b16 %v4504
    %v4718 = vunpack.c.l.b16 %v4505
    %v4719 = vunpack.c.h.b16 %v4505
    %v4720 = vunpack.c.l.b16 %v4506
    %v4721 = vunpack.c.l.b16 %v4507
    %v4722 = vunpack.c.h.b16 %v4507
    %v4723 = vunpack.c.l.b16 %v4508
    %v4724 = vunpack.c.l.b16 %v4509
    %v4725 = vunpack.c.h.b16 %v4509
    %v4726 = vunpack.c.l.b16 %v4510
    %v4727 = vunpack.c.l.b16 %v4511
    %v4728 = vunpack.c.h.b16 %v4511
    %v4729 = vunpack.c.l.b16 %v4512
    %v4730 = vunpack.c.l.b16 %v4513
    %v4731 = vunpack.c.h.b16 %v4513
    %v4732 = vunpack.c.l.b16 %v4514
    %v4733 = vunpack.c.l.b16 %v4515
    %v4734 = vunpack.c.h.b16 %v4515
    %v4735 = vunpack.c.l.b16 %v4516
    %v4736 = vunpack.c.l.b16 %v4517
    %v4737 = vunpack.c.h.b16 %v4517
    %v4738 = vunpack.c.l.b16 %v4518
    %v4739 = vunpack.c.l.b16 %v4519
    %v4740 = vunpack.c.h.b16 %v4519
    %v4741 = vunpack.c.l.b16 %v4520
    %v4742 = vunpack.c.l.b16 %v4521
    %v4743 = vunpack.c.h.b16 %v4521
    %v4744 = vunpack.c.l.b16 %v4522
    %v4745 = vunpack.c.l.b16 %v4523
    %v4746 = vunpack.c.h.b16 %v4523
    %v4747 = vunpack.c.l.b16 %v4524
    %v4748 = vunpack.c.l.b16 %v4525
    %v4749 = vunpack.c.h.b16 %v4525
    %v4750 = vunpack.c.l.b16 %v4526
    %v4751 = vunpack.c.l.b16 %v4527
    %v4752 = vunpack.c.h.b16 %v4527
    %v4753 = vunpack.c.l.b16 %v4528
    %v4754 = vunpack.c.l.b16 %v4529
    %v4755 = vunpack.c.h.b16 %v4529
    %v4756 = vunpack.c.l.b16 %v4530
    %v4757 = vunpack.c.l.b16 %v4531
    %v4758 = vunpack.c.h.b16 %v4531
    %v4759 = vunpack.c.l.b16 %v4532
    %v4760 = vunpack.c.l.b16 %v4533
    %v4761 = vunpack.c.h.b16 %v4533
    %v4762 = vunpack.c.l.b16 %v4534
    %v4763 = vunpack.c.l.b16 %v4535
    %v4764 = vunpack.c.h.b16 %v4535
    %v4765 = vunpack.c.l.b16 %v4536
    %v4766 = vunpack.c.l.b16 %v4537
    %v4767 = vunpack.c.h.b16 %v4537
    %v4768 = vunpack.c.l.b16 %v4538
    %v4769 = vunpack.c.l.b16 %v4539
    %v4770 = vunpack.c.h.b16 %v4539
    %v4771 = vunpack.c.l.b16 %v4540
    %v4772 = vunpack.c.l.b16 %v4541
    %v4773 = vunpack.c.h.b16 %v4541
    %v4774 = vunpack.c.l.b16 %v4542
    %v4775 = vunpack.c.l.b16 %v4543
    %v4776 = vunpack.c.h.b16 %v4543
    %v4777 = vunpack.c.l.b16 %v4544
    %v4778 = vunpack.c.l.b16 %v4545
    %v4779 = vunpack.c.h.b16 %v4545
    %v4780 = vunpack.c.l.b16 %v4546
    %v4781 = vunpack.c.l.b16 %v4547
    %v4782 = vunpack.c.h.b16 %v4547
    %v4783 = vunpack.c.l.b16 %v4548
    %v4784 = vunpack.c.l.b16 %v4549
    %v4785 = vunpack.c.h.b16 %v4549
    %v4786 = vunpack.c.l.b16 %v4550
    %v4787 = vunpack.c.l.b16 %v4551
    %v4788 = vunpack.c.h.b16 %v4551
    %v4789 = vunpack.c.l.b16 %v4552
    %v4790 = vunpack.c.l.b16 %v4553
    %v4791 = vunpack.c.h.b16 %v4553
    %v4792 = vunpack.c.l.b16 %v4554
    %v4793 = vunpack.c.l.b16 %v4555
    %v4794 = vunpack.c.h.b16 %v4555
    %v4795 = vunpack.c.l.b16 %v4556
    %v4796 = vunpack.c.l.b16 %v4557
    %v4797 = vunpack.c.h.b16 %v4557
    %v4798 = vunpack.c.l.b16 %v4558
    %v4799 = vpack.c.b16 %v4658, %v4655
    %v4800 = vpack.c.b16 %v4659, %v4656
    %v4801 = vpack.c.b16 %v4660, %v4657
    %v4802 = vpack.c.b16 %v4664, %v4661
    %v4803 = vpack.c.b16 %v4665, %v4662
    %v4804 = vpack.c.b16 %v4666, %v4663
    %v4805 = vpack.c.b16 %v4670, %v4667
    %v4806 = vpack.c.b16 %v4671, %v4668
    %v4807 = vpack.c.b16 %v4672, %v4669
    %v4808 = vpack.c.b16 %v4676, %v4673
    %v4809 = vpack.c.b16 %v4677, %v4674
    %v4810 = vpack.c.b16 %v4678, %v4675
    %v4811 = vpack.c.b16 %v4682, %v4679
    %v4812 = vpack.c.b16 %v4683, %v4680
    %v4813 = vpack.c.b16 %v4684, %v4681
    %v4814 = vpack.c.b16 %v4688, %v4685
    %v4815 = vpack.c.b16 %v4689, %v4686
    %v4816 = vpack.c.b16 %v4690, %v4687
    %v4817 = vpack.c.b16 %v4694, %v4691
    %v4818 = vpack.c.b16 %v4695, %v4692
    %v4819 = vpack.c.b16 %v4696, %v4693
    %v4820 = vpack.c.b16 %v4700, %v4697
    %v4821 = vpack.c.b16 %v4701, %v4698
    %v4822 = vpack.c.b16 %v4702, %v4699
    %v4823 = vpack.c.b16 %v4706, %v4703
    %v4824 = vpack.c.b16 %v4707, %v4704
    %v4825 = vpack.c.b16 %v4708, %v4705
    %v4826 = vpack.c.b16 %v4712, %v4709
    %v4827 = vpack.c.b16 %v4713, %v4710
    %v4828 = vpack.c.b16 %v4714, %v4711
    %v4829 = vpack.c.b16 %v4718, %v4715
    %v4830 = vpack.c.b16 %v4719, %v4716
    %v4831 = vpack.c.b16 %v4720, %v4717
    %v4832 = vpack.c.b16 %v4724, %v4721
    %v4833 = vpack.c.b16 %v4725, %v4722
    %v4834 = vpack.c.b16 %v4726, %v4723
    %v4835 = vpack.c.b16 %v4730, %v4727
    %v4836 = vpack.c.b16 %v4731, %v4728
    %v4837 = vpack.c.b16 %v4732, %v4729
    %v4838 = vpack.c.b16 %v4736, %v4733
    %v4839 = vpack.c.b16 %v4737, %v4734
    %v4840 = vpack.c.b16 %v4738, %v4735
    %v4841 = vpack.c.b16 %v4742, %v4739
    %v4842 = vpack.c.b16 %v4743, %v4740
    %v4843 = vpack.c.b16 %v4744, %v4741
    %v4844 = vpack.c.b16 %v4748, %v4745
    %v4845 = vpack.c.b16 %v4749, %v4746
    %v4846 = vpack.c.b16 %v4750, %v4747
    %v4847 = vpack.c.b16 %v4754, %v4751
    %v4848 = vpack.c.b16 %v4755, %v4752
    %v4849 = vpack.c.b16 %v4756, %v4753
    %v4850 = vpack.c.b16 %v4760, %v4757
    %v4851 = vpack.c.b16 %v4761, %v4758
    %v4852 = vpack.c.b16 %v4762, %v4759
    %v4853 = vpack.c.b16 %v4766, %v4763
    %v4854 = vpack.c.b16 %v4767, %v4764
    %v4855 = vpack.c.b16 %v4768, %v4765
    %v4856 = vpack.c.b16 %v4772, %v4769
    %v4857 = vpack.c.b16 %v4773, %v4770
    %v4858 = vpack.c.b16 %v4774, %v4771
    %v4859 = vpack.c.b16 %v4778, %v4775
    %v4860 = vpack.c.b16 %v4779, %v4776
    %v4861 = vpack.c.b16 %v4780, %v4777
    %v4862 = vpack.c.b16 %v4784, %v4781
    %v4863 = vpack.c.b16 %v4785, %v4782
    %v4864 = vpack.c.b16 %v4786, %v4783
    %v4865 = vpack.c.b16 %v4790, %v4787
    %v4866 = vpack.c.b16 %v4791, %v4788
    %v4867 = vpack.c.b16 %v4792, %v4789
    %v4868 = vpack.c.b16 %v4796, %v4793
    %v4869 = vpack.c.b16 %v4797, %v4794
    %v4870 = vpack.c.b16 %v4798, %v4795
    %4943 = vmatpush.bf16.msra.mxu0 %v4820
    %4944 = vmatpush.bf16.msra.mxu0 %v4817
    %4945 = vmatpush.bf16.msra.mxu0 %v4814
    %4946 = vmatpush.bf16.msra.mxu0 %v4811
    %4947 = vmatpush.bf16.msra.mxu0 %v4808
    %4948 = vmatpush.bf16.msra.mxu0 %v4805
    %4949 = vmatpush.bf16.msra.mxu0 %v4802
    %4950 = vmatpush.bf16.msra.mxu0 %v4799
    %4951 = vmatmul.bf16.gmra.mxu0 %v4456
    %v4952 = vpop.f32.mrf.mxu0
    %v4953 = vadd.f32 0.0, %v4952
    %v4954 = vpop.f32.mrf.mxu0
    %4955 = vdwg.mxu0
    %4956 = vmatpush.bf16.msra.mxu0 %v4844
    %4957 = vmatpush.bf16.msra.mxu0 %v4841
    %4958 = vmatpush.bf16.msra.mxu0 %v4838
    %4959 = vmatpush.bf16.msra.mxu0 %v4835
    %4960 = vmatpush.bf16.msra.mxu0 %v4832
    %4961 = vmatpush.bf16.msra.mxu0 %v4829
    %4962 = vmatpush.bf16.msra.mxu0 %v4826
    %4963 = vmatpush.bf16.msra.mxu0 %v4823
    %4964 = vmatmul.bf16.gmra.mxu0 %v4457
    %v4965 = vpop.f32.mrf.mxu0
    %v4966 = vadd.f32 %v4953, %v4965
    %v4967 = vpop.f32.mrf.mxu0
    %4968 = vdwg.mxu0
    %4969 = vmatpush.bf16.msra.mxu0 %v4868
    %4970 = vmatpush.bf16.msra.mxu0 %v4865
    %4971 = vmatpush.bf16.msra.mxu0 %v4862
    %4972 = vmatpush.bf16.msra.mxu0 %v4859
    %4973 = vmatpush.bf16.msra.mxu0 %v4856
    %4974 = vmatpush.bf16.msra.mxu0 %v4853
    %4975 = vmatpush.bf16.msra.mxu0 %v4850
    %4976 = vmatpush.bf16.msra.mxu0 %v4847
    %4977 = vmatmul.bf16.gmra.mxu0 %v4458
    %v4978 = vpop.f32.mrf.mxu0
    %v4979 = vadd.f32 %v4966, %v4978
    %v4980 = vpop.f32.mrf.mxu0
    %4981 = vdwg.mxu0
    %4982 = vmatpush.bf16.msra.mxu0 %v4821
    %4983 = vmatpush.bf16.msra.mxu0 %v4818
    %4984 = vmatpush.bf16.msra.mxu0 %v4815
    %4985 = vmatpush.bf16.msra.mxu0 %v4812
    %4986 = vmatpush.bf16.msra.mxu0 %v4809
    %4987 = vmatpush.bf16.msra.mxu0 %v4806
    %4988 = vmatpush.bf16.msra.mxu0 %v4803
    %4989 = vmatpush.bf16.msra.mxu0 %v4800
    %4990 = vmatmul.bf16.gmra.mxu0 %v4456
    %v4991 = vpop.f32.mrf.mxu0
    %v4992 = vadd.f32 0.0, %v4991
    %v4993 = vpop.f32.mrf.mxu0
    %4994 = vdwg.mxu0
    %4995 = vmatpush.bf16.msra.mxu0 %v4845
    %4996 = vmatpush.bf16.msra.mxu0 %v4842
    %4997 = vmatpush.bf16.msra.mxu0 %v4839
    %4998 = vmatpush.bf16.msra.mxu0 %v4836
    %4999 = vmatpush.bf16.msra.mxu0 %v4833
    %5000 = vmatpush.bf16.msra.mxu0 %v4830
    %5001 = vmatpush.bf16.msra.mxu0 %v4827
    %5002 = vmatpush.bf16.msra.mxu0 %v4824
    %5003 = vmatmul.bf16.gmra.mxu0 %v4457
    %v5004 = vpop.f32.mrf.mxu0
    %v5005 = vadd.f32 %v4992, %v5004
    %v5006 = vpop.f32.mrf.mxu0
    %5007 = vdwg.mxu0
    %5008 = vmatpush.bf16.msra.mxu0 %v4869
    %5009 = vmatpush.bf16.msra.mxu0 %v4866
    %5010 = vmatpush.bf16.msra.mxu0 %v4863
    %5011 = vmatpush.bf16.msra.mxu0 %v4860
    %5012 = vmatpush.bf16.msra.mxu0 %v4857
    %5013 = vmatpush.bf16.msra.mxu0 %v4854
    %5014 = vmatpush.bf16.msra.mxu0 %v4851
    %5015 = vmatpush.bf16.msra.mxu0 %v4848
    %5016 = vmatmul.bf16.gmra.mxu0 %v4458
    %v5017 = vpop.f32.mrf.mxu0
    %v5018 = vadd.f32 %v5005, %v5017
    %v5019 = vpop.f32.mrf.mxu0
    %5020 = vdwg.mxu0
    %5021 = vmatpush.bf16.msra.mxu0 %v4822
    %5022 = vmatpush.bf16.msra.mxu0 %v4819
    %5023 = vmatpush.bf16.msra.mxu0 %v4816
    %5024 = vmatpush.bf16.msra.mxu0 %v4813
    %5025 = vmatpush.bf16.msra.mxu0 %v4810
    %5026 = vmatpush.bf16.msra.mxu0 %v4807
    %5027 = vmatpush.bf16.msra.mxu0 %v4804
    %5028 = vmatpush.bf16.msra.mxu0 %v4801
    %5029 = vmatmul.bf16.gmra.mxu0 %v4456
    %v5030 = vpop.f32.mrf.mxu0
    %v5031 = vadd.f32 0.0, %v5030
    %v5032 = vpop.f32.mrf.mxu0
    %5033 = vdwg.mxu0
    %5034 = vmatpush.bf16.msra.mxu0 %v4846
    %5035 = vmatpush.bf16.msra.mxu0 %v4843
    %5036 = vmatpush.bf16.msra.mxu0 %v4840
    %5037 = vmatpush.bf16.msra.mxu0 %v4837
    %5038 = vmatpush.bf16.msra.mxu0 %v4834
    %5039 = vmatpush.bf16.msra.mxu0 %v4831
    %5040 = vmatpush.bf16.msra.mxu0 %v4828
    %5041 = vmatpush.bf16.msra.mxu0 %v4825
    %5042 = vmatmul.bf16.gmra.mxu0 %v4457
    %v5043 = vpop.f32.mrf.mxu0
    %v5044 = vadd.f32 %v5031, %v5043
    %v5045 = vpop.f32.mrf.mxu0
    %5046 = vdwg.mxu0
    %5047 = vmatpush.bf16.msra.mxu0 %v4870
    %5048 = vmatpush.bf16.msra.mxu0 %v4867
    %5049 = vmatpush.bf16.msra.mxu0 %v4864
    %5050 = vmatpush.bf16.msra.mxu0 %v4861
    %5051 = vmatpush.bf16.msra.mxu0 %v4858
    %5052 = vmatpush.bf16.msra.mxu0 %v4855
    %5053 = vmatpush.bf16.msra.mxu0 %v4852
    %5054 = vmatpush.bf16.msra.mxu0 %v4849
    %5055 = vmatmul.bf16.gmra.mxu0 %v4458
    %v5056 = vpop.f32.mrf.mxu0
    %v5057 = vadd.f32 %v5044, %v5056
    %v5058 = vpop.f32.mrf.mxu0
    %5059 = vdwg.mxu0
    %v5060 = vadd.f32 %v4459, %v4979
    %v5061 = vadd.f32 %v4460, %v5018
    %v5062 = vadd.f32 %v4461, %v5057
    %5063 = vst [vmem:[#allocation3] sm:$0xff] %v5060
    %5064 = vst [vmem:[#allocation3 + $0x8] sm:$0xff] %v5061
    %5065 = vst [vmem:[#allocation3 + $0x10] sm:$0xff] %v5062
    %v5066 = vld [vmem:[#allocation2 + $0x60] sm:$0xff]
    %v5067 = vld [vmem:[#allocation2 + $0x68] sm:$0xff]
    %v5068 = vld [vmem:[#allocation2 + $0x70] sm:$0xff]
    %5069 = vmatpush.bf16.msra.mxu0 %v1113
    %5070 = vmatpush.bf16.msra.mxu0 %v1110
    %5071 = vmatpush.bf16.msra.mxu0 %v1107
    %5072 = vmatpush.bf16.msra.mxu0 %v1104
    %5073 = vmatpush.bf16.msra.mxu0 %v1101
    %5074 = vmatpush.bf16.msra.mxu0 %v1098
    %5075 = vmatpush.bf16.msra.mxu0 %v1095
    %5076 = vmatpush.bf16.msra.mxu0 %v1092
    %5077 = vmatmul.bf16.gmra.mxu0 %v4213
    %v5078 = vpop.f32.mrf.mxu0
    %v5079 = vadd.f32 0.0, %v5078
    %v5080 = vpop.f32.mrf.mxu0
    %5081 = vdwg.mxu0
    %5082 = vmatpush.bf16.msra.mxu0 %v1137
    %5083 = vmatpush.bf16.msra.mxu0 %v1134
    %5084 = vmatpush.bf16.msra.mxu0 %v1131
    %5085 = vmatpush.bf16.msra.mxu0 %v1128
    %5086 = vmatpush.bf16.msra.mxu0 %v1125
    %5087 = vmatpush.bf16.msra.mxu0 %v1122
    %5088 = vmatpush.bf16.msra.mxu0 %v1119
    %5089 = vmatpush.bf16.msra.mxu0 %v1116
    %5090 = vmatmul.bf16.gmra.mxu0 %v4214
    %v5091 = vpop.f32.mrf.mxu0
    %v5092 = vadd.f32 %v5079, %v5091
    %v5093 = vpop.f32.mrf.mxu0
    %5094 = vdwg.mxu0
    %5095 = vmatpush.bf16.msra.mxu0 %v1161
    %5096 = vmatpush.bf16.msra.mxu0 %v1158
    %5097 = vmatpush.bf16.msra.mxu0 %v1155
    %5098 = vmatpush.bf16.msra.mxu0 %v1152
    %5099 = vmatpush.bf16.msra.mxu0 %v1149
    %5100 = vmatpush.bf16.msra.mxu0 %v1146
    %5101 = vmatpush.bf16.msra.mxu0 %v1143
    %5102 = vmatpush.bf16.msra.mxu0 %v1140
    %5103 = vmatmul.bf16.gmra.mxu0 %v4215
    %v5104 = vpop.f32.mrf.mxu0
    %v5105 = vadd.f32 %v5092, %v5104
    %v5106 = vpop.f32.mrf.mxu0
    %5107 = vdwg.mxu0
    %5108 = vmatpush.bf16.msra.mxu0 %v1114
    %5109 = vmatpush.bf16.msra.mxu0 %v1111
    %5110 = vmatpush.bf16.msra.mxu0 %v1108
    %5111 = vmatpush.bf16.msra.mxu0 %v1105
    %5112 = vmatpush.bf16.msra.mxu0 %v1102
    %5113 = vmatpush.bf16.msra.mxu0 %v1099
    %5114 = vmatpush.bf16.msra.mxu0 %v1096
    %5115 = vmatpush.bf16.msra.mxu0 %v1093
    %5116 = vmatmul.bf16.gmra.mxu0 %v4213
    %v5117 = vpop.f32.mrf.mxu0
    %v5118 = vadd.f32 0.0, %v5117
    %v5119 = vpop.f32.mrf.mxu0
    %5120 = vdwg.mxu0
    %5121 = vmatpush.bf16.msra.mxu0 %v1138
    %5122 = vmatpush.bf16.msra.mxu0 %v1135
    %5123 = vmatpush.bf16.msra.mxu0 %v1132
    %5124 = vmatpush.bf16.msra.mxu0 %v1129
    %5125 = vmatpush.bf16.msra.mxu0 %v1126
    %5126 = vmatpush.bf16.msra.mxu0 %v1123
    %5127 = vmatpush.bf16.msra.mxu0 %v1120
    %5128 = vmatpush.bf16.msra.mxu0 %v1117
    %5129 = vmatmul.bf16.gmra.mxu0 %v4214
    %v5130 = vpop.f32.mrf.mxu0
    %v5131 = vadd.f32 %v5118, %v5130
    %v5132 = vpop.f32.mrf.mxu0
    %5133 = vdwg.mxu0
    %5134 = vmatpush.bf16.msra.mxu0 %v1162
    %5135 = vmatpush.bf16.msra.mxu0 %v1159
    %5136 = vmatpush.bf16.msra.mxu0 %v1156
    %5137 = vmatpush.bf16.msra.mxu0 %v1153
    %5138 = vmatpush.bf16.msra.mxu0 %v1150
    %5139 = vmatpush.bf16.msra.mxu0 %v1147
    %5140 = vmatpush.bf16.msra.mxu0 %v1144
    %5141 = vmatpush.bf16.msra.mxu0 %v1141
    %5142 = vmatmul.bf16.gmra.mxu0 %v4215
    %v5143 = vpop.f32.mrf.mxu0
    %v5144 = vadd.f32 %v5131, %v5143
    %v5145 = vpop.f32.mrf.mxu0
    %5146 = vdwg.mxu0
    %5147 = vmatpush.bf16.msra.mxu0 %v1115
    %5148 = vmatpush.bf16.msra.mxu0 %v1112
    %5149 = vmatpush.bf16.msra.mxu0 %v1109
    %5150 = vmatpush.bf16.msra.mxu0 %v1106
    %5151 = vmatpush.bf16.msra.mxu0 %v1103
    %5152 = vmatpush.bf16.msra.mxu0 %v1100
    %5153 = vmatpush.bf16.msra.mxu0 %v1097
    %5154 = vmatpush.bf16.msra.mxu0 %v1094
    %5155 = vmatmul.bf16.gmra.mxu0 %v4213
    %v5156 = vpop.f32.mrf.mxu0
    %v5157 = vadd.f32 0.0, %v5156
    %v5158 = vpop.f32.mrf.mxu0
    %5159 = vdwg.mxu0
    %5160 = vmatpush.bf16.msra.mxu0 %v1139
    %5161 = vmatpush.bf16.msra.mxu0 %v1136
    %5162 = vmatpush.bf16.msra.mxu0 %v1133
    %5163 = vmatpush.bf16.msra.mxu0 %v1130
    %5164 = vmatpush.bf16.msra.mxu0 %v1127
    %5165 = vmatpush.bf16.msra.mxu0 %v1124
    %5166 = vmatpush.bf16.msra.mxu0 %v1121
    %5167 = vmatpush.bf16.msra.mxu0 %v1118
    %5168 = vmatmul.bf16.gmra.mxu0 %v4214
    %v5169 = vpop.f32.mrf.mxu0
    %v5170 = vadd.f32 %v5157, %v5169
    %v5171 = vpop.f32.mrf.mxu0
    %5172 = vdwg.mxu0
    %5173 = vmatpush.bf16.msra.mxu0 %v1163
    %5174 = vmatpush.bf16.msra.mxu0 %v1160
    %5175 = vmatpush.bf16.msra.mxu0 %v1157
    %5176 = vmatpush.bf16.msra.mxu0 %v1154
    %5177 = vmatpush.bf16.msra.mxu0 %v1151
    %5178 = vmatpush.bf16.msra.mxu0 %v1148
    %5179 = vmatpush.bf16.msra.mxu0 %v1145
    %5180 = vmatpush.bf16.msra.mxu0 %v1142
    %5181 = vmatmul.bf16.gmra.mxu0 %v4215
    %v5182 = vpop.f32.mrf.mxu0
    %v5183 = vadd.f32 %v5170, %v5182
    %v5184 = vpop.f32.mrf.mxu0
    %5185 = vdwg.mxu0
    %v5186 = vadd.f32 %v5066, %v5105
    %v5187 = vadd.f32 %v5067, %v5144
    %v5188 = vadd.f32 %v5068, %v5183
    %v5189 = vtanh.pop %v5186
    %v5190 = vtanh.pop %v5187
    %v5191 = vtanh.pop %v5188
    %v5192 = vpack.c.bf16 %v5189, %v5189
    %v5193 = vpack.c.bf16 %v5190, %v5190
    %v5194 = vpack.c.bf16 %v5191, %v5191
    %5195 = vmatpush.bf16.msra.mxu0 %v1752
    %5196 = vmatpush.bf16.msra.mxu0 %v1749
    %5197 = vmatpush.bf16.msra.mxu0 %v1746
    %5198 = vmatpush.bf16.msra.mxu0 %v1743
    %5199 = vmatpush.bf16.msra.mxu0 %v1740
    %5200 = vmatpush.bf16.msra.mxu0 %v1737
    %5201 = vmatpush.bf16.msra.mxu0 %v1734
    %5202 = vmatpush.bf16.msra.mxu0 %v1731
    %5203 = vmatmul.bf16.gmra.mxu0 %v4456
    %v5204 = vpop.f32.mrf.mxu0
    %v5205 = vadd.f32 0.0, %v5204
    %v5206 = vpop.f32.mrf.mxu0
    %5207 = vdwg.mxu0
    %5208 = vmatpush.bf16.msra.mxu0 %v1776
    %5209 = vmatpush.bf16.msra.mxu0 %v1773
    %5210 = vmatpush.bf16.msra.mxu0 %v1770
    %5211 = vmatpush.bf16.msra.mxu0 %v1767
    %5212 = vmatpush.bf16.msra.mxu0 %v1764
    %5213 = vmatpush.bf16.msra.mxu0 %v1761
    %5214 = vmatpush.bf16.msra.mxu0 %v1758
    %5215 = vmatpush.bf16.msra.mxu0 %v1755
    %5216 = vmatmul.bf16.gmra.mxu0 %v4457
    %v5217 = vpop.f32.mrf.mxu0
    %v5218 = vadd.f32 %v5205, %v5217
    %v5219 = vpop.f32.mrf.mxu0
    %5220 = vdwg.mxu0
    %5221 = vmatpush.bf16.msra.mxu0 %v1800
    %5222 = vmatpush.bf16.msra.mxu0 %v1797
    %5223 = vmatpush.bf16.msra.mxu0 %v1794
    %5224 = vmatpush.bf16.msra.mxu0 %v1791
    %5225 = vmatpush.bf16.msra.mxu0 %v1788
    %5226 = vmatpush.bf16.msra.mxu0 %v1785
    %5227 = vmatpush.bf16.msra.mxu0 %v1782
    %5228 = vmatpush.bf16.msra.mxu0 %v1779
    %5229 = vmatmul.bf16.gmra.mxu0 %v4458
    %v5230 = vpop.f32.mrf.mxu0
    %v5231 = vadd.f32 %v5218, %v5230
    %v5232 = vpop.f32.mrf.mxu0
    %5233 = vdwg.mxu0
    %5234 = vmatpush.bf16.msra.mxu0 %v1753
    %5235 = vmatpush.bf16.msra.mxu0 %v1750
    %5236 = vmatpush.bf16.msra.mxu0 %v1747
    %5237 = vmatpush.bf16.msra.mxu0 %v1744
    %5238 = vmatpush.bf16.msra.mxu0 %v1741
    %5239 = vmatpush.bf16.msra.mxu0 %v1738
    %5240 = vmatpush.bf16.msra.mxu0 %v1735
    %5241 = vmatpush.bf16.msra.mxu0 %v1732
    %5242 = vmatmul.bf16.gmra.mxu0 %v4456
    %v5243 = vpop.f32.mrf.mxu0
    %v5244 = vadd.f32 0.0, %v5243
    %v5245 = vpop.f32.mrf.mxu0
    %5246 = vdwg.mxu0
    %5247 = vmatpush.bf16.msra.mxu0 %v1777
    %5248 = vmatpush.bf16.msra.mxu0 %v1774
    %5249 = vmatpush.bf16.msra.mxu0 %v1771
    %5250 = vmatpush.bf16.msra.mxu0 %v1768
    %5251 = vmatpush.bf16.msra.mxu0 %v1765
    %5252 = vmatpush.bf16.msra.mxu0 %v1762
    %5253 = vmatpush.bf16.msra.mxu0 %v1759
    %5254 = vmatpush.bf16.msra.mxu0 %v1756
    %5255 = vmatmul.bf16.gmra.mxu0 %v4457
    %v5256 = vpop.f32.mrf.mxu0
    %v5257 = vadd.f32 %v5244, %v5256
    %v5258 = vpop.f32.mrf.mxu0
    %5259 = vdwg.mxu0
    %5260 = vmatpush.bf16.msra.mxu0 %v1801
    %5261 = vmatpush.bf16.msra.mxu0 %v1798
    %5262 = vmatpush.bf16.msra.mxu0 %v1795
    %5263 = vmatpush.bf16.msra.mxu0 %v1792
    %5264 = vmatpush.bf16.msra.mxu0 %v1789
    %5265 = vmatpush.bf16.msra.mxu0 %v1786
    %5266 = vmatpush.bf16.msra.mxu0 %v1783
    %5267 = vmatpush.bf16.msra.mxu0 %v1780
    %5268 = vmatmul.bf16.gmra.mxu0 %v4458
    %v5269 = vpop.f32.mrf.mxu0
    %v5270 = vadd.f32 %v5257, %v5269
    %v5271 = vpop.f32.mrf.mxu0
    %5272 = vdwg.mxu0
    %5273 = vmatpush.bf16.msra.mxu0 %v1754
    %5274 = vmatpush.bf16.msra.mxu0 %v1751
    %5275 = vmatpush.bf16.msra.mxu0 %v1748
    %5276 = vmatpush.bf16.msra.mxu0 %v1745
    %5277 = vmatpush.bf16.msra.mxu0 %v1742
    %5278 = vmatpush.bf16.msra.mxu0 %v1739
    %5279 = vmatpush.bf16.msra.mxu0 %v1736
    %5280 = vmatpush.bf16.msra.mxu0 %v1733
    %5281 = vmatmul.bf16.gmra.mxu0 %v4456
    %v5282 = vpop.f32.mrf.mxu0
    %v5283 = vadd.f32 0.0, %v5282
    %v5284 = vpop.f32.mrf.mxu0
    %5285 = vdwg.mxu0
    %5286 = vmatpush.bf16.msra.mxu0 %v1778
    %5287 = vmatpush.bf16.msra.mxu0 %v1775
    %5288 = vmatpush.bf16.msra.mxu0 %v1772
    %5289 = vmatpush.bf16.msra.mxu0 %v1769
    %5290 = vmatpush.bf16.msra.mxu0 %v1766
    %5291 = vmatpush.bf16.msra.mxu0 %v1763
    %5292 = vmatpush.bf16.msra.mxu0 %v1760
    %5293 = vmatpush.bf16.msra.mxu0 %v1757
    %5294 = vmatmul.bf16.gmra.mxu0 %v4457
    %v5295 = vpop.f32.mrf.mxu0
    %v5296 = vadd.f32 %v5283, %v5295
    %v5297 = vpop.f32.mrf.mxu0
    %5298 = vdwg.mxu0
    %5299 = vmatpush.bf16.msra.mxu0 %v1802
    %5300 = vmatpush.bf16.msra.mxu0 %v1799
    %5301 = vmatpush.bf16.msra.mxu0 %v1796
    %5302 = vmatpush.bf16.msra.mxu0 %v1793
    %5303 = vmatpush.bf16.msra.mxu0 %v1790
    %5304 = vmatpush.bf16.msra.mxu0 %v1787
    %5305 = vmatpush.bf16.msra.mxu0 %v1784
    %5306 = vmatpush.bf16.msra.mxu0 %v1781
    %5307 = vmatmul.bf16.gmra.mxu0 %v4458
    %v5308 = vpop.f32.mrf.mxu0
    %v5309 = vadd.f32 %v5296, %v5308
    %v5310 = vpop.f32.mrf.mxu0
    %5311 = vdwg.mxu0
    %5312 = vmatpush.bf16.msra.mxu0 %v2253
    %5313 = vmatpush.bf16.msra.mxu0 %v2250
    %5314 = vmatpush.bf16.msra.mxu0 %v2247
    %5315 = vmatpush.bf16.msra.mxu0 %v2244
    %5316 = vmatpush.bf16.msra.mxu0 %v2241
    %5317 = vmatpush.bf16.msra.mxu0 %v2238
    %5318 = vmatpush.bf16.msra.mxu0 %v2235
    %5319 = vmatpush.bf16.msra.mxu0 %v2232
    %5320 = vmatmul.bf16.gmra.mxu0 %v4213
    %v5321 = vpop.f32.mrf.mxu0
    %v5322 = vadd.f32 %v5231, %v5321
    %v5323 = vpop.f32.mrf.mxu0
    %5324 = vdwg.mxu0
    %5325 = vmatpush.bf16.msra.mxu0 %v2277
    %5326 = vmatpush.bf16.msra.mxu0 %v2274
    %5327 = vmatpush.bf16.msra.mxu0 %v2271
    %5328 = vmatpush.bf16.msra.mxu0 %v2268
    %5329 = vmatpush.bf16.msra.mxu0 %v2265
    %5330 = vmatpush.bf16.msra.mxu0 %v2262
    %5331 = vmatpush.bf16.msra.mxu0 %v2259
    %5332 = vmatpush.bf16.msra.mxu0 %v2256
    %5333 = vmatmul.bf16.gmra.mxu0 %v4214
    %v5334 = vpop.f32.mrf.mxu0
    %v5335 = vadd.f32 %v5322, %v5334
    %v5336 = vpop.f32.mrf.mxu0
    %5337 = vdwg.mxu0
    %5338 = vmatpush.bf16.msra.mxu0 %v2301
    %5339 = vmatpush.bf16.msra.mxu0 %v2298
    %5340 = vmatpush.bf16.msra.mxu0 %v2295
    %5341 = vmatpush.bf16.msra.mxu0 %v2292
    %5342 = vmatpush.bf16.msra.mxu0 %v2289
    %5343 = vmatpush.bf16.msra.mxu0 %v2286
    %5344 = vmatpush.bf16.msra.mxu0 %v2283
    %5345 = vmatpush.bf16.msra.mxu0 %v2280
    %5346 = vmatmul.bf16.gmra.mxu0 %v4215
    %v5347 = vpop.f32.mrf.mxu0
    %v5348 = vadd.f32 %v5335, %v5347
    %v5349 = vpop.f32.mrf.mxu0
    %5350 = vdwg.mxu0
    %5351 = vmatpush.bf16.msra.mxu0 %v2254
    %5352 = vmatpush.bf16.msra.mxu0 %v2251
    %5353 = vmatpush.bf16.msra.mxu0 %v2248
    %5354 = vmatpush.bf16.msra.mxu0 %v2245
    %5355 = vmatpush.bf16.msra.mxu0 %v2242
    %5356 = vmatpush.bf16.msra.mxu0 %v2239
    %5357 = vmatpush.bf16.msra.mxu0 %v2236
    %5358 = vmatpush.bf16.msra.mxu0 %v2233
    %5359 = vmatmul.bf16.gmra.mxu0 %v4213
    %v5360 = vpop.f32.mrf.mxu0
    %v5361 = vadd.f32 %v5270, %v5360
    %v5362 = vpop.f32.mrf.mxu0
    %5363 = vdwg.mxu0
    %5364 = vmatpush.bf16.msra.mxu0 %v2278
    %5365 = vmatpush.bf16.msra.mxu0 %v2275
    %5366 = vmatpush.bf16.msra.mxu0 %v2272
    %5367 = vmatpush.bf16.msra.mxu0 %v2269
    %5368 = vmatpush.bf16.msra.mxu0 %v2266
    %5369 = vmatpush.bf16.msra.mxu0 %v2263
    %5370 = vmatpush.bf16.msra.mxu0 %v2260
    %5371 = vmatpush.bf16.msra.mxu0 %v2257
    %5372 = vmatmul.bf16.gmra.mxu0 %v4214
    %v5373 = vpop.f32.mrf.mxu0
    %v5374 = vadd.f32 %v5361, %v5373
    %v5375 = vpop.f32.mrf.mxu0
    %5376 = vdwg.mxu0
    %5377 = vmatpush.bf16.msra.mxu0 %v2302
    %5378 = vmatpush.bf16.msra.mxu0 %v2299
    %5379 = vmatpush.bf16.msra.mxu0 %v2296
    %5380 = vmatpush.bf16.msra.mxu0 %v2293
    %5381 = vmatpush.bf16.msra.mxu0 %v2290
    %5382 = vmatpush.bf16.msra.mxu0 %v2287
    %5383 = vmatpush.bf16.msra.mxu0 %v2284
    %5384 = vmatpush.bf16.msra.mxu0 %v2281
    %5385 = vmatmul.bf16.gmra.mxu0 %v4215
    %v5386 = vpop.f32.mrf.mxu0
    %v5387 = vadd.f32 %v5374, %v5386
    %v5388 = vpop.f32.mrf.mxu0
    %5389 = vdwg.mxu0
    %5390 = vmatpush.bf16.msra.mxu0 %v2255
    %5391 = vmatpush.bf16.msra.mxu0 %v2252
    %5392 = vmatpush.bf16.msra.mxu0 %v2249
    %5393 = vmatpush.bf16.msra.mxu0 %v2246
    %5394 = vmatpush.bf16.msra.mxu0 %v2243
    %5395 = vmatpush.bf16.msra.mxu0 %v2240
    %5396 = vmatpush.bf16.msra.mxu0 %v2237
    %5397 = vmatpush.bf16.msra.mxu0 %v2234
    %5398 = vmatmul.bf16.gmra.mxu0 %v4213
    %v5399 = vpop.f32.mrf.mxu0
    %v5400 = vadd.f32 %v5309, %v5399
    %v5401 = vpop.f32.mrf.mxu0
    %5402 = vdwg.mxu0
    %5403 = vmatpush.bf16.msra.mxu0 %v2279
    %5404 = vmatpush.bf16.msra.mxu0 %v2276
    %5405 = vmatpush.bf16.msra.mxu0 %v2273
    %5406 = vmatpush.bf16.msra.mxu0 %v2270
    %5407 = vmatpush.bf16.msra.mxu0 %v2267
    %5408 = vmatpush.bf16.msra.mxu0 %v2264
    %5409 = vmatpush.bf16.msra.mxu0 %v2261
    %5410 = vmatpush.bf16.msra.mxu0 %v2258
    %5411 = vmatmul.bf16.gmra.mxu0 %v4214
    %v5412 = vpop.f32.mrf.mxu0
    %v5413 = vadd.f32 %v5400, %v5412
    %v5414 = vpop.f32.mrf.mxu0
    %5415 = vdwg.mxu0
    %5416 = vmatpush.bf16.msra.mxu0 %v2303
    %5417 = vmatpush.bf16.msra.mxu0 %v2300
    %5418 = vmatpush.bf16.msra.mxu0 %v2297
    %5419 = vmatpush.bf16.msra.mxu0 %v2294
    %5420 = vmatpush.bf16.msra.mxu0 %v2291
    %5421 = vmatpush.bf16.msra.mxu0 %v2288
    %5422 = vmatpush.bf16.msra.mxu0 %v2285
    %5423 = vmatpush.bf16.msra.mxu0 %v2282
    %5424 = vmatmul.bf16.gmra.mxu0 %v4215
    %v5425 = vpop.f32.mrf.mxu0
    %v5426 = vadd.f32 %v5413, %v5425
    %v5427 = vpop.f32.mrf.mxu0
    %5428 = vdwg.mxu0
    %v5429 = vadd.f32 %v5348, %v832
    %v5430 = vadd.f32 %v5387, %v833
    %v5431 = vadd.f32 %v5426, %v834
    %v5432 = vtanh.pop %v5429
    %v5433 = vtanh.pop %v5430
    %v5434 = vtanh.pop %v5431
    %v5435 = vpack.c.bf16 %v5432, %v5432
    %v5436 = vpack.c.bf16 %v5433, %v5433
    %v5437 = vpack.c.bf16 %v5434, %v5434
    %v5438 = vld [vmem:[#allocation3] sm:$0xff]
    %v5439 = vld [vmem:[#allocation3 + $0x8] sm:$0xff]
    %v5440 = vld [vmem:[#allocation3 + $0x10] sm:$0xff]
    %s5441 = scalar_lea.vmem [#allocation14], 1728
    %v5442 = vld [vmem:[%s5441] sm:$0xff]
    %v5443 = vld [vmem:[%s5441 + $0x8] sm:$0xf]
    %v5444 = vld [vmem:[%s5441 + $0xc] sm:$0xff]
    %v5445 = vld [vmem:[%s5441 + $0x14] sm:$0xf]
    %v5446 = vld [vmem:[%s5441 + $0x18] sm:$0xff]
    %v5447 = vld [vmem:[%s5441 + $0x20] sm:$0xf]
    %v5448 = vld [vmem:[%s5441 + $0x24] sm:$0xff]
    %v5449 = vld [vmem:[%s5441 + $0x2c] sm:$0xf]
    %v5450 = vld [vmem:[%s5441 + $0x30] sm:$0xff]
    %v5451 = vld [vmem:[%s5441 + $0x38] sm:$0xf]
    %v5452 = vld [vmem:[%s5441 + $0x3c] sm:$0xff]
    %v5453 = vld [vmem:[%s5441 + $0x44] sm:$0xf]
    %v5454 = vld [vmem:[%s5441 + $0x48] sm:$0xff]
    %v5455 = vld [vmem:[%s5441 + $0x50] sm:$0xf]
    %v5456 = vld [vmem:[%s5441 + $0x54] sm:$0xff]
    %v5457 = vld [vmem:[%s5441 + $0x5c] sm:$0xf]
    %v5458 = vld [vmem:[%s5441 + $0x60] sm:$0xff]
    %v5459 = vld [vmem:[%s5441 + $0x68] sm:$0xf]
    %v5460 = vld [vmem:[%s5441 + $0x6c] sm:$0xff]
    %v5461 = vld [vmem:[%s5441 + $0x74] sm:$0xf]
    %v5462 = vld [vmem:[%s5441 + $0x78] sm:$0xff]
    %v5463 = vld [vmem:[%s5441 + $0x80] sm:$0xf]
    %v5464 = vld [vmem:[%s5441 + $0x84] sm:$0xff]
    %v5465 = vld [vmem:[%s5441 + $0x8c] sm:$0xf]
    %v5466 = vld [vmem:[%s5441 + $0x90] sm:$0xff]
    %v5467 = vld [vmem:[%s5441 + $0x98] sm:$0xf]
    %v5468 = vld [vmem:[%s5441 + $0x9c] sm:$0xff]
    %v5469 = vld [vmem:[%s5441 + $0xa4] sm:$0xf]
    %v5470 = vld [vmem:[%s5441 + $0xa8] sm:$0xff]
    %v5471 = vld [vmem:[%s5441 + $0xb0] sm:$0xf]
    %v5472 = vld [vmem:[%s5441 + $0xb4] sm:$0xff]
    %v5473 = vld [vmem:[%s5441 + $0xbc] sm:$0xf]
    %v5474 = vld [vmem:[%s5441 + $0xc0] sm:$0xff]
    %v5475 = vld [vmem:[%s5441 + $0xc8] sm:$0xf]
    %v5476 = vld [vmem:[%s5441 + $0xcc] sm:$0xff]
    %v5477 = vld [vmem:[%s5441 + $0xd4] sm:$0xf]
    %v5478 = vld [vmem:[%s5441 + $0xd8] sm:$0xff]
    %v5479 = vld [vmem:[%s5441 + $0xe0] sm:$0xf]
    %v5480 = vld [vmem:[%s5441 + $0xe4] sm:$0xff]
    %v5481 = vld [vmem:[%s5441 + $0xec] sm:$0xf]
    %v5482 = vld [vmem:[%s5441 + $0xf0] sm:$0xff]
    %v5483 = vld [vmem:[%s5441 + $0xf8] sm:$0xf]
    %v5484 = vld [vmem:[%s5441 + $0xfc] sm:$0xff]
    %v5485 = vld [vmem:[%s5441 + $0x104] sm:$0xf]
    %v5486 = vld [vmem:[%s5441 + $0x108] sm:$0xff]
    %v5487 = vld [vmem:[%s5441 + $0x110] sm:$0xf]
    %v5488 = vld [vmem:[%s5441 + $0x114] sm:$0xff]
    %v5489 = vld [vmem:[%s5441 + $0x11c] sm:$0xf]
    %v5490 = vld [vmem:[%s5441 + $0x120] sm:$0xff]
    %v5491 = vld [vmem:[%s5441 + $0x128] sm:$0xf]
    %v5492 = vld [vmem:[%s5441 + $0x12c] sm:$0xff]
    %v5493 = vld [vmem:[%s5441 + $0x134] sm:$0xf]
    %v5494 = vld [vmem:[%s5441 + $0x138] sm:$0xff]
    %v5495 = vld [vmem:[%s5441 + $0x140] sm:$0xf]
    %v5496 = vld [vmem:[%s5441 + $0x144] sm:$0xff]
    %v5497 = vld [vmem:[%s5441 + $0x14c] sm:$0xf]
    %v5498 = vld [vmem:[%s5441 + $0x150] sm:$0xff]
    %v5499 = vld [vmem:[%s5441 + $0x158] sm:$0xf]
    %v5500 = vld [vmem:[%s5441 + $0x15c] sm:$0xff]
    %v5501 = vld [vmem:[%s5441 + $0x164] sm:$0xf]
    %v5502 = vld [vmem:[%s5441 + $0x168] sm:$0xff]
    %v5503 = vld [vmem:[%s5441 + $0x170] sm:$0xf]
    %v5504 = vld [vmem:[%s5441 + $0x174] sm:$0xff]
    %v5505 = vld [vmem:[%s5441 + $0x17c] sm:$0xf]
    %v5506 = vld [vmem:[%s5441 + $0x180] sm:$0xff]
    %v5507 = vld [vmem:[%s5441 + $0x188] sm:$0xf]
    %v5508 = vld [vmem:[%s5441 + $0x18c] sm:$0xff]
    %v5509 = vld [vmem:[%s5441 + $0x194] sm:$0xf]
    %v5510 = vld [vmem:[%s5441 + $0x198] sm:$0xff]
    %v5511 = vld [vmem:[%s5441 + $0x1a0] sm:$0xf]
    %v5512 = vld [vmem:[%s5441 + $0x1a4] sm:$0xff]
    %v5513 = vld [vmem:[%s5441 + $0x1ac] sm:$0xf]
    %v5514 = vld [vmem:[%s5441 + $0x1b0] sm:$0xff]
    %v5515 = vld [vmem:[%s5441 + $0x1b8] sm:$0xf]
    %v5516 = vld [vmem:[%s5441 + $0x1bc] sm:$0xff]
    %v5517 = vld [vmem:[%s5441 + $0x1c4] sm:$0xf]
    %v5518 = vld [vmem:[%s5441 + $0x1c8] sm:$0xff]
    %v5519 = vld [vmem:[%s5441 + $0x1d0] sm:$0xf]
    %v5520 = vld [vmem:[%s5441 + $0x1d4] sm:$0xff]
    %v5521 = vld [vmem:[%s5441 + $0x1dc] sm:$0xf]
    %v5522 = vld [vmem:[%s5441 + $0x1e0] sm:$0xff]
    %v5523 = vld [vmem:[%s5441 + $0x1e8] sm:$0xf]
    %v5524 = vld [vmem:[%s5441 + $0x1ec] sm:$0xff]
    %v5525 = vld [vmem:[%s5441 + $0x1f4] sm:$0xf]
    %v5526 = vld [vmem:[%s5441 + $0x1f8] sm:$0xff]
    %v5527 = vld [vmem:[%s5441 + $0x200] sm:$0xf]
    %v5528 = vld [vmem:[%s5441 + $0x204] sm:$0xff]
    %v5529 = vld [vmem:[%s5441 + $0x20c] sm:$0xf]
    %v5530 = vld [vmem:[%s5441 + $0x210] sm:$0xff]
    %v5531 = vld [vmem:[%s5441 + $0x218] sm:$0xf]
    %v5532 = vld [vmem:[%s5441 + $0x21c] sm:$0xff]
    %v5533 = vld [vmem:[%s5441 + $0x224] sm:$0xf]
    %v5534 = vld [vmem:[%s5441 + $0x228] sm:$0xff]
    %v5535 = vld [vmem:[%s5441 + $0x230] sm:$0xf]
    %v5536 = vld [vmem:[%s5441 + $0x234] sm:$0xff]
    %v5537 = vld [vmem:[%s5441 + $0x23c] sm:$0xf]
    %v5634 = vunpack.c.l.b16 %v5442
    %v5635 = vunpack.c.h.b16 %v5442
    %v5636 = vunpack.c.l.b16 %v5443
    %v5637 = vunpack.c.l.b16 %v5444
    %v5638 = vunpack.c.h.b16 %v5444
    %v5639 = vunpack.c.l.b16 %v5445
    %v5640 = vunpack.c.l.b16 %v5446
    %v5641 = vunpack.c.h.b16 %v5446
    %v5642 = vunpack.c.l.b16 %v5447
    %v5643 = vunpack.c.l.b16 %v5448
    %v5644 = vunpack.c.h.b16 %v5448
    %v5645 = vunpack.c.l.b16 %v5449
    %v5646 = vunpack.c.l.b16 %v5450
    %v5647 = vunpack.c.h.b16 %v5450
    %v5648 = vunpack.c.l.b16 %v5451
    %v5649 = vunpack.c.l.b16 %v5452
    %v5650 = vunpack.c.h.b16 %v5452
    %v5651 = vunpack.c.l.b16 %v5453
    %v5652 = vunpack.c.l.b16 %v5454
    %v5653 = vunpack.c.h.b16 %v5454
    %v5654 = vunpack.c.l.b16 %v5455
    %v5655 = vunpack.c.l.b16 %v5456
    %v5656 = vunpack.c.h.b16 %v5456
    %v5657 = vunpack.c.l.b16 %v5457
    %v5658 = vunpack.c.l.b16 %v5458
    %v5659 = vunpack.c.h.b16 %v5458
    %v5660 = vunpack.c.l.b16 %v5459
    %v5661 = vunpack.c.l.b16 %v5460
    %v5662 = vunpack.c.h.b16 %v5460
    %v5663 = vunpack.c.l.b16 %v5461
    %v5664 = vunpack.c.l.b16 %v5462
    %v5665 = vunpack.c.h.b16 %v5462
    %v5666 = vunpack.c.l.b16 %v5463
    %v5667 = vunpack.c.l.b16 %v5464
    %v5668 = vunpack.c.h.b16 %v5464
    %v5669 = vunpack.c.l.b16 %v5465
    %v5670 = vunpack.c.l.b16 %v5466
    %v5671 = vunpack.c.h.b16 %v5466
    %v5672 = vunpack.c.l.b16 %v5467
    %v5673 = vunpack.c.l.b16 %v5468
    %v5674 = vunpack.c.h.b16 %v5468
    %v5675 = vunpack.c.l.b16 %v5469
    %v5676 = vunpack.c.l.b16 %v5470
    %v5677 = vunpack.c.h.b16 %v5470
    %v5678 = vunpack.c.l.b16 %v5471
    %v5679 = vunpack.c.l.b16 %v5472
    %v5680 = vunpack.c.h.b16 %v5472
    %v5681 = vunpack.c.l.b16 %v5473
    %v5682 = vunpack.c.l.b16 %v5474
    %v5683 = vunpack.c.h.b16 %v5474
    %v5684 = vunpack.c.l.b16 %v5475
    %v5685 = vunpack.c.l.b16 %v5476
    %v5686 = vunpack.c.h.b16 %v5476
    %v5687 = vunpack.c.l.b16 %v5477
    %v5688 = vunpack.c.l.b16 %v5478
    %v5689 = vunpack.c.h.b16 %v5478
    %v5690 = vunpack.c.l.b16 %v5479
    %v5691 = vunpack.c.l.b16 %v5480
    %v5692 = vunpack.c.h.b16 %v5480
    %v5693 = vunpack.c.l.b16 %v5481
    %v5694 = vunpack.c.l.b16 %v5482
    %v5695 = vunpack.c.h.b16 %v5482
    %v5696 = vunpack.c.l.b16 %v5483
    %v5697 = vunpack.c.l.b16 %v5484
    %v5698 = vunpack.c.h.b16 %v5484
    %v5699 = vunpack.c.l.b16 %v5485
    %v5700 = vunpack.c.l.b16 %v5486
    %v5701 = vunpack.c.h.b16 %v5486
    %v5702 = vunpack.c.l.b16 %v5487
    %v5703 = vunpack.c.l.b16 %v5488
    %v5704 = vunpack.c.h.b16 %v5488
    %v5705 = vunpack.c.l.b16 %v5489
    %v5706 = vunpack.c.l.b16 %v5490
    %v5707 = vunpack.c.h.b16 %v5490
    %v5708 = vunpack.c.l.b16 %v5491
    %v5709 = vunpack.c.l.b16 %v5492
    %v5710 = vunpack.c.h.b16 %v5492
    %v5711 = vunpack.c.l.b16 %v5493
    %v5712 = vunpack.c.l.b16 %v5494
    %v5713 = vunpack.c.h.b16 %v5494
    %v5714 = vunpack.c.l.b16 %v5495
    %v5715 = vunpack.c.l.b16 %v5496
    %v5716 = vunpack.c.h.b16 %v5496
    %v5717 = vunpack.c.l.b16 %v5497
    %v5718 = vunpack.c.l.b16 %v5498
    %v5719 = vunpack.c.h.b16 %v5498
    %v5720 = vunpack.c.l.b16 %v5499
    %v5721 = vunpack.c.l.b16 %v5500
    %v5722 = vunpack.c.h.b16 %v5500
    %v5723 = vunpack.c.l.b16 %v5501
    %v5724 = vunpack.c.l.b16 %v5502
    %v5725 = vunpack.c.h.b16 %v5502
    %v5726 = vunpack.c.l.b16 %v5503
    %v5727 = vunpack.c.l.b16 %v5504
    %v5728 = vunpack.c.h.b16 %v5504
    %v5729 = vunpack.c.l.b16 %v5505
    %v5730 = vunpack.c.l.b16 %v5506
    %v5731 = vunpack.c.h.b16 %v5506
    %v5732 = vunpack.c.l.b16 %v5507
    %v5733 = vunpack.c.l.b16 %v5508
    %v5734 = vunpack.c.h.b16 %v5508
    %v5735 = vunpack.c.l.b16 %v5509
    %v5736 = vunpack.c.l.b16 %v5510
    %v5737 = vunpack.c.h.b16 %v5510
    %v5738 = vunpack.c.l.b16 %v5511
    %v5739 = vunpack.c.l.b16 %v5512
    %v5740 = vunpack.c.h.b16 %v5512
    %v5741 = vunpack.c.l.b16 %v5513
    %v5742 = vunpack.c.l.b16 %v5514
    %v5743 = vunpack.c.h.b16 %v5514
    %v5744 = vunpack.c.l.b16 %v5515
    %v5745 = vunpack.c.l.b16 %v5516
    %v5746 = vunpack.c.h.b16 %v5516
    %v5747 = vunpack.c.l.b16 %v5517
    %v5748 = vunpack.c.l.b16 %v5518
    %v5749 = vunpack.c.h.b16 %v5518
    %v5750 = vunpack.c.l.b16 %v5519
    %v5751 = vunpack.c.l.b16 %v5520
    %v5752 = vunpack.c.h.b16 %v5520
    %v5753 = vunpack.c.l.b16 %v5521
    %v5754 = vunpack.c.l.b16 %v5522
    %v5755 = vunpack.c.h.b16 %v5522
    %v5756 = vunpack.c.l.b16 %v5523
    %v5757 = vunpack.c.l.b16 %v5524
    %v5758 = vunpack.c.h.b16 %v5524
    %v5759 = vunpack.c.l.b16 %v5525
    %v5760 = vunpack.c.l.b16 %v5526
    %v5761 = vunpack.c.h.b16 %v5526
    %v5762 = vunpack.c.l.b16 %v5527
    %v5763 = vunpack.c.l.b16 %v5528
    %v5764 = vunpack.c.h.b16 %v5528
    %v5765 = vunpack.c.l.b16 %v5529
    %v5766 = vunpack.c.l.b16 %v5530
    %v5767 = vunpack.c.h.b16 %v5530
    %v5768 = vunpack.c.l.b16 %v5531
    %v5769 = vunpack.c.l.b16 %v5532
    %v5770 = vunpack.c.h.b16 %v5532
    %v5771 = vunpack.c.l.b16 %v5533
    %v5772 = vunpack.c.l.b16 %v5534
    %v5773 = vunpack.c.h.b16 %v5534
    %v5774 = vunpack.c.l.b16 %v5535
    %v5775 = vunpack.c.l.b16 %v5536
    %v5776 = vunpack.c.h.b16 %v5536
    %v5777 = vunpack.c.l.b16 %v5537
    %v5778 = vpack.c.b16 %v5637, %v5634
    %v5779 = vpack.c.b16 %v5638, %v5635
    %v5780 = vpack.c.b16 %v5639, %v5636
    %v5781 = vpack.c.b16 %v5643, %v5640
    %v5782 = vpack.c.b16 %v5644, %v5641
    %v5783 = vpack.c.b16 %v5645, %v5642
    %v5784 = vpack.c.b16 %v5649, %v5646
    %v5785 = vpack.c.b16 %v5650, %v5647
    %v5786 = vpack.c.b16 %v5651, %v5648
    %v5787 = vpack.c.b16 %v5655, %v5652
    %v5788 = vpack.c.b16 %v5656, %v5653
    %v5789 = vpack.c.b16 %v5657, %v5654
    %v5790 = vpack.c.b16 %v5661, %v5658
    %v5791 = vpack.c.b16 %v5662, %v5659
    %v5792 = vpack.c.b16 %v5663, %v5660
    %v5793 = vpack.c.b16 %v5667, %v5664
    %v5794 = vpack.c.b16 %v5668, %v5665
    %v5795 = vpack.c.b16 %v5669, %v5666
    %v5796 = vpack.c.b16 %v5673, %v5670
    %v5797 = vpack.c.b16 %v5674, %v5671
    %v5798 = vpack.c.b16 %v5675, %v5672
    %v5799 = vpack.c.b16 %v5679, %v5676
    %v5800 = vpack.c.b16 %v5680, %v5677
    %v5801 = vpack.c.b16 %v5681, %v5678
    %v5802 = vpack.c.b16 %v5685, %v5682
    %v5803 = vpack.c.b16 %v5686, %v5683
    %v5804 = vpack.c.b16 %v5687, %v5684
    %v5805 = vpack.c.b16 %v5691, %v5688
    %v5806 = vpack.c.b16 %v5692, %v5689
    %v5807 = vpack.c.b16 %v5693, %v5690
    %v5808 = vpack.c.b16 %v5697, %v5694
    %v5809 = vpack.c.b16 %v5698, %v5695
    %v5810 = vpack.c.b16 %v5699, %v5696
    %v5811 = vpack.c.b16 %v5703, %v5700
    %v5812 = vpack.c.b16 %v5704, %v5701
    %v5813 = vpack.c.b16 %v5705, %v5702
    %v5814 = vpack.c.b16 %v5709, %v5706
    %v5815 = vpack.c.b16 %v5710, %v5707
    %v5816 = vpack.c.b16 %v5711, %v5708
    %v5817 = vpack.c.b16 %v5715, %v5712
    %v5818 = vpack.c.b16 %v5716, %v5713
    %v5819 = vpack.c.b16 %v5717, %v5714
    %v5820 = vpack.c.b16 %v5721, %v5718
    %v5821 = vpack.c.b16 %v5722, %v5719
    %v5822 = vpack.c.b16 %v5723, %v5720
    %v5823 = vpack.c.b16 %v5727, %v5724
    %v5824 = vpack.c.b16 %v5728, %v5725
    %v5825 = vpack.c.b16 %v5729, %v5726
    %v5826 = vpack.c.b16 %v5733, %v5730
    %v5827 = vpack.c.b16 %v5734, %v5731
    %v5828 = vpack.c.b16 %v5735, %v5732
    %v5829 = vpack.c.b16 %v5739, %v5736
    %v5830 = vpack.c.b16 %v5740, %v5737
    %v5831 = vpack.c.b16 %v5741, %v5738
    %v5832 = vpack.c.b16 %v5745, %v5742
    %v5833 = vpack.c.b16 %v5746, %v5743
    %v5834 = vpack.c.b16 %v5747, %v5744
    %v5835 = vpack.c.b16 %v5751, %v5748
    %v5836 = vpack.c.b16 %v5752, %v5749
    %v5837 = vpack.c.b16 %v5753, %v5750
    %v5838 = vpack.c.b16 %v5757, %v5754
    %v5839 = vpack.c.b16 %v5758, %v5755
    %v5840 = vpack.c.b16 %v5759, %v5756
    %v5841 = vpack.c.b16 %v5763, %v5760
    %v5842 = vpack.c.b16 %v5764, %v5761
    %v5843 = vpack.c.b16 %v5765, %v5762
    %v5844 = vpack.c.b16 %v5769, %v5766
    %v5845 = vpack.c.b16 %v5770, %v5767
    %v5846 = vpack.c.b16 %v5771, %v5768
    %v5847 = vpack.c.b16 %v5775, %v5772
    %v5848 = vpack.c.b16 %v5776, %v5773
    %v5849 = vpack.c.b16 %v5777, %v5774
    %5922 = vmatpush.bf16.msra.mxu0 %v5799
    %5923 = vmatpush.bf16.msra.mxu0 %v5796
    %5924 = vmatpush.bf16.msra.mxu0 %v5793
    %5925 = vmatpush.bf16.msra.mxu0 %v5790
    %5926 = vmatpush.bf16.msra.mxu0 %v5787
    %5927 = vmatpush.bf16.msra.mxu0 %v5784
    %5928 = vmatpush.bf16.msra.mxu0 %v5781
    %5929 = vmatpush.bf16.msra.mxu0 %v5778
    %5930 = vmatmul.bf16.gmra.mxu0 %v5435
    %v5931 = vpop.f32.mrf.mxu0
    %v5932 = vadd.f32 0.0, %v5931
    %v5933 = vpop.f32.mrf.mxu0
    %5934 = vdwg.mxu0
    %5935 = vmatpush.bf16.msra.mxu0 %v5823
    %5936 = vmatpush.bf16.msra.mxu0 %v5820
    %5937 = vmatpush.bf16.msra.mxu0 %v5817
    %5938 = vmatpush.bf16.msra.mxu0 %v5814
    %5939 = vmatpush.bf16.msra.mxu0 %v5811
    %5940 = vmatpush.bf16.msra.mxu0 %v5808
    %5941 = vmatpush.bf16.msra.mxu0 %v5805
    %5942 = vmatpush.bf16.msra.mxu0 %v5802
    %5943 = vmatmul.bf16.gmra.mxu0 %v5436
    %v5944 = vpop.f32.mrf.mxu0
    %v5945 = vadd.f32 %v5932, %v5944
    %v5946 = vpop.f32.mrf.mxu0
    %5947 = vdwg.mxu0
    %5948 = vmatpush.bf16.msra.mxu0 %v5847
    %5949 = vmatpush.bf16.msra.mxu0 %v5844
    %5950 = vmatpush.bf16.msra.mxu0 %v5841
    %5951 = vmatpush.bf16.msra.mxu0 %v5838
    %5952 = vmatpush.bf16.msra.mxu0 %v5835
    %5953 = vmatpush.bf16.msra.mxu0 %v5832
    %5954 = vmatpush.bf16.msra.mxu0 %v5829
    %5955 = vmatpush.bf16.msra.mxu0 %v5826
    %5956 = vmatmul.bf16.gmra.mxu0 %v5437
    %v5957 = vpop.f32.mrf.mxu0
    %v5958 = vadd.f32 %v5945, %v5957
    %v5959 = vpop.f32.mrf.mxu0
    %5960 = vdwg.mxu0
    %5961 = vmatpush.bf16.msra.mxu0 %v5800
    %5962 = vmatpush.bf16.msra.mxu0 %v5797
    %5963 = vmatpush.bf16.msra.mxu0 %v5794
    %5964 = vmatpush.bf16.msra.mxu0 %v5791
    %5965 = vmatpush.bf16.msra.mxu0 %v5788
    %5966 = vmatpush.bf16.msra.mxu0 %v5785
    %5967 = vmatpush.bf16.msra.mxu0 %v5782
    %5968 = vmatpush.bf16.msra.mxu0 %v5779
    %5969 = vmatmul.bf16.gmra.mxu0 %v5435
    %v5970 = vpop.f32.mrf.mxu0
    %v5971 = vadd.f32 0.0, %v5970
    %v5972 = vpop.f32.mrf.mxu0
    %5973 = vdwg.mxu0
    %5974 = vmatpush.bf16.msra.mxu0 %v5824
    %5975 = vmatpush.bf16.msra.mxu0 %v5821
    %5976 = vmatpush.bf16.msra.mxu0 %v5818
    %5977 = vmatpush.bf16.msra.mxu0 %v5815
    %5978 = vmatpush.bf16.msra.mxu0 %v5812
    %5979 = vmatpush.bf16.msra.mxu0 %v5809
    %5980 = vmatpush.bf16.msra.mxu0 %v5806
    %5981 = vmatpush.bf16.msra.mxu0 %v5803
    %5982 = vmatmul.bf16.gmra.mxu0 %v5436
    %v5983 = vpop.f32.mrf.mxu0
    %v5984 = vadd.f32 %v5971, %v5983
    %v5985 = vpop.f32.mrf.mxu0
    %5986 = vdwg.mxu0
    %5987 = vmatpush.bf16.msra.mxu0 %v5848
    %5988 = vmatpush.bf16.msra.mxu0 %v5845
    %5989 = vmatpush.bf16.msra.mxu0 %v5842
    %5990 = vmatpush.bf16.msra.mxu0 %v5839
    %5991 = vmatpush.bf16.msra.mxu0 %v5836
    %5992 = vmatpush.bf16.msra.mxu0 %v5833
    %5993 = vmatpush.bf16.msra.mxu0 %v5830
    %5994 = vmatpush.bf16.msra.mxu0 %v5827
    %5995 = vmatmul.bf16.gmra.mxu0 %v5437
    %v5996 = vpop.f32.mrf.mxu0
    %v5997 = vadd.f32 %v5984, %v5996
    %v5998 = vpop.f32.mrf.mxu0
    %5999 = vdwg.mxu0
    %6000 = vmatpush.bf16.msra.mxu0 %v5801
    %6001 = vmatpush.bf16.msra.mxu0 %v5798
    %6002 = vmatpush.bf16.msra.mxu0 %v5795
    %6003 = vmatpush.bf16.msra.mxu0 %v5792
    %6004 = vmatpush.bf16.msra.mxu0 %v5789
    %6005 = vmatpush.bf16.msra.mxu0 %v5786
    %6006 = vmatpush.bf16.msra.mxu0 %v5783
    %6007 = vmatpush.bf16.msra.mxu0 %v5780
    %6008 = vmatmul.bf16.gmra.mxu0 %v5435
    %v6009 = vpop.f32.mrf.mxu0
    %v6010 = vadd.f32 0.0, %v6009
    %v6011 = vpop.f32.mrf.mxu0
    %6012 = vdwg.mxu0
    %6013 = vmatpush.bf16.msra.mxu0 %v5825
    %6014 = vmatpush.bf16.msra.mxu0 %v5822
    %6015 = vmatpush.bf16.msra.mxu0 %v5819
    %6016 = vmatpush.bf16.msra.mxu0 %v5816
    %6017 = vmatpush.bf16.msra.mxu0 %v5813
    %6018 = vmatpush.bf16.msra.mxu0 %v5810
    %6019 = vmatpush.bf16.msra.mxu0 %v5807
    %6020 = vmatpush.bf16.msra.mxu0 %v5804
    %6021 = vmatmul.bf16.gmra.mxu0 %v5436
    %v6022 = vpop.f32.mrf.mxu0
    %v6023 = vadd.f32 %v6010, %v6022
    %v6024 = vpop.f32.mrf.mxu0
    %6025 = vdwg.mxu0
    %6026 = vmatpush.bf16.msra.mxu0 %v5849
    %6027 = vmatpush.bf16.msra.mxu0 %v5846
    %6028 = vmatpush.bf16.msra.mxu0 %v5843
    %6029 = vmatpush.bf16.msra.mxu0 %v5840
    %6030 = vmatpush.bf16.msra.mxu0 %v5837
    %6031 = vmatpush.bf16.msra.mxu0 %v5834
    %6032 = vmatpush.bf16.msra.mxu0 %v5831
    %6033 = vmatpush.bf16.msra.mxu0 %v5828
    %6034 = vmatmul.bf16.gmra.mxu0 %v5437
    %v6035 = vpop.f32.mrf.mxu0
    %v6036 = vadd.f32 %v6023, %v6035
    %v6037 = vpop.f32.mrf.mxu0
    %6038 = vdwg.mxu0
    %v6039 = vadd.f32 %v5438, %v5958
    %v6040 = vadd.f32 %v5439, %v5997
    %v6041 = vadd.f32 %v5440, %v6036
    %6042 = vst [vmem:[#allocation3] sm:$0xff] %v6039
    %6043 = vst [vmem:[#allocation3 + $0x8] sm:$0xff] %v6040
    %6044 = vst [vmem:[#allocation3 + $0x10] sm:$0xff] %v6041
    %v6045 = vld [vmem:[#allocation2 + $0x78] sm:$0xff]
    %v6046 = vld [vmem:[#allocation2 + $0x80] sm:$0xff]
    %v6047 = vld [vmem:[#allocation2 + $0x88] sm:$0xff]
    %6048 = vmatpush.bf16.msra.mxu0 %v1113
    %6049 = vmatpush.bf16.msra.mxu0 %v1110
    %6050 = vmatpush.bf16.msra.mxu0 %v1107
    %6051 = vmatpush.bf16.msra.mxu0 %v1104
    %6052 = vmatpush.bf16.msra.mxu0 %v1101
    %6053 = vmatpush.bf16.msra.mxu0 %v1098
    %6054 = vmatpush.bf16.msra.mxu0 %v1095
    %6055 = vmatpush.bf16.msra.mxu0 %v1092
    %6056 = vmatmul.bf16.gmra.mxu0 %v5192
    %v6057 = vpop.f32.mrf.mxu0
    %v6058 = vadd.f32 0.0, %v6057
    %v6059 = vpop.f32.mrf.mxu0
    %6060 = vdwg.mxu0
    %6061 = vmatpush.bf16.msra.mxu0 %v1137
    %6062 = vmatpush.bf16.msra.mxu0 %v1134
    %6063 = vmatpush.bf16.msra.mxu0 %v1131
    %6064 = vmatpush.bf16.msra.mxu0 %v1128
    %6065 = vmatpush.bf16.msra.mxu0 %v1125
    %6066 = vmatpush.bf16.msra.mxu0 %v1122
    %6067 = vmatpush.bf16.msra.mxu0 %v1119
    %6068 = vmatpush.bf16.msra.mxu0 %v1116
    %6069 = vmatmul.bf16.gmra.mxu0 %v5193
    %v6070 = vpop.f32.mrf.mxu0
    %v6071 = vadd.f32 %v6058, %v6070
    %v6072 = vpop.f32.mrf.mxu0
    %6073 = vdwg.mxu0
    %6074 = vmatpush.bf16.msra.mxu0 %v1161
    %6075 = vmatpush.bf16.msra.mxu0 %v1158
    %6076 = vmatpush.bf16.msra.mxu0 %v1155
    %6077 = vmatpush.bf16.msra.mxu0 %v1152
    %6078 = vmatpush.bf16.msra.mxu0 %v1149
    %6079 = vmatpush.bf16.msra.mxu0 %v1146
    %6080 = vmatpush.bf16.msra.mxu0 %v1143
    %6081 = vmatpush.bf16.msra.mxu0 %v1140
    %6082 = vmatmul.bf16.gmra.mxu0 %v5194
    %v6083 = vpop.f32.mrf.mxu0
    %v6084 = vadd.f32 %v6071, %v6083
    %v6085 = vpop.f32.mrf.mxu0
    %6086 = vdwg.mxu0
    %6087 = vmatpush.bf16.msra.mxu0 %v1114
    %6088 = vmatpush.bf16.msra.mxu0 %v1111
    %6089 = vmatpush.bf16.msra.mxu0 %v1108
    %6090 = vmatpush.bf16.msra.mxu0 %v1105
    %6091 = vmatpush.bf16.msra.mxu0 %v1102
    %6092 = vmatpush.bf16.msra.mxu0 %v1099
    %6093 = vmatpush.bf16.msra.mxu0 %v1096
    %6094 = vmatpush.bf16.msra.mxu0 %v1093
    %6095 = vmatmul.bf16.gmra.mxu0 %v5192
    %v6096 = vpop.f32.mrf.mxu0
    %v6097 = vadd.f32 0.0, %v6096
    %v6098 = vpop.f32.mrf.mxu0
    %6099 = vdwg.mxu0
    %6100 = vmatpush.bf16.msra.mxu0 %v1138
    %6101 = vmatpush.bf16.msra.mxu0 %v1135
    %6102 = vmatpush.bf16.msra.mxu0 %v1132
    %6103 = vmatpush.bf16.msra.mxu0 %v1129
    %6104 = vmatpush.bf16.msra.mxu0 %v1126
    %6105 = vmatpush.bf16.msra.mxu0 %v1123
    %6106 = vmatpush.bf16.msra.mxu0 %v1120
    %6107 = vmatpush.bf16.msra.mxu0 %v1117
    %6108 = vmatmul.bf16.gmra.mxu0 %v5193
    %v6109 = vpop.f32.mrf.mxu0
    %v6110 = vadd.f32 %v6097, %v6109
    %v6111 = vpop.f32.mrf.mxu0
    %6112 = vdwg.mxu0
    %6113 = vmatpush.bf16.msra.mxu0 %v1162
    %6114 = vmatpush.bf16.msra.mxu0 %v1159
    %6115 = vmatpush.bf16.msra.mxu0 %v1156
    %6116 = vmatpush.bf16.msra.mxu0 %v1153
    %6117 = vmatpush.bf16.msra.mxu0 %v1150
    %6118 = vmatpush.bf16.msra.mxu0 %v1147
    %6119 = vmatpush.bf16.msra.mxu0 %v1144
    %6120 = vmatpush.bf16.msra.mxu0 %v1141
    %6121 = vmatmul.bf16.gmra.mxu0 %v5194
    %v6122 = vpop.f32.mrf.mxu0
    %v6123 = vadd.f32 %v6110, %v6122
    %v6124 = vpop.f32.mrf.mxu0
    %6125 = vdwg.mxu0
    %6126 = vmatpush.bf16.msra.mxu0 %v1115
    %6127 = vmatpush.bf16.msra.mxu0 %v1112
    %6128 = vmatpush.bf16.msra.mxu0 %v1109
    %6129 = vmatpush.bf16.msra.mxu0 %v1106
    %6130 = vmatpush.bf16.msra.mxu0 %v1103
    %6131 = vmatpush.bf16.msra.mxu0 %v1100
    %6132 = vmatpush.bf16.msra.mxu0 %v1097
    %6133 = vmatpush.bf16.msra.mxu0 %v1094
    %6134 = vmatmul.bf16.gmra.mxu0 %v5192
    %v6135 = vpop.f32.mrf.mxu0
    %v6136 = vadd.f32 0.0, %v6135
    %v6137 = vpop.f32.mrf.mxu0
    %6138 = vdwg.mxu0
    %6139 = vmatpush.bf16.msra.mxu0 %v1139
    %6140 = vmatpush.bf16.msra.mxu0 %v1136
    %6141 = vmatpush.bf16.msra.mxu0 %v1133
    %6142 = vmatpush.bf16.msra.mxu0 %v1130
    %6143 = vmatpush.bf16.msra.mxu0 %v1127
    %6144 = vmatpush.bf16.msra.mxu0 %v1124
    %6145 = vmatpush.bf16.msra.mxu0 %v1121
    %6146 = vmatpush.bf16.msra.mxu0 %v1118
    %6147 = vmatmul.bf16.gmra.mxu0 %v5193
    %v6148 = vpop.f32.mrf.mxu0
    %v6149 = vadd.f32 %v6136, %v6148
    %v6150 = vpop.f32.mrf.mxu0
    %6151 = vdwg.mxu0
    %6152 = vmatpush.bf16.msra.mxu0 %v1163
    %6153 = vmatpush.bf16.msra.mxu0 %v1160
    %6154 = vmatpush.bf16.msra.mxu0 %v1157
    %6155 = vmatpush.bf16.msra.mxu0 %v1154
    %6156 = vmatpush.bf16.msra.mxu0 %v1151
    %6157 = vmatpush.bf16.msra.mxu0 %v1148
    %6158 = vmatpush.bf16.msra.mxu0 %v1145
    %6159 = vmatpush.bf16.msra.mxu0 %v1142
    %6160 = vmatmul.bf16.gmra.mxu0 %v5194
    %v6161 = vpop.f32.mrf.mxu0
    %v6162 = vadd.f32 %v6149, %v6161
    %v6163 = vpop.f32.mrf.mxu0
    %6164 = vdwg.mxu0
    %v6165 = vadd.f32 %v6045, %v6084
    %v6166 = vadd.f32 %v6046, %v6123
    %v6167 = vadd.f32 %v6047, %v6162
    %v6168 = vtanh.pop %v6165
    %v6169 = vtanh.pop %v6166
    %v6170 = vtanh.pop %v6167
    %v6171 = vpack.c.bf16 %v6168, %v6168
    %v6172 = vpack.c.bf16 %v6169, %v6169
    %v6173 = vpack.c.bf16 %v6170, %v6170
    %6174 = vmatpush.bf16.msra.mxu0 %v1752
    %6175 = vmatpush.bf16.msra.mxu0 %v1749
    %6176 = vmatpush.bf16.msra.mxu0 %v1746
    %6177 = vmatpush.bf16.msra.mxu0 %v1743
    %6178 = vmatpush.bf16.msra.mxu0 %v1740
    %6179 = vmatpush.bf16.msra.mxu0 %v1737
    %6180 = vmatpush.bf16.msra.mxu0 %v1734
    %6181 = vmatpush.bf16.msra.mxu0 %v1731
    %6182 = vmatmul.bf16.gmra.mxu0 %v5435
    %v6183 = vpop.f32.mrf.mxu0
    %v6184 = vadd.f32 0.0, %v6183
    %v6185 = vpop.f32.mrf.mxu0
    %6186 = vdwg.mxu0
    %6187 = vmatpush.bf16.msra.mxu0 %v1776
    %6188 = vmatpush.bf16.msra.mxu0 %v1773
    %6189 = vmatpush.bf16.msra.mxu0 %v1770
    %6190 = vmatpush.bf16.msra.mxu0 %v1767
    %6191 = vmatpush.bf16.msra.mxu0 %v1764
    %6192 = vmatpush.bf16.msra.mxu0 %v1761
    %6193 = vmatpush.bf16.msra.mxu0 %v1758
    %6194 = vmatpush.bf16.msra.mxu0 %v1755
    %6195 = vmatmul.bf16.gmra.mxu0 %v5436
    %v6196 = vpop.f32.mrf.mxu0
    %v6197 = vadd.f32 %v6184, %v6196
    %v6198 = vpop.f32.mrf.mxu0
    %6199 = vdwg.mxu0
    %6200 = vmatpush.bf16.msra.mxu0 %v1800
    %6201 = vmatpush.bf16.msra.mxu0 %v1797
    %6202 = vmatpush.bf16.msra.mxu0 %v1794
    %6203 = vmatpush.bf16.msra.mxu0 %v1791
    %6204 = vmatpush.bf16.msra.mxu0 %v1788
    %6205 = vmatpush.bf16.msra.mxu0 %v1785
    %6206 = vmatpush.bf16.msra.mxu0 %v1782
    %6207 = vmatpush.bf16.msra.mxu0 %v1779
    %6208 = vmatmul.bf16.gmra.mxu0 %v5437
    %v6209 = vpop.f32.mrf.mxu0
    %v6210 = vadd.f32 %v6197, %v6209
    %v6211 = vpop.f32.mrf.mxu0
    %6212 = vdwg.mxu0
    %6213 = vmatpush.bf16.msra.mxu0 %v1753
    %6214 = vmatpush.bf16.msra.mxu0 %v1750
    %6215 = vmatpush.bf16.msra.mxu0 %v1747
    %6216 = vmatpush.bf16.msra.mxu0 %v1744
    %6217 = vmatpush.bf16.msra.mxu0 %v1741
    %6218 = vmatpush.bf16.msra.mxu0 %v1738
    %6219 = vmatpush.bf16.msra.mxu0 %v1735
    %6220 = vmatpush.bf16.msra.mxu0 %v1732
    %6221 = vmatmul.bf16.gmra.mxu0 %v5435
    %v6222 = vpop.f32.mrf.mxu0
    %v6223 = vadd.f32 0.0, %v6222
    %v6224 = vpop.f32.mrf.mxu0
    %6225 = vdwg.mxu0
    %6226 = vmatpush.bf16.msra.mxu0 %v1777
    %6227 = vmatpush.bf16.msra.mxu0 %v1774
    %6228 = vmatpush.bf16.msra.mxu0 %v1771
    %6229 = vmatpush.bf16.msra.mxu0 %v1768
    %6230 = vmatpush.bf16.msra.mxu0 %v1765
    %6231 = vmatpush.bf16.msra.mxu0 %v1762
    %6232 = vmatpush.bf16.msra.mxu0 %v1759
    %6233 = vmatpush.bf16.msra.mxu0 %v1756
    %6234 = vmatmul.bf16.gmra.mxu0 %v5436
    %v6235 = vpop.f32.mrf.mxu0
    %v6236 = vadd.f32 %v6223, %v6235
    %v6237 = vpop.f32.mrf.mxu0
    %6238 = vdwg.mxu0
    %6239 = vmatpush.bf16.msra.mxu0 %v1801
    %6240 = vmatpush.bf16.msra.mxu0 %v1798
    %6241 = vmatpush.bf16.msra.mxu0 %v1795
    %6242 = vmatpush.bf16.msra.mxu0 %v1792
    %6243 = vmatpush.bf16.msra.mxu0 %v1789
    %6244 = vmatpush.bf16.msra.mxu0 %v1786
    %6245 = vmatpush.bf16.msra.mxu0 %v1783
    %6246 = vmatpush.bf16.msra.mxu0 %v1780
    %6247 = vmatmul.bf16.gmra.mxu0 %v5437
    %v6248 = vpop.f32.mrf.mxu0
    %v6249 = vadd.f32 %v6236, %v6248
    %v6250 = vpop.f32.mrf.mxu0
    %6251 = vdwg.mxu0
    %6252 = vmatpush.bf16.msra.mxu0 %v1754
    %6253 = vmatpush.bf16.msra.mxu0 %v1751
    %6254 = vmatpush.bf16.msra.mxu0 %v1748
    %6255 = vmatpush.bf16.msra.mxu0 %v1745
    %6256 = vmatpush.bf16.msra.mxu0 %v1742
    %6257 = vmatpush.bf16.msra.mxu0 %v1739
    %6258 = vmatpush.bf16.msra.mxu0 %v1736
    %6259 = vmatpush.bf16.msra.mxu0 %v1733
    %6260 = vmatmul.bf16.gmra.mxu0 %v5435
    %v6261 = vpop.f32.mrf.mxu0
    %v6262 = vadd.f32 0.0, %v6261
    %v6263 = vpop.f32.mrf.mxu0
    %6264 = vdwg.mxu0
    %6265 = vmatpush.bf16.msra.mxu0 %v1778
    %6266 = vmatpush.bf16.msra.mxu0 %v1775
    %6267 = vmatpush.bf16.msra.mxu0 %v1772
    %6268 = vmatpush.bf16.msra.mxu0 %v1769
    %6269 = vmatpush.bf16.msra.mxu0 %v1766
    %6270 = vmatpush.bf16.msra.mxu0 %v1763
    %6271 = vmatpush.bf16.msra.mxu0 %v1760
    %6272 = vmatpush.bf16.msra.mxu0 %v1757
    %6273 = vmatmul.bf16.gmra.mxu0 %v5436
    %v6274 = vpop.f32.mrf.mxu0
    %v6275 = vadd.f32 %v6262, %v6274
    %v6276 = vpop.f32.mrf.mxu0
    %6277 = vdwg.mxu0
    %6278 = vmatpush.bf16.msra.mxu0 %v1802
    %6279 = vmatpush.bf16.msra.mxu0 %v1799
    %6280 = vmatpush.bf16.msra.mxu0 %v1796
    %6281 = vmatpush.bf16.msra.mxu0 %v1793
    %6282 = vmatpush.bf16.msra.mxu0 %v1790
    %6283 = vmatpush.bf16.msra.mxu0 %v1787
    %6284 = vmatpush.bf16.msra.mxu0 %v1784
    %6285 = vmatpush.bf16.msra.mxu0 %v1781
    %6286 = vmatmul.bf16.gmra.mxu0 %v5437
    %v6287 = vpop.f32.mrf.mxu0
    %v6288 = vadd.f32 %v6275, %v6287
    %v6289 = vpop.f32.mrf.mxu0
    %6290 = vdwg.mxu0
    %6291 = vmatpush.bf16.msra.mxu0 %v2253
    %6292 = vmatpush.bf16.msra.mxu0 %v2250
    %6293 = vmatpush.bf16.msra.mxu0 %v2247
    %6294 = vmatpush.bf16.msra.mxu0 %v2244
    %6295 = vmatpush.bf16.msra.mxu0 %v2241
    %6296 = vmatpush.bf16.msra.mxu0 %v2238
    %6297 = vmatpush.bf16.msra.mxu0 %v2235
    %6298 = vmatpush.bf16.msra.mxu0 %v2232
    %6299 = vmatmul.bf16.gmra.mxu0 %v5192
    %v6300 = vpop.f32.mrf.mxu0
    %v6301 = vadd.f32 %v6210, %v6300
    %v6302 = vpop.f32.mrf.mxu0
    %6303 = vdwg.mxu0
    %6304 = vmatpush.bf16.msra.mxu0 %v2277
    %6305 = vmatpush.bf16.msra.mxu0 %v2274
    %6306 = vmatpush.bf16.msra.mxu0 %v2271
    %6307 = vmatpush.bf16.msra.mxu0 %v2268
    %6308 = vmatpush.bf16.msra.mxu0 %v2265
    %6309 = vmatpush.bf16.msra.mxu0 %v2262
    %6310 = vmatpush.bf16.msra.mxu0 %v2259
    %6311 = vmatpush.bf16.msra.mxu0 %v2256
    %6312 = vmatmul.bf16.gmra.mxu0 %v5193
    %v6313 = vpop.f32.mrf.mxu0
    %v6314 = vadd.f32 %v6301, %v6313
    %v6315 = vpop.f32.mrf.mxu0
    %6316 = vdwg.mxu0
    %6317 = vmatpush.bf16.msra.mxu0 %v2301
    %6318 = vmatpush.bf16.msra.mxu0 %v2298
    %6319 = vmatpush.bf16.msra.mxu0 %v2295
    %6320 = vmatpush.bf16.msra.mxu0 %v2292
    %6321 = vmatpush.bf16.msra.mxu0 %v2289
    %6322 = vmatpush.bf16.msra.mxu0 %v2286
    %6323 = vmatpush.bf16.msra.mxu0 %v2283
    %6324 = vmatpush.bf16.msra.mxu0 %v2280
    %6325 = vmatmul.bf16.gmra.mxu0 %v5194
    %v6326 = vpop.f32.mrf.mxu0
    %v6327 = vadd.f32 %v6314, %v6326
    %v6328 = vpop.f32.mrf.mxu0
    %6329 = vdwg.mxu0
    %6330 = vmatpush.bf16.msra.mxu0 %v2254
    %6331 = vmatpush.bf16.msra.mxu0 %v2251
    %6332 = vmatpush.bf16.msra.mxu0 %v2248
    %6333 = vmatpush.bf16.msra.mxu0 %v2245
    %6334 = vmatpush.bf16.msra.mxu0 %v2242
    %6335 = vmatpush.bf16.msra.mxu0 %v2239
    %6336 = vmatpush.bf16.msra.mxu0 %v2236
    %6337 = vmatpush.bf16.msra.mxu0 %v2233
    %6338 = vmatmul.bf16.gmra.mxu0 %v5192
    %v6339 = vpop.f32.mrf.mxu0
    %v6340 = vadd.f32 %v6249, %v6339
    %v6341 = vpop.f32.mrf.mxu0
    %6342 = vdwg.mxu0
    %6343 = vmatpush.bf16.msra.mxu0 %v2278
    %6344 = vmatpush.bf16.msra.mxu0 %v2275
    %6345 = vmatpush.bf16.msra.mxu0 %v2272
    %6346 = vmatpush.bf16.msra.mxu0 %v2269
    %6347 = vmatpush.bf16.msra.mxu0 %v2266
    %6348 = vmatpush.bf16.msra.mxu0 %v2263
    %6349 = vmatpush.bf16.msra.mxu0 %v2260
    %6350 = vmatpush.bf16.msra.mxu0 %v2257
    %6351 = vmatmul.bf16.gmra.mxu0 %v5193
    %v6352 = vpop.f32.mrf.mxu0
    %v6353 = vadd.f32 %v6340, %v6352
    %v6354 = vpop.f32.mrf.mxu0
    %6355 = vdwg.mxu0
    %6356 = vmatpush.bf16.msra.mxu0 %v2302
    %6357 = vmatpush.bf16.msra.mxu0 %v2299
    %6358 = vmatpush.bf16.msra.mxu0 %v2296
    %6359 = vmatpush.bf16.msra.mxu0 %v2293
    %6360 = vmatpush.bf16.msra.mxu0 %v2290
    %6361 = vmatpush.bf16.msra.mxu0 %v2287
    %6362 = vmatpush.bf16.msra.mxu0 %v2284
    %6363 = vmatpush.bf16.msra.mxu0 %v2281
    %6364 = vmatmul.bf16.gmra.mxu0 %v5194
    %v6365 = vpop.f32.mrf.mxu0
    %v6366 = vadd.f32 %v6353, %v6365
    %v6367 = vpop.f32.mrf.mxu0
    %6368 = vdwg.mxu0
    %6369 = vmatpush.bf16.msra.mxu0 %v2255
    %6370 = vmatpush.bf16.msra.mxu0 %v2252
    %6371 = vmatpush.bf16.msra.mxu0 %v2249
    %6372 = vmatpush.bf16.msra.mxu0 %v2246
    %6373 = vmatpush.bf16.msra.mxu0 %v2243
    %6374 = vmatpush.bf16.msra.mxu0 %v2240
    %6375 = vmatpush.bf16.msra.mxu0 %v2237
    %6376 = vmatpush.bf16.msra.mxu0 %v2234
    %6377 = vmatmul.bf16.gmra.mxu0 %v5192
    %v6378 = vpop.f32.mrf.mxu0
    %v6379 = vadd.f32 %v6288, %v6378
    %v6380 = vpop.f32.mrf.mxu0
    %6381 = vdwg.mxu0
    %6382 = vmatpush.bf16.msra.mxu0 %v2279
    %6383 = vmatpush.bf16.msra.mxu0 %v2276
    %6384 = vmatpush.bf16.msra.mxu0 %v2273
    %6385 = vmatpush.bf16.msra.mxu0 %v2270
    %6386 = vmatpush.bf16.msra.mxu0 %v2267
    %6387 = vmatpush.bf16.msra.mxu0 %v2264
    %6388 = vmatpush.bf16.msra.mxu0 %v2261
    %6389 = vmatpush.bf16.msra.mxu0 %v2258
    %6390 = vmatmul.bf16.gmra.mxu0 %v5193
    %v6391 = vpop.f32.mrf.mxu0
    %v6392 = vadd.f32 %v6379, %v6391
    %v6393 = vpop.f32.mrf.mxu0
    %6394 = vdwg.mxu0
    %6395 = vmatpush.bf16.msra.mxu0 %v2303
    %6396 = vmatpush.bf16.msra.mxu0 %v2300
    %6397 = vmatpush.bf16.msra.mxu0 %v2297
    %6398 = vmatpush.bf16.msra.mxu0 %v2294
    %6399 = vmatpush.bf16.msra.mxu0 %v2291
    %6400 = vmatpush.bf16.msra.mxu0 %v2288
    %6401 = vmatpush.bf16.msra.mxu0 %v2285
    %6402 = vmatpush.bf16.msra.mxu0 %v2282
    %6403 = vmatmul.bf16.gmra.mxu0 %v5194
    %v6404 = vpop.f32.mrf.mxu0
    %v6405 = vadd.f32 %v6392, %v6404
    %v6406 = vpop.f32.mrf.mxu0
    %6407 = vdwg.mxu0
    %v6408 = vadd.f32 %v6327, %v832
    %v6409 = vadd.f32 %v6366, %v833
    %v6410 = vadd.f32 %v6405, %v834
    %v6411 = vtanh.pop %v6408
    %v6412 = vtanh.pop %v6409
    %v6413 = vtanh.pop %v6410
    %v6414 = vpack.c.bf16 %v6411, %v6411
    %v6415 = vpack.c.bf16 %v6412, %v6412
    %v6416 = vpack.c.bf16 %v6413, %v6413
    %v6417 = vld [vmem:[#allocation3] sm:$0xff]
    %v6418 = vld [vmem:[#allocation3 + $0x8] sm:$0xff]
    %v6419 = vld [vmem:[#allocation3 + $0x10] sm:$0xff]
    %s6420 = scalar_lea.vmem [#allocation14], 2304
    %v6421 = vld [vmem:[%s6420] sm:$0xff]
    %v6422 = vld [vmem:[%s6420 + $0x8] sm:$0xf]
    %v6423 = vld [vmem:[%s6420 + $0xc] sm:$0xff]
    %v6424 = vld [vmem:[%s6420 + $0x14] sm:$0xf]
    %v6425 = vld [vmem:[%s6420 + $0x18] sm:$0xff]
    %v6426 = vld [vmem:[%s6420 + $0x20] sm:$0xf]
    %v6427 = vld [vmem:[%s6420 + $0x24] sm:$0xff]
    %v6428 = vld [vmem:[%s6420 + $0x2c] sm:$0xf]
    %v6429 = vld [vmem:[%s6420 + $0x30] sm:$0xff]
    %v6430 = vld [vmem:[%s6420 + $0x38] sm:$0xf]
    %v6431 = vld [vmem:[%s6420 + $0x3c] sm:$0xff]
    %v6432 = vld [vmem:[%s6420 + $0x44] sm:$0xf]
    %v6433 = vld [vmem:[%s6420 + $0x48] sm:$0xff]
    %v6434 = vld [vmem:[%s6420 + $0x50] sm:$0xf]
    %v6435 = vld [vmem:[%s6420 + $0x54] sm:$0xff]
    %v6436 = vld [vmem:[%s6420 + $0x5c] sm:$0xf]
    %v6437 = vld [vmem:[%s6420 + $0x60] sm:$0xff]
    %v6438 = vld [vmem:[%s6420 + $0x68] sm:$0xf]
    %v6439 = vld [vmem:[%s6420 + $0x6c] sm:$0xff]
    %v6440 = vld [vmem:[%s6420 + $0x74] sm:$0xf]
    %v6441 = vld [vmem:[%s6420 + $0x78] sm:$0xff]
    %v6442 = vld [vmem:[%s6420 + $0x80] sm:$0xf]
    %v6443 = vld [vmem:[%s6420 + $0x84] sm:$0xff]
    %v6444 = vld [vmem:[%s6420 + $0x8c] sm:$0xf]
    %v6445 = vld [vmem:[%s6420 + $0x90] sm:$0xff]
    %v6446 = vld [vmem:[%s6420 + $0x98] sm:$0xf]
    %v6447 = vld [vmem:[%s6420 + $0x9c] sm:$0xff]
    %v6448 = vld [vmem:[%s6420 + $0xa4] sm:$0xf]
    %v6449 = vld [vmem:[%s6420 + $0xa8] sm:$0xff]
    %v6450 = vld [vmem:[%s6420 + $0xb0] sm:$0xf]
    %v6451 = vld [vmem:[%s6420 + $0xb4] sm:$0xff]
    %v6452 = vld [vmem:[%s6420 + $0xbc] sm:$0xf]
    %v6453 = vld [vmem:[%s6420 + $0xc0] sm:$0xff]
    %v6454 = vld [vmem:[%s6420 + $0xc8] sm:$0xf]
    %v6455 = vld [vmem:[%s6420 + $0xcc] sm:$0xff]
    %v6456 = vld [vmem:[%s6420 + $0xd4] sm:$0xf]
    %v6457 = vld [vmem:[%s6420 + $0xd8] sm:$0xff]
    %v6458 = vld [vmem:[%s6420 + $0xe0] sm:$0xf]
    %v6459 = vld [vmem:[%s6420 + $0xe4] sm:$0xff]
    %v6460 = vld [vmem:[%s6420 + $0xec] sm:$0xf]
    %v6461 = vld [vmem:[%s6420 + $0xf0] sm:$0xff]
    %v6462 = vld [vmem:[%s6420 + $0xf8] sm:$0xf]
    %v6463 = vld [vmem:[%s6420 + $0xfc] sm:$0xff]
    %v6464 = vld [vmem:[%s6420 + $0x104] sm:$0xf]
    %v6465 = vld [vmem:[%s6420 + $0x108] sm:$0xff]
    %v6466 = vld [vmem:[%s6420 + $0x110] sm:$0xf]
    %v6467 = vld [vmem:[%s6420 + $0x114] sm:$0xff]
    %v6468 = vld [vmem:[%s6420 + $0x11c] sm:$0xf]
    %v6469 = vld [vmem:[%s6420 + $0x120] sm:$0xff]
    %v6470 = vld [vmem:[%s6420 + $0x128] sm:$0xf]
    %v6471 = vld [vmem:[%s6420 + $0x12c] sm:$0xff]
    %v6472 = vld [vmem:[%s6420 + $0x134] sm:$0xf]
    %v6473 = vld [vmem:[%s6420 + $0x138] sm:$0xff]
    %v6474 = vld [vmem:[%s6420 + $0x140] sm:$0xf]
    %v6475 = vld [vmem:[%s6420 + $0x144] sm:$0xff]
    %v6476 = vld [vmem:[%s6420 + $0x14c] sm:$0xf]
    %v6477 = vld [vmem:[%s6420 + $0x150] sm:$0xff]
    %v6478 = vld [vmem:[%s6420 + $0x158] sm:$0xf]
    %v6479 = vld [vmem:[%s6420 + $0x15c] sm:$0xff]
    %v6480 = vld [vmem:[%s6420 + $0x164] sm:$0xf]
    %v6481 = vld [vmem:[%s6420 + $0x168] sm:$0xff]
    %v6482 = vld [vmem:[%s6420 + $0x170] sm:$0xf]
    %v6483 = vld [vmem:[%s6420 + $0x174] sm:$0xff]
    %v6484 = vld [vmem:[%s6420 + $0x17c] sm:$0xf]
    %v6485 = vld [vmem:[%s6420 + $0x180] sm:$0xff]
    %v6486 = vld [vmem:[%s6420 + $0x188] sm:$0xf]
    %v6487 = vld [vmem:[%s6420 + $0x18c] sm:$0xff]
    %v6488 = vld [vmem:[%s6420 + $0x194] sm:$0xf]
    %v6489 = vld [vmem:[%s6420 + $0x198] sm:$0xff]
    %v6490 = vld [vmem:[%s6420 + $0x1a0] sm:$0xf]
    %v6491 = vld [vmem:[%s6420 + $0x1a4] sm:$0xff]
    %v6492 = vld [vmem:[%s6420 + $0x1ac] sm:$0xf]
    %v6493 = vld [vmem:[%s6420 + $0x1b0] sm:$0xff]
    %v6494 = vld [vmem:[%s6420 + $0x1b8] sm:$0xf]
    %v6495 = vld [vmem:[%s6420 + $0x1bc] sm:$0xff]
    %v6496 = vld [vmem:[%s6420 + $0x1c4] sm:$0xf]
    %v6497 = vld [vmem:[%s6420 + $0x1c8] sm:$0xff]
    %v6498 = vld [vmem:[%s6420 + $0x1d0] sm:$0xf]
    %v6499 = vld [vmem:[%s6420 + $0x1d4] sm:$0xff]
    %v6500 = vld [vmem:[%s6420 + $0x1dc] sm:$0xf]
    %v6501 = vld [vmem:[%s6420 + $0x1e0] sm:$0xff]
    %v6502 = vld [vmem:[%s6420 + $0x1e8] sm:$0xf]
    %v6503 = vld [vmem:[%s6420 + $0x1ec] sm:$0xff]
    %v6504 = vld [vmem:[%s6420 + $0x1f4] sm:$0xf]
    %v6505 = vld [vmem:[%s6420 + $0x1f8] sm:$0xff]
    %v6506 = vld [vmem:[%s6420 + $0x200] sm:$0xf]
    %v6507 = vld [vmem:[%s6420 + $0x204] sm:$0xff]
    %v6508 = vld [vmem:[%s6420 + $0x20c] sm:$0xf]
    %v6509 = vld [vmem:[%s6420 + $0x210] sm:$0xff]
    %v6510 = vld [vmem:[%s6420 + $0x218] sm:$0xf]
    %v6511 = vld [vmem:[%s6420 + $0x21c] sm:$0xff]
    %v6512 = vld [vmem:[%s6420 + $0x224] sm:$0xf]
    %v6513 = vld [vmem:[%s6420 + $0x228] sm:$0xff]
    %v6514 = vld [vmem:[%s6420 + $0x230] sm:$0xf]
    %v6515 = vld [vmem:[%s6420 + $0x234] sm:$0xff]
    %v6516 = vld [vmem:[%s6420 + $0x23c] sm:$0xf]
    %v6613 = vunpack.c.l.b16 %v6421
    %v6614 = vunpack.c.h.b16 %v6421
    %v6615 = vunpack.c.l.b16 %v6422
    %v6616 = vunpack.c.l.b16 %v6423
    %v6617 = vunpack.c.h.b16 %v6423
    %v6618 = vunpack.c.l.b16 %v6424
    %v6619 = vunpack.c.l.b16 %v6425
    %v6620 = vunpack.c.h.b16 %v6425
    %v6621 = vunpack.c.l.b16 %v6426
    %v6622 = vunpack.c.l.b16 %v6427
    %v6623 = vunpack.c.h.b16 %v6427
    %v6624 = vunpack.c.l.b16 %v6428
    %v6625 = vunpack.c.l.b16 %v6429
    %v6626 = vunpack.c.h.b16 %v6429
    %v6627 = vunpack.c.l.b16 %v6430
    %v6628 = vunpack.c.l.b16 %v6431
    %v6629 = vunpack.c.h.b16 %v6431
    %v6630 = vunpack.c.l.b16 %v6432
    %v6631 = vunpack.c.l.b16 %v6433
    %v6632 = vunpack.c.h.b16 %v6433
    %v6633 = vunpack.c.l.b16 %v6434
    %v6634 = vunpack.c.l.b16 %v6435
    %v6635 = vunpack.c.h.b16 %v6435
    %v6636 = vunpack.c.l.b16 %v6436
    %v6637 = vunpack.c.l.b16 %v6437
    %v6638 = vunpack.c.h.b16 %v6437
    %v6639 = vunpack.c.l.b16 %v6438
    %v6640 = vunpack.c.l.b16 %v6439
    %v6641 = vunpack.c.h.b16 %v6439
    %v6642 = vunpack.c.l.b16 %v6440
    %v6643 = vunpack.c.l.b16 %v6441
    %v6644 = vunpack.c.h.b16 %v6441
    %v6645 = vunpack.c.l.b16 %v6442
    %v6646 = vunpack.c.l.b16 %v6443
    %v6647 = vunpack.c.h.b16 %v6443
    %v6648 = vunpack.c.l.b16 %v6444
    %v6649 = vunpack.c.l.b16 %v6445
    %v6650 = vunpack.c.h.b16 %v6445
    %v6651 = vunpack.c.l.b16 %v6446
    %v6652 = vunpack.c.l.b16 %v6447
    %v6653 = vunpack.c.h.b16 %v6447
    %v6654 = vunpack.c.l.b16 %v6448
    %v6655 = vunpack.c.l.b16 %v6449
    %v6656 = vunpack.c.h.b16 %v6449
    %v6657 = vunpack.c.l.b16 %v6450
    %v6658 = vunpack.c.l.b16 %v6451
    %v6659 = vunpack.c.h.b16 %v6451
    %v6660 = vunpack.c.l.b16 %v6452
    %v6661 = vunpack.c.l.b16 %v6453
    %v6662 = vunpack.c.h.b16 %v6453
    %v6663 = vunpack.c.l.b16 %v6454
    %v6664 = vunpack.c.l.b16 %v6455
    %v6665 = vunpack.c.h.b16 %v6455
    %v6666 = vunpack.c.l.b16 %v6456
    %v6667 = vunpack.c.l.b16 %v6457
    %v6668 = vunpack.c.h.b16 %v6457
    %v6669 = vunpack.c.l.b16 %v6458
    %v6670 = vunpack.c.l.b16 %v6459
    %v6671 = vunpack.c.h.b16 %v6459
    %v6672 = vunpack.c.l.b16 %v6460
    %v6673 = vunpack.c.l.b16 %v6461
    %v6674 = vunpack.c.h.b16 %v6461
    %v6675 = vunpack.c.l.b16 %v6462
    %v6676 = vunpack.c.l.b16 %v6463
    %v6677 = vunpack.c.h.b16 %v6463
    %v6678 = vunpack.c.l.b16 %v6464
    %v6679 = vunpack.c.l.b16 %v6465
    %v6680 = vunpack.c.h.b16 %v6465
    %v6681 = vunpack.c.l.b16 %v6466
    %v6682 = vunpack.c.l.b16 %v6467
    %v6683 = vunpack.c.h.b16 %v6467
    %v6684 = vunpack.c.l.b16 %v6468
    %v6685 = vunpack.c.l.b16 %v6469
    %v6686 = vunpack.c.h.b16 %v6469
    %v6687 = vunpack.c.l.b16 %v6470
    %v6688 = vunpack.c.l.b16 %v6471
    %v6689 = vunpack.c.h.b16 %v6471
    %v6690 = vunpack.c.l.b16 %v6472
    %v6691 = vunpack.c.l.b16 %v6473
    %v6692 = vunpack.c.h.b16 %v6473
    %v6693 = vunpack.c.l.b16 %v6474
    %v6694 = vunpack.c.l.b16 %v6475
    %v6695 = vunpack.c.h.b16 %v6475
    %v6696 = vunpack.c.l.b16 %v6476
    %v6697 = vunpack.c.l.b16 %v6477
    %v6698 = vunpack.c.h.b16 %v6477
    %v6699 = vunpack.c.l.b16 %v6478
    %v6700 = vunpack.c.l.b16 %v6479
    %v6701 = vunpack.c.h.b16 %v6479
    %v6702 = vunpack.c.l.b16 %v6480
    %v6703 = vunpack.c.l.b16 %v6481
    %v6704 = vunpack.c.h.b16 %v6481
    %v6705 = vunpack.c.l.b16 %v6482
    %v6706 = vunpack.c.l.b16 %v6483
    %v6707 = vunpack.c.h.b16 %v6483
    %v6708 = vunpack.c.l.b16 %v6484
    %v6709 = vunpack.c.l.b16 %v6485
    %v6710 = vunpack.c.h.b16 %v6485
    %v6711 = vunpack.c.l.b16 %v6486
    %v6712 = vunpack.c.l.b16 %v6487
    %v6713 = vunpack.c.h.b16 %v6487
    %v6714 = vunpack.c.l.b16 %v6488
    %v6715 = vunpack.c.l.b16 %v6489
    %v6716 = vunpack.c.h.b16 %v6489
    %v6717 = vunpack.c.l.b16 %v6490
    %v6718 = vunpack.c.l.b16 %v6491
    %v6719 = vunpack.c.h.b16 %v6491
    %v6720 = vunpack.c.l.b16 %v6492
    %v6721 = vunpack.c.l.b16 %v6493
    %v6722 = vunpack.c.h.b16 %v6493
    %v6723 = vunpack.c.l.b16 %v6494
    %v6724 = vunpack.c.l.b16 %v6495
    %v6725 = vunpack.c.h.b16 %v6495
    %v6726 = vunpack.c.l.b16 %v6496
    %v6727 = vunpack.c.l.b16 %v6497
    %v6728 = vunpack.c.h.b16 %v6497
    %v6729 = vunpack.c.l.b16 %v6498
    %v6730 = vunpack.c.l.b16 %v6499
    %v6731 = vunpack.c.h.b16 %v6499
    %v6732 = vunpack.c.l.b16 %v6500
    %v6733 = vunpack.c.l.b16 %v6501
    %v6734 = vunpack.c.h.b16 %v6501
    %v6735 = vunpack.c.l.b16 %v6502
    %v6736 = vunpack.c.l.b16 %v6503
    %v6737 = vunpack.c.h.b16 %v6503
    %v6738 = vunpack.c.l.b16 %v6504
    %v6739 = vunpack.c.l.b16 %v6505
    %v6740 = vunpack.c.h.b16 %v6505
    %v6741 = vunpack.c.l.b16 %v6506
    %v6742 = vunpack.c.l.b16 %v6507
    %v6743 = vunpack.c.h.b16 %v6507
    %v6744 = vunpack.c.l.b16 %v6508
    %v6745 = vunpack.c.l.b16 %v6509
    %v6746 = vunpack.c.h.b16 %v6509
    %v6747 = vunpack.c.l.b16 %v6510
    %v6748 = vunpack.c.l.b16 %v6511
    %v6749 = vunpack.c.h.b16 %v6511
    %v6750 = vunpack.c.l.b16 %v6512
    %v6751 = vunpack.c.l.b16 %v6513
    %v6752 = vunpack.c.h.b16 %v6513
    %v6753 = vunpack.c.l.b16 %v6514
    %v6754 = vunpack.c.l.b16 %v6515
    %v6755 = vunpack.c.h.b16 %v6515
    %v6756 = vunpack.c.l.b16 %v6516
    %v6757 = vpack.c.b16 %v6616, %v6613
    %v6758 = vpack.c.b16 %v6617, %v6614
    %v6759 = vpack.c.b16 %v6618, %v6615
    %v6760 = vpack.c.b16 %v6622, %v6619
    %v6761 = vpack.c.b16 %v6623, %v6620
    %v6762 = vpack.c.b16 %v6624, %v6621
    %v6763 = vpack.c.b16 %v6628, %v6625
    %v6764 = vpack.c.b16 %v6629, %v6626
    %v6765 = vpack.c.b16 %v6630, %v6627
    %v6766 = vpack.c.b16 %v6634, %v6631
    %v6767 = vpack.c.b16 %v6635, %v6632
    %v6768 = vpack.c.b16 %v6636, %v6633
    %v6769 = vpack.c.b16 %v6640, %v6637
    %v6770 = vpack.c.b16 %v6641, %v6638
    %v6771 = vpack.c.b16 %v6642, %v6639
    %v6772 = vpack.c.b16 %v6646, %v6643
    %v6773 = vpack.c.b16 %v6647, %v6644
    %v6774 = vpack.c.b16 %v6648, %v6645
    %v6775 = vpack.c.b16 %v6652, %v6649
    %v6776 = vpack.c.b16 %v6653, %v6650
    %v6777 = vpack.c.b16 %v6654, %v6651
    %v6778 = vpack.c.b16 %v6658, %v6655
    %v6779 = vpack.c.b16 %v6659, %v6656
    %v6780 = vpack.c.b16 %v6660, %v6657
    %v6781 = vpack.c.b16 %v6664, %v6661
    %v6782 = vpack.c.b16 %v6665, %v6662
    %v6783 = vpack.c.b16 %v6666, %v6663
    %v6784 = vpack.c.b16 %v6670, %v6667
    %v6785 = vpack.c.b16 %v6671, %v6668
    %v6786 = vpack.c.b16 %v6672, %v6669
    %v6787 = vpack.c.b16 %v6676, %v6673
    %v6788 = vpack.c.b16 %v6677, %v6674
    %v6789 = vpack.c.b16 %v6678, %v6675
    %v6790 = vpack.c.b16 %v6682, %v6679
    %v6791 = vpack.c.b16 %v6683, %v6680
    %v6792 = vpack.c.b16 %v6684, %v6681
    %v6793 = vpack.c.b16 %v6688, %v6685
    %v6794 = vpack.c.b16 %v6689, %v6686
    %v6795 = vpack.c.b16 %v6690, %v6687
    %v6796 = vpack.c.b16 %v6694, %v6691
    %v6797 = vpack.c.b16 %v6695, %v6692
    %v6798 = vpack.c.b16 %v6696, %v6693
    %v6799 = vpack.c.b16 %v6700, %v6697
    %v6800 = vpack.c.b16 %v6701, %v6698
    %v6801 = vpack.c.b16 %v6702, %v6699
    %v6802 = vpack.c.b16 %v6706, %v6703
    %v6803 = vpack.c.b16 %v6707, %v6704
    %v6804 = vpack.c.b16 %v6708, %v6705
    %v6805 = vpack.c.b16 %v6712, %v6709
    %v6806 = vpack.c.b16 %v6713, %v6710
    %v6807 = vpack.c.b16 %v6714, %v6711
    %v6808 = vpack.c.b16 %v6718, %v6715
    %v6809 = vpack.c.b16 %v6719, %v6716
    %v6810 = vpack.c.b16 %v6720, %v6717
    %v6811 = vpack.c.b16 %v6724, %v6721
    %v6812 = vpack.c.b16 %v6725, %v6722
    %v6813 = vpack.c.b16 %v6726, %v6723
    %v6814 = vpack.c.b16 %v6730, %v6727
    %v6815 = vpack.c.b16 %v6731, %v6728
    %v6816 = vpack.c.b16 %v6732, %v6729
    %v6817 = vpack.c.b16 %v6736, %v6733
    %v6818 = vpack.c.b16 %v6737, %v6734
    %v6819 = vpack.c.b16 %v6738, %v6735
    %v6820 = vpack.c.b16 %v6742, %v6739
    %v6821 = vpack.c.b16 %v6743, %v6740
    %v6822 = vpack.c.b16 %v6744, %v6741
    %v6823 = vpack.c.b16 %v6748, %v6745
    %v6824 = vpack.c.b16 %v6749, %v6746
    %v6825 = vpack.c.b16 %v6750, %v6747
    %v6826 = vpack.c.b16 %v6754, %v6751
    %v6827 = vpack.c.b16 %v6755, %v6752
    %v6828 = vpack.c.b16 %v6756, %v6753
    %6901 = vmatpush.bf16.msra.mxu0 %v6778
    %6902 = vmatpush.bf16.msra.mxu0 %v6775
    %6903 = vmatpush.bf16.msra.mxu0 %v6772
    %6904 = vmatpush.bf16.msra.mxu0 %v6769
    %6905 = vmatpush.bf16.msra.mxu0 %v6766
    %6906 = vmatpush.bf16.msra.mxu0 %v6763
    %6907 = vmatpush.bf16.msra.mxu0 %v6760
    %6908 = vmatpush.bf16.msra.mxu0 %v6757
    %6909 = vmatmul.bf16.gmra.mxu0 %v6414
    %v6910 = vpop.f32.mrf.mxu0
    %v6911 = vadd.f32 0.0, %v6910
    %v6912 = vpop.f32.mrf.mxu0
    %6913 = vdwg.mxu0
    %6914 = vmatpush.bf16.msra.mxu0 %v6802
    %6915 = vmatpush.bf16.msra.mxu0 %v6799
    %6916 = vmatpush.bf16.msra.mxu0 %v6796
    %6917 = vmatpush.bf16.msra.mxu0 %v6793
    %6918 = vmatpush.bf16.msra.mxu0 %v6790
    %6919 = vmatpush.bf16.msra.mxu0 %v6787
    %6920 = vmatpush.bf16.msra.mxu0 %v6784
    %6921 = vmatpush.bf16.msra.mxu0 %v6781
    %6922 = vmatmul.bf16.gmra.mxu0 %v6415
    %v6923 = vpop.f32.mrf.mxu0
    %v6924 = vadd.f32 %v6911, %v6923
    %v6925 = vpop.f32.mrf.mxu0
    %6926 = vdwg.mxu0
    %6927 = vmatpush.bf16.msra.mxu0 %v6826
    %6928 = vmatpush.bf16.msra.mxu0 %v6823
    %6929 = vmatpush.bf16.msra.mxu0 %v6820
    %6930 = vmatpush.bf16.msra.mxu0 %v6817
    %6931 = vmatpush.bf16.msra.mxu0 %v6814
    %6932 = vmatpush.bf16.msra.mxu0 %v6811
    %6933 = vmatpush.bf16.msra.mxu0 %v6808
    %6934 = vmatpush.bf16.msra.mxu0 %v6805
    %6935 = vmatmul.bf16.gmra.mxu0 %v6416
    %v6936 = vpop.f32.mrf.mxu0
    %v6937 = vadd.f32 %v6924, %v6936
    %v6938 = vpop.f32.mrf.mxu0
    %6939 = vdwg.mxu0
    %6940 = vmatpush.bf16.msra.mxu0 %v6779
    %6941 = vmatpush.bf16.msra.mxu0 %v6776
    %6942 = vmatpush.bf16.msra.mxu0 %v6773
    %6943 = vmatpush.bf16.msra.mxu0 %v6770
    %6944 = vmatpush.bf16.msra.mxu0 %v6767
    %6945 = vmatpush.bf16.msra.mxu0 %v6764
    %6946 = vmatpush.bf16.msra.mxu0 %v6761
    %6947 = vmatpush.bf16.msra.mxu0 %v6758
    %6948 = vmatmul.bf16.gmra.mxu0 %v6414
    %v6949 = vpop.f32.mrf.mxu0
    %v6950 = vadd.f32 0.0, %v6949
    %v6951 = vpop.f32.mrf.mxu0
    %6952 = vdwg.mxu0
    %6953 = vmatpush.bf16.msra.mxu0 %v6803
    %6954 = vmatpush.bf16.msra.mxu0 %v6800
    %6955 = vmatpush.bf16.msra.mxu0 %v6797
    %6956 = vmatpush.bf16.msra.mxu0 %v6794
    %6957 = vmatpush.bf16.msra.mxu0 %v6791
    %6958 = vmatpush.bf16.msra.mxu0 %v6788
    %6959 = vmatpush.bf16.msra.mxu0 %v6785
    %6960 = vmatpush.bf16.msra.mxu0 %v6782
    %6961 = vmatmul.bf16.gmra.mxu0 %v6415
    %v6962 = vpop.f32.mrf.mxu0
    %v6963 = vadd.f32 %v6950, %v6962
    %v6964 = vpop.f32.mrf.mxu0
    %6965 = vdwg.mxu0
    %6966 = vmatpush.bf16.msra.mxu0 %v6827
    %6967 = vmatpush.bf16.msra.mxu0 %v6824
    %6968 = vmatpush.bf16.msra.mxu0 %v6821
    %6969 = vmatpush.bf16.msra.mxu0 %v6818
    %6970 = vmatpush.bf16.msra.mxu0 %v6815
    %6971 = vmatpush.bf16.msra.mxu0 %v6812
    %6972 = vmatpush.bf16.msra.mxu0 %v6809
    %6973 = vmatpush.bf16.msra.mxu0 %v6806
    %6974 = vmatmul.bf16.gmra.mxu0 %v6416
    %v6975 = vpop.f32.mrf.mxu0
    %v6976 = vadd.f32 %v6963, %v6975
    %v6977 = vpop.f32.mrf.mxu0
    %6978 = vdwg.mxu0
    %6979 = vmatpush.bf16.msra.mxu0 %v6780
    %6980 = vmatpush.bf16.msra.mxu0 %v6777
    %6981 = vmatpush.bf16.msra.mxu0 %v6774
    %6982 = vmatpush.bf16.msra.mxu0 %v6771
    %6983 = vmatpush.bf16.msra.mxu0 %v6768
    %6984 = vmatpush.bf16.msra.mxu0 %v6765
    %6985 = vmatpush.bf16.msra.mxu0 %v6762
    %6986 = vmatpush.bf16.msra.mxu0 %v6759
    %6987 = vmatmul.bf16.gmra.mxu0 %v6414
    %v6988 = vpop.f32.mrf.mxu0
    %v6989 = vadd.f32 0.0, %v6988
    %v6990 = vpop.f32.mrf.mxu0
    %6991 = vdwg.mxu0
    %6992 = vmatpush.bf16.msra.mxu0 %v6804
    %6993 = vmatpush.bf16.msra.mxu0 %v6801
    %6994 = vmatpush.bf16.msra.mxu0 %v6798
    %6995 = vmatpush.bf16.msra.mxu0 %v6795
    %6996 = vmatpush.bf16.msra.mxu0 %v6792
    %6997 = vmatpush.bf16.msra.mxu0 %v6789
    %6998 = vmatpush.bf16.msra.mxu0 %v6786
    %6999 = vmatpush.bf16.msra.mxu0 %v6783
    %7000 = vmatmul.bf16.gmra.mxu0 %v6415
    %v7001 = vpop.f32.mrf.mxu0
    %v7002 = vadd.f32 %v6989, %v7001
    %v7003 = vpop.f32.mrf.mxu0
    %7004 = vdwg.mxu0
    %7005 = vmatpush.bf16.msra.mxu0 %v6828
    %7006 = vmatpush.bf16.msra.mxu0 %v6825
    %7007 = vmatpush.bf16.msra.mxu0 %v6822
    %7008 = vmatpush.bf16.msra.mxu0 %v6819
    %7009 = vmatpush.bf16.msra.mxu0 %v6816
    %7010 = vmatpush.bf16.msra.mxu0 %v6813
    %7011 = vmatpush.bf16.msra.mxu0 %v6810
    %7012 = vmatpush.bf16.msra.mxu0 %v6807
    %7013 = vmatmul.bf16.gmra.mxu0 %v6416
    %v7014 = vpop.f32.mrf.mxu0
    %v7015 = vadd.f32 %v7002, %v7014
    %v7016 = vpop.f32.mrf.mxu0
    %7017 = vdwg.mxu0
    %v7018 = vadd.f32 %v6417, %v6937
    %v7019 = vadd.f32 %v6418, %v6976
    %v7020 = vadd.f32 %v6419, %v7015
    %7021 = vst [vmem:[#allocation3] sm:$0xff] %v7018
    %7022 = vst [vmem:[#allocation3 + $0x8] sm:$0xff] %v7019
    %7023 = vst [vmem:[#allocation3 + $0x10] sm:$0xff] %v7020
    %v7024 = vld [vmem:[#allocation2 + $0x90] sm:$0xff]
    %v7025 = vld [vmem:[#allocation2 + $0x98] sm:$0xff]
    %v7026 = vld [vmem:[#allocation2 + $0xa0] sm:$0xff]
    %7027 = vmatpush.bf16.msra.mxu0 %v1113
    %7028 = vmatpush.bf16.msra.mxu0 %v1110
    %7029 = vmatpush.bf16.msra.mxu0 %v1107
    %7030 = vmatpush.bf16.msra.mxu0 %v1104
    %7031 = vmatpush.bf16.msra.mxu0 %v1101
    %7032 = vmatpush.bf16.msra.mxu0 %v1098
    %7033 = vmatpush.bf16.msra.mxu0 %v1095
    %7034 = vmatpush.bf16.msra.mxu0 %v1092
    %7035 = vmatmul.bf16.gmra.mxu0 %v6171
    %v7036 = vpop.f32.mrf.mxu0
    %v7037 = vadd.f32 0.0, %v7036
    %v7038 = vpop.f32.mrf.mxu0
    %7039 = vdwg.mxu0
    %7040 = vmatpush.bf16.msra.mxu0 %v1137
    %7041 = vmatpush.bf16.msra.mxu0 %v1134
    %7042 = vmatpush.bf16.msra.mxu0 %v1131
    %7043 = vmatpush.bf16.msra.mxu0 %v1128
    %7044 = vmatpush.bf16.msra.mxu0 %v1125
    %7045 = vmatpush.bf16.msra.mxu0 %v1122
    %7046 = vmatpush.bf16.msra.mxu0 %v1119
    %7047 = vmatpush.bf16.msra.mxu0 %v1116
    %7048 = vmatmul.bf16.gmra.mxu0 %v6172
    %v7049 = vpop.f32.mrf.mxu0
    %v7050 = vadd.f32 %v7037, %v7049
    %v7051 = vpop.f32.mrf.mxu0
    %7052 = vdwg.mxu0
    %7053 = vmatpush.bf16.msra.mxu0 %v1161
    %7054 = vmatpush.bf16.msra.mxu0 %v1158
    %7055 = vmatpush.bf16.msra.mxu0 %v1155
    %7056 = vmatpush.bf16.msra.mxu0 %v1152
    %7057 = vmatpush.bf16.msra.mxu0 %v1149
    %7058 = vmatpush.bf16.msra.mxu0 %v1146
    %7059 = vmatpush.bf16.msra.mxu0 %v1143
    %7060 = vmatpush.bf16.msra.mxu0 %v1140
    %7061 = vmatmul.bf16.gmra.mxu0 %v6173
    %v7062 = vpop.f32.mrf.mxu0
    %v7063 = vadd.f32 %v7050, %v7062
    %v7064 = vpop.f32.mrf.mxu0
    %7065 = vdwg.mxu0
    %7066 = vmatpush.bf16.msra.mxu0 %v1114
    %7067 = vmatpush.bf16.msra.mxu0 %v1111
    %7068 = vmatpush.bf16.msra.mxu0 %v1108
    %7069 = vmatpush.bf16.msra.mxu0 %v1105
    %7070 = vmatpush.bf16.msra.mxu0 %v1102
    %7071 = vmatpush.bf16.msra.mxu0 %v1099
    %7072 = vmatpush.bf16.msra.mxu0 %v1096
    %7073 = vmatpush.bf16.msra.mxu0 %v1093
    %7074 = vmatmul.bf16.gmra.mxu0 %v6171
    %v7075 = vpop.f32.mrf.mxu0
    %v7076 = vadd.f32 0.0, %v7075
    %v7077 = vpop.f32.mrf.mxu0
    %7078 = vdwg.mxu0
    %7079 = vmatpush.bf16.msra.mxu0 %v1138
    %7080 = vmatpush.bf16.msra.mxu0 %v1135
    %7081 = vmatpush.bf16.msra.mxu0 %v1132
    %7082 = vmatpush.bf16.msra.mxu0 %v1129
    %7083 = vmatpush.bf16.msra.mxu0 %v1126
    %7084 = vmatpush.bf16.msra.mxu0 %v1123
    %7085 = vmatpush.bf16.msra.mxu0 %v1120
    %7086 = vmatpush.bf16.msra.mxu0 %v1117
    %7087 = vmatmul.bf16.gmra.mxu0 %v6172
    %v7088 = vpop.f32.mrf.mxu0
    %v7089 = vadd.f32 %v7076, %v7088
    %v7090 = vpop.f32.mrf.mxu0
    %7091 = vdwg.mxu0
    %7092 = vmatpush.bf16.msra.mxu0 %v1162
    %7093 = vmatpush.bf16.msra.mxu0 %v1159
    %7094 = vmatpush.bf16.msra.mxu0 %v1156
    %7095 = vmatpush.bf16.msra.mxu0 %v1153
    %7096 = vmatpush.bf16.msra.mxu0 %v1150
    %7097 = vmatpush.bf16.msra.mxu0 %v1147
    %7098 = vmatpush.bf16.msra.mxu0 %v1144
    %7099 = vmatpush.bf16.msra.mxu0 %v1141
    %7100 = vmatmul.bf16.gmra.mxu0 %v6173
    %v7101 = vpop.f32.mrf.mxu0
    %v7102 = vadd.f32 %v7089, %v7101
    %v7103 = vpop.f32.mrf.mxu0
    %7104 = vdwg.mxu0
    %7105 = vmatpush.bf16.msra.mxu0 %v1115
    %7106 = vmatpush.bf16.msra.mxu0 %v1112
    %7107 = vmatpush.bf16.msra.mxu0 %v1109
    %7108 = vmatpush.bf16.msra.mxu0 %v1106
    %7109 = vmatpush.bf16.msra.mxu0 %v1103
    %7110 = vmatpush.bf16.msra.mxu0 %v1100
    %7111 = vmatpush.bf16.msra.mxu0 %v1097
    %7112 = vmatpush.bf16.msra.mxu0 %v1094
    %7113 = vmatmul.bf16.gmra.mxu0 %v6171
    %v7114 = vpop.f32.mrf.mxu0
    %v7115 = vadd.f32 0.0, %v7114
    %v7116 = vpop.f32.mrf.mxu0
    %7117 = vdwg.mxu0
    %7118 = vmatpush.bf16.msra.mxu0 %v1139
    %7119 = vmatpush.bf16.msra.mxu0 %v1136
    %7120 = vmatpush.bf16.msra.mxu0 %v1133
    %7121 = vmatpush.bf16.msra.mxu0 %v1130
    %7122 = vmatpush.bf16.msra.mxu0 %v1127
    %7123 = vmatpush.bf16.msra.mxu0 %v1124
    %7124 = vmatpush.bf16.msra.mxu0 %v1121
    %7125 = vmatpush.bf16.msra.mxu0 %v1118
    %7126 = vmatmul.bf16.gmra.mxu0 %v6172
    %v7127 = vpop.f32.mrf.mxu0
    %v7128 = vadd.f32 %v7115, %v7127
    %v7129 = vpop.f32.mrf.mxu0
    %7130 = vdwg.mxu0
    %7131 = vmatpush.bf16.msra.mxu0 %v1163
    %7132 = vmatpush.bf16.msra.mxu0 %v1160
    %7133 = vmatpush.bf16.msra.mxu0 %v1157
    %7134 = vmatpush.bf16.msra.mxu0 %v1154
    %7135 = vmatpush.bf16.msra.mxu0 %v1151
    %7136 = vmatpush.bf16.msra.mxu0 %v1148
    %7137 = vmatpush.bf16.msra.mxu0 %v1145
    %7138 = vmatpush.bf16.msra.mxu0 %v1142
    %7139 = vmatmul.bf16.gmra.mxu0 %v6173
    %v7140 = vpop.f32.mrf.mxu0
    %v7141 = vadd.f32 %v7128, %v7140
    %v7142 = vpop.f32.mrf.mxu0
    %7143 = vdwg.mxu0
    %v7144 = vadd.f32 %v7024, %v7063
    %v7145 = vadd.f32 %v7025, %v7102
    %v7146 = vadd.f32 %v7026, %v7141
    %v7147 = vtanh.pop %v7144
    %v7148 = vtanh.pop %v7145
    %v7149 = vtanh.pop %v7146
    %v7150 = vpack.c.bf16 %v7147, %v7147
    %v7151 = vpack.c.bf16 %v7148, %v7148
    %v7152 = vpack.c.bf16 %v7149, %v7149
    %7153 = vmatpush.bf16.msra.mxu0 %v1752
    %7154 = vmatpush.bf16.msra.mxu0 %v1749
    %7155 = vmatpush.bf16.msra.mxu0 %v1746
    %7156 = vmatpush.bf16.msra.mxu0 %v1743
    %7157 = vmatpush.bf16.msra.mxu0 %v1740
    %7158 = vmatpush.bf16.msra.mxu0 %v1737
    %7159 = vmatpush.bf16.msra.mxu0 %v1734
    %7160 = vmatpush.bf16.msra.mxu0 %v1731
    %7161 = vmatmul.bf16.gmra.mxu0 %v6414
    %v7162 = vpop.f32.mrf.mxu0
    %v7163 = vadd.f32 0.0, %v7162
    %v7164 = vpop.f32.mrf.mxu0
    %7165 = vdwg.mxu0
    %7166 = vmatpush.bf16.msra.mxu0 %v1776
    %7167 = vmatpush.bf16.msra.mxu0 %v1773
    %7168 = vmatpush.bf16.msra.mxu0 %v1770
    %7169 = vmatpush.bf16.msra.mxu0 %v1767
    %7170 = vmatpush.bf16.msra.mxu0 %v1764
    %7171 = vmatpush.bf16.msra.mxu0 %v1761
    %7172 = vmatpush.bf16.msra.mxu0 %v1758
    %7173 = vmatpush.bf16.msra.mxu0 %v1755
    %7174 = vmatmul.bf16.gmra.mxu0 %v6415
    %v7175 = vpop.f32.mrf.mxu0
    %v7176 = vadd.f32 %v7163, %v7175
    %v7177 = vpop.f32.mrf.mxu0
    %7178 = vdwg.mxu0
    %7179 = vmatpush.bf16.msra.mxu0 %v1800
    %7180 = vmatpush.bf16.msra.mxu0 %v1797
    %7181 = vmatpush.bf16.msra.mxu0 %v1794
    %7182 = vmatpush.bf16.msra.mxu0 %v1791
    %7183 = vmatpush.bf16.msra.mxu0 %v1788
    %7184 = vmatpush.bf16.msra.mxu0 %v1785
    %7185 = vmatpush.bf16.msra.mxu0 %v1782
    %7186 = vmatpush.bf16.msra.mxu0 %v1779
    %7187 = vmatmul.bf16.gmra.mxu0 %v6416
    %v7188 = vpop.f32.mrf.mxu0
    %v7189 = vadd.f32 %v7176, %v7188
    %v7190 = vpop.f32.mrf.mxu0
    %7191 = vdwg.mxu0
    %7192 = vmatpush.bf16.msra.mxu0 %v1753
    %7193 = vmatpush.bf16.msra.mxu0 %v1750
    %7194 = vmatpush.bf16.msra.mxu0 %v1747
    %7195 = vmatpush.bf16.msra.mxu0 %v1744
    %7196 = vmatpush.bf16.msra.mxu0 %v1741
    %7197 = vmatpush.bf16.msra.mxu0 %v1738
    %7198 = vmatpush.bf16.msra.mxu0 %v1735
    %7199 = vmatpush.bf16.msra.mxu0 %v1732
    %7200 = vmatmul.bf16.gmra.mxu0 %v6414
    %v7201 = vpop.f32.mrf.mxu0
    %v7202 = vadd.f32 0.0, %v7201
    %v7203 = vpop.f32.mrf.mxu0
    %7204 = vdwg.mxu0
    %7205 = vmatpush.bf16.msra.mxu0 %v1777
    %7206 = vmatpush.bf16.msra.mxu0 %v1774
    %7207 = vmatpush.bf16.msra.mxu0 %v1771
    %7208 = vmatpush.bf16.msra.mxu0 %v1768
    %7209 = vmatpush.bf16.msra.mxu0 %v1765
    %7210 = vmatpush.bf16.msra.mxu0 %v1762
    %7211 = vmatpush.bf16.msra.mxu0 %v1759
    %7212 = vmatpush.bf16.msra.mxu0 %v1756
    %7213 = vmatmul.bf16.gmra.mxu0 %v6415
    %v7214 = vpop.f32.mrf.mxu0
    %v7215 = vadd.f32 %v7202, %v7214
    %v7216 = vpop.f32.mrf.mxu0
    %7217 = vdwg.mxu0
    %7218 = vmatpush.bf16.msra.mxu0 %v1801
    %7219 = vmatpush.bf16.msra.mxu0 %v1798
    %7220 = vmatpush.bf16.msra.mxu0 %v1795
    %7221 = vmatpush.bf16.msra.mxu0 %v1792
    %7222 = vmatpush.bf16.msra.mxu0 %v1789
    %7223 = vmatpush.bf16.msra.mxu0 %v1786
    %7224 = vmatpush.bf16.msra.mxu0 %v1783
    %7225 = vmatpush.bf16.msra.mxu0 %v1780
    %7226 = vmatmul.bf16.gmra.mxu0 %v6416
    %v7227 = vpop.f32.mrf.mxu0
    %v7228 = vadd.f32 %v7215, %v7227
    %v7229 = vpop.f32.mrf.mxu0
    %7230 = vdwg.mxu0
    %7231 = vmatpush.bf16.msra.mxu0 %v1754
    %7232 = vmatpush.bf16.msra.mxu0 %v1751
    %7233 = vmatpush.bf16.msra.mxu0 %v1748
    %7234 = vmatpush.bf16.msra.mxu0 %v1745
    %7235 = vmatpush.bf16.msra.mxu0 %v1742
    %7236 = vmatpush.bf16.msra.mxu0 %v1739
    %7237 = vmatpush.bf16.msra.mxu0 %v1736
    %7238 = vmatpush.bf16.msra.mxu0 %v1733
    %7239 = vmatmul.bf16.gmra.mxu0 %v6414
    %v7240 = vpop.f32.mrf.mxu0
    %v7241 = vadd.f32 0.0, %v7240
    %v7242 = vpop.f32.mrf.mxu0
    %7243 = vdwg.mxu0
    %7244 = vmatpush.bf16.msra.mxu0 %v1778
    %7245 = vmatpush.bf16.msra.mxu0 %v1775
    %7246 = vmatpush.bf16.msra.mxu0 %v1772
    %7247 = vmatpush.bf16.msra.mxu0 %v1769
    %7248 = vmatpush.bf16.msra.mxu0 %v1766
    %7249 = vmatpush.bf16.msra.mxu0 %v1763
    %7250 = vmatpush.bf16.msra.mxu0 %v1760
    %7251 = vmatpush.bf16.msra.mxu0 %v1757
    %7252 = vmatmul.bf16.gmra.mxu0 %v6415
    %v7253 = vpop.f32.mrf.mxu0
    %v7254 = vadd.f32 %v7241, %v7253
    %v7255 = vpop.f32.mrf.mxu0
    %7256 = vdwg.mxu0
    %7257 = vmatpush.bf16.msra.mxu0 %v1802
    %7258 = vmatpush.bf16.msra.mxu0 %v1799
    %7259 = vmatpush.bf16.msra.mxu0 %v1796
    %7260 = vmatpush.bf16.msra.mxu0 %v1793
    %7261 = vmatpush.bf16.msra.mxu0 %v1790
    %7262 = vmatpush.bf16.msra.mxu0 %v1787
    %7263 = vmatpush.bf16.msra.mxu0 %v1784
    %7264 = vmatpush.bf16.msra.mxu0 %v1781
    %7265 = vmatmul.bf16.gmra.mxu0 %v6416
    %v7266 = vpop.f32.mrf.mxu0
    %v7267 = vadd.f32 %v7254, %v7266
    %v7268 = vpop.f32.mrf.mxu0
    %7269 = vdwg.mxu0
    %7270 = vmatpush.bf16.msra.mxu0 %v2253
    %7271 = vmatpush.bf16.msra.mxu0 %v2250
    %7272 = vmatpush.bf16.msra.mxu0 %v2247
    %7273 = vmatpush.bf16.msra.mxu0 %v2244
    %7274 = vmatpush.bf16.msra.mxu0 %v2241
    %7275 = vmatpush.bf16.msra.mxu0 %v2238
    %7276 = vmatpush.bf16.msra.mxu0 %v2235
    %7277 = vmatpush.bf16.msra.mxu0 %v2232
    %7278 = vmatmul.bf16.gmra.mxu0 %v6171
    %v7279 = vpop.f32.mrf.mxu0
    %v7280 = vadd.f32 %v7189, %v7279
    %v7281 = vpop.f32.mrf.mxu0
    %7282 = vdwg.mxu0
    %7283 = vmatpush.bf16.msra.mxu0 %v2277
    %7284 = vmatpush.bf16.msra.mxu0 %v2274
    %7285 = vmatpush.bf16.msra.mxu0 %v2271
    %7286 = vmatpush.bf16.msra.mxu0 %v2268
    %7287 = vmatpush.bf16.msra.mxu0 %v2265
    %7288 = vmatpush.bf16.msra.mxu0 %v2262
    %7289 = vmatpush.bf16.msra.mxu0 %v2259
    %7290 = vmatpush.bf16.msra.mxu0 %v2256
    %7291 = vmatmul.bf16.gmra.mxu0 %v6172
    %v7292 = vpop.f32.mrf.mxu0
    %v7293 = vadd.f32 %v7280, %v7292
    %v7294 = vpop.f32.mrf.mxu0
    %7295 = vdwg.mxu0
    %7296 = vmatpush.bf16.msra.mxu0 %v2301
    %7297 = vmatpush.bf16.msra.mxu0 %v2298
    %7298 = vmatpush.bf16.msra.mxu0 %v2295
    %7299 = vmatpush.bf16.msra.mxu0 %v2292
    %7300 = vmatpush.bf16.msra.mxu0 %v2289
    %7301 = vmatpush.bf16.msra.mxu0 %v2286
    %7302 = vmatpush.bf16.msra.mxu0 %v2283
    %7303 = vmatpush.bf16.msra.mxu0 %v2280
    %7304 = vmatmul.bf16.gmra.mxu0 %v6173
    %v7305 = vpop.f32.mrf.mxu0
    %v7306 = vadd.f32 %v7293, %v7305
    %v7307 = vpop.f32.mrf.mxu0
    %7308 = vdwg.mxu0
    %7309 = vmatpush.bf16.msra.mxu0 %v2254
    %7310 = vmatpush.bf16.msra.mxu0 %v2251
    %7311 = vmatpush.bf16.msra.mxu0 %v2248
    %7312 = vmatpush.bf16.msra.mxu0 %v2245
    %7313 = vmatpush.bf16.msra.mxu0 %v2242
    %7314 = vmatpush.bf16.msra.mxu0 %v2239
    %7315 = vmatpush.bf16.msra.mxu0 %v2236
    %7316 = vmatpush.bf16.msra.mxu0 %v2233
    %7317 = vmatmul.bf16.gmra.mxu0 %v6171
    %v7318 = vpop.f32.mrf.mxu0
    %v7319 = vadd.f32 %v7228, %v7318
    %v7320 = vpop.f32.mrf.mxu0
    %7321 = vdwg.mxu0
    %7322 = vmatpush.bf16.msra.mxu0 %v2278
    %7323 = vmatpush.bf16.msra.mxu0 %v2275
    %7324 = vmatpush.bf16.msra.mxu0 %v2272
    %7325 = vmatpush.bf16.msra.mxu0 %v2269
    %7326 = vmatpush.bf16.msra.mxu0 %v2266
    %7327 = vmatpush.bf16.msra.mxu0 %v2263
    %7328 = vmatpush.bf16.msra.mxu0 %v2260
    %7329 = vmatpush.bf16.msra.mxu0 %v2257
    %7330 = vmatmul.bf16.gmra.mxu0 %v6172
    %v7331 = vpop.f32.mrf.mxu0
    %v7332 = vadd.f32 %v7319, %v7331
    %v7333 = vpop.f32.mrf.mxu0
    %7334 = vdwg.mxu0
    %7335 = vmatpush.bf16.msra.mxu0 %v2302
    %7336 = vmatpush.bf16.msra.mxu0 %v2299
    %7337 = vmatpush.bf16.msra.mxu0 %v2296
    %7338 = vmatpush.bf16.msra.mxu0 %v2293
    %7339 = vmatpush.bf16.msra.mxu0 %v2290
    %7340 = vmatpush.bf16.msra.mxu0 %v2287
    %7341 = vmatpush.bf16.msra.mxu0 %v2284
    %7342 = vmatpush.bf16.msra.mxu0 %v2281
    %7343 = vmatmul.bf16.gmra.mxu0 %v6173
    %v7344 = vpop.f32.mrf.mxu0
    %v7345 = vadd.f32 %v7332, %v7344
    %v7346 = vpop.f32.mrf.mxu0
    %7347 = vdwg.mxu0
    %7348 = vmatpush.bf16.msra.mxu0 %v2255
    %7349 = vmatpush.bf16.msra.mxu0 %v2252
    %7350 = vmatpush.bf16.msra.mxu0 %v2249
    %7351 = vmatpush.bf16.msra.mxu0 %v2246
    %7352 = vmatpush.bf16.msra.mxu0 %v2243
    %7353 = vmatpush.bf16.msra.mxu0 %v2240
    %7354 = vmatpush.bf16.msra.mxu0 %v2237
    %7355 = vmatpush.bf16.msra.mxu0 %v2234
    %7356 = vmatmul.bf16.gmra.mxu0 %v6171
    %v7357 = vpop.f32.mrf.mxu0
    %v7358 = vadd.f32 %v7267, %v7357
    %v7359 = vpop.f32.mrf.mxu0
    %7360 = vdwg.mxu0
    %7361 = vmatpush.bf16.msra.mxu0 %v2279
    %7362 = vmatpush.bf16.msra.mxu0 %v2276
    %7363 = vmatpush.bf16.msra.mxu0 %v2273
    %7364 = vmatpush.bf16.msra.mxu0 %v2270
    %7365 = vmatpush.bf16.msra.mxu0 %v2267
    %7366 = vmatpush.bf16.msra.mxu0 %v2264
    %7367 = vmatpush.bf16.msra.mxu0 %v2261
    %7368 = vmatpush.bf16.msra.mxu0 %v2258
    %7369 = vmatmul.bf16.gmra.mxu0 %v6172
    %v7370 = vpop.f32.mrf.mxu0
    %v7371 = vadd.f32 %v7358, %v7370
    %v7372 = vpop.f32.mrf.mxu0
    %7373 = vdwg.mxu0
    %7374 = vmatpush.bf16.msra.mxu0 %v2303
    %7375 = vmatpush.bf16.msra.mxu0 %v2300
    %7376 = vmatpush.bf16.msra.mxu0 %v2297
    %7377 = vmatpush.bf16.msra.mxu0 %v2294
    %7378 = vmatpush.bf16.msra.mxu0 %v2291
    %7379 = vmatpush.bf16.msra.mxu0 %v2288
    %7380 = vmatpush.bf16.msra.mxu0 %v2285
    %7381 = vmatpush.bf16.msra.mxu0 %v2282
    %7382 = vmatmul.bf16.gmra.mxu0 %v6173
    %v7383 = vpop.f32.mrf.mxu0
    %v7384 = vadd.f32 %v7371, %v7383
    %v7385 = vpop.f32.mrf.mxu0
    %7386 = vdwg.mxu0
    %v7387 = vadd.f32 %v7306, %v832
    %v7388 = vadd.f32 %v7345, %v833
    %v7389 = vadd.f32 %v7384, %v834
    %v7390 = vtanh.pop %v7387
    %v7391 = vtanh.pop %v7388
    %v7392 = vtanh.pop %v7389
    %v7393 = vpack.c.bf16 %v7390, %v7390
    %v7394 = vpack.c.bf16 %v7391, %v7391
    %v7395 = vpack.c.bf16 %v7392, %v7392
    %v7396 = vld [vmem:[#allocation3] sm:$0xff]
    %v7397 = vld [vmem:[#allocation3 + $0x8] sm:$0xff]
    %v7398 = vld [vmem:[#allocation3 + $0x10] sm:$0xff]
    %s7399 = scalar_lea.vmem [#allocation14], 2880
    %v7400 = vld [vmem:[%s7399] sm:$0xff]
    %v7401 = vld [vmem:[%s7399 + $0x8] sm:$0xf]
    %v7402 = vld [vmem:[%s7399 + $0xc] sm:$0xff]
    %v7403 = vld [vmem:[%s7399 + $0x14] sm:$0xf]
    %v7404 = vld [vmem:[%s7399 + $0x18] sm:$0xff]
    %v7405 = vld [vmem:[%s7399 + $0x20] sm:$0xf]
    %v7406 = vld [vmem:[%s7399 + $0x24] sm:$0xff]
    %v7407 = vld [vmem:[%s7399 + $0x2c] sm:$0xf]
    %v7408 = vld [vmem:[%s7399 + $0x30] sm:$0xff]
    %v7409 = vld [vmem:[%s7399 + $0x38] sm:$0xf]
    %v7410 = vld [vmem:[%s7399 + $0x3c] sm:$0xff]
    %v7411 = vld [vmem:[%s7399 + $0x44] sm:$0xf]
    %v7412 = vld [vmem:[%s7399 + $0x48] sm:$0xff]
    %v7413 = vld [vmem:[%s7399 + $0x50] sm:$0xf]
    %v7414 = vld [vmem:[%s7399 + $0x54] sm:$0xff]
    %v7415 = vld [vmem:[%s7399 + $0x5c] sm:$0xf]
    %v7416 = vld [vmem:[%s7399 + $0x60] sm:$0xff]
    %v7417 = vld [vmem:[%s7399 + $0x68] sm:$0xf]
    %v7418 = vld [vmem:[%s7399 + $0x6c] sm:$0xff]
    %v7419 = vld [vmem:[%s7399 + $0x74] sm:$0xf]
    %v7420 = vld [vmem:[%s7399 + $0x78] sm:$0xff]
    %v7421 = vld [vmem:[%s7399 + $0x80] sm:$0xf]
    %v7422 = vld [vmem:[%s7399 + $0x84] sm:$0xff]
    %v7423 = vld [vmem:[%s7399 + $0x8c] sm:$0xf]
    %v7424 = vld [vmem:[%s7399 + $0x90] sm:$0xff]
    %v7425 = vld [vmem:[%s7399 + $0x98] sm:$0xf]
    %v7426 = vld [vmem:[%s7399 + $0x9c] sm:$0xff]
    %v7427 = vld [vmem:[%s7399 + $0xa4] sm:$0xf]
    %v7428 = vld [vmem:[%s7399 + $0xa8] sm:$0xff]
    %v7429 = vld [vmem:[%s7399 + $0xb0] sm:$0xf]
    %v7430 = vld [vmem:[%s7399 + $0xb4] sm:$0xff]
    %v7431 = vld [vmem:[%s7399 + $0xbc] sm:$0xf]
    %v7432 = vld [vmem:[%s7399 + $0xc0] sm:$0xff]
    %v7433 = vld [vmem:[%s7399 + $0xc8] sm:$0xf]
    %v7434 = vld [vmem:[%s7399 + $0xcc] sm:$0xff]
    %v7435 = vld [vmem:[%s7399 + $0xd4] sm:$0xf]
    %v7436 = vld [vmem:[%s7399 + $0xd8] sm:$0xff]
    %v7437 = vld [vmem:[%s7399 + $0xe0] sm:$0xf]
    %v7438 = vld [vmem:[%s7399 + $0xe4] sm:$0xff]
    %v7439 = vld [vmem:[%s7399 + $0xec] sm:$0xf]
    %v7440 = vld [vmem:[%s7399 + $0xf0] sm:$0xff]
    %v7441 = vld [vmem:[%s7399 + $0xf8] sm:$0xf]
    %v7442 = vld [vmem:[%s7399 + $0xfc] sm:$0xff]
    %v7443 = vld [vmem:[%s7399 + $0x104] sm:$0xf]
    %v7444 = vld [vmem:[%s7399 + $0x108] sm:$0xff]
    %v7445 = vld [vmem:[%s7399 + $0x110] sm:$0xf]
    %v7446 = vld [vmem:[%s7399 + $0x114] sm:$0xff]
    %v7447 = vld [vmem:[%s7399 + $0x11c] sm:$0xf]
    %v7448 = vld [vmem:[%s7399 + $0x120] sm:$0xff]
    %v7449 = vld [vmem:[%s7399 + $0x128] sm:$0xf]
    %v7450 = vld [vmem:[%s7399 + $0x12c] sm:$0xff]
    %v7451 = vld [vmem:[%s7399 + $0x134] sm:$0xf]
    %v7452 = vld [vmem:[%s7399 + $0x138] sm:$0xff]
    %v7453 = vld [vmem:[%s7399 + $0x140] sm:$0xf]
    %v7454 = vld [vmem:[%s7399 + $0x144] sm:$0xff]
    %v7455 = vld [vmem:[%s7399 + $0x14c] sm:$0xf]
    %v7456 = vld [vmem:[%s7399 + $0x150] sm:$0xff]
    %v7457 = vld [vmem:[%s7399 + $0x158] sm:$0xf]
    %v7458 = vld [vmem:[%s7399 + $0x15c] sm:$0xff]
    %v7459 = vld [vmem:[%s7399 + $0x164] sm:$0xf]
    %v7460 = vld [vmem:[%s7399 + $0x168] sm:$0xff]
    %v7461 = vld [vmem:[%s7399 + $0x170] sm:$0xf]
    %v7462 = vld [vmem:[%s7399 + $0x174] sm:$0xff]
    %v7463 = vld [vmem:[%s7399 + $0x17c] sm:$0xf]
    %v7464 = vld [vmem:[%s7399 + $0x180] sm:$0xff]
    %v7465 = vld [vmem:[%s7399 + $0x188] sm:$0xf]
    %v7466 = vld [vmem:[%s7399 + $0x18c] sm:$0xff]
    %v7467 = vld [vmem:[%s7399 + $0x194] sm:$0xf]
    %v7468 = vld [vmem:[%s7399 + $0x198] sm:$0xff]
    %v7469 = vld [vmem:[%s7399 + $0x1a0] sm:$0xf]
    %v7470 = vld [vmem:[%s7399 + $0x1a4] sm:$0xff]
    %v7471 = vld [vmem:[%s7399 + $0x1ac] sm:$0xf]
    %v7472 = vld [vmem:[%s7399 + $0x1b0] sm:$0xff]
    %v7473 = vld [vmem:[%s7399 + $0x1b8] sm:$0xf]
    %v7474 = vld [vmem:[%s7399 + $0x1bc] sm:$0xff]
    %v7475 = vld [vmem:[%s7399 + $0x1c4] sm:$0xf]
    %v7476 = vld [vmem:[%s7399 + $0x1c8] sm:$0xff]
    %v7477 = vld [vmem:[%s7399 + $0x1d0] sm:$0xf]
    %v7478 = vld [vmem:[%s7399 + $0x1d4] sm:$0xff]
    %v7479 = vld [vmem:[%s7399 + $0x1dc] sm:$0xf]
    %v7480 = vld [vmem:[%s7399 + $0x1e0] sm:$0xff]
    %v7481 = vld [vmem:[%s7399 + $0x1e8] sm:$0xf]
    %v7482 = vld [vmem:[%s7399 + $0x1ec] sm:$0xff]
    %v7483 = vld [vmem:[%s7399 + $0x1f4] sm:$0xf]
    %v7484 = vld [vmem:[%s7399 + $0x1f8] sm:$0xff]
    %v7485 = vld [vmem:[%s7399 + $0x200] sm:$0xf]
    %v7486 = vld [vmem:[%s7399 + $0x204] sm:$0xff]
    %v7487 = vld [vmem:[%s7399 + $0x20c] sm:$0xf]
    %v7488 = vld [vmem:[%s7399 + $0x210] sm:$0xff]
    %v7489 = vld [vmem:[%s7399 + $0x218] sm:$0xf]
    %v7490 = vld [vmem:[%s7399 + $0x21c] sm:$0xff]
    %v7491 = vld [vmem:[%s7399 + $0x224] sm:$0xf]
    %v7492 = vld [vmem:[%s7399 + $0x228] sm:$0xff]
    %v7493 = vld [vmem:[%s7399 + $0x230] sm:$0xf]
    %v7494 = vld [vmem:[%s7399 + $0x234] sm:$0xff]
    %v7495 = vld [vmem:[%s7399 + $0x23c] sm:$0xf]
    %v7592 = vunpack.c.l.b16 %v7400
    %v7593 = vunpack.c.h.b16 %v7400
    %v7594 = vunpack.c.l.b16 %v7401
    %v7595 = vunpack.c.l.b16 %v7402
    %v7596 = vunpack.c.h.b16 %v7402
    %v7597 = vunpack.c.l.b16 %v7403
    %v7598 = vunpack.c.l.b16 %v7404
    %v7599 = vunpack.c.h.b16 %v7404
    %v7600 = vunpack.c.l.b16 %v7405
    %v7601 = vunpack.c.l.b16 %v7406
    %v7602 = vunpack.c.h.b16 %v7406
    %v7603 = vunpack.c.l.b16 %v7407
    %v7604 = vunpack.c.l.b16 %v7408
    %v7605 = vunpack.c.h.b16 %v7408
    %v7606 = vunpack.c.l.b16 %v7409
    %v7607 = vunpack.c.l.b16 %v7410
    %v7608 = vunpack.c.h.b16 %v7410
    %v7609 = vunpack.c.l.b16 %v7411
    %v7610 = vunpack.c.l.b16 %v7412
    %v7611 = vunpack.c.h.b16 %v7412
    %v7612 = vunpack.c.l.b16 %v7413
    %v7613 = vunpack.c.l.b16 %v7414
    %v7614 = vunpack.c.h.b16 %v7414
    %v7615 = vunpack.c.l.b16 %v7415
    %v7616 = vunpack.c.l.b16 %v7416
    %v7617 = vunpack.c.h.b16 %v7416
    %v7618 = vunpack.c.l.b16 %v7417
    %v7619 = vunpack.c.l.b16 %v7418
    %v7620 = vunpack.c.h.b16 %v7418
    %v7621 = vunpack.c.l.b16 %v7419
    %v7622 = vunpack.c.l.b16 %v7420
    %v7623 = vunpack.c.h.b16 %v7420
    %v7624 = vunpack.c.l.b16 %v7421
    %v7625 = vunpack.c.l.b16 %v7422
    %v7626 = vunpack.c.h.b16 %v7422
    %v7627 = vunpack.c.l.b16 %v7423
    %v7628 = vunpack.c.l.b16 %v7424
    %v7629 = vunpack.c.h.b16 %v7424
    %v7630 = vunpack.c.l.b16 %v7425
    %v7631 = vunpack.c.l.b16 %v7426
    %v7632 = vunpack.c.h.b16 %v7426
    %v7633 = vunpack.c.l.b16 %v7427
    %v7634 = vunpack.c.l.b16 %v7428
    %v7635 = vunpack.c.h.b16 %v7428
    %v7636 = vunpack.c.l.b16 %v7429
    %v7637 = vunpack.c.l.b16 %v7430
    %v7638 = vunpack.c.h.b16 %v7430
    %v7639 = vunpack.c.l.b16 %v7431
    %v7640 = vunpack.c.l.b16 %v7432
    %v7641 = vunpack.c.h.b16 %v7432
    %v7642 = vunpack.c.l.b16 %v7433
    %v7643 = vunpack.c.l.b16 %v7434
    %v7644 = vunpack.c.h.b16 %v7434
    %v7645 = vunpack.c.l.b16 %v7435
    %v7646 = vunpack.c.l.b16 %v7436
    %v7647 = vunpack.c.h.b16 %v7436
    %v7648 = vunpack.c.l.b16 %v7437
    %v7649 = vunpack.c.l.b16 %v7438
    %v7650 = vunpack.c.h.b16 %v7438
    %v7651 = vunpack.c.l.b16 %v7439
    %v7652 = vunpack.c.l.b16 %v7440
    %v7653 = vunpack.c.h.b16 %v7440
    %v7654 = vunpack.c.l.b16 %v7441
    %v7655 = vunpack.c.l.b16 %v7442
    %v7656 = vunpack.c.h.b16 %v7442
    %v7657 = vunpack.c.l.b16 %v7443
    %v7658 = vunpack.c.l.b16 %v7444
    %v7659 = vunpack.c.h.b16 %v7444
    %v7660 = vunpack.c.l.b16 %v7445
    %v7661 = vunpack.c.l.b16 %v7446
    %v7662 = vunpack.c.h.b16 %v7446
    %v7663 = vunpack.c.l.b16 %v7447
    %v7664 = vunpack.c.l.b16 %v7448
    %v7665 = vunpack.c.h.b16 %v7448
    %v7666 = vunpack.c.l.b16 %v7449
    %v7667 = vunpack.c.l.b16 %v7450
    %v7668 = vunpack.c.h.b16 %v7450
    %v7669 = vunpack.c.l.b16 %v7451
    %v7670 = vunpack.c.l.b16 %v7452
    %v7671 = vunpack.c.h.b16 %v7452
    %v7672 = vunpack.c.l.b16 %v7453
    %v7673 = vunpack.c.l.b16 %v7454
    %v7674 = vunpack.c.h.b16 %v7454
    %v7675 = vunpack.c.l.b16 %v7455
    %v7676 = vunpack.c.l.b16 %v7456
    %v7677 = vunpack.c.h.b16 %v7456
    %v7678 = vunpack.c.l.b16 %v7457
    %v7679 = vunpack.c.l.b16 %v7458
    %v7680 = vunpack.c.h.b16 %v7458
    %v7681 = vunpack.c.l.b16 %v7459
    %v7682 = vunpack.c.l.b16 %v7460
    %v7683 = vunpack.c.h.b16 %v7460
    %v7684 = vunpack.c.l.b16 %v7461
    %v7685 = vunpack.c.l.b16 %v7462
    %v7686 = vunpack.c.h.b16 %v7462
    %v7687 = vunpack.c.l.b16 %v7463
    %v7688 = vunpack.c.l.b16 %v7464
    %v7689 = vunpack.c.h.b16 %v7464
    %v7690 = vunpack.c.l.b16 %v7465
    %v7691 = vunpack.c.l.b16 %v7466
    %v7692 = vunpack.c.h.b16 %v7466
    %v7693 = vunpack.c.l.b16 %v7467
    %v7694 = vunpack.c.l.b16 %v7468
    %v7695 = vunpack.c.h.b16 %v7468
    %v7696 = vunpack.c.l.b16 %v7469
    %v7697 = vunpack.c.l.b16 %v7470
    %v7698 = vunpack.c.h.b16 %v7470
    %v7699 = vunpack.c.l.b16 %v7471
    %v7700 = vunpack.c.l.b16 %v7472
    %v7701 = vunpack.c.h.b16 %v7472
    %v7702 = vunpack.c.l.b16 %v7473
    %v7703 = vunpack.c.l.b16 %v7474
    %v7704 = vunpack.c.h.b16 %v7474
    %v7705 = vunpack.c.l.b16 %v7475
    %v7706 = vunpack.c.l.b16 %v7476
    %v7707 = vunpack.c.h.b16 %v7476
    %v7708 = vunpack.c.l.b16 %v7477
    %v7709 = vunpack.c.l.b16 %v7478
    %v7710 = vunpack.c.h.b16 %v7478
    %v7711 = vunpack.c.l.b16 %v7479
    %v7712 = vunpack.c.l.b16 %v7480
    %v7713 = vunpack.c.h.b16 %v7480
    %v7714 = vunpack.c.l.b16 %v7481
    %v7715 = vunpack.c.l.b16 %v7482
    %v7716 = vunpack.c.h.b16 %v7482
    %v7717 = vunpack.c.l.b16 %v7483
    %v7718 = vunpack.c.l.b16 %v7484
    %v7719 = vunpack.c.h.b16 %v7484
    %v7720 = vunpack.c.l.b16 %v7485
    %v7721 = vunpack.c.l.b16 %v7486
    %v7722 = vunpack.c.h.b16 %v7486
    %v7723 = vunpack.c.l.b16 %v7487
    %v7724 = vunpack.c.l.b16 %v7488
    %v7725 = vunpack.c.h.b16 %v7488
    %v7726 = vunpack.c.l.b16 %v7489
    %v7727 = vunpack.c.l.b16 %v7490
    %v7728 = vunpack.c.h.b16 %v7490
    %v7729 = vunpack.c.l.b16 %v7491
    %v7730 = vunpack.c.l.b16 %v7492
    %v7731 = vunpack.c.h.b16 %v7492
    %v7732 = vunpack.c.l.b16 %v7493
    %v7733 = vunpack.c.l.b16 %v7494
    %v7734 = vunpack.c.h.b16 %v7494
    %v7735 = vunpack.c.l.b16 %v7495
    %v7736 = vpack.c.b16 %v7595, %v7592
    %v7737 = vpack.c.b16 %v7596, %v7593
    %v7738 = vpack.c.b16 %v7597, %v7594
    %v7739 = vpack.c.b16 %v7601, %v7598
    %v7740 = vpack.c.b16 %v7602, %v7599
    %v7741 = vpack.c.b16 %v7603, %v7600
    %v7742 = vpack.c.b16 %v7607, %v7604
    %v7743 = vpack.c.b16 %v7608, %v7605
    %v7744 = vpack.c.b16 %v7609, %v7606
    %v7745 = vpack.c.b16 %v7613, %v7610
    %v7746 = vpack.c.b16 %v7614, %v7611
    %v7747 = vpack.c.b16 %v7615, %v7612
    %v7748 = vpack.c.b16 %v7619, %v7616
    %v7749 = vpack.c.b16 %v7620, %v7617
    %v7750 = vpack.c.b16 %v7621, %v7618
    %v7751 = vpack.c.b16 %v7625, %v7622
    %v7752 = vpack.c.b16 %v7626, %v7623
    %v7753 = vpack.c.b16 %v7627, %v7624
    %v7754 = vpack.c.b16 %v7631, %v7628
    %v7755 = vpack.c.b16 %v7632, %v7629
    %v7756 = vpack.c.b16 %v7633, %v7630
    %v7757 = vpack.c.b16 %v7637, %v7634
    %v7758 = vpack.c.b16 %v7638, %v7635
    %v7759 = vpack.c.b16 %v7639, %v7636
    %v7760 = vpack.c.b16 %v7643, %v7640
    %v7761 = vpack.c.b16 %v7644, %v7641
    %v7762 = vpack.c.b16 %v7645, %v7642
    %v7763 = vpack.c.b16 %v7649, %v7646
    %v7764 = vpack.c.b16 %v7650, %v7647
    %v7765 = vpack.c.b16 %v7651, %v7648
    %v7766 = vpack.c.b16 %v7655, %v7652
    %v7767 = vpack.c.b16 %v7656, %v7653
    %v7768 = vpack.c.b16 %v7657, %v7654
    %v7769 = vpack.c.b16 %v7661, %v7658
    %v7770 = vpack.c.b16 %v7662, %v7659
    %v7771 = vpack.c.b16 %v7663, %v7660
    %v7772 = vpack.c.b16 %v7667, %v7664
    %v7773 = vpack.c.b16 %v7668, %v7665
    %v7774 = vpack.c.b16 %v7669, %v7666
    %v7775 = vpack.c.b16 %v7673, %v7670
    %v7776 = vpack.c.b16 %v7674, %v7671
    %v7777 = vpack.c.b16 %v7675, %v7672
    %v7778 = vpack.c.b16 %v7679, %v7676
    %v7779 = vpack.c.b16 %v7680, %v7677
    %v7780 = vpack.c.b16 %v7681, %v7678
    %v7781 = vpack.c.b16 %v7685, %v7682
    %v7782 = vpack.c.b16 %v7686, %v7683
    %v7783 = vpack.c.b16 %v7687, %v7684
    %v7784 = vpack.c.b16 %v7691, %v7688
    %v7785 = vpack.c.b16 %v7692, %v7689
    %v7786 = vpack.c.b16 %v7693, %v7690
    %v7787 = vpack.c.b16 %v7697, %v7694
    %v7788 = vpack.c.b16 %v7698, %v7695
    %v7789 = vpack.c.b16 %v7699, %v7696
    %v7790 = vpack.c.b16 %v7703, %v7700
    %v7791 = vpack.c.b16 %v7704, %v7701
    %v7792 = vpack.c.b16 %v7705, %v7702
    %v7793 = vpack.c.b16 %v7709, %v7706
    %v7794 = vpack.c.b16 %v7710, %v7707
    %v7795 = vpack.c.b16 %v7711, %v7708
    %v7796 = vpack.c.b16 %v7715, %v7712
    %v7797 = vpack.c.b16 %v7716, %v7713
    %v7798 = vpack.c.b16 %v7717, %v7714
    %v7799 = vpack.c.b16 %v7721, %v7718
    %v7800 = vpack.c.b16 %v7722, %v7719
    %v7801 = vpack.c.b16 %v7723, %v7720
    %v7802 = vpack.c.b16 %v7727, %v7724
    %v7803 = vpack.c.b16 %v7728, %v7725
    %v7804 = vpack.c.b16 %v7729, %v7726
    %v7805 = vpack.c.b16 %v7733, %v7730
    %v7806 = vpack.c.b16 %v7734, %v7731
    %v7807 = vpack.c.b16 %v7735, %v7732
    %7880 = vmatpush.bf16.msra.mxu0 %v7757
    %7881 = vmatpush.bf16.msra.mxu0 %v7754
    %7882 = vmatpush.bf16.msra.mxu0 %v7751
    %7883 = vmatpush.bf16.msra.mxu0 %v7748
    %7884 = vmatpush.bf16.msra.mxu0 %v7745
    %7885 = vmatpush.bf16.msra.mxu0 %v7742
    %7886 = vmatpush.bf16.msra.mxu0 %v7739
    %7887 = vmatpush.bf16.msra.mxu0 %v7736
    %7888 = vmatmul.bf16.gmra.mxu0 %v7393
    %v7889 = vpop.f32.mrf.mxu0
    %v7890 = vadd.f32 0.0, %v7889
    %v7891 = vpop.f32.mrf.mxu0
    %7892 = vdwg.mxu0
    %7893 = vmatpush.bf16.msra.mxu0 %v7781
    %7894 = vmatpush.bf16.msra.mxu0 %v7778
    %7895 = vmatpush.bf16.msra.mxu0 %v7775
    %7896 = vmatpush.bf16.msra.mxu0 %v7772
    %7897 = vmatpush.bf16.msra.mxu0 %v7769
    %7898 = vmatpush.bf16.msra.mxu0 %v7766
    %7899 = vmatpush.bf16.msra.mxu0 %v7763
    %7900 = vmatpush.bf16.msra.mxu0 %v7760
    %7901 = vmatmul.bf16.gmra.mxu0 %v7394
    %v7902 = vpop.f32.mrf.mxu0
    %v7903 = vadd.f32 %v7890, %v7902
    %v7904 = vpop.f32.mrf.mxu0
    %7905 = vdwg.mxu0
    %7906 = vmatpush.bf16.msra.mxu0 %v7805
    %7907 = vmatpush.bf16.msra.mxu0 %v7802
    %7908 = vmatpush.bf16.msra.mxu0 %v7799
    %7909 = vmatpush.bf16.msra.mxu0 %v7796
    %7910 = vmatpush.bf16.msra.mxu0 %v7793
    %7911 = vmatpush.bf16.msra.mxu0 %v7790
    %7912 = vmatpush.bf16.msra.mxu0 %v7787
    %7913 = vmatpush.bf16.msra.mxu0 %v7784
    %7914 = vmatmul.bf16.gmra.mxu0 %v7395
    %v7915 = vpop.f32.mrf.mxu0
    %v7916 = vadd.f32 %v7903, %v7915
    %v7917 = vpop.f32.mrf.mxu0
    %7918 = vdwg.mxu0
    %7919 = vmatpush.bf16.msra.mxu0 %v7758
    %7920 = vmatpush.bf16.msra.mxu0 %v7755
    %7921 = vmatpush.bf16.msra.mxu0 %v7752
    %7922 = vmatpush.bf16.msra.mxu0 %v7749
    %7923 = vmatpush.bf16.msra.mxu0 %v7746
    %7924 = vmatpush.bf16.msra.mxu0 %v7743
    %7925 = vmatpush.bf16.msra.mxu0 %v7740
    %7926 = vmatpush.bf16.msra.mxu0 %v7737
    %7927 = vmatmul.bf16.gmra.mxu0 %v7393
    %v7928 = vpop.f32.mrf.mxu0
    %v7929 = vadd.f32 0.0, %v7928
    %v7930 = vpop.f32.mrf.mxu0
    %7931 = vdwg.mxu0
    %7932 = vmatpush.bf16.msra.mxu0 %v7782
    %7933 = vmatpush.bf16.msra.mxu0 %v7779
    %7934 = vmatpush.bf16.msra.mxu0 %v7776
    %7935 = vmatpush.bf16.msra.mxu0 %v7773
    %7936 = vmatpush.bf16.msra.mxu0 %v7770
    %7937 = vmatpush.bf16.msra.mxu0 %v7767
    %7938 = vmatpush.bf16.msra.mxu0 %v7764
    %7939 = vmatpush.bf16.msra.mxu0 %v7761
    %7940 = vmatmul.bf16.gmra.mxu0 %v7394
    %v7941 = vpop.f32.mrf.mxu0
    %v7942 = vadd.f32 %v7929, %v7941
    %v7943 = vpop.f32.mrf.mxu0
    %7944 = vdwg.mxu0
    %7945 = vmatpush.bf16.msra.mxu0 %v7806
    %7946 = vmatpush.bf16.msra.mxu0 %v7803
    %7947 = vmatpush.bf16.msra.mxu0 %v7800
    %7948 = vmatpush.bf16.msra.mxu0 %v7797
    %7949 = vmatpush.bf16.msra.mxu0 %v7794
    %7950 = vmatpush.bf16.msra.mxu0 %v7791
    %7951 = vmatpush.bf16.msra.mxu0 %v7788
    %7952 = vmatpush.bf16.msra.mxu0 %v7785
    %7953 = vmatmul.bf16.gmra.mxu0 %v7395
    %v7954 = vpop.f32.mrf.mxu0
    %v7955 = vadd.f32 %v7942, %v7954
    %v7956 = vpop.f32.mrf.mxu0
    %7957 = vdwg.mxu0
    %7958 = vmatpush.bf16.msra.mxu0 %v7759
    %7959 = vmatpush.bf16.msra.mxu0 %v7756
    %7960 = vmatpush.bf16.msra.mxu0 %v7753
    %7961 = vmatpush.bf16.msra.mxu0 %v7750
    %7962 = vmatpush.bf16.msra.mxu0 %v7747
    %7963 = vmatpush.bf16.msra.mxu0 %v7744
    %7964 = vmatpush.bf16.msra.mxu0 %v7741
    %7965 = vmatpush.bf16.msra.mxu0 %v7738
    %7966 = vmatmul.bf16.gmra.mxu0 %v7393
    %v7967 = vpop.f32.mrf.mxu0
    %v7968 = vadd.f32 0.0, %v7967
    %v7969 = vpop.f32.mrf.mxu0
    %7970 = vdwg.mxu0
    %7971 = vmatpush.bf16.msra.mxu0 %v7783
    %7972 = vmatpush.bf16.msra.mxu0 %v7780
    %7973 = vmatpush.bf16.msra.mxu0 %v7777
    %7974 = vmatpush.bf16.msra.mxu0 %v7774
    %7975 = vmatpush.bf16.msra.mxu0 %v7771
    %7976 = vmatpush.bf16.msra.mxu0 %v7768
    %7977 = vmatpush.bf16.msra.mxu0 %v7765
    %7978 = vmatpush.bf16.msra.mxu0 %v7762
    %7979 = vmatmul.bf16.gmra.mxu0 %v7394
    %v7980 = vpop.f32.mrf.mxu0
    %v7981 = vadd.f32 %v7968, %v7980
    %v7982 = vpop.f32.mrf.mxu0
    %7983 = vdwg.mxu0
    %7984 = vmatpush.bf16.msra.mxu0 %v7807
    %7985 = vmatpush.bf16.msra.mxu0 %v7804
    %7986 = vmatpush.bf16.msra.mxu0 %v7801
    %7987 = vmatpush.bf16.msra.mxu0 %v7798
    %7988 = vmatpush.bf16.msra.mxu0 %v7795
    %7989 = vmatpush.bf16.msra.mxu0 %v7792
    %7990 = vmatpush.bf16.msra.mxu0 %v7789
    %7991 = vmatpush.bf16.msra.mxu0 %v7786
    %7992 = vmatmul.bf16.gmra.mxu0 %v7395
    %v7993 = vpop.f32.mrf.mxu0
    %v7994 = vadd.f32 %v7981, %v7993
    %v7995 = vpop.f32.mrf.mxu0
    %7996 = vdwg.mxu0
    %v7997 = vadd.f32 %v7396, %v7916
    %v7998 = vadd.f32 %v7397, %v7955
    %v7999 = vadd.f32 %v7398, %v7994
    %8000 = vst [vmem:[#allocation3] sm:$0xff] %v7997
    %8001 = vst [vmem:[#allocation3 + $0x8] sm:$0xff] %v7998
    %8002 = vst [vmem:[#allocation3 + $0x10] sm:$0xff] %v7999
    %v8003 = vld [vmem:[#allocation2 + $0xa8] sm:$0xff]
    %v8004 = vld [vmem:[#allocation2 + $0xb0] sm:$0xff]
    %v8005 = vld [vmem:[#allocation2 + $0xb8] sm:$0xff]
    %8006 = vmatpush.bf16.msra.mxu0 %v1113
    %8007 = vmatpush.bf16.msra.mxu0 %v1110
    %8008 = vmatpush.bf16.msra.mxu0 %v1107
    %8009 = vmatpush.bf16.msra.mxu0 %v1104
    %8010 = vmatpush.bf16.msra.mxu0 %v1101
    %8011 = vmatpush.bf16.msra.mxu0 %v1098
    %8012 = vmatpush.bf16.msra.mxu0 %v1095
    %8013 = vmatpush.bf16.msra.mxu0 %v1092
    %8014 = vmatmul.bf16.gmra.mxu0 %v7150
    %v8015 = vpop.f32.mrf.mxu0
    %v8016 = vadd.f32 0.0, %v8015
    %v8017 = vpop.f32.mrf.mxu0
    %8018 = vdwg.mxu0
    %8019 = vmatpush.bf16.msra.mxu0 %v1137
    %8020 = vmatpush.bf16.msra.mxu0 %v1134
    %8021 = vmatpush.bf16.msra.mxu0 %v1131
    %8022 = vmatpush.bf16.msra.mxu0 %v1128
    %8023 = vmatpush.bf16.msra.mxu0 %v1125
    %8024 = vmatpush.bf16.msra.mxu0 %v1122
    %8025 = vmatpush.bf16.msra.mxu0 %v1119
    %8026 = vmatpush.bf16.msra.mxu0 %v1116
    %8027 = vmatmul.bf16.gmra.mxu0 %v7151
    %v8028 = vpop.f32.mrf.mxu0
    %v8029 = vadd.f32 %v8016, %v8028
    %v8030 = vpop.f32.mrf.mxu0
    %8031 = vdwg.mxu0
    %8032 = vmatpush.bf16.msra.mxu0 %v1161
    %8033 = vmatpush.bf16.msra.mxu0 %v1158
    %8034 = vmatpush.bf16.msra.mxu0 %v1155
    %8035 = vmatpush.bf16.msra.mxu0 %v1152
    %8036 = vmatpush.bf16.msra.mxu0 %v1149
    %8037 = vmatpush.bf16.msra.mxu0 %v1146
    %8038 = vmatpush.bf16.msra.mxu0 %v1143
    %8039 = vmatpush.bf16.msra.mxu0 %v1140
    %8040 = vmatmul.bf16.gmra.mxu0 %v7152
    %v8041 = vpop.f32.mrf.mxu0
    %v8042 = vadd.f32 %v8029, %v8041
    %v8043 = vpop.f32.mrf.mxu0
    %8044 = vdwg.mxu0
    %8045 = vmatpush.bf16.msra.mxu0 %v1114
    %8046 = vmatpush.bf16.msra.mxu0 %v1111
    %8047 = vmatpush.bf16.msra.mxu0 %v1108
    %8048 = vmatpush.bf16.msra.mxu0 %v1105
    %8049 = vmatpush.bf16.msra.mxu0 %v1102
    %8050 = vmatpush.bf16.msra.mxu0 %v1099
    %8051 = vmatpush.bf16.msra.mxu0 %v1096
    %8052 = vmatpush.bf16.msra.mxu0 %v1093
    %8053 = vmatmul.bf16.gmra.mxu0 %v7150
    %v8054 = vpop.f32.mrf.mxu0
    %v8055 = vadd.f32 0.0, %v8054
    %v8056 = vpop.f32.mrf.mxu0
    %8057 = vdwg.mxu0
    %8058 = vmatpush.bf16.msra.mxu0 %v1138
    %8059 = vmatpush.bf16.msra.mxu0 %v1135
    %8060 = vmatpush.bf16.msra.mxu0 %v1132
    %8061 = vmatpush.bf16.msra.mxu0 %v1129
    %8062 = vmatpush.bf16.msra.mxu0 %v1126
    %8063 = vmatpush.bf16.msra.mxu0 %v1123
    %8064 = vmatpush.bf16.msra.mxu0 %v1120
    %8065 = vmatpush.bf16.msra.mxu0 %v1117
    %8066 = vmatmul.bf16.gmra.mxu0 %v7151
    %v8067 = vpop.f32.mrf.mxu0
    %v8068 = vadd.f32 %v8055, %v8067
    %v8069 = vpop.f32.mrf.mxu0
    %8070 = vdwg.mxu0
    %8071 = vmatpush.bf16.msra.mxu0 %v1162
    %8072 = vmatpush.bf16.msra.mxu0 %v1159
    %8073 = vmatpush.bf16.msra.mxu0 %v1156
    %8074 = vmatpush.bf16.msra.mxu0 %v1153
    %8075 = vmatpush.bf16.msra.mxu0 %v1150
    %8076 = vmatpush.bf16.msra.mxu0 %v1147
    %8077 = vmatpush.bf16.msra.mxu0 %v1144
    %8078 = vmatpush.bf16.msra.mxu0 %v1141
    %8079 = vmatmul.bf16.gmra.mxu0 %v7152
    %v8080 = vpop.f32.mrf.mxu0
    %v8081 = vadd.f32 %v8068, %v8080
    %v8082 = vpop.f32.mrf.mxu0
    %8083 = vdwg.mxu0
    %8084 = vmatpush.bf16.msra.mxu0 %v1115
    %8085 = vmatpush.bf16.msra.mxu0 %v1112
    %8086 = vmatpush.bf16.msra.mxu0 %v1109
    %8087 = vmatpush.bf16.msra.mxu0 %v1106
    %8088 = vmatpush.bf16.msra.mxu0 %v1103
    %8089 = vmatpush.bf16.msra.mxu0 %v1100
    %8090 = vmatpush.bf16.msra.mxu0 %v1097
    %8091 = vmatpush.bf16.msra.mxu0 %v1094
    %8092 = vmatmul.bf16.gmra.mxu0 %v7150
    %v8093 = vpop.f32.mrf.mxu0
    %v8094 = vadd.f32 0.0, %v8093
    %v8095 = vpop.f32.mrf.mxu0
    %8096 = vdwg.mxu0
    %8097 = vmatpush.bf16.msra.mxu0 %v1139
    %8098 = vmatpush.bf16.msra.mxu0 %v1136
    %8099 = vmatpush.bf16.msra.mxu0 %v1133
    %8100 = vmatpush.bf16.msra.mxu0 %v1130
    %8101 = vmatpush.bf16.msra.mxu0 %v1127
    %8102 = vmatpush.bf16.msra.mxu0 %v1124
    %8103 = vmatpush.bf16.msra.mxu0 %v1121
    %8104 = vmatpush.bf16.msra.mxu0 %v1118
    %8105 = vmatmul.bf16.gmra.mxu0 %v7151
    %v8106 = vpop.f32.mrf.mxu0
    %v8107 = vadd.f32 %v8094, %v8106
    %v8108 = vpop.f32.mrf.mxu0
    %8109 = vdwg.mxu0
    %8110 = vmatpush.bf16.msra.mxu0 %v1163
    %8111 = vmatpush.bf16.msra.mxu0 %v1160
    %8112 = vmatpush.bf16.msra.mxu0 %v1157
    %8113 = vmatpush.bf16.msra.mxu0 %v1154
    %8114 = vmatpush.bf16.msra.mxu0 %v1151
    %8115 = vmatpush.bf16.msra.mxu0 %v1148
    %8116 = vmatpush.bf16.msra.mxu0 %v1145
    %8117 = vmatpush.bf16.msra.mxu0 %v1142
    %8118 = vmatmul.bf16.gmra.mxu0 %v7152
    %v8119 = vpop.f32.mrf.mxu0
    %v8120 = vadd.f32 %v8107, %v8119
    %v8121 = vpop.f32.mrf.mxu0
    %8122 = vdwg.mxu0
    %v8123 = vadd.f32 %v8003, %v8042
    %v8124 = vadd.f32 %v8004, %v8081
    %v8125 = vadd.f32 %v8005, %v8120
    %v8126 = vtanh.pop %v8123
    %v8127 = vtanh.pop %v8124
    %v8128 = vtanh.pop %v8125
    %v8129 = vpack.c.bf16 %v8126, %v8126
    %v8130 = vpack.c.bf16 %v8127, %v8127
    %v8131 = vpack.c.bf16 %v8128, %v8128
    %8132 = vmatpush.bf16.msra.mxu0 %v1752
    %8133 = vmatpush.bf16.msra.mxu0 %v1749
    %8134 = vmatpush.bf16.msra.mxu0 %v1746
    %8135 = vmatpush.bf16.msra.mxu0 %v1743
    %8136 = vmatpush.bf16.msra.mxu0 %v1740
    %8137 = vmatpush.bf16.msra.mxu0 %v1737
    %8138 = vmatpush.bf16.msra.mxu0 %v1734
    %8139 = vmatpush.bf16.msra.mxu0 %v1731
    %8140 = vmatmul.bf16.gmra.mxu0 %v7393
    %v8141 = vpop.f32.mrf.mxu0
    %v8142 = vadd.f32 0.0, %v8141
    %v8143 = vpop.f32.mrf.mxu0
    %8144 = vdwg.mxu0
    %8145 = vmatpush.bf16.msra.mxu0 %v1776
    %8146 = vmatpush.bf16.msra.mxu0 %v1773
    %8147 = vmatpush.bf16.msra.mxu0 %v1770
    %8148 = vmatpush.bf16.msra.mxu0 %v1767
    %8149 = vmatpush.bf16.msra.mxu0 %v1764
    %8150 = vmatpush.bf16.msra.mxu0 %v1761
    %8151 = vmatpush.bf16.msra.mxu0 %v1758
    %8152 = vmatpush.bf16.msra.mxu0 %v1755
    %8153 = vmatmul.bf16.gmra.mxu0 %v7394
    %v8154 = vpop.f32.mrf.mxu0
    %v8155 = vadd.f32 %v8142, %v8154
    %v8156 = vpop.f32.mrf.mxu0
    %8157 = vdwg.mxu0
    %8158 = vmatpush.bf16.msra.mxu0 %v1800
    %8159 = vmatpush.bf16.msra.mxu0 %v1797
    %8160 = vmatpush.bf16.msra.mxu0 %v1794
    %8161 = vmatpush.bf16.msra.mxu0 %v1791
    %8162 = vmatpush.bf16.msra.mxu0 %v1788
    %8163 = vmatpush.bf16.msra.mxu0 %v1785
    %8164 = vmatpush.bf16.msra.mxu0 %v1782
    %8165 = vmatpush.bf16.msra.mxu0 %v1779
    %8166 = vmatmul.bf16.gmra.mxu0 %v7395
    %v8167 = vpop.f32.mrf.mxu0
    %v8168 = vadd.f32 %v8155, %v8167
    %v8169 = vpop.f32.mrf.mxu0
    %8170 = vdwg.mxu0
    %8171 = vmatpush.bf16.msra.mxu0 %v1753
    %8172 = vmatpush.bf16.msra.mxu0 %v1750
    %8173 = vmatpush.bf16.msra.mxu0 %v1747
    %8174 = vmatpush.bf16.msra.mxu0 %v1744
    %8175 = vmatpush.bf16.msra.mxu0 %v1741
    %8176 = vmatpush.bf16.msra.mxu0 %v1738
    %8177 = vmatpush.bf16.msra.mxu0 %v1735
    %8178 = vmatpush.bf16.msra.mxu0 %v1732
    %8179 = vmatmul.bf16.gmra.mxu0 %v7393
    %v8180 = vpop.f32.mrf.mxu0
    %v8181 = vadd.f32 0.0, %v8180
    %v8182 = vpop.f32.mrf.mxu0
    %8183 = vdwg.mxu0
    %8184 = vmatpush.bf16.msra.mxu0 %v1777
    %8185 = vmatpush.bf16.msra.mxu0 %v1774
    %8186 = vmatpush.bf16.msra.mxu0 %v1771
    %8187 = vmatpush.bf16.msra.mxu0 %v1768
    %8188 = vmatpush.bf16.msra.mxu0 %v1765
    %8189 = vmatpush.bf16.msra.mxu0 %v1762
    %8190 = vmatpush.bf16.msra.mxu0 %v1759
    %8191 = vmatpush.bf16.msra.mxu0 %v1756
    %8192 = vmatmul.bf16.gmra.mxu0 %v7394
    %v8193 = vpop.f32.mrf.mxu0
    %v8194 = vadd.f32 %v8181, %v8193
    %v8195 = vpop.f32.mrf.mxu0
    %8196 = vdwg.mxu0
    %8197 = vmatpush.bf16.msra.mxu0 %v1801
    %8198 = vmatpush.bf16.msra.mxu0 %v1798
    %8199 = vmatpush.bf16.msra.mxu0 %v1795
    %8200 = vmatpush.bf16.msra.mxu0 %v1792
    %8201 = vmatpush.bf16.msra.mxu0 %v1789
    %8202 = vmatpush.bf16.msra.mxu0 %v1786
    %8203 = vmatpush.bf16.msra.mxu0 %v1783
    %8204 = vmatpush.bf16.msra.mxu0 %v1780
    %8205 = vmatmul.bf16.gmra.mxu0 %v7395
    %v8206 = vpop.f32.mrf.mxu0
    %v8207 = vadd.f32 %v8194, %v8206
    %v8208 = vpop.f32.mrf.mxu0
    %8209 = vdwg.mxu0
    %8210 = vmatpush.bf16.msra.mxu0 %v1754
    %8211 = vmatpush.bf16.msra.mxu0 %v1751
    %8212 = vmatpush.bf16.msra.mxu0 %v1748
    %8213 = vmatpush.bf16.msra.mxu0 %v1745
    %8214 = vmatpush.bf16.msra.mxu0 %v1742
    %8215 = vmatpush.bf16.msra.mxu0 %v1739
    %8216 = vmatpush.bf16.msra.mxu0 %v1736
    %8217 = vmatpush.bf16.msra.mxu0 %v1733
    %8218 = vmatmul.bf16.gmra.mxu0 %v7393
    %v8219 = vpop.f32.mrf.mxu0
    %v8220 = vadd.f32 0.0, %v8219
    %v8221 = vpop.f32.mrf.mxu0
    %8222 = vdwg.mxu0
    %8223 = vmatpush.bf16.msra.mxu0 %v1778
    %8224 = vmatpush.bf16.msra.mxu0 %v1775
    %8225 = vmatpush.bf16.msra.mxu0 %v1772
    %8226 = vmatpush.bf16.msra.mxu0 %v1769
    %8227 = vmatpush.bf16.msra.mxu0 %v1766
    %8228 = vmatpush.bf16.msra.mxu0 %v1763
    %8229 = vmatpush.bf16.msra.mxu0 %v1760
    %8230 = vmatpush.bf16.msra.mxu0 %v1757
    %8231 = vmatmul.bf16.gmra.mxu0 %v7394
    %v8232 = vpop.f32.mrf.mxu0
    %v8233 = vadd.f32 %v8220, %v8232
    %v8234 = vpop.f32.mrf.mxu0
    %8235 = vdwg.mxu0
    %8236 = vmatpush.bf16.msra.mxu0 %v1802
    %8237 = vmatpush.bf16.msra.mxu0 %v1799
    %8238 = vmatpush.bf16.msra.mxu0 %v1796
    %8239 = vmatpush.bf16.msra.mxu0 %v1793
    %8240 = vmatpush.bf16.msra.mxu0 %v1790
    %8241 = vmatpush.bf16.msra.mxu0 %v1787
    %8242 = vmatpush.bf16.msra.mxu0 %v1784
    %8243 = vmatpush.bf16.msra.mxu0 %v1781
    %8244 = vmatmul.bf16.gmra.mxu0 %v7395
    %v8245 = vpop.f32.mrf.mxu0
    %v8246 = vadd.f32 %v8233, %v8245
    %v8247 = vpop.f32.mrf.mxu0
    %8248 = vdwg.mxu0
    %8249 = vmatpush.bf16.msra.mxu0 %v2253
    %8250 = vmatpush.bf16.msra.mxu0 %v2250
    %8251 = vmatpush.bf16.msra.mxu0 %v2247
    %8252 = vmatpush.bf16.msra.mxu0 %v2244
    %8253 = vmatpush.bf16.msra.mxu0 %v2241
    %8254 = vmatpush.bf16.msra.mxu0 %v2238
    %8255 = vmatpush.bf16.msra.mxu0 %v2235
    %8256 = vmatpush.bf16.msra.mxu0 %v2232
    %8257 = vmatmul.bf16.gmra.mxu0 %v7150
    %v8258 = vpop.f32.mrf.mxu0
    %v8259 = vadd.f32 %v8168, %v8258
    %v8260 = vpop.f32.mrf.mxu0
    %8261 = vdwg.mxu0
    %8262 = vmatpush.bf16.msra.mxu0 %v2277
    %8263 = vmatpush.bf16.msra.mxu0 %v2274
    %8264 = vmatpush.bf16.msra.mxu0 %v2271
    %8265 = vmatpush.bf16.msra.mxu0 %v2268
    %8266 = vmatpush.bf16.msra.mxu0 %v2265
    %8267 = vmatpush.bf16.msra.mxu0 %v2262
    %8268 = vmatpush.bf16.msra.mxu0 %v2259
    %8269 = vmatpush.bf16.msra.mxu0 %v2256
    %8270 = vmatmul.bf16.gmra.mxu0 %v7151
    %v8271 = vpop.f32.mrf.mxu0
    %v8272 = vadd.f32 %v8259, %v8271
    %v8273 = vpop.f32.mrf.mxu0
    %8274 = vdwg.mxu0
    %8275 = vmatpush.bf16.msra.mxu0 %v2301
    %8276 = vmatpush.bf16.msra.mxu0 %v2298
    %8277 = vmatpush.bf16.msra.mxu0 %v2295
    %8278 = vmatpush.bf16.msra.mxu0 %v2292
    %8279 = vmatpush.bf16.msra.mxu0 %v2289
    %8280 = vmatpush.bf16.msra.mxu0 %v2286
    %8281 = vmatpush.bf16.msra.mxu0 %v2283
    %8282 = vmatpush.bf16.msra.mxu0 %v2280
    %8283 = vmatmul.bf16.gmra.mxu0 %v7152
    %v8284 = vpop.f32.mrf.mxu0
    %v8285 = vadd.f32 %v8272, %v8284
    %v8286 = vpop.f32.mrf.mxu0
    %8287 = vdwg.mxu0
    %8288 = vmatpush.bf16.msra.mxu0 %v2254
    %8289 = vmatpush.bf16.msra.mxu0 %v2251
    %8290 = vmatpush.bf16.msra.mxu0 %v2248
    %8291 = vmatpush.bf16.msra.mxu0 %v2245
    %8292 = vmatpush.bf16.msra.mxu0 %v2242
    %8293 = vmatpush.bf16.msra.mxu0 %v2239
    %8294 = vmatpush.bf16.msra.mxu0 %v2236
    %8295 = vmatpush.bf16.msra.mxu0 %v2233
    %8296 = vmatmul.bf16.gmra.mxu0 %v7150
    %v8297 = vpop.f32.mrf.mxu0
    %v8298 = vadd.f32 %v8207, %v8297
    %v8299 = vpop.f32.mrf.mxu0
    %8300 = vdwg.mxu0
    %8301 = vmatpush.bf16.msra.mxu0 %v2278
    %8302 = vmatpush.bf16.msra.mxu0 %v2275
    %8303 = vmatpush.bf16.msra.mxu0 %v2272
    %8304 = vmatpush.bf16.msra.mxu0 %v2269
    %8305 = vmatpush.bf16.msra.mxu0 %v2266
    %8306 = vmatpush.bf16.msra.mxu0 %v2263
    %8307 = vmatpush.bf16.msra.mxu0 %v2260
    %8308 = vmatpush.bf16.msra.mxu0 %v2257
    %8309 = vmatmul.bf16.gmra.mxu0 %v7151
    %v8310 = vpop.f32.mrf.mxu0
    %v8311 = vadd.f32 %v8298, %v8310
    %v8312 = vpop.f32.mrf.mxu0
    %8313 = vdwg.mxu0
    %8314 = vmatpush.bf16.msra.mxu0 %v2302
    %8315 = vmatpush.bf16.msra.mxu0 %v2299
    %8316 = vmatpush.bf16.msra.mxu0 %v2296
    %8317 = vmatpush.bf16.msra.mxu0 %v2293
    %8318 = vmatpush.bf16.msra.mxu0 %v2290
    %8319 = vmatpush.bf16.msra.mxu0 %v2287
    %8320 = vmatpush.bf16.msra.mxu0 %v2284
    %8321 = vmatpush.bf16.msra.mxu0 %v2281
    %8322 = vmatmul.bf16.gmra.mxu0 %v7152
    %v8323 = vpop.f32.mrf.mxu0
    %v8324 = vadd.f32 %v8311, %v8323
    %v8325 = vpop.f32.mrf.mxu0
    %8326 = vdwg.mxu0
    %8327 = vmatpush.bf16.msra.mxu0 %v2255
    %8328 = vmatpush.bf16.msra.mxu0 %v2252
    %8329 = vmatpush.bf16.msra.mxu0 %v2249
    %8330 = vmatpush.bf16.msra.mxu0 %v2246
    %8331 = vmatpush.bf16.msra.mxu0 %v2243
    %8332 = vmatpush.bf16.msra.mxu0 %v2240
    %8333 = vmatpush.bf16.msra.mxu0 %v2237
    %8334 = vmatpush.bf16.msra.mxu0 %v2234
    %8335 = vmatmul.bf16.gmra.mxu0 %v7150
    %v8336 = vpop.f32.mrf.mxu0
    %v8337 = vadd.f32 %v8246, %v8336
    %v8338 = vpop.f32.mrf.mxu0
    %8339 = vdwg.mxu0
    %8340 = vmatpush.bf16.msra.mxu0 %v2279
    %8341 = vmatpush.bf16.msra.mxu0 %v2276
    %8342 = vmatpush.bf16.msra.mxu0 %v2273
    %8343 = vmatpush.bf16.msra.mxu0 %v2270
    %8344 = vmatpush.bf16.msra.mxu0 %v2267
    %8345 = vmatpush.bf16.msra.mxu0 %v2264
    %8346 = vmatpush.bf16.msra.mxu0 %v2261
    %8347 = vmatpush.bf16.msra.mxu0 %v2258
    %8348 = vmatmul.bf16.gmra.mxu0 %v7151
    %v8349 = vpop.f32.mrf.mxu0
    %v8350 = vadd.f32 %v8337, %v8349
    %v8351 = vpop.f32.mrf.mxu0
    %8352 = vdwg.mxu0
    %8353 = vmatpush.bf16.msra.mxu0 %v2303
    %8354 = vmatpush.bf16.msra.mxu0 %v2300
    %8355 = vmatpush.bf16.msra.mxu0 %v2297
    %8356 = vmatpush.bf16.msra.mxu0 %v2294
    %8357 = vmatpush.bf16.msra.mxu0 %v2291
    %8358 = vmatpush.bf16.msra.mxu0 %v2288
    %8359 = vmatpush.bf16.msra.mxu0 %v2285
    %8360 = vmatpush.bf16.msra.mxu0 %v2282
    %8361 = vmatmul.bf16.gmra.mxu0 %v7152
    %v8362 = vpop.f32.mrf.mxu0
    %v8363 = vadd.f32 %v8350, %v8362
    %v8364 = vpop.f32.mrf.mxu0
    %8365 = vdwg.mxu0
    %v8366 = vadd.f32 %v8285, %v832
    %v8367 = vadd.f32 %v8324, %v833
    %v8368 = vadd.f32 %v8363, %v834
    %v8369 = vtanh.pop %v8366
    %v8370 = vtanh.pop %v8367
    %v8371 = vtanh.pop %v8368
    %v8372 = vpack.c.bf16 %v8369, %v8369
    %v8373 = vpack.c.bf16 %v8370, %v8370
    %v8374 = vpack.c.bf16 %v8371, %v8371
    %v8375 = vld [vmem:[#allocation3] sm:$0xff]
    %v8376 = vld [vmem:[#allocation3 + $0x8] sm:$0xff]
    %v8377 = vld [vmem:[#allocation3 + $0x10] sm:$0xff]
    %s8378 = scalar_lea.vmem [#allocation14], 3456
    %v8379 = vld [vmem:[%s8378] sm:$0xff]
    %v8380 = vld [vmem:[%s8378 + $0x8] sm:$0xf]
    %v8381 = vld [vmem:[%s8378 + $0xc] sm:$0xff]
    %v8382 = vld [vmem:[%s8378 + $0x14] sm:$0xf]
    %v8383 = vld [vmem:[%s8378 + $0x18] sm:$0xff]
    %v8384 = vld [vmem:[%s8378 + $0x20] sm:$0xf]
    %v8385 = vld [vmem:[%s8378 + $0x24] sm:$0xff]
    %v8386 = vld [vmem:[%s8378 + $0x2c] sm:$0xf]
    %v8387 = vld [vmem:[%s8378 + $0x30] sm:$0xff]
    %v8388 = vld [vmem:[%s8378 + $0x38] sm:$0xf]
    %v8389 = vld [vmem:[%s8378 + $0x3c] sm:$0xff]
    %v8390 = vld [vmem:[%s8378 + $0x44] sm:$0xf]
    %v8391 = vld [vmem:[%s8378 + $0x48] sm:$0xff]
    %v8392 = vld [vmem:[%s8378 + $0x50] sm:$0xf]
    %v8393 = vld [vmem:[%s8378 + $0x54] sm:$0xff]
    %v8394 = vld [vmem:[%s8378 + $0x5c] sm:$0xf]
    %v8395 = vld [vmem:[%s8378 + $0x60] sm:$0xff]
    %v8396 = vld [vmem:[%s8378 + $0x68] sm:$0xf]
    %v8397 = vld [vmem:[%s8378 + $0x6c] sm:$0xff]
    %v8398 = vld [vmem:[%s8378 + $0x74] sm:$0xf]
    %v8399 = vld [vmem:[%s8378 + $0x78] sm:$0xff]
    %v8400 = vld [vmem:[%s8378 + $0x80] sm:$0xf]
    %v8401 = vld [vmem:[%s8378 + $0x84] sm:$0xff]
    %v8402 = vld [vmem:[%s8378 + $0x8c] sm:$0xf]
    %v8403 = vld [vmem:[%s8378 + $0x90] sm:$0xff]
    %v8404 = vld [vmem:[%s8378 + $0x98] sm:$0xf]
    %v8405 = vld [vmem:[%s8378 + $0x9c] sm:$0xff]
    %v8406 = vld [vmem:[%s8378 + $0xa4] sm:$0xf]
    %v8407 = vld [vmem:[%s8378 + $0xa8] sm:$0xff]
    %v8408 = vld [vmem:[%s8378 + $0xb0] sm:$0xf]
    %v8409 = vld [vmem:[%s8378 + $0xb4] sm:$0xff]
    %v8410 = vld [vmem:[%s8378 + $0xbc] sm:$0xf]
    %v8411 = vld [vmem:[%s8378 + $0xc0] sm:$0xff]
    %v8412 = vld [vmem:[%s8378 + $0xc8] sm:$0xf]
    %v8413 = vld [vmem:[%s8378 + $0xcc] sm:$0xff]
    %v8414 = vld [vmem:[%s8378 + $0xd4] sm:$0xf]
    %v8415 = vld [vmem:[%s8378 + $0xd8] sm:$0xff]
    %v8416 = vld [vmem:[%s8378 + $0xe0] sm:$0xf]
    %v8417 = vld [vmem:[%s8378 + $0xe4] sm:$0xff]
    %v8418 = vld [vmem:[%s8378 + $0xec] sm:$0xf]
    %v8419 = vld [vmem:[%s8378 + $0xf0] sm:$0xff]
    %v8420 = vld [vmem:[%s8378 + $0xf8] sm:$0xf]
    %v8421 = vld [vmem:[%s8378 + $0xfc] sm:$0xff]
    %v8422 = vld [vmem:[%s8378 + $0x104] sm:$0xf]
    %v8423 = vld [vmem:[%s8378 + $0x108] sm:$0xff]
    %v8424 = vld [vmem:[%s8378 + $0x110] sm:$0xf]
    %v8425 = vld [vmem:[%s8378 + $0x114] sm:$0xff]
    %v8426 = vld [vmem:[%s8378 + $0x11c] sm:$0xf]
    %v8427 = vld [vmem:[%s8378 + $0x120] sm:$0xff]
    %v8428 = vld [vmem:[%s8378 + $0x128] sm:$0xf]
    %v8429 = vld [vmem:[%s8378 + $0x12c] sm:$0xff]
    %v8430 = vld [vmem:[%s8378 + $0x134] sm:$0xf]
    %v8431 = vld [vmem:[%s8378 + $0x138] sm:$0xff]
    %v8432 = vld [vmem:[%s8378 + $0x140] sm:$0xf]
    %v8433 = vld [vmem:[%s8378 + $0x144] sm:$0xff]
    %v8434 = vld [vmem:[%s8378 + $0x14c] sm:$0xf]
    %v8435 = vld [vmem:[%s8378 + $0x150] sm:$0xff]
    %v8436 = vld [vmem:[%s8378 + $0x158] sm:$0xf]
    %v8437 = vld [vmem:[%s8378 + $0x15c] sm:$0xff]
    %v8438 = vld [vmem:[%s8378 + $0x164] sm:$0xf]
    %v8439 = vld [vmem:[%s8378 + $0x168] sm:$0xff]
    %v8440 = vld [vmem:[%s8378 + $0x170] sm:$0xf]
    %v8441 = vld [vmem:[%s8378 + $0x174] sm:$0xff]
    %v8442 = vld [vmem:[%s8378 + $0x17c] sm:$0xf]
    %v8443 = vld [vmem:[%s8378 + $0x180] sm:$0xff]
    %v8444 = vld [vmem:[%s8378 + $0x188] sm:$0xf]
    %v8445 = vld [vmem:[%s8378 + $0x18c] sm:$0xff]
    %v8446 = vld [vmem:[%s8378 + $0x194] sm:$0xf]
    %v8447 = vld [vmem:[%s8378 + $0x198] sm:$0xff]
    %v8448 = vld [vmem:[%s8378 + $0x1a0] sm:$0xf]
    %v8449 = vld [vmem:[%s8378 + $0x1a4] sm:$0xff]
    %v8450 = vld [vmem:[%s8378 + $0x1ac] sm:$0xf]
    %v8451 = vld [vmem:[%s8378 + $0x1b0] sm:$0xff]
    %v8452 = vld [vmem:[%s8378 + $0x1b8] sm:$0xf]
    %v8453 = vld [vmem:[%s8378 + $0x1bc] sm:$0xff]
    %v8454 = vld [vmem:[%s8378 + $0x1c4] sm:$0xf]
    %v8455 = vld [vmem:[%s8378 + $0x1c8] sm:$0xff]
    %v8456 = vld [vmem:[%s8378 + $0x1d0] sm:$0xf]
    %v8457 = vld [vmem:[%s8378 + $0x1d4] sm:$0xff]
    %v8458 = vld [vmem:[%s8378 + $0x1dc] sm:$0xf]
    %v8459 = vld [vmem:[%s8378 + $0x1e0] sm:$0xff]
    %v8460 = vld [vmem:[%s8378 + $0x1e8] sm:$0xf]
    %v8461 = vld [vmem:[%s8378 + $0x1ec] sm:$0xff]
    %v8462 = vld [vmem:[%s8378 + $0x1f4] sm:$0xf]
    %v8463 = vld [vmem:[%s8378 + $0x1f8] sm:$0xff]
    %v8464 = vld [vmem:[%s8378 + $0x200] sm:$0xf]
    %v8465 = vld [vmem:[%s8378 + $0x204] sm:$0xff]
    %v8466 = vld [vmem:[%s8378 + $0x20c] sm:$0xf]
    %v8467 = vld [vmem:[%s8378 + $0x210] sm:$0xff]
    %v8468 = vld [vmem:[%s8378 + $0x218] sm:$0xf]
    %v8469 = vld [vmem:[%s8378 + $0x21c] sm:$0xff]
    %v8470 = vld [vmem:[%s8378 + $0x224] sm:$0xf]
    %v8471 = vld [vmem:[%s8378 + $0x228] sm:$0xff]
    %v8472 = vld [vmem:[%s8378 + $0x230] sm:$0xf]
    %v8473 = vld [vmem:[%s8378 + $0x234] sm:$0xff]
    %v8474 = vld [vmem:[%s8378 + $0x23c] sm:$0xf]
    %v8571 = vunpack.c.l.b16 %v8379
    %v8572 = vunpack.c.h.b16 %v8379
    %v8573 = vunpack.c.l.b16 %v8380
    %v8574 = vunpack.c.l.b16 %v8381
    %v8575 = vunpack.c.h.b16 %v8381
    %v8576 = vunpack.c.l.b16 %v8382
    %v8577 = vunpack.c.l.b16 %v8383
    %v8578 = vunpack.c.h.b16 %v8383
    %v8579 = vunpack.c.l.b16 %v8384
    %v8580 = vunpack.c.l.b16 %v8385
    %v8581 = vunpack.c.h.b16 %v8385
    %v8582 = vunpack.c.l.b16 %v8386
    %v8583 = vunpack.c.l.b16 %v8387
    %v8584 = vunpack.c.h.b16 %v8387
    %v8585 = vunpack.c.l.b16 %v8388
    %v8586 = vunpack.c.l.b16 %v8389
    %v8587 = vunpack.c.h.b16 %v8389
    %v8588 = vunpack.c.l.b16 %v8390
    %v8589 = vunpack.c.l.b16 %v8391
    %v8590 = vunpack.c.h.b16 %v8391
    %v8591 = vunpack.c.l.b16 %v8392
    %v8592 = vunpack.c.l.b16 %v8393
    %v8593 = vunpack.c.h.b16 %v8393
    %v8594 = vunpack.c.l.b16 %v8394
    %v8595 = vunpack.c.l.b16 %v8395
    %v8596 = vunpack.c.h.b16 %v8395
    %v8597 = vunpack.c.l.b16 %v8396
    %v8598 = vunpack.c.l.b16 %v8397
    %v8599 = vunpack.c.h.b16 %v8397
    %v8600 = vunpack.c.l.b16 %v8398
    %v8601 = vunpack.c.l.b16 %v8399
    %v8602 = vunpack.c.h.b16 %v8399
    %v8603 = vunpack.c.l.b16 %v8400
    %v8604 = vunpack.c.l.b16 %v8401
    %v8605 = vunpack.c.h.b16 %v8401
    %v8606 = vunpack.c.l.b16 %v8402
    %v8607 = vunpack.c.l.b16 %v8403
    %v8608 = vunpack.c.h.b16 %v8403
    %v8609 = vunpack.c.l.b16 %v8404
    %v8610 = vunpack.c.l.b16 %v8405
    %v8611 = vunpack.c.h.b16 %v8405
    %v8612 = vunpack.c.l.b16 %v8406
    %v8613 = vunpack.c.l.b16 %v8407
    %v8614 = vunpack.c.h.b16 %v8407
    %v8615 = vunpack.c.l.b16 %v8408
    %v8616 = vunpack.c.l.b16 %v8409
    %v8617 = vunpack.c.h.b16 %v8409
    %v8618 = vunpack.c.l.b16 %v8410
    %v8619 = vunpack.c.l.b16 %v8411
    %v8620 = vunpack.c.h.b16 %v8411
    %v8621 = vunpack.c.l.b16 %v8412
    %v8622 = vunpack.c.l.b16 %v8413
    %v8623 = vunpack.c.h.b16 %v8413
    %v8624 = vunpack.c.l.b16 %v8414
    %v8625 = vunpack.c.l.b16 %v8415
    %v8626 = vunpack.c.h.b16 %v8415
    %v8627 = vunpack.c.l.b16 %v8416
    %v8628 = vunpack.c.l.b16 %v8417
    %v8629 = vunpack.c.h.b16 %v8417
    %v8630 = vunpack.c.l.b16 %v8418
    %v8631 = vunpack.c.l.b16 %v8419
    %v8632 = vunpack.c.h.b16 %v8419
    %v8633 = vunpack.c.l.b16 %v8420
    %v8634 = vunpack.c.l.b16 %v8421
    %v8635 = vunpack.c.h.b16 %v8421
    %v8636 = vunpack.c.l.b16 %v8422
    %v8637 = vunpack.c.l.b16 %v8423
    %v8638 = vunpack.c.h.b16 %v8423
    %v8639 = vunpack.c.l.b16 %v8424
    %v8640 = vunpack.c.l.b16 %v8425
    %v8641 = vunpack.c.h.b16 %v8425
    %v8642 = vunpack.c.l.b16 %v8426
    %v8643 = vunpack.c.l.b16 %v8427
    %v8644 = vunpack.c.h.b16 %v8427
    %v8645 = vunpack.c.l.b16 %v8428
    %v8646 = vunpack.c.l.b16 %v8429
    %v8647 = vunpack.c.h.b16 %v8429
    %v8648 = vunpack.c.l.b16 %v8430
    %v8649 = vunpack.c.l.b16 %v8431
    %v8650 = vunpack.c.h.b16 %v8431
    %v8651 = vunpack.c.l.b16 %v8432
    %v8652 = vunpack.c.l.b16 %v8433
    %v8653 = vunpack.c.h.b16 %v8433
    %v8654 = vunpack.c.l.b16 %v8434
    %v8655 = vunpack.c.l.b16 %v8435
    %v8656 = vunpack.c.h.b16 %v8435
    %v8657 = vunpack.c.l.b16 %v8436
    %v8658 = vunpack.c.l.b16 %v8437
    %v8659 = vunpack.c.h.b16 %v8437
    %v8660 = vunpack.c.l.b16 %v8438
    %v8661 = vunpack.c.l.b16 %v8439
    %v8662 = vunpack.c.h.b16 %v8439
    %v8663 = vunpack.c.l.b16 %v8440
    %v8664 = vunpack.c.l.b16 %v8441
    %v8665 = vunpack.c.h.b16 %v8441
    %v8666 = vunpack.c.l.b16 %v8442
    %v8667 = vunpack.c.l.b16 %v8443
    %v8668 = vunpack.c.h.b16 %v8443
    %v8669 = vunpack.c.l.b16 %v8444
    %v8670 = vunpack.c.l.b16 %v8445
    %v8671 = vunpack.c.h.b16 %v8445
    %v8672 = vunpack.c.l.b16 %v8446
    %v8673 = vunpack.c.l.b16 %v8447
    %v8674 = vunpack.c.h.b16 %v8447
    %v8675 = vunpack.c.l.b16 %v8448
    %v8676 = vunpack.c.l.b16 %v8449
    %v8677 = vunpack.c.h.b16 %v8449
    %v8678 = vunpack.c.l.b16 %v8450
    %v8679 = vunpack.c.l.b16 %v8451
    %v8680 = vunpack.c.h.b16 %v8451
    %v8681 = vunpack.c.l.b16 %v8452
    %v8682 = vunpack.c.l.b16 %v8453
    %v8683 = vunpack.c.h.b16 %v8453
    %v8684 = vunpack.c.l.b16 %v8454
    %v8685 = vunpack.c.l.b16 %v8455
    %v8686 = vunpack.c.h.b16 %v8455
    %v8687 = vunpack.c.l.b16 %v8456
    %v8688 = vunpack.c.l.b16 %v8457
    %v8689 = vunpack.c.h.b16 %v8457
    %v8690 = vunpack.c.l.b16 %v8458
    %v8691 = vunpack.c.l.b16 %v8459
    %v8692 = vunpack.c.h.b16 %v8459
    %v8693 = vunpack.c.l.b16 %v8460
    %v8694 = vunpack.c.l.b16 %v8461
    %v8695 = vunpack.c.h.b16 %v8461
    %v8696 = vunpack.c.l.b16 %v8462
    %v8697 = vunpack.c.l.b16 %v8463
    %v8698 = vunpack.c.h.b16 %v8463
    %v8699 = vunpack.c.l.b16 %v8464
    %v8700 = vunpack.c.l.b16 %v8465
    %v8701 = vunpack.c.h.b16 %v8465
    %v8702 = vunpack.c.l.b16 %v8466
    %v8703 = vunpack.c.l.b16 %v8467
    %v8704 = vunpack.c.h.b16 %v8467
    %v8705 = vunpack.c.l.b16 %v8468
    %v8706 = vunpack.c.l.b16 %v8469
    %v8707 = vunpack.c.h.b16 %v8469
    %v8708 = vunpack.c.l.b16 %v8470
    %v8709 = vunpack.c.l.b16 %v8471
    %v8710 = vunpack.c.h.b16 %v8471
    %v8711 = vunpack.c.l.b16 %v8472
    %v8712 = vunpack.c.l.b16 %v8473
    %v8713 = vunpack.c.h.b16 %v8473
    %v8714 = vunpack.c.l.b16 %v8474
    %v8715 = vpack.c.b16 %v8574, %v8571
    %v8716 = vpack.c.b16 %v8575, %v8572
    %v8717 = vpack.c.b16 %v8576, %v8573
    %v8718 = vpack.c.b16 %v8580, %v8577
    %v8719 = vpack.c.b16 %v8581, %v8578
    %v8720 = vpack.c.b16 %v8582, %v8579
    %v8721 = vpack.c.b16 %v8586, %v8583
    %v8722 = vpack.c.b16 %v8587, %v8584
    %v8723 = vpack.c.b16 %v8588, %v8585
    %v8724 = vpack.c.b16 %v8592, %v8589
    %v8725 = vpack.c.b16 %v8593, %v8590
    %v8726 = vpack.c.b16 %v8594, %v8591
    %v8727 = vpack.c.b16 %v8598, %v8595
    %v8728 = vpack.c.b16 %v8599, %v8596
    %v8729 = vpack.c.b16 %v8600, %v8597
    %v8730 = vpack.c.b16 %v8604, %v8601
    %v8731 = vpack.c.b16 %v8605, %v8602
    %v8732 = vpack.c.b16 %v8606, %v8603
    %v8733 = vpack.c.b16 %v8610, %v8607
    %v8734 = vpack.c.b16 %v8611, %v8608
    %v8735 = vpack.c.b16 %v8612, %v8609
    %v8736 = vpack.c.b16 %v8616, %v8613
    %v8737 = vpack.c.b16 %v8617, %v8614
    %v8738 = vpack.c.b16 %v8618, %v8615
    %v8739 = vpack.c.b16 %v8622, %v8619
    %v8740 = vpack.c.b16 %v8623, %v8620
    %v8741 = vpack.c.b16 %v8624, %v8621
    %v8742 = vpack.c.b16 %v8628, %v8625
    %v8743 = vpack.c.b16 %v8629, %v8626
    %v8744 = vpack.c.b16 %v8630, %v8627
    %v8745 = vpack.c.b16 %v8634, %v8631
    %v8746 = vpack.c.b16 %v8635, %v8632
    %v8747 = vpack.c.b16 %v8636, %v8633
    %v8748 = vpack.c.b16 %v8640, %v8637
    %v8749 = vpack.c.b16 %v8641, %v8638
    %v8750 = vpack.c.b16 %v8642, %v8639
    %v8751 = vpack.c.b16 %v8646, %v8643
    %v8752 = vpack.c.b16 %v8647, %v8644
    %v8753 = vpack.c.b16 %v8648, %v8645
    %v8754 = vpack.c.b16 %v8652, %v8649
    %v8755 = vpack.c.b16 %v8653, %v8650
    %v8756 = vpack.c.b16 %v8654, %v8651
    %v8757 = vpack.c.b16 %v8658, %v8655
    %v8758 = vpack.c.b16 %v8659, %v8656
    %v8759 = vpack.c.b16 %v8660, %v8657
    %v8760 = vpack.c.b16 %v8664, %v8661
    %v8761 = vpack.c.b16 %v8665, %v8662
    %v8762 = vpack.c.b16 %v8666, %v8663
    %v8763 = vpack.c.b16 %v8670, %v8667
    %v8764 = vpack.c.b16 %v8671, %v8668
    %v8765 = vpack.c.b16 %v8672, %v8669
    %v8766 = vpack.c.b16 %v8676, %v8673
    %v8767 = vpack.c.b16 %v8677, %v8674
    %v8768 = vpack.c.b16 %v8678, %v8675
    %v8769 = vpack.c.b16 %v8682, %v8679
    %v8770 = vpack.c.b16 %v8683, %v8680
    %v8771 = vpack.c.b16 %v8684, %v8681
    %v8772 = vpack.c.b16 %v8688, %v8685
    %v8773 = vpack.c.b16 %v8689, %v8686
    %v8774 = vpack.c.b16 %v8690, %v8687
    %v8775 = vpack.c.b16 %v8694, %v8691
    %v8776 = vpack.c.b16 %v8695, %v8692
    %v8777 = vpack.c.b16 %v8696, %v8693
    %v8778 = vpack.c.b16 %v8700, %v8697
    %v8779 = vpack.c.b16 %v8701, %v8698
    %v8780 = vpack.c.b16 %v8702, %v8699
    %v8781 = vpack.c.b16 %v8706, %v8703
    %v8782 = vpack.c.b16 %v8707, %v8704
    %v8783 = vpack.c.b16 %v8708, %v8705
    %v8784 = vpack.c.b16 %v8712, %v8709
    %v8785 = vpack.c.b16 %v8713, %v8710
    %v8786 = vpack.c.b16 %v8714, %v8711
    %8859 = vmatpush.bf16.msra.mxu0 %v8736
    %8860 = vmatpush.bf16.msra.mxu0 %v8733
    %8861 = vmatpush.bf16.msra.mxu0 %v8730
    %8862 = vmatpush.bf16.msra.mxu0 %v8727
    %8863 = vmatpush.bf16.msra.mxu0 %v8724
    %8864 = vmatpush.bf16.msra.mxu0 %v8721
    %8865 = vmatpush.bf16.msra.mxu0 %v8718
    %8866 = vmatpush.bf16.msra.mxu0 %v8715
    %8867 = vmatmul.bf16.gmra.mxu0 %v8372
    %v8868 = vpop.f32.mrf.mxu0
    %v8869 = vadd.f32 0.0, %v8868
    %v8870 = vpop.f32.mrf.mxu0
    %8871 = vdwg.mxu0
    %8872 = vmatpush.bf16.msra.mxu0 %v8760
    %8873 = vmatpush.bf16.msra.mxu0 %v8757
    %8874 = vmatpush.bf16.msra.mxu0 %v8754
    %8875 = vmatpush.bf16.msra.mxu0 %v8751
    %8876 = vmatpush.bf16.msra.mxu0 %v8748
    %8877 = vmatpush.bf16.msra.mxu0 %v8745
    %8878 = vmatpush.bf16.msra.mxu0 %v8742
    %8879 = vmatpush.bf16.msra.mxu0 %v8739
    %8880 = vmatmul.bf16.gmra.mxu0 %v8373
    %v8881 = vpop.f32.mrf.mxu0
    %v8882 = vadd.f32 %v8869, %v8881
    %v8883 = vpop.f32.mrf.mxu0
    %8884 = vdwg.mxu0
    %8885 = vmatpush.bf16.msra.mxu0 %v8784
    %8886 = vmatpush.bf16.msra.mxu0 %v8781
    %8887 = vmatpush.bf16.msra.mxu0 %v8778
    %8888 = vmatpush.bf16.msra.mxu0 %v8775
    %8889 = vmatpush.bf16.msra.mxu0 %v8772
    %8890 = vmatpush.bf16.msra.mxu0 %v8769
    %8891 = vmatpush.bf16.msra.mxu0 %v8766
    %8892 = vmatpush.bf16.msra.mxu0 %v8763
    %8893 = vmatmul.bf16.gmra.mxu0 %v8374
    %v8894 = vpop.f32.mrf.mxu0
    %v8895 = vadd.f32 %v8882, %v8894
    %v8896 = vpop.f32.mrf.mxu0
    %8897 = vdwg.mxu0
    %8898 = vmatpush.bf16.msra.mxu0 %v8737
    %8899 = vmatpush.bf16.msra.mxu0 %v8734
    %8900 = vmatpush.bf16.msra.mxu0 %v8731
    %8901 = vmatpush.bf16.msra.mxu0 %v8728
    %8902 = vmatpush.bf16.msra.mxu0 %v8725
    %8903 = vmatpush.bf16.msra.mxu0 %v8722
    %8904 = vmatpush.bf16.msra.mxu0 %v8719
    %8905 = vmatpush.bf16.msra.mxu0 %v8716
    %8906 = vmatmul.bf16.gmra.mxu0 %v8372
    %v8907 = vpop.f32.mrf.mxu0
    %v8908 = vadd.f32 0.0, %v8907
    %v8909 = vpop.f32.mrf.mxu0
    %8910 = vdwg.mxu0
    %8911 = vmatpush.bf16.msra.mxu0 %v8761
    %8912 = vmatpush.bf16.msra.mxu0 %v8758
    %8913 = vmatpush.bf16.msra.mxu0 %v8755
    %8914 = vmatpush.bf16.msra.mxu0 %v8752
    %8915 = vmatpush.bf16.msra.mxu0 %v8749
    %8916 = vmatpush.bf16.msra.mxu0 %v8746
    %8917 = vmatpush.bf16.msra.mxu0 %v8743
    %8918 = vmatpush.bf16.msra.mxu0 %v8740
    %8919 = vmatmul.bf16.gmra.mxu0 %v8373
    %v8920 = vpop.f32.mrf.mxu0
    %v8921 = vadd.f32 %v8908, %v8920
    %v8922 = vpop.f32.mrf.mxu0
    %8923 = vdwg.mxu0
    %8924 = vmatpush.bf16.msra.mxu0 %v8785
    %8925 = vmatpush.bf16.msra.mxu0 %v8782
    %8926 = vmatpush.bf16.msra.mxu0 %v8779
    %8927 = vmatpush.bf16.msra.mxu0 %v8776
    %8928 = vmatpush.bf16.msra.mxu0 %v8773
    %8929 = vmatpush.bf16.msra.mxu0 %v8770
    %8930 = vmatpush.bf16.msra.mxu0 %v8767
    %8931 = vmatpush.bf16.msra.mxu0 %v8764
    %8932 = vmatmul.bf16.gmra.mxu0 %v8374
    %v8933 = vpop.f32.mrf.mxu0
    %v8934 = vadd.f32 %v8921, %v8933
    %v8935 = vpop.f32.mrf.mxu0
    %8936 = vdwg.mxu0
    %8937 = vmatpush.bf16.msra.mxu0 %v8738
    %8938 = vmatpush.bf16.msra.mxu0 %v8735
    %8939 = vmatpush.bf16.msra.mxu0 %v8732
    %8940 = vmatpush.bf16.msra.mxu0 %v8729
    %8941 = vmatpush.bf16.msra.mxu0 %v8726
    %8942 = vmatpush.bf16.msra.mxu0 %v8723
    %8943 = vmatpush.bf16.msra.mxu0 %v8720
    %8944 = vmatpush.bf16.msra.mxu0 %v8717
    %8945 = vmatmul.bf16.gmra.mxu0 %v8372
    %v8946 = vpop.f32.mrf.mxu0
    %v8947 = vadd.f32 0.0, %v8946
    %v8948 = vpop.f32.mrf.mxu0
    %8949 = vdwg.mxu0
    %8950 = vmatpush.bf16.msra.mxu0 %v8762
    %8951 = vmatpush.bf16.msra.mxu0 %v8759
    %8952 = vmatpush.bf16.msra.mxu0 %v8756
    %8953 = vmatpush.bf16.msra.mxu0 %v8753
    %8954 = vmatpush.bf16.msra.mxu0 %v8750
    %8955 = vmatpush.bf16.msra.mxu0 %v8747
    %8956 = vmatpush.bf16.msra.mxu0 %v8744
    %8957 = vmatpush.bf16.msra.mxu0 %v8741
    %8958 = vmatmul.bf16.gmra.mxu0 %v8373
    %v8959 = vpop.f32.mrf.mxu0
    %v8960 = vadd.f32 %v8947, %v8959
    %v8961 = vpop.f32.mrf.mxu0
    %8962 = vdwg.mxu0
    %8963 = vmatpush.bf16.msra.mxu0 %v8786
    %8964 = vmatpush.bf16.msra.mxu0 %v8783
    %8965 = vmatpush.bf16.msra.mxu0 %v8780
    %8966 = vmatpush.bf16.msra.mxu0 %v8777
    %8967 = vmatpush.bf16.msra.mxu0 %v8774
    %8968 = vmatpush.bf16.msra.mxu0 %v8771
    %8969 = vmatpush.bf16.msra.mxu0 %v8768
    %8970 = vmatpush.bf16.msra.mxu0 %v8765
    %8971 = vmatmul.bf16.gmra.mxu0 %v8374
    %v8972 = vpop.f32.mrf.mxu0
    %v8973 = vadd.f32 %v8960, %v8972
    %v8974 = vpop.f32.mrf.mxu0
    %8975 = vdwg.mxu0
    %v8976 = vadd.f32 %v8375, %v8895
    %v8977 = vadd.f32 %v8376, %v8934
    %v8978 = vadd.f32 %v8377, %v8973
    %8979 = vst [vmem:[#allocation3] sm:$0xff] %v8976
    %8980 = vst [vmem:[#allocation3 + $0x8] sm:$0xff] %v8977
    %8981 = vst [vmem:[#allocation3 + $0x10] sm:$0xff] %v8978
    %v8982 = vld [vmem:[#allocation2 + $0xc0] sm:$0xff]
    %v8983 = vld [vmem:[#allocation2 + $0xc8] sm:$0xff]
    %v8984 = vld [vmem:[#allocation2 + $0xd0] sm:$0xff]
    %8985 = vmatpush.bf16.msra.mxu0 %v1113
    %8986 = vmatpush.bf16.msra.mxu0 %v1110
    %8987 = vmatpush.bf16.msra.mxu0 %v1107
    %8988 = vmatpush.bf16.msra.mxu0 %v1104
    %8989 = vmatpush.bf16.msra.mxu0 %v1101
    %8990 = vmatpush.bf16.msra.mxu0 %v1098
    %8991 = vmatpush.bf16.msra.mxu0 %v1095
    %8992 = vmatpush.bf16.msra.mxu0 %v1092
    %8993 = vmatmul.bf16.gmra.mxu0 %v8129
    %v8994 = vpop.f32.mrf.mxu0
    %v8995 = vadd.f32 0.0, %v8994
    %v8996 = vpop.f32.mrf.mxu0
    %8997 = vdwg.mxu0
    %8998 = vmatpush.bf16.msra.mxu0 %v1137
    %8999 = vmatpush.bf16.msra.mxu0 %v1134
    %9000 = vmatpush.bf16.msra.mxu0 %v1131
    %9001 = vmatpush.bf16.msra.mxu0 %v1128
    %9002 = vmatpush.bf16.msra.mxu0 %v1125
    %9003 = vmatpush.bf16.msra.mxu0 %v1122
    %9004 = vmatpush.bf16.msra.mxu0 %v1119
    %9005 = vmatpush.bf16.msra.mxu0 %v1116
    %9006 = vmatmul.bf16.gmra.mxu0 %v8130
    %v9007 = vpop.f32.mrf.mxu0
    %v9008 = vadd.f32 %v8995, %v9007
    %v9009 = vpop.f32.mrf.mxu0
    %9010 = vdwg.mxu0
    %9011 = vmatpush.bf16.msra.mxu0 %v1161
    %9012 = vmatpush.bf16.msra.mxu0 %v1158
    %9013 = vmatpush.bf16.msra.mxu0 %v1155
    %9014 = vmatpush.bf16.msra.mxu0 %v1152
    %9015 = vmatpush.bf16.msra.mxu0 %v1149
    %9016 = vmatpush.bf16.msra.mxu0 %v1146
    %9017 = vmatpush.bf16.msra.mxu0 %v1143
    %9018 = vmatpush.bf16.msra.mxu0 %v1140
    %9019 = vmatmul.bf16.gmra.mxu0 %v8131
    %v9020 = vpop.f32.mrf.mxu0
    %v9021 = vadd.f32 %v9008, %v9020
    %v9022 = vpop.f32.mrf.mxu0
    %9023 = vdwg.mxu0
    %9024 = vmatpush.bf16.msra.mxu0 %v1114
    %9025 = vmatpush.bf16.msra.mxu0 %v1111
    %9026 = vmatpush.bf16.msra.mxu0 %v1108
    %9027 = vmatpush.bf16.msra.mxu0 %v1105
    %9028 = vmatpush.bf16.msra.mxu0 %v1102
    %9029 = vmatpush.bf16.msra.mxu0 %v1099
    %9030 = vmatpush.bf16.msra.mxu0 %v1096
    %9031 = vmatpush.bf16.msra.mxu0 %v1093
    %9032 = vmatmul.bf16.gmra.mxu0 %v8129
    %v9033 = vpop.f32.mrf.mxu0
    %v9034 = vadd.f32 0.0, %v9033
    %v9035 = vpop.f32.mrf.mxu0
    %9036 = vdwg.mxu0
    %9037 = vmatpush.bf16.msra.mxu0 %v1138
    %9038 = vmatpush.bf16.msra.mxu0 %v1135
    %9039 = vmatpush.bf16.msra.mxu0 %v1132
    %9040 = vmatpush.bf16.msra.mxu0 %v1129
    %9041 = vmatpush.bf16.msra.mxu0 %v1126
    %9042 = vmatpush.bf16.msra.mxu0 %v1123
    %9043 = vmatpush.bf16.msra.mxu0 %v1120
    %9044 = vmatpush.bf16.msra.mxu0 %v1117
    %9045 = vmatmul.bf16.gmra.mxu0 %v8130
    %v9046 = vpop.f32.mrf.mxu0
    %v9047 = vadd.f32 %v9034, %v9046
    %v9048 = vpop.f32.mrf.mxu0
    %9049 = vdwg.mxu0
    %9050 = vmatpush.bf16.msra.mxu0 %v1162
    %9051 = vmatpush.bf16.msra.mxu0 %v1159
    %9052 = vmatpush.bf16.msra.mxu0 %v1156
    %9053 = vmatpush.bf16.msra.mxu0 %v1153
    %9054 = vmatpush.bf16.msra.mxu0 %v1150
    %9055 = vmatpush.bf16.msra.mxu0 %v1147
    %9056 = vmatpush.bf16.msra.mxu0 %v1144
    %9057 = vmatpush.bf16.msra.mxu0 %v1141
    %9058 = vmatmul.bf16.gmra.mxu0 %v8131
    %v9059 = vpop.f32.mrf.mxu0
    %v9060 = vadd.f32 %v9047, %v9059
    %v9061 = vpop.f32.mrf.mxu0
    %9062 = vdwg.mxu0
    %9063 = vmatpush.bf16.msra.mxu0 %v1115
    %9064 = vmatpush.bf16.msra.mxu0 %v1112
    %9065 = vmatpush.bf16.msra.mxu0 %v1109
    %9066 = vmatpush.bf16.msra.mxu0 %v1106
    %9067 = vmatpush.bf16.msra.mxu0 %v1103
    %9068 = vmatpush.bf16.msra.mxu0 %v1100
    %9069 = vmatpush.bf16.msra.mxu0 %v1097
    %9070 = vmatpush.bf16.msra.mxu0 %v1094
    %9071 = vmatmul.bf16.gmra.mxu0 %v8129
    %v9072 = vpop.f32.mrf.mxu0
    %v9073 = vadd.f32 0.0, %v9072
    %v9074 = vpop.f32.mrf.mxu0
    %9075 = vdwg.mxu0
    %9076 = vmatpush.bf16.msra.mxu0 %v1139
    %9077 = vmatpush.bf16.msra.mxu0 %v1136
    %9078 = vmatpush.bf16.msra.mxu0 %v1133
    %9079 = vmatpush.bf16.msra.mxu0 %v1130
    %9080 = vmatpush.bf16.msra.mxu0 %v1127
    %9081 = vmatpush.bf16.msra.mxu0 %v1124
    %9082 = vmatpush.bf16.msra.mxu0 %v1121
    %9083 = vmatpush.bf16.msra.mxu0 %v1118
    %9084 = vmatmul.bf16.gmra.mxu0 %v8130
    %v9085 = vpop.f32.mrf.mxu0
    %v9086 = vadd.f32 %v9073, %v9085
    %v9087 = vpop.f32.mrf.mxu0
    %9088 = vdwg.mxu0
    %9089 = vmatpush.bf16.msra.mxu0 %v1163
    %9090 = vmatpush.bf16.msra.mxu0 %v1160
    %9091 = vmatpush.bf16.msra.mxu0 %v1157
    %9092 = vmatpush.bf16.msra.mxu0 %v1154
    %9093 = vmatpush.bf16.msra.mxu0 %v1151
    %9094 = vmatpush.bf16.msra.mxu0 %v1148
    %9095 = vmatpush.bf16.msra.mxu0 %v1145
    %9096 = vmatpush.bf16.msra.mxu0 %v1142
    %9097 = vmatmul.bf16.gmra.mxu0 %v8131
    %v9098 = vpop.f32.mrf.mxu0
    %v9099 = vadd.f32 %v9086, %v9098
    %v9100 = vpop.f32.mrf.mxu0
    %9101 = vdwg.mxu0
    %v9102 = vadd.f32 %v8982, %v9021
    %v9103 = vadd.f32 %v8983, %v9060
    %v9104 = vadd.f32 %v8984, %v9099
    %v9105 = vtanh.pop %v9102
    %v9106 = vtanh.pop %v9103
    %v9107 = vtanh.pop %v9104
    %v9108 = vpack.c.bf16 %v9105, %v9105
    %v9109 = vpack.c.bf16 %v9106, %v9106
    %v9110 = vpack.c.bf16 %v9107, %v9107
    %9111 = vmatpush.bf16.msra.mxu0 %v1752
    %9112 = vmatpush.bf16.msra.mxu0 %v1749
    %9113 = vmatpush.bf16.msra.mxu0 %v1746
    %9114 = vmatpush.bf16.msra.mxu0 %v1743
    %9115 = vmatpush.bf16.msra.mxu0 %v1740
    %9116 = vmatpush.bf16.msra.mxu0 %v1737
    %9117 = vmatpush.bf16.msra.mxu0 %v1734
    %9118 = vmatpush.bf16.msra.mxu0 %v1731
    %9119 = vmatmul.bf16.gmra.mxu0 %v8372
    %v9120 = vpop.f32.mrf.mxu0
    %v9121 = vadd.f32 0.0, %v9120
    %v9122 = vpop.f32.mrf.mxu0
    %9123 = vdwg.mxu0
    %9124 = vmatpush.bf16.msra.mxu0 %v1776
    %9125 = vmatpush.bf16.msra.mxu0 %v1773
    %9126 = vmatpush.bf16.msra.mxu0 %v1770
    %9127 = vmatpush.bf16.msra.mxu0 %v1767
    %9128 = vmatpush.bf16.msra.mxu0 %v1764
    %9129 = vmatpush.bf16.msra.mxu0 %v1761
    %9130 = vmatpush.bf16.msra.mxu0 %v1758
    %9131 = vmatpush.bf16.msra.mxu0 %v1755
    %9132 = vmatmul.bf16.gmra.mxu0 %v8373
    %v9133 = vpop.f32.mrf.mxu0
    %v9134 = vadd.f32 %v9121, %v9133
    %v9135 = vpop.f32.mrf.mxu0
    %9136 = vdwg.mxu0
    %9137 = vmatpush.bf16.msra.mxu0 %v1800
    %9138 = vmatpush.bf16.msra.mxu0 %v1797
    %9139 = vmatpush.bf16.msra.mxu0 %v1794
    %9140 = vmatpush.bf16.msra.mxu0 %v1791
    %9141 = vmatpush.bf16.msra.mxu0 %v1788
    %9142 = vmatpush.bf16.msra.mxu0 %v1785
    %9143 = vmatpush.bf16.msra.mxu0 %v1782
    %9144 = vmatpush.bf16.msra.mxu0 %v1779
    %9145 = vmatmul.bf16.gmra.mxu0 %v8374
    %v9146 = vpop.f32.mrf.mxu0
    %v9147 = vadd.f32 %v9134, %v9146
    %v9148 = vpop.f32.mrf.mxu0
    %9149 = vdwg.mxu0
    %9150 = vmatpush.bf16.msra.mxu0 %v1753
    %9151 = vmatpush.bf16.msra.mxu0 %v1750
    %9152 = vmatpush.bf16.msra.mxu0 %v1747
    %9153 = vmatpush.bf16.msra.mxu0 %v1744
    %9154 = vmatpush.bf16.msra.mxu0 %v1741
    %9155 = vmatpush.bf16.msra.mxu0 %v1738
    %9156 = vmatpush.bf16.msra.mxu0 %v1735
    %9157 = vmatpush.bf16.msra.mxu0 %v1732
    %9158 = vmatmul.bf16.gmra.mxu0 %v8372
    %v9159 = vpop.f32.mrf.mxu0
    %v9160 = vadd.f32 0.0, %v9159
    %v9161 = vpop.f32.mrf.mxu0
    %9162 = vdwg.mxu0
    %9163 = vmatpush.bf16.msra.mxu0 %v1777
    %9164 = vmatpush.bf16.msra.mxu0 %v1774
    %9165 = vmatpush.bf16.msra.mxu0 %v1771
    %9166 = vmatpush.bf16.msra.mxu0 %v1768
    %9167 = vmatpush.bf16.msra.mxu0 %v1765
    %9168 = vmatpush.bf16.msra.mxu0 %v1762
    %9169 = vmatpush.bf16.msra.mxu0 %v1759
    %9170 = vmatpush.bf16.msra.mxu0 %v1756
    %9171 = vmatmul.bf16.gmra.mxu0 %v8373
    %v9172 = vpop.f32.mrf.mxu0
    %v9173 = vadd.f32 %v9160, %v9172
    %v9174 = vpop.f32.mrf.mxu0
    %9175 = vdwg.mxu0
    %9176 = vmatpush.bf16.msra.mxu0 %v1801
    %9177 = vmatpush.bf16.msra.mxu0 %v1798
    %9178 = vmatpush.bf16.msra.mxu0 %v1795
    %9179 = vmatpush.bf16.msra.mxu0 %v1792
    %9180 = vmatpush.bf16.msra.mxu0 %v1789
    %9181 = vmatpush.bf16.msra.mxu0 %v1786
    %9182 = vmatpush.bf16.msra.mxu0 %v1783
    %9183 = vmatpush.bf16.msra.mxu0 %v1780
    %9184 = vmatmul.bf16.gmra.mxu0 %v8374
    %v9185 = vpop.f32.mrf.mxu0
    %v9186 = vadd.f32 %v9173, %v9185
    %v9187 = vpop.f32.mrf.mxu0
    %9188 = vdwg.mxu0
    %9189 = vmatpush.bf16.msra.mxu0 %v1754
    %9190 = vmatpush.bf16.msra.mxu0 %v1751
    %9191 = vmatpush.bf16.msra.mxu0 %v1748
    %9192 = vmatpush.bf16.msra.mxu0 %v1745
    %9193 = vmatpush.bf16.msra.mxu0 %v1742
    %9194 = vmatpush.bf16.msra.mxu0 %v1739
    %9195 = vmatpush.bf16.msra.mxu0 %v1736
    %9196 = vmatpush.bf16.msra.mxu0 %v1733
    %9197 = vmatmul.bf16.gmra.mxu0 %v8372
    %v9198 = vpop.f32.mrf.mxu0
    %v9199 = vadd.f32 0.0, %v9198
    %v9200 = vpop.f32.mrf.mxu0
    %9201 = vdwg.mxu0
    %9202 = vmatpush.bf16.msra.mxu0 %v1778
    %9203 = vmatpush.bf16.msra.mxu0 %v1775
    %9204 = vmatpush.bf16.msra.mxu0 %v1772
    %9205 = vmatpush.bf16.msra.mxu0 %v1769
    %9206 = vmatpush.bf16.msra.mxu0 %v1766
    %9207 = vmatpush.bf16.msra.mxu0 %v1763
    %9208 = vmatpush.bf16.msra.mxu0 %v1760
    %9209 = vmatpush.bf16.msra.mxu0 %v1757
    %9210 = vmatmul.bf16.gmra.mxu0 %v8373
    %v9211 = vpop.f32.mrf.mxu0
    %v9212 = vadd.f32 %v9199, %v9211
    %v9213 = vpop.f32.mrf.mxu0
    %9214 = vdwg.mxu0
    %9215 = vmatpush.bf16.msra.mxu0 %v1802
    %9216 = vmatpush.bf16.msra.mxu0 %v1799
    %9217 = vmatpush.bf16.msra.mxu0 %v1796
    %9218 = vmatpush.bf16.msra.mxu0 %v1793
    %9219 = vmatpush.bf16.msra.mxu0 %v1790
    %9220 = vmatpush.bf16.msra.mxu0 %v1787
    %9221 = vmatpush.bf16.msra.mxu0 %v1784
    %9222 = vmatpush.bf16.msra.mxu0 %v1781
    %9223 = vmatmul.bf16.gmra.mxu0 %v8374
    %v9224 = vpop.f32.mrf.mxu0
    %v9225 = vadd.f32 %v9212, %v9224
    %v9226 = vpop.f32.mrf.mxu0
    %9227 = vdwg.mxu0
    %9228 = vmatpush.bf16.msra.mxu0 %v2253
    %9229 = vmatpush.bf16.msra.mxu0 %v2250
    %9230 = vmatpush.bf16.msra.mxu0 %v2247
    %9231 = vmatpush.bf16.msra.mxu0 %v2244
    %9232 = vmatpush.bf16.msra.mxu0 %v2241
    %9233 = vmatpush.bf16.msra.mxu0 %v2238
    %9234 = vmatpush.bf16.msra.mxu0 %v2235
    %9235 = vmatpush.bf16.msra.mxu0 %v2232
    %9236 = vmatmul.bf16.gmra.mxu0 %v8129
    %v9237 = vpop.f32.mrf.mxu0
    %v9238 = vadd.f32 %v9147, %v9237
    %v9239 = vpop.f32.mrf.mxu0
    %9240 = vdwg.mxu0
    %9241 = vmatpush.bf16.msra.mxu0 %v2277
    %9242 = vmatpush.bf16.msra.mxu0 %v2274
    %9243 = vmatpush.bf16.msra.mxu0 %v2271
    %9244 = vmatpush.bf16.msra.mxu0 %v2268
    %9245 = vmatpush.bf16.msra.mxu0 %v2265
    %9246 = vmatpush.bf16.msra.mxu0 %v2262
    %9247 = vmatpush.bf16.msra.mxu0 %v2259
    %9248 = vmatpush.bf16.msra.mxu0 %v2256
    %9249 = vmatmul.bf16.gmra.mxu0 %v8130
    %v9250 = vpop.f32.mrf.mxu0
    %v9251 = vadd.f32 %v9238, %v9250
    %v9252 = vpop.f32.mrf.mxu0
    %9253 = vdwg.mxu0
    %9254 = vmatpush.bf16.msra.mxu0 %v2301
    %9255 = vmatpush.bf16.msra.mxu0 %v2298
    %9256 = vmatpush.bf16.msra.mxu0 %v2295
    %9257 = vmatpush.bf16.msra.mxu0 %v2292
    %9258 = vmatpush.bf16.msra.mxu0 %v2289
    %9259 = vmatpush.bf16.msra.mxu0 %v2286
    %9260 = vmatpush.bf16.msra.mxu0 %v2283
    %9261 = vmatpush.bf16.msra.mxu0 %v2280
    %9262 = vmatmul.bf16.gmra.mxu0 %v8131
    %v9263 = vpop.f32.mrf.mxu0
    %v9264 = vadd.f32 %v9251, %v9263
    %v9265 = vpop.f32.mrf.mxu0
    %9266 = vdwg.mxu0
    %9267 = vmatpush.bf16.msra.mxu0 %v2254
    %9268 = vmatpush.bf16.msra.mxu0 %v2251
    %9269 = vmatpush.bf16.msra.mxu0 %v2248
    %9270 = vmatpush.bf16.msra.mxu0 %v2245
    %9271 = vmatpush.bf16.msra.mxu0 %v2242
    %9272 = vmatpush.bf16.msra.mxu0 %v2239
    %9273 = vmatpush.bf16.msra.mxu0 %v2236
    %9274 = vmatpush.bf16.msra.mxu0 %v2233
    %9275 = vmatmul.bf16.gmra.mxu0 %v8129
    %v9276 = vpop.f32.mrf.mxu0
    %v9277 = vadd.f32 %v9186, %v9276
    %v9278 = vpop.f32.mrf.mxu0
    %9279 = vdwg.mxu0
    %9280 = vmatpush.bf16.msra.mxu0 %v2278
    %9281 = vmatpush.bf16.msra.mxu0 %v2275
    %9282 = vmatpush.bf16.msra.mxu0 %v2272
    %9283 = vmatpush.bf16.msra.mxu0 %v2269
    %9284 = vmatpush.bf16.msra.mxu0 %v2266
    %9285 = vmatpush.bf16.msra.mxu0 %v2263
    %9286 = vmatpush.bf16.msra.mxu0 %v2260
    %9287 = vmatpush.bf16.msra.mxu0 %v2257
    %9288 = vmatmul.bf16.gmra.mxu0 %v8130
    %v9289 = vpop.f32.mrf.mxu0
    %v9290 = vadd.f32 %v9277, %v9289
    %v9291 = vpop.f32.mrf.mxu0
    %9292 = vdwg.mxu0
    %9293 = vmatpush.bf16.msra.mxu0 %v2302
    %9294 = vmatpush.bf16.msra.mxu0 %v2299
    %9295 = vmatpush.bf16.msra.mxu0 %v2296
    %9296 = vmatpush.bf16.msra.mxu0 %v2293
    %9297 = vmatpush.bf16.msra.mxu0 %v2290
    %9298 = vmatpush.bf16.msra.mxu0 %v2287
    %9299 = vmatpush.bf16.msra.mxu0 %v2284
    %9300 = vmatpush.bf16.msra.mxu0 %v2281
    %9301 = vmatmul.bf16.gmra.mxu0 %v8131
    %v9302 = vpop.f32.mrf.mxu0
    %v9303 = vadd.f32 %v9290, %v9302
    %v9304 = vpop.f32.mrf.mxu0
    %9305 = vdwg.mxu0
    %9306 = vmatpush.bf16.msra.mxu0 %v2255
    %9307 = vmatpush.bf16.msra.mxu0 %v2252
    %9308 = vmatpush.bf16.msra.mxu0 %v2249
    %9309 = vmatpush.bf16.msra.mxu0 %v2246
    %9310 = vmatpush.bf16.msra.mxu0 %v2243
    %9311 = vmatpush.bf16.msra.mxu0 %v2240
    %9312 = vmatpush.bf16.msra.mxu0 %v2237
    %9313 = vmatpush.bf16.msra.mxu0 %v2234
    %9314 = vmatmul.bf16.gmra.mxu0 %v8129
    %v9315 = vpop.f32.mrf.mxu0
    %v9316 = vadd.f32 %v9225, %v9315
    %v9317 = vpop.f32.mrf.mxu0
    %9318 = vdwg.mxu0
    %9319 = vmatpush.bf16.msra.mxu0 %v2279
    %9320 = vmatpush.bf16.msra.mxu0 %v2276
    %9321 = vmatpush.bf16.msra.mxu0 %v2273
    %9322 = vmatpush.bf16.msra.mxu0 %v2270
    %9323 = vmatpush.bf16.msra.mxu0 %v2267
    %9324 = vmatpush.bf16.msra.mxu0 %v2264
    %9325 = vmatpush.bf16.msra.mxu0 %v2261
    %9326 = vmatpush.bf16.msra.mxu0 %v2258
    %9327 = vmatmul.bf16.gmra.mxu0 %v8130
    %v9328 = vpop.f32.mrf.mxu0
    %v9329 = vadd.f32 %v9316, %v9328
    %v9330 = vpop.f32.mrf.mxu0
    %9331 = vdwg.mxu0
    %9332 = vmatpush.bf16.msra.mxu0 %v2303
    %9333 = vmatpush.bf16.msra.mxu0 %v2300
    %9334 = vmatpush.bf16.msra.mxu0 %v2297
    %9335 = vmatpush.bf16.msra.mxu0 %v2294
    %9336 = vmatpush.bf16.msra.mxu0 %v2291
    %9337 = vmatpush.bf16.msra.mxu0 %v2288
    %9338 = vmatpush.bf16.msra.mxu0 %v2285
    %9339 = vmatpush.bf16.msra.mxu0 %v2282
    %9340 = vmatmul.bf16.gmra.mxu0 %v8131
    %v9341 = vpop.f32.mrf.mxu0
    %v9342 = vadd.f32 %v9329, %v9341
    %v9343 = vpop.f32.mrf.mxu0
    %9344 = vdwg.mxu0
    %v9345 = vadd.f32 %v9264, %v832
    %v9346 = vadd.f32 %v9303, %v833
    %v9347 = vadd.f32 %v9342, %v834
    %v9348 = vtanh.pop %v9345
    %v9349 = vtanh.pop %v9346
    %v9350 = vtanh.pop %v9347
    %v9351 = vpack.c.bf16 %v9348, %v9348
    %v9352 = vpack.c.bf16 %v9349, %v9349
    %v9353 = vpack.c.bf16 %v9350, %v9350
    %v9354 = vld [vmem:[#allocation3] sm:$0xff]
    %v9355 = vld [vmem:[#allocation3 + $0x8] sm:$0xff]
    %v9356 = vld [vmem:[#allocation3 + $0x10] sm:$0xff]
    %s9357 = scalar_lea.vmem [#allocation14], 4032
    %v9358 = vld [vmem:[%s9357] sm:$0xff]
    %v9359 = vld [vmem:[%s9357 + $0x8] sm:$0xf]
    %v9360 = vld [vmem:[%s9357 + $0xc] sm:$0xff]
    %v9361 = vld [vmem:[%s9357 + $0x14] sm:$0xf]
    %v9362 = vld [vmem:[%s9357 + $0x18] sm:$0xff]
    %v9363 = vld [vmem:[%s9357 + $0x20] sm:$0xf]
    %v9364 = vld [vmem:[%s9357 + $0x24] sm:$0xff]
    %v9365 = vld [vmem:[%s9357 + $0x2c] sm:$0xf]
    %v9366 = vld [vmem:[%s9357 + $0x30] sm:$0xff]
    %v9367 = vld [vmem:[%s9357 + $0x38] sm:$0xf]
    %v9368 = vld [vmem:[%s9357 + $0x3c] sm:$0xff]
    %v9369 = vld [vmem:[%s9357 + $0x44] sm:$0xf]
    %v9370 = vld [vmem:[%s9357 + $0x48] sm:$0xff]
    %v9371 = vld [vmem:[%s9357 + $0x50] sm:$0xf]
    %v9372 = vld [vmem:[%s9357 + $0x54] sm:$0xff]
    %v9373 = vld [vmem:[%s9357 + $0x5c] sm:$0xf]
    %v9374 = vld [vmem:[%s9357 + $0x60] sm:$0xff]
    %v9375 = vld [vmem:[%s9357 + $0x68] sm:$0xf]
    %v9376 = vld [vmem:[%s9357 + $0x6c] sm:$0xff]
    %v9377 = vld [vmem:[%s9357 + $0x74] sm:$0xf]
    %v9378 = vld [vmem:[%s9357 + $0x78] sm:$0xff]
    %v9379 = vld [vmem:[%s9357 + $0x80] sm:$0xf]
    %v9380 = vld [vmem:[%s9357 + $0x84] sm:$0xff]
    %v9381 = vld [vmem:[%s9357 + $0x8c] sm:$0xf]
    %v9382 = vld [vmem:[%s9357 + $0x90] sm:$0xff]
    %v9383 = vld [vmem:[%s9357 + $0x98] sm:$0xf]
    %v9384 = vld [vmem:[%s9357 + $0x9c] sm:$0xff]
    %v9385 = vld [vmem:[%s9357 + $0xa4] sm:$0xf]
    %v9386 = vld [vmem:[%s9357 + $0xa8] sm:$0xff]
    %v9387 = vld [vmem:[%s9357 + $0xb0] sm:$0xf]
    %v9388 = vld [vmem:[%s9357 + $0xb4] sm:$0xff]
    %v9389 = vld [vmem:[%s9357 + $0xbc] sm:$0xf]
    %v9390 = vld [vmem:[%s9357 + $0xc0] sm:$0xff]
    %v9391 = vld [vmem:[%s9357 + $0xc8] sm:$0xf]
    %v9392 = vld [vmem:[%s9357 + $0xcc] sm:$0xff]
    %v9393 = vld [vmem:[%s9357 + $0xd4] sm:$0xf]
    %v9394 = vld [vmem:[%s9357 + $0xd8] sm:$0xff]
    %v9395 = vld [vmem:[%s9357 + $0xe0] sm:$0xf]
    %v9396 = vld [vmem:[%s9357 + $0xe4] sm:$0xff]
    %v9397 = vld [vmem:[%s9357 + $0xec] sm:$0xf]
    %v9398 = vld [vmem:[%s9357 + $0xf0] sm:$0xff]
    %v9399 = vld [vmem:[%s9357 + $0xf8] sm:$0xf]
    %v9400 = vld [vmem:[%s9357 + $0xfc] sm:$0xff]
    %v9401 = vld [vmem:[%s9357 + $0x104] sm:$0xf]
    %v9402 = vld [vmem:[%s9357 + $0x108] sm:$0xff]
    %v9403 = vld [vmem:[%s9357 + $0x110] sm:$0xf]
    %v9404 = vld [vmem:[%s9357 + $0x114] sm:$0xff]
    %v9405 = vld [vmem:[%s9357 + $0x11c] sm:$0xf]
    %v9406 = vld [vmem:[%s9357 + $0x120] sm:$0xff]
    %v9407 = vld [vmem:[%s9357 + $0x128] sm:$0xf]
    %v9408 = vld [vmem:[%s9357 + $0x12c] sm:$0xff]
    %v9409 = vld [vmem:[%s9357 + $0x134] sm:$0xf]
    %v9410 = vld [vmem:[%s9357 + $0x138] sm:$0xff]
    %v9411 = vld [vmem:[%s9357 + $0x140] sm:$0xf]
    %v9412 = vld [vmem:[%s9357 + $0x144] sm:$0xff]
    %v9413 = vld [vmem:[%s9357 + $0x14c] sm:$0xf]
    %v9414 = vld [vmem:[%s9357 + $0x150] sm:$0xff]
    %v9415 = vld [vmem:[%s9357 + $0x158] sm:$0xf]
    %v9416 = vld [vmem:[%s9357 + $0x15c] sm:$0xff]
    %v9417 = vld [vmem:[%s9357 + $0x164] sm:$0xf]
    %v9418 = vld [vmem:[%s9357 + $0x168] sm:$0xff]
    %v9419 = vld [vmem:[%s9357 + $0x170] sm:$0xf]
    %v9420 = vld [vmem:[%s9357 + $0x174] sm:$0xff]
    %v9421 = vld [vmem:[%s9357 + $0x17c] sm:$0xf]
    %v9422 = vld [vmem:[%s9357 + $0x180] sm:$0xff]
    %v9423 = vld [vmem:[%s9357 + $0x188] sm:$0xf]
    %v9424 = vld [vmem:[%s9357 + $0x18c] sm:$0xff]
    %v9425 = vld [vmem:[%s9357 + $0x194] sm:$0xf]
    %v9426 = vld [vmem:[%s9357 + $0x198] sm:$0xff]
    %v9427 = vld [vmem:[%s9357 + $0x1a0] sm:$0xf]
    %v9428 = vld [vmem:[%s9357 + $0x1a4] sm:$0xff]
    %v9429 = vld [vmem:[%s9357 + $0x1ac] sm:$0xf]
    %v9430 = vld [vmem:[%s9357 + $0x1b0] sm:$0xff]
    %v9431 = vld [vmem:[%s9357 + $0x1b8] sm:$0xf]
    %v9432 = vld [vmem:[%s9357 + $0x1bc] sm:$0xff]
    %v9433 = vld [vmem:[%s9357 + $0x1c4] sm:$0xf]
    %v9434 = vld [vmem:[%s9357 + $0x1c8] sm:$0xff]
    %v9435 = vld [vmem:[%s9357 + $0x1d0] sm:$0xf]
    %v9436 = vld [vmem:[%s9357 + $0x1d4] sm:$0xff]
    %v9437 = vld [vmem:[%s9357 + $0x1dc] sm:$0xf]
    %v9438 = vld [vmem:[%s9357 + $0x1e0] sm:$0xff]
    %v9439 = vld [vmem:[%s9357 + $0x1e8] sm:$0xf]
    %v9440 = vld [vmem:[%s9357 + $0x1ec] sm:$0xff]
    %v9441 = vld [vmem:[%s9357 + $0x1f4] sm:$0xf]
    %v9442 = vld [vmem:[%s9357 + $0x1f8] sm:$0xff]
    %v9443 = vld [vmem:[%s9357 + $0x200] sm:$0xf]
    %v9444 = vld [vmem:[%s9357 + $0x204] sm:$0xff]
    %v9445 = vld [vmem:[%s9357 + $0x20c] sm:$0xf]
    %v9446 = vld [vmem:[%s9357 + $0x210] sm:$0xff]
    %v9447 = vld [vmem:[%s9357 + $0x218] sm:$0xf]
    %v9448 = vld [vmem:[%s9357 + $0x21c] sm:$0xff]
    %v9449 = vld [vmem:[%s9357 + $0x224] sm:$0xf]
    %v9450 = vld [vmem:[%s9357 + $0x228] sm:$0xff]
    %v9451 = vld [vmem:[%s9357 + $0x230] sm:$0xf]
    %v9452 = vld [vmem:[%s9357 + $0x234] sm:$0xff]
    %v9453 = vld [vmem:[%s9357 + $0x23c] sm:$0xf]
    %v9550 = vunpack.c.l.b16 %v9358
    %v9551 = vunpack.c.h.b16 %v9358
    %v9552 = vunpack.c.l.b16 %v9359
    %v9553 = vunpack.c.l.b16 %v9360
    %v9554 = vunpack.c.h.b16 %v9360
    %v9555 = vunpack.c.l.b16 %v9361
    %v9556 = vunpack.c.l.b16 %v9362
    %v9557 = vunpack.c.h.b16 %v9362
    %v9558 = vunpack.c.l.b16 %v9363
    %v9559 = vunpack.c.l.b16 %v9364
    %v9560 = vunpack.c.h.b16 %v9364
    %v9561 = vunpack.c.l.b16 %v9365
    %v9562 = vunpack.c.l.b16 %v9366
    %v9563 = vunpack.c.h.b16 %v9366
    %v9564 = vunpack.c.l.b16 %v9367
    %v9565 = vunpack.c.l.b16 %v9368
    %v9566 = vunpack.c.h.b16 %v9368
    %v9567 = vunpack.c.l.b16 %v9369
    %v9568 = vunpack.c.l.b16 %v9370
    %v9569 = vunpack.c.h.b16 %v9370
    %v9570 = vunpack.c.l.b16 %v9371
    %v9571 = vunpack.c.l.b16 %v9372
    %v9572 = vunpack.c.h.b16 %v9372
    %v9573 = vunpack.c.l.b16 %v9373
    %v9574 = vunpack.c.l.b16 %v9374
    %v9575 = vunpack.c.h.b16 %v9374
    %v9576 = vunpack.c.l.b16 %v9375
    %v9577 = vunpack.c.l.b16 %v9376
    %v9578 = vunpack.c.h.b16 %v9376
    %v9579 = vunpack.c.l.b16 %v9377
    %v9580 = vunpack.c.l.b16 %v9378
    %v9581 = vunpack.c.h.b16 %v9378
    %v9582 = vunpack.c.l.b16 %v9379
    %v9583 = vunpack.c.l.b16 %v9380
    %v9584 = vunpack.c.h.b16 %v9380
    %v9585 = vunpack.c.l.b16 %v9381
    %v9586 = vunpack.c.l.b16 %v9382
    %v9587 = vunpack.c.h.b16 %v9382
    %v9588 = vunpack.c.l.b16 %v9383
    %v9589 = vunpack.c.l.b16 %v9384
    %v9590 = vunpack.c.h.b16 %v9384
    %v9591 = vunpack.c.l.b16 %v9385
    %v9592 = vunpack.c.l.b16 %v9386
    %v9593 = vunpack.c.h.b16 %v9386
    %v9594 = vunpack.c.l.b16 %v9387
    %v9595 = vunpack.c.l.b16 %v9388
    %v9596 = vunpack.c.h.b16 %v9388
    %v9597 = vunpack.c.l.b16 %v9389
    %v9598 = vunpack.c.l.b16 %v9390
    %v9599 = vunpack.c.h.b16 %v9390
    %v9600 = vunpack.c.l.b16 %v9391
    %v9601 = vunpack.c.l.b16 %v9392
    %v9602 = vunpack.c.h.b16 %v9392
    %v9603 = vunpack.c.l.b16 %v9393
    %v9604 = vunpack.c.l.b16 %v9394
    %v9605 = vunpack.c.h.b16 %v9394
    %v9606 = vunpack.c.l.b16 %v9395
    %v9607 = vunpack.c.l.b16 %v9396
    %v9608 = vunpack.c.h.b16 %v9396
    %v9609 = vunpack.c.l.b16 %v9397
    %v9610 = vunpack.c.l.b16 %v9398
    %v9611 = vunpack.c.h.b16 %v9398
    %v9612 = vunpack.c.l.b16 %v9399
    %v9613 = vunpack.c.l.b16 %v9400
    %v9614 = vunpack.c.h.b16 %v9400
    %v9615 = vunpack.c.l.b16 %v9401
    %v9616 = vunpack.c.l.b16 %v9402
    %v9617 = vunpack.c.h.b16 %v9402
    %v9618 = vunpack.c.l.b16 %v9403
    %v9619 = vunpack.c.l.b16 %v9404
    %v9620 = vunpack.c.h.b16 %v9404
    %v9621 = vunpack.c.l.b16 %v9405
    %v9622 = vunpack.c.l.b16 %v9406
    %v9623 = vunpack.c.h.b16 %v9406
    %v9624 = vunpack.c.l.b16 %v9407
    %v9625 = vunpack.c.l.b16 %v9408
    %v9626 = vunpack.c.h.b16 %v9408
    %v9627 = vunpack.c.l.b16 %v9409
    %v9628 = vunpack.c.l.b16 %v9410
    %v9629 = vunpack.c.h.b16 %v9410
    %v9630 = vunpack.c.l.b16 %v9411
    %v9631 = vunpack.c.l.b16 %v9412
    %v9632 = vunpack.c.h.b16 %v9412
    %v9633 = vunpack.c.l.b16 %v9413
    %v9634 = vunpack.c.l.b16 %v9414
    %v9635 = vunpack.c.h.b16 %v9414
    %v9636 = vunpack.c.l.b16 %v9415
    %v9637 = vunpack.c.l.b16 %v9416
    %v9638 = vunpack.c.h.b16 %v9416
    %v9639 = vunpack.c.l.b16 %v9417
    %v9640 = vunpack.c.l.b16 %v9418
    %v9641 = vunpack.c.h.b16 %v9418
    %v9642 = vunpack.c.l.b16 %v9419
    %v9643 = vunpack.c.l.b16 %v9420
    %v9644 = vunpack.c.h.b16 %v9420
    %v9645 = vunpack.c.l.b16 %v9421
    %v9646 = vunpack.c.l.b16 %v9422
    %v9647 = vunpack.c.h.b16 %v9422
    %v9648 = vunpack.c.l.b16 %v9423
    %v9649 = vunpack.c.l.b16 %v9424
    %v9650 = vunpack.c.h.b16 %v9424
    %v9651 = vunpack.c.l.b16 %v9425
    %v9652 = vunpack.c.l.b16 %v9426
    %v9653 = vunpack.c.h.b16 %v9426
    %v9654 = vunpack.c.l.b16 %v9427
    %v9655 = vunpack.c.l.b16 %v9428
    %v9656 = vunpack.c.h.b16 %v9428
    %v9657 = vunpack.c.l.b16 %v9429
    %v9658 = vunpack.c.l.b16 %v9430
    %v9659 = vunpack.c.h.b16 %v9430
    %v9660 = vunpack.c.l.b16 %v9431
    %v9661 = vunpack.c.l.b16 %v9432
    %v9662 = vunpack.c.h.b16 %v9432
    %v9663 = vunpack.c.l.b16 %v9433
    %v9664 = vunpack.c.l.b16 %v9434
    %v9665 = vunpack.c.h.b16 %v9434
    %v9666 = vunpack.c.l.b16 %v9435
    %v9667 = vunpack.c.l.b16 %v9436
    %v9668 = vunpack.c.h.b16 %v9436
    %v9669 = vunpack.c.l.b16 %v9437
    %v9670 = vunpack.c.l.b16 %v9438
    %v9671 = vunpack.c.h.b16 %v9438
    %v9672 = vunpack.c.l.b16 %v9439
    %v9673 = vunpack.c.l.b16 %v9440
    %v9674 = vunpack.c.h.b16 %v9440
    %v9675 = vunpack.c.l.b16 %v9441
    %v9676 = vunpack.c.l.b16 %v9442
    %v9677 = vunpack.c.h.b16 %v9442
    %v9678 = vunpack.c.l.b16 %v9443
    %v9679 = vunpack.c.l.b16 %v9444
    %v9680 = vunpack.c.h.b16 %v9444
    %v9681 = vunpack.c.l.b16 %v9445
    %v9682 = vunpack.c.l.b16 %v9446
    %v9683 = vunpack.c.h.b16 %v9446
    %v9684 = vunpack.c.l.b16 %v9447
    %v9685 = vunpack.c.l.b16 %v9448
    %v9686 = vunpack.c.h.b16 %v9448
    %v9687 = vunpack.c.l.b16 %v9449
    %v9688 = vunpack.c.l.b16 %v9450
    %v9689 = vunpack.c.h.b16 %v9450
    %v9690 = vunpack.c.l.b16 %v9451
    %v9691 = vunpack.c.l.b16 %v9452
    %v9692 = vunpack.c.h.b16 %v9452
    %v9693 = vunpack.c.l.b16 %v9453
    %v9694 = vpack.c.b16 %v9553, %v9550
    %v9695 = vpack.c.b16 %v9554, %v9551
    %v9696 = vpack.c.b16 %v9555, %v9552
    %v9697 = vpack.c.b16 %v9559, %v9556
    %v9698 = vpack.c.b16 %v9560, %v9557
    %v9699 = vpack.c.b16 %v9561, %v9558
    %v9700 = vpack.c.b16 %v9565, %v9562
    %v9701 = vpack.c.b16 %v9566, %v9563
    %v9702 = vpack.c.b16 %v9567, %v9564
    %v9703 = vpack.c.b16 %v9571, %v9568
    %v9704 = vpack.c.b16 %v9572, %v9569
    %v9705 = vpack.c.b16 %v9573, %v9570
    %v9706 = vpack.c.b16 %v9577, %v9574
    %v9707 = vpack.c.b16 %v9578, %v9575
    %v9708 = vpack.c.b16 %v9579, %v9576
    %v9709 = vpack.c.b16 %v9583, %v9580
    %v9710 = vpack.c.b16 %v9584, %v9581
    %v9711 = vpack.c.b16 %v9585, %v9582
    %v9712 = vpack.c.b16 %v9589, %v9586
    %v9713 = vpack.c.b16 %v9590, %v9587
    %v9714 = vpack.c.b16 %v9591, %v9588
    %v9715 = vpack.c.b16 %v9595, %v9592
    %v9716 = vpack.c.b16 %v9596, %v9593
    %v9717 = vpack.c.b16 %v9597, %v9594
    %v9718 = vpack.c.b16 %v9601, %v9598
    %v9719 = vpack.c.b16 %v9602, %v9599
    %v9720 = vpack.c.b16 %v9603, %v9600
    %v9721 = vpack.c.b16 %v9607, %v9604
    %v9722 = vpack.c.b16 %v9608, %v9605
    %v9723 = vpack.c.b16 %v9609, %v9606
    %v9724 = vpack.c.b16 %v9613, %v9610
    %v9725 = vpack.c.b16 %v9614, %v9611
    %v9726 = vpack.c.b16 %v9615, %v9612
    %v9727 = vpack.c.b16 %v9619, %v9616
    %v9728 = vpack.c.b16 %v9620, %v9617
    %v9729 = vpack.c.b16 %v9621, %v9618
    %v9730 = vpack.c.b16 %v9625, %v9622
    %v9731 = vpack.c.b16 %v9626, %v9623
    %v9732 = vpack.c.b16 %v9627, %v9624
    %v9733 = vpack.c.b16 %v9631, %v9628
    %v9734 = vpack.c.b16 %v9632, %v9629
    %v9735 = vpack.c.b16 %v9633, %v9630
    %v9736 = vpack.c.b16 %v9637, %v9634
    %v9737 = vpack.c.b16 %v9638, %v9635
    %v9738 = vpack.c.b16 %v9639, %v9636
    %v9739 = vpack.c.b16 %v9643, %v9640
    %v9740 = vpack.c.b16 %v9644, %v9641
    %v9741 = vpack.c.b16 %v9645, %v9642
    %v9742 = vpack.c.b16 %v9649, %v9646
    %v9743 = vpack.c.b16 %v9650, %v9647
    %v9744 = vpack.c.b16 %v9651, %v9648
    %v9745 = vpack.c.b16 %v9655, %v9652
    %v9746 = vpack.c.b16 %v9656, %v9653
    %v9747 = vpack.c.b16 %v9657, %v9654
    %v9748 = vpack.c.b16 %v9661, %v9658
    %v9749 = vpack.c.b16 %v9662, %v9659
    %v9750 = vpack.c.b16 %v9663, %v9660
    %v9751 = vpack.c.b16 %v9667, %v9664
    %v9752 = vpack.c.b16 %v9668, %v9665
    %v9753 = vpack.c.b16 %v9669, %v9666
    %v9754 = vpack.c.b16 %v9673, %v9670
    %v9755 = vpack.c.b16 %v9674, %v9671
    %v9756 = vpack.c.b16 %v9675, %v9672
    %v9757 = vpack.c.b16 %v9679, %v9676
    %v9758 = vpack.c.b16 %v9680, %v9677
    %v9759 = vpack.c.b16 %v9681, %v9678
    %v9760 = vpack.c.b16 %v9685, %v9682
    %v9761 = vpack.c.b16 %v9686, %v9683
    %v9762 = vpack.c.b16 %v9687, %v9684
    %v9763 = vpack.c.b16 %v9691, %v9688
    %v9764 = vpack.c.b16 %v9692, %v9689
    %v9765 = vpack.c.b16 %v9693, %v9690
    %9838 = vmatpush.bf16.msra.mxu0 %v9715
    %9839 = vmatpush.bf16.msra.mxu0 %v9712
    %9840 = vmatpush.bf16.msra.mxu0 %v9709
    %9841 = vmatpush.bf16.msra.mxu0 %v9706
    %9842 = vmatpush.bf16.msra.mxu0 %v9703
    %9843 = vmatpush.bf16.msra.mxu0 %v9700
    %9844 = vmatpush.bf16.msra.mxu0 %v9697
    %9845 = vmatpush.bf16.msra.mxu0 %v9694
    %9846 = vmatmul.bf16.gmra.mxu0 %v9351
    %v9847 = vpop.f32.mrf.mxu0
    %v9848 = vadd.f32 0.0, %v9847
    %v9849 = vpop.f32.mrf.mxu0
    %9850 = vdwg.mxu0
    %9851 = vmatpush.bf16.msra.mxu0 %v9739
    %9852 = vmatpush.bf16.msra.mxu0 %v9736
    %9853 = vmatpush.bf16.msra.mxu0 %v9733
    %9854 = vmatpush.bf16.msra.mxu0 %v9730
    %9855 = vmatpush.bf16.msra.mxu0 %v9727
    %9856 = vmatpush.bf16.msra.mxu0 %v9724
    %9857 = vmatpush.bf16.msra.mxu0 %v9721
    %9858 = vmatpush.bf16.msra.mxu0 %v9718
    %9859 = vmatmul.bf16.gmra.mxu0 %v9352
    %v9860 = vpop.f32.mrf.mxu0
    %v9861 = vadd.f32 %v9848, %v9860
    %v9862 = vpop.f32.mrf.mxu0
    %9863 = vdwg.mxu0
    %9864 = vmatpush.bf16.msra.mxu0 %v9763
    %9865 = vmatpush.bf16.msra.mxu0 %v9760
    %9866 = vmatpush.bf16.msra.mxu0 %v9757
    %9867 = vmatpush.bf16.msra.mxu0 %v9754
    %9868 = vmatpush.bf16.msra.mxu0 %v9751
    %9869 = vmatpush.bf16.msra.mxu0 %v9748
    %9870 = vmatpush.bf16.msra.mxu0 %v9745
    %9871 = vmatpush.bf16.msra.mxu0 %v9742
    %9872 = vmatmul.bf16.gmra.mxu0 %v9353
    %v9873 = vpop.f32.mrf.mxu0
    %v9874 = vadd.f32 %v9861, %v9873
    %v9875 = vpop.f32.mrf.mxu0
    %9876 = vdwg.mxu0
    %9877 = vmatpush.bf16.msra.mxu0 %v9716
    %9878 = vmatpush.bf16.msra.mxu0 %v9713
    %9879 = vmatpush.bf16.msra.mxu0 %v9710
    %9880 = vmatpush.bf16.msra.mxu0 %v9707
    %9881 = vmatpush.bf16.msra.mxu0 %v9704
    %9882 = vmatpush.bf16.msra.mxu0 %v9701
    %9883 = vmatpush.bf16.msra.mxu0 %v9698
    %9884 = vmatpush.bf16.msra.mxu0 %v9695
    %9885 = vmatmul.bf16.gmra.mxu0 %v9351
    %v9886 = vpop.f32.mrf.mxu0
    %v9887 = vadd.f32 0.0, %v9886
    %v9888 = vpop.f32.mrf.mxu0
    %9889 = vdwg.mxu0
    %9890 = vmatpush.bf16.msra.mxu0 %v9740
    %9891 = vmatpush.bf16.msra.mxu0 %v9737
    %9892 = vmatpush.bf16.msra.mxu0 %v9734
    %9893 = vmatpush.bf16.msra.mxu0 %v9731
    %9894 = vmatpush.bf16.msra.mxu0 %v9728
    %9895 = vmatpush.bf16.msra.mxu0 %v9725
    %9896 = vmatpush.bf16.msra.mxu0 %v9722
    %9897 = vmatpush.bf16.msra.mxu0 %v9719
    %9898 = vmatmul.bf16.gmra.mxu0 %v9352
    %v9899 = vpop.f32.mrf.mxu0
    %v9900 = vadd.f32 %v9887, %v9899
    %v9901 = vpop.f32.mrf.mxu0
    %9902 = vdwg.mxu0
    %9903 = vmatpush.bf16.msra.mxu0 %v9764
    %9904 = vmatpush.bf16.msra.mxu0 %v9761
    %9905 = vmatpush.bf16.msra.mxu0 %v9758
    %9906 = vmatpush.bf16.msra.mxu0 %v9755
    %9907 = vmatpush.bf16.msra.mxu0 %v9752
    %9908 = vmatpush.bf16.msra.mxu0 %v9749
    %9909 = vmatpush.bf16.msra.mxu0 %v9746
    %9910 = vmatpush.bf16.msra.mxu0 %v9743
    %9911 = vmatmul.bf16.gmra.mxu0 %v9353
    %v9912 = vpop.f32.mrf.mxu0
    %v9913 = vadd.f32 %v9900, %v9912
    %v9914 = vpop.f32.mrf.mxu0
    %9915 = vdwg.mxu0
    %9916 = vmatpush.bf16.msra.mxu0 %v9717
    %9917 = vmatpush.bf16.msra.mxu0 %v9714
    %9918 = vmatpush.bf16.msra.mxu0 %v9711
    %9919 = vmatpush.bf16.msra.mxu0 %v9708
    %9920 = vmatpush.bf16.msra.mxu0 %v9705
    %9921 = vmatpush.bf16.msra.mxu0 %v9702
    %9922 = vmatpush.bf16.msra.mxu0 %v9699
    %9923 = vmatpush.bf16.msra.mxu0 %v9696
    %9924 = vmatmul.bf16.gmra.mxu0 %v9351
    %v9925 = vpop.f32.mrf.mxu0
    %v9926 = vadd.f32 0.0, %v9925
    %v9927 = vpop.f32.mrf.mxu0
    %9928 = vdwg.mxu0
    %9929 = vmatpush.bf16.msra.mxu0 %v9741
    %9930 = vmatpush.bf16.msra.mxu0 %v9738
    %9931 = vmatpush.bf16.msra.mxu0 %v9735
    %9932 = vmatpush.bf16.msra.mxu0 %v9732
    %9933 = vmatpush.bf16.msra.mxu0 %v9729
    %9934 = vmatpush.bf16.msra.mxu0 %v9726
    %9935 = vmatpush.bf16.msra.mxu0 %v9723
    %9936 = vmatpush.bf16.msra.mxu0 %v9720
    %9937 = vmatmul.bf16.gmra.mxu0 %v9352
    %v9938 = vpop.f32.mrf.mxu0
    %v9939 = vadd.f32 %v9926, %v9938
    %v9940 = vpop.f32.mrf.mxu0
    %9941 = vdwg.mxu0
    %9942 = vmatpush.bf16.msra.mxu0 %v9765
    %9943 = vmatpush.bf16.msra.mxu0 %v9762
    %9944 = vmatpush.bf16.msra.mxu0 %v9759
    %9945 = vmatpush.bf16.msra.mxu0 %v9756
    %9946 = vmatpush.bf16.msra.mxu0 %v9753
    %9947 = vmatpush.bf16.msra.mxu0 %v9750
    %9948 = vmatpush.bf16.msra.mxu0 %v9747
    %9949 = vmatpush.bf16.msra.mxu0 %v9744
    %9950 = vmatmul.bf16.gmra.mxu0 %v9353
    %v9951 = vpop.f32.mrf.mxu0
    %v9952 = vadd.f32 %v9939, %v9951
    %v9953 = vpop.f32.mrf.mxu0
    %9954 = vdwg.mxu0
    %v9955 = vadd.f32 %v9354, %v9874
    %v9956 = vadd.f32 %v9355, %v9913
    %v9957 = vadd.f32 %v9356, %v9952
    %9958 = vst [vmem:[#allocation3] sm:$0xff] %v9955
    %9959 = vst [vmem:[#allocation3 + $0x8] sm:$0xff] %v9956
    %9960 = vst [vmem:[#allocation3 + $0x10] sm:$0xff] %v9957
    %9961 = vmatpush.bf16.msra.mxu0 %v1752
    %9962 = vmatpush.bf16.msra.mxu0 %v1749
    %9963 = vmatpush.bf16.msra.mxu0 %v1746
    %9964 = vmatpush.bf16.msra.mxu0 %v1743
    %9965 = vmatpush.bf16.msra.mxu0 %v1740
    %9966 = vmatpush.bf16.msra.mxu0 %v1737
    %9967 = vmatpush.bf16.msra.mxu0 %v1734
    %9968 = vmatpush.bf16.msra.mxu0 %v1731
    %9969 = vmatmul.bf16.gmra.mxu0 %v9351
    %v9970 = vpop.f32.mrf.mxu0
    %v9971 = vadd.f32 0.0, %v9970
    %v9972 = vpop.f32.mrf.mxu0
    %9973 = vdwg.mxu0
    %9974 = vmatpush.bf16.msra.mxu0 %v1776
    %9975 = vmatpush.bf16.msra.mxu0 %v1773
    %9976 = vmatpush.bf16.msra.mxu0 %v1770
    %9977 = vmatpush.bf16.msra.mxu0 %v1767
    %9978 = vmatpush.bf16.msra.mxu0 %v1764
    %9979 = vmatpush.bf16.msra.mxu0 %v1761
    %9980 = vmatpush.bf16.msra.mxu0 %v1758
    %9981 = vmatpush.bf16.msra.mxu0 %v1755
    %9982 = vmatmul.bf16.gmra.mxu0 %v9352
    %v9983 = vpop.f32.mrf.mxu0
    %v9984 = vadd.f32 %v9971, %v9983
    %v9985 = vpop.f32.mrf.mxu0
    %9986 = vdwg.mxu0
    %9987 = vmatpush.bf16.msra.mxu0 %v1800
    %9988 = vmatpush.bf16.msra.mxu0 %v1797
    %9989 = vmatpush.bf16.msra.mxu0 %v1794
    %9990 = vmatpush.bf16.msra.mxu0 %v1791
    %9991 = vmatpush.bf16.msra.mxu0 %v1788
    %9992 = vmatpush.bf16.msra.mxu0 %v1785
    %9993 = vmatpush.bf16.msra.mxu0 %v1782
    %9994 = vmatpush.bf16.msra.mxu0 %v1779
    %9995 = vmatmul.bf16.gmra.mxu0 %v9353
    %v9996 = vpop.f32.mrf.mxu0
    %v9997 = vadd.f32 %v9984, %v9996
    %v9998 = vpop.f32.mrf.mxu0
    %9999 = vdwg.mxu0
    %10000 = vmatpush.bf16.msra.mxu0 %v1753
    %10001 = vmatpush.bf16.msra.mxu0 %v1750
    %10002 = vmatpush.bf16.msra.mxu0 %v1747
    %10003 = vmatpush.bf16.msra.mxu0 %v1744
    %10004 = vmatpush.bf16.msra.mxu0 %v1741
    %10005 = vmatpush.bf16.msra.mxu0 %v1738
    %10006 = vmatpush.bf16.msra.mxu0 %v1735
    %10007 = vmatpush.bf16.msra.mxu0 %v1732
    %10008 = vmatmul.bf16.gmra.mxu0 %v9351
    %v10009 = vpop.f32.mrf.mxu0
    %v10010 = vadd.f32 0.0, %v10009
    %v10011 = vpop.f32.mrf.mxu0
    %10012 = vdwg.mxu0
    %10013 = vmatpush.bf16.msra.mxu0 %v1777
    %10014 = vmatpush.bf16.msra.mxu0 %v1774
    %10015 = vmatpush.bf16.msra.mxu0 %v1771
    %10016 = vmatpush.bf16.msra.mxu0 %v1768
    %10017 = vmatpush.bf16.msra.mxu0 %v1765
    %10018 = vmatpush.bf16.msra.mxu0 %v1762
    %10019 = vmatpush.bf16.msra.mxu0 %v1759
    %10020 = vmatpush.bf16.msra.mxu0 %v1756
    %10021 = vmatmul.bf16.gmra.mxu0 %v9352
    %v10022 = vpop.f32.mrf.mxu0
    %v10023 = vadd.f32 %v10010, %v10022
    %v10024 = vpop.f32.mrf.mxu0
    %10025 = vdwg.mxu0
    %10026 = vmatpush.bf16.msra.mxu0 %v1801
    %10027 = vmatpush.bf16.msra.mxu0 %v1798
    %10028 = vmatpush.bf16.msra.mxu0 %v1795
    %10029 = vmatpush.bf16.msra.mxu0 %v1792
    %10030 = vmatpush.bf16.msra.mxu0 %v1789
    %10031 = vmatpush.bf16.msra.mxu0 %v1786
    %10032 = vmatpush.bf16.msra.mxu0 %v1783
    %10033 = vmatpush.bf16.msra.mxu0 %v1780
    %10034 = vmatmul.bf16.gmra.mxu0 %v9353
    %v10035 = vpop.f32.mrf.mxu0
    %v10036 = vadd.f32 %v10023, %v10035
    %v10037 = vpop.f32.mrf.mxu0
    %10038 = vdwg.mxu0
    %10039 = vmatpush.bf16.msra.mxu0 %v1754
    %10040 = vmatpush.bf16.msra.mxu0 %v1751
    %10041 = vmatpush.bf16.msra.mxu0 %v1748
    %10042 = vmatpush.bf16.msra.mxu0 %v1745
    %10043 = vmatpush.bf16.msra.mxu0 %v1742
    %10044 = vmatpush.bf16.msra.mxu0 %v1739
    %10045 = vmatpush.bf16.msra.mxu0 %v1736
    %10046 = vmatpush.bf16.msra.mxu0 %v1733
    %10047 = vmatmul.bf16.gmra.mxu0 %v9351
    %v10048 = vpop.f32.mrf.mxu0
    %v10049 = vadd.f32 0.0, %v10048
    %v10050 = vpop.f32.mrf.mxu0
    %10051 = vdwg.mxu0
    %10052 = vmatpush.bf16.msra.mxu0 %v1778
    %10053 = vmatpush.bf16.msra.mxu0 %v1775
    %10054 = vmatpush.bf16.msra.mxu0 %v1772
    %10055 = vmatpush.bf16.msra.mxu0 %v1769
    %10056 = vmatpush.bf16.msra.mxu0 %v1766
    %10057 = vmatpush.bf16.msra.mxu0 %v1763
    %10058 = vmatpush.bf16.msra.mxu0 %v1760
    %10059 = vmatpush.bf16.msra.mxu0 %v1757
    %10060 = vmatmul.bf16.gmra.mxu0 %v9352
    %v10061 = vpop.f32.mrf.mxu0
    %v10062 = vadd.f32 %v10049, %v10061
    %v10063 = vpop.f32.mrf.mxu0
    %10064 = vdwg.mxu0
    %10065 = vmatpush.bf16.msra.mxu0 %v1802
    %10066 = vmatpush.bf16.msra.mxu0 %v1799
    %10067 = vmatpush.bf16.msra.mxu0 %v1796
    %10068 = vmatpush.bf16.msra.mxu0 %v1793
    %10069 = vmatpush.bf16.msra.mxu0 %v1790
    %10070 = vmatpush.bf16.msra.mxu0 %v1787
    %10071 = vmatpush.bf16.msra.mxu0 %v1784
    %10072 = vmatpush.bf16.msra.mxu0 %v1781
    %10073 = vmatmul.bf16.gmra.mxu0 %v9353
    %v10074 = vpop.f32.mrf.mxu0
    %v10075 = vadd.f32 %v10062, %v10074
    %v10076 = vpop.f32.mrf.mxu0
    %10077 = vdwg.mxu0
    %10078 = vmatpush.bf16.msra.mxu0 %v2253
    %10079 = vmatpush.bf16.msra.mxu0 %v2250
    %10080 = vmatpush.bf16.msra.mxu0 %v2247
    %10081 = vmatpush.bf16.msra.mxu0 %v2244
    %10082 = vmatpush.bf16.msra.mxu0 %v2241
    %10083 = vmatpush.bf16.msra.mxu0 %v2238
    %10084 = vmatpush.bf16.msra.mxu0 %v2235
    %10085 = vmatpush.bf16.msra.mxu0 %v2232
    %10086 = vmatmul.bf16.gmra.mxu0 %v9108
    %v10087 = vpop.f32.mrf.mxu0
    %v10088 = vadd.f32 %v9997, %v10087
    %v10089 = vpop.f32.mrf.mxu0
    %10090 = vdwg.mxu0
    %10091 = vmatpush.bf16.msra.mxu0 %v2277
    %10092 = vmatpush.bf16.msra.mxu0 %v2274
    %10093 = vmatpush.bf16.msra.mxu0 %v2271
    %10094 = vmatpush.bf16.msra.mxu0 %v2268
    %10095 = vmatpush.bf16.msra.mxu0 %v2265
    %10096 = vmatpush.bf16.msra.mxu0 %v2262
    %10097 = vmatpush.bf16.msra.mxu0 %v2259
    %10098 = vmatpush.bf16.msra.mxu0 %v2256
    %10099 = vmatmul.bf16.gmra.mxu0 %v9109
    %v10100 = vpop.f32.mrf.mxu0
    %v10101 = vadd.f32 %v10088, %v10100
    %v10102 = vpop.f32.mrf.mxu0
    %10103 = vdwg.mxu0
    %10104 = vmatpush.bf16.msra.mxu0 %v2301
    %10105 = vmatpush.bf16.msra.mxu0 %v2298
    %10106 = vmatpush.bf16.msra.mxu0 %v2295
    %10107 = vmatpush.bf16.msra.mxu0 %v2292
    %10108 = vmatpush.bf16.msra.mxu0 %v2289
    %10109 = vmatpush.bf16.msra.mxu0 %v2286
    %10110 = vmatpush.bf16.msra.mxu0 %v2283
    %10111 = vmatpush.bf16.msra.mxu0 %v2280
    %10112 = vmatmul.bf16.gmra.mxu0 %v9110
    %v10113 = vpop.f32.mrf.mxu0
    %v10114 = vadd.f32 %v10101, %v10113
    %v10115 = vpop.f32.mrf.mxu0
    %10116 = vdwg.mxu0
    %10117 = vmatpush.bf16.msra.mxu0 %v2254
    %10118 = vmatpush.bf16.msra.mxu0 %v2251
    %10119 = vmatpush.bf16.msra.mxu0 %v2248
    %10120 = vmatpush.bf16.msra.mxu0 %v2245
    %10121 = vmatpush.bf16.msra.mxu0 %v2242
    %10122 = vmatpush.bf16.msra.mxu0 %v2239
    %10123 = vmatpush.bf16.msra.mxu0 %v2236
    %10124 = vmatpush.bf16.msra.mxu0 %v2233
    %10125 = vmatmul.bf16.gmra.mxu0 %v9108
    %v10126 = vpop.f32.mrf.mxu0
    %v10127 = vadd.f32 %v10036, %v10126
    %v10128 = vpop.f32.mrf.mxu0
    %10129 = vdwg.mxu0
    %10130 = vmatpush.bf16.msra.mxu0 %v2278
    %10131 = vmatpush.bf16.msra.mxu0 %v2275
    %10132 = vmatpush.bf16.msra.mxu0 %v2272
    %10133 = vmatpush.bf16.msra.mxu0 %v2269
    %10134 = vmatpush.bf16.msra.mxu0 %v2266
    %10135 = vmatpush.bf16.msra.mxu0 %v2263
    %10136 = vmatpush.bf16.msra.mxu0 %v2260
    %10137 = vmatpush.bf16.msra.mxu0 %v2257
    %10138 = vmatmul.bf16.gmra.mxu0 %v9109
    %v10139 = vpop.f32.mrf.mxu0
    %v10140 = vadd.f32 %v10127, %v10139
    %v10141 = vpop.f32.mrf.mxu0
    %10142 = vdwg.mxu0
    %10143 = vmatpush.bf16.msra.mxu0 %v2302
    %10144 = vmatpush.bf16.msra.mxu0 %v2299
    %10145 = vmatpush.bf16.msra.mxu0 %v2296
    %10146 = vmatpush.bf16.msra.mxu0 %v2293
    %10147 = vmatpush.bf16.msra.mxu0 %v2290
    %10148 = vmatpush.bf16.msra.mxu0 %v2287
    %10149 = vmatpush.bf16.msra.mxu0 %v2284
    %10150 = vmatpush.bf16.msra.mxu0 %v2281
    %10151 = vmatmul.bf16.gmra.mxu0 %v9110
    %v10152 = vpop.f32.mrf.mxu0
    %v10153 = vadd.f32 %v10140, %v10152
    %v10154 = vpop.f32.mrf.mxu0
    %10155 = vdwg.mxu0
    %10156 = vmatpush.bf16.msra.mxu0 %v2255
    %10157 = vmatpush.bf16.msra.mxu0 %v2252
    %10158 = vmatpush.bf16.msra.mxu0 %v2249
    %10159 = vmatpush.bf16.msra.mxu0 %v2246
    %10160 = vmatpush.bf16.msra.mxu0 %v2243
    %10161 = vmatpush.bf16.msra.mxu0 %v2240
    %10162 = vmatpush.bf16.msra.mxu0 %v2237
    %10163 = vmatpush.bf16.msra.mxu0 %v2234
    %10164 = vmatmul.bf16.gmra.mxu0 %v9108
    %v10165 = vpop.f32.mrf.mxu0
    %v10166 = vadd.f32 %v10075, %v10165
    %v10167 = vpop.f32.mrf.mxu0
    %10168 = vdwg.mxu0
    %10169 = vmatpush.bf16.msra.mxu0 %v2279
    %10170 = vmatpush.bf16.msra.mxu0 %v2276
    %10171 = vmatpush.bf16.msra.mxu0 %v2273
    %10172 = vmatpush.bf16.msra.mxu0 %v2270
    %10173 = vmatpush.bf16.msra.mxu0 %v2267
    %10174 = vmatpush.bf16.msra.mxu0 %v2264
    %10175 = vmatpush.bf16.msra.mxu0 %v2261
    %10176 = vmatpush.bf16.msra.mxu0 %v2258
    %10177 = vmatmul.bf16.gmra.mxu0 %v9109
    %v10178 = vpop.f32.mrf.mxu0
    %v10179 = vadd.f32 %v10166, %v10178
    %v10180 = vpop.f32.mrf.mxu0
    %10181 = vdwg.mxu0
    %10182 = vmatpush.bf16.msra.mxu0 %v2303
    %10183 = vmatpush.bf16.msra.mxu0 %v2300
    %10184 = vmatpush.bf16.msra.mxu0 %v2297
    %10185 = vmatpush.bf16.msra.mxu0 %v2294
    %10186 = vmatpush.bf16.msra.mxu0 %v2291
    %10187 = vmatpush.bf16.msra.mxu0 %v2288
    %10188 = vmatpush.bf16.msra.mxu0 %v2285
    %10189 = vmatpush.bf16.msra.mxu0 %v2282
    %10190 = vmatmul.bf16.gmra.mxu0 %v9110
    %v10191 = vpop.f32.mrf.mxu0
    %v10192 = vadd.f32 %v10179, %v10191
    %v10193 = vpop.f32.mrf.mxu0
    %10194 = vdwg.mxu0
    %v10195 = vadd.f32 %v10114, %v832
    %v10196 = vadd.f32 %v10153, %v833
    %v10197 = vadd.f32 %v10192, %v834
    %v10198 = vtanh.pop %v10195
    %v10199 = vtanh.pop %v10196
    %v10200 = vtanh.pop %v10197
    %v10201 = vpack.c.bf16 %v10198, %v10198
    %v10202 = vpack.c.bf16 %v10199, %v10199
    %v10203 = vpack.c.bf16 %v10200, %v10200
    %v10204 = vld [vmem:[#allocation3] sm:$0xff]
    %v10205 = vld [vmem:[#allocation3 + $0x8] sm:$0xff]
    %v10206 = vld [vmem:[#allocation3 + $0x10] sm:$0xff]
    %s10207 = scalar_lea.vmem [#allocation14], 4608
    %v10208 = vld [vmem:[%s10207] sm:$0xff]
    %v10209 = vld [vmem:[%s10207 + $0x8] sm:$0xf]
    %v10210 = vld [vmem:[%s10207 + $0xc] sm:$0xff]
    %v10211 = vld [vmem:[%s10207 + $0x14] sm:$0xf]
    %v10212 = vld [vmem:[%s10207 + $0x18] sm:$0xff]
    %v10213 = vld [vmem:[%s10207 + $0x20] sm:$0xf]
    %v10214 = vld [vmem:[%s10207 + $0x24] sm:$0xff]
    %v10215 = vld [vmem:[%s10207 + $0x2c] sm:$0xf]
    %v10216 = vld [vmem:[%s10207 + $0x30] sm:$0xff]
    %v10217 = vld [vmem:[%s10207 + $0x38] sm:$0xf]
    %v10218 = vld [vmem:[%s10207 + $0x3c] sm:$0xff]
    %v10219 = vld [vmem:[%s10207 + $0x44] sm:$0xf]
    %v10220 = vld [vmem:[%s10207 + $0x48] sm:$0xff]
    %v10221 = vld [vmem:[%s10207 + $0x50] sm:$0xf]
    %v10222 = vld [vmem:[%s10207 + $0x54] sm:$0xff]
    %v10223 = vld [vmem:[%s10207 + $0x5c] sm:$0xf]
    %v10224 = vld [vmem:[%s10207 + $0x60] sm:$0xff]
    %v10225 = vld [vmem:[%s10207 + $0x68] sm:$0xf]
    %v10226 = vld [vmem:[%s10207 + $0x6c] sm:$0xff]
    %v10227 = vld [vmem:[%s10207 + $0x74] sm:$0xf]
    %v10228 = vld [vmem:[%s10207 + $0x78] sm:$0xff]
    %v10229 = vld [vmem:[%s10207 + $0x80] sm:$0xf]
    %v10230 = vld [vmem:[%s10207 + $0x84] sm:$0xff]
    %v10231 = vld [vmem:[%s10207 + $0x8c] sm:$0xf]
    %v10232 = vld [vmem:[%s10207 + $0x90] sm:$0xff]
    %v10233 = vld [vmem:[%s10207 + $0x98] sm:$0xf]
    %v10234 = vld [vmem:[%s10207 + $0x9c] sm:$0xff]
    %v10235 = vld [vmem:[%s10207 + $0xa4] sm:$0xf]
    %v10236 = vld [vmem:[%s10207 + $0xa8] sm:$0xff]
    %v10237 = vld [vmem:[%s10207 + $0xb0] sm:$0xf]
    %v10238 = vld [vmem:[%s10207 + $0xb4] sm:$0xff]
    %v10239 = vld [vmem:[%s10207 + $0xbc] sm:$0xf]
    %v10240 = vld [vmem:[%s10207 + $0xc0] sm:$0xff]
    %v10241 = vld [vmem:[%s10207 + $0xc8] sm:$0xf]
    %v10242 = vld [vmem:[%s10207 + $0xcc] sm:$0xff]
    %v10243 = vld [vmem:[%s10207 + $0xd4] sm:$0xf]
    %v10244 = vld [vmem:[%s10207 + $0xd8] sm:$0xff]
    %v10245 = vld [vmem:[%s10207 + $0xe0] sm:$0xf]
    %v10246 = vld [vmem:[%s10207 + $0xe4] sm:$0xff]
    %v10247 = vld [vmem:[%s10207 + $0xec] sm:$0xf]
    %v10248 = vld [vmem:[%s10207 + $0xf0] sm:$0xff]
    %v10249 = vld [vmem:[%s10207 + $0xf8] sm:$0xf]
    %v10250 = vld [vmem:[%s10207 + $0xfc] sm:$0xff]
    %v10251 = vld [vmem:[%s10207 + $0x104] sm:$0xf]
    %v10252 = vld [vmem:[%s10207 + $0x108] sm:$0xff]
    %v10253 = vld [vmem:[%s10207 + $0x110] sm:$0xf]
    %v10254 = vld [vmem:[%s10207 + $0x114] sm:$0xff]
    %v10255 = vld [vmem:[%s10207 + $0x11c] sm:$0xf]
    %v10256 = vld [vmem:[%s10207 + $0x120] sm:$0xff]
    %v10257 = vld [vmem:[%s10207 + $0x128] sm:$0xf]
    %v10258 = vld [vmem:[%s10207 + $0x12c] sm:$0xff]
    %v10259 = vld [vmem:[%s10207 + $0x134] sm:$0xf]
    %v10260 = vld [vmem:[%s10207 + $0x138] sm:$0xff]
    %v10261 = vld [vmem:[%s10207 + $0x140] sm:$0xf]
    %v10262 = vld [vmem:[%s10207 + $0x144] sm:$0xff]
    %v10263 = vld [vmem:[%s10207 + $0x14c] sm:$0xf]
    %v10264 = vld [vmem:[%s10207 + $0x150] sm:$0xff]
    %v10265 = vld [vmem:[%s10207 + $0x158] sm:$0xf]
    %v10266 = vld [vmem:[%s10207 + $0x15c] sm:$0xff]
    %v10267 = vld [vmem:[%s10207 + $0x164] sm:$0xf]
    %v10268 = vld [vmem:[%s10207 + $0x168] sm:$0xff]
    %v10269 = vld [vmem:[%s10207 + $0x170] sm:$0xf]
    %v10270 = vld [vmem:[%s10207 + $0x174] sm:$0xff]
    %v10271 = vld [vmem:[%s10207 + $0x17c] sm:$0xf]
    %v10272 = vld [vmem:[%s10207 + $0x180] sm:$0xff]
    %v10273 = vld [vmem:[%s10207 + $0x188] sm:$0xf]
    %v10274 = vld [vmem:[%s10207 + $0x18c] sm:$0xff]
    %v10275 = vld [vmem:[%s10207 + $0x194] sm:$0xf]
    %v10276 = vld [vmem:[%s10207 + $0x198] sm:$0xff]
    %v10277 = vld [vmem:[%s10207 + $0x1a0] sm:$0xf]
    %v10278 = vld [vmem:[%s10207 + $0x1a4] sm:$0xff]
    %v10279 = vld [vmem:[%s10207 + $0x1ac] sm:$0xf]
    %v10280 = vld [vmem:[%s10207 + $0x1b0] sm:$0xff]
    %v10281 = vld [vmem:[%s10207 + $0x1b8] sm:$0xf]
    %v10282 = vld [vmem:[%s10207 + $0x1bc] sm:$0xff]
    %v10283 = vld [vmem:[%s10207 + $0x1c4] sm:$0xf]
    %v10284 = vld [vmem:[%s10207 + $0x1c8] sm:$0xff]
    %v10285 = vld [vmem:[%s10207 + $0x1d0] sm:$0xf]
    %v10286 = vld [vmem:[%s10207 + $0x1d4] sm:$0xff]
    %v10287 = vld [vmem:[%s10207 + $0x1dc] sm:$0xf]
    %v10288 = vld [vmem:[%s10207 + $0x1e0] sm:$0xff]
    %v10289 = vld [vmem:[%s10207 + $0x1e8] sm:$0xf]
    %v10290 = vld [vmem:[%s10207 + $0x1ec] sm:$0xff]
    %v10291 = vld [vmem:[%s10207 + $0x1f4] sm:$0xf]
    %v10292 = vld [vmem:[%s10207 + $0x1f8] sm:$0xff]
    %v10293 = vld [vmem:[%s10207 + $0x200] sm:$0xf]
    %v10294 = vld [vmem:[%s10207 + $0x204] sm:$0xff]
    %v10295 = vld [vmem:[%s10207 + $0x20c] sm:$0xf]
    %v10296 = vld [vmem:[%s10207 + $0x210] sm:$0xff]
    %v10297 = vld [vmem:[%s10207 + $0x218] sm:$0xf]
    %v10298 = vld [vmem:[%s10207 + $0x21c] sm:$0xff]
    %v10299 = vld [vmem:[%s10207 + $0x224] sm:$0xf]
    %v10300 = vld [vmem:[%s10207 + $0x228] sm:$0xff]
    %v10301 = vld [vmem:[%s10207 + $0x230] sm:$0xf]
    %v10302 = vld [vmem:[%s10207 + $0x234] sm:$0xff]
    %v10303 = vld [vmem:[%s10207 + $0x23c] sm:$0xf]
    %v10400 = vunpack.c.l.b16 %v10208
    %v10401 = vunpack.c.h.b16 %v10208
    %v10402 = vunpack.c.l.b16 %v10209
    %v10403 = vunpack.c.l.b16 %v10210
    %v10404 = vunpack.c.h.b16 %v10210
    %v10405 = vunpack.c.l.b16 %v10211
    %v10406 = vunpack.c.l.b16 %v10212
    %v10407 = vunpack.c.h.b16 %v10212
    %v10408 = vunpack.c.l.b16 %v10213
    %v10409 = vunpack.c.l.b16 %v10214
    %v10410 = vunpack.c.h.b16 %v10214
    %v10411 = vunpack.c.l.b16 %v10215
    %v10412 = vunpack.c.l.b16 %v10216
    %v10413 = vunpack.c.h.b16 %v10216
    %v10414 = vunpack.c.l.b16 %v10217
    %v10415 = vunpack.c.l.b16 %v10218
    %v10416 = vunpack.c.h.b16 %v10218
    %v10417 = vunpack.c.l.b16 %v10219
    %v10418 = vunpack.c.l.b16 %v10220
    %v10419 = vunpack.c.h.b16 %v10220
    %v10420 = vunpack.c.l.b16 %v10221
    %v10421 = vunpack.c.l.b16 %v10222
    %v10422 = vunpack.c.h.b16 %v10222
    %v10423 = vunpack.c.l.b16 %v10223
    %v10424 = vunpack.c.l.b16 %v10224
    %v10425 = vunpack.c.h.b16 %v10224
    %v10426 = vunpack.c.l.b16 %v10225
    %v10427 = vunpack.c.l.b16 %v10226
    %v10428 = vunpack.c.h.b16 %v10226
    %v10429 = vunpack.c.l.b16 %v10227
    %v10430 = vunpack.c.l.b16 %v10228
    %v10431 = vunpack.c.h.b16 %v10228
    %v10432 = vunpack.c.l.b16 %v10229
    %v10433 = vunpack.c.l.b16 %v10230
    %v10434 = vunpack.c.h.b16 %v10230
    %v10435 = vunpack.c.l.b16 %v10231
    %v10436 = vunpack.c.l.b16 %v10232
    %v10437 = vunpack.c.h.b16 %v10232
    %v10438 = vunpack.c.l.b16 %v10233
    %v10439 = vunpack.c.l.b16 %v10234
    %v10440 = vunpack.c.h.b16 %v10234
    %v10441 = vunpack.c.l.b16 %v10235
    %v10442 = vunpack.c.l.b16 %v10236
    %v10443 = vunpack.c.h.b16 %v10236
    %v10444 = vunpack.c.l.b16 %v10237
    %v10445 = vunpack.c.l.b16 %v10238
    %v10446 = vunpack.c.h.b16 %v10238
    %v10447 = vunpack.c.l.b16 %v10239
    %v10448 = vunpack.c.l.b16 %v10240
    %v10449 = vunpack.c.h.b16 %v10240
    %v10450 = vunpack.c.l.b16 %v10241
    %v10451 = vunpack.c.l.b16 %v10242
    %v10452 = vunpack.c.h.b16 %v10242
    %v10453 = vunpack.c.l.b16 %v10243
    %v10454 = vunpack.c.l.b16 %v10244
    %v10455 = vunpack.c.h.b16 %v10244
    %v10456 = vunpack.c.l.b16 %v10245
    %v10457 = vunpack.c.l.b16 %v10246
    %v10458 = vunpack.c.h.b16 %v10246
    %v10459 = vunpack.c.l.b16 %v10247
    %v10460 = vunpack.c.l.b16 %v10248
    %v10461 = vunpack.c.h.b16 %v10248
    %v10462 = vunpack.c.l.b16 %v10249
    %v10463 = vunpack.c.l.b16 %v10250
    %v10464 = vunpack.c.h.b16 %v10250
    %v10465 = vunpack.c.l.b16 %v10251
    %v10466 = vunpack.c.l.b16 %v10252
    %v10467 = vunpack.c.h.b16 %v10252
    %v10468 = vunpack.c.l.b16 %v10253
    %v10469 = vunpack.c.l.b16 %v10254
    %v10470 = vunpack.c.h.b16 %v10254
    %v10471 = vunpack.c.l.b16 %v10255
    %v10472 = vunpack.c.l.b16 %v10256
    %v10473 = vunpack.c.h.b16 %v10256
    %v10474 = vunpack.c.l.b16 %v10257
    %v10475 = vunpack.c.l.b16 %v10258
    %v10476 = vunpack.c.h.b16 %v10258
    %v10477 = vunpack.c.l.b16 %v10259
    %v10478 = vunpack.c.l.b16 %v10260
    %v10479 = vunpack.c.h.b16 %v10260
    %v10480 = vunpack.c.l.b16 %v10261
    %v10481 = vunpack.c.l.b16 %v10262
    %v10482 = vunpack.c.h.b16 %v10262
    %v10483 = vunpack.c.l.b16 %v10263
    %v10484 = vunpack.c.l.b16 %v10264
    %v10485 = vunpack.c.h.b16 %v10264
    %v10486 = vunpack.c.l.b16 %v10265
    %v10487 = vunpack.c.l.b16 %v10266
    %v10488 = vunpack.c.h.b16 %v10266
    %v10489 = vunpack.c.l.b16 %v10267
    %v10490 = vunpack.c.l.b16 %v10268
    %v10491 = vunpack.c.h.b16 %v10268
    %v10492 = vunpack.c.l.b16 %v10269
    %v10493 = vunpack.c.l.b16 %v10270
    %v10494 = vunpack.c.h.b16 %v10270
    %v10495 = vunpack.c.l.b16 %v10271
    %v10496 = vunpack.c.l.b16 %v10272
    %v10497 = vunpack.c.h.b16 %v10272
    %v10498 = vunpack.c.l.b16 %v10273
    %v10499 = vunpack.c.l.b16 %v10274
    %v10500 = vunpack.c.h.b16 %v10274
    %v10501 = vunpack.c.l.b16 %v10275
    %v10502 = vunpack.c.l.b16 %v10276
    %v10503 = vunpack.c.h.b16 %v10276
    %v10504 = vunpack.c.l.b16 %v10277
    %v10505 = vunpack.c.l.b16 %v10278
    %v10506 = vunpack.c.h.b16 %v10278
    %v10507 = vunpack.c.l.b16 %v10279
    %v10508 = vunpack.c.l.b16 %v10280
    %v10509 = vunpack.c.h.b16 %v10280
    %v10510 = vunpack.c.l.b16 %v10281
    %v10511 = vunpack.c.l.b16 %v10282
    %v10512 = vunpack.c.h.b16 %v10282
    %v10513 = vunpack.c.l.b16 %v10283
    %v10514 = vunpack.c.l.b16 %v10284
    %v10515 = vunpack.c.h.b16 %v10284
    %v10516 = vunpack.c.l.b16 %v10285
    %v10517 = vunpack.c.l.b16 %v10286
    %v10518 = vunpack.c.h.b16 %v10286
    %v10519 = vunpack.c.l.b16 %v10287
    %v10520 = vunpack.c.l.b16 %v10288
    %v10521 = vunpack.c.h.b16 %v10288
    %v10522 = vunpack.c.l.b16 %v10289
    %v10523 = vunpack.c.l.b16 %v10290
    %v10524 = vunpack.c.h.b16 %v10290
    %v10525 = vunpack.c.l.b16 %v10291
    %v10526 = vunpack.c.l.b16 %v10292
    %v10527 = vunpack.c.h.b16 %v10292
    %v10528 = vunpack.c.l.b16 %v10293
    %v10529 = vunpack.c.l.b16 %v10294
    %v10530 = vunpack.c.h.b16 %v10294
    %v10531 = vunpack.c.l.b16 %v10295
    %v10532 = vunpack.c.l.b16 %v10296
    %v10533 = vunpack.c.h.b16 %v10296
    %v10534 = vunpack.c.l.b16 %v10297
    %v10535 = vunpack.c.l.b16 %v10298
    %v10536 = vunpack.c.h.b16 %v10298
    %v10537 = vunpack.c.l.b16 %v10299
    %v10538 = vunpack.c.l.b16 %v10300
    %v10539 = vunpack.c.h.b16 %v10300
    %v10540 = vunpack.c.l.b16 %v10301
    %v10541 = vunpack.c.l.b16 %v10302
    %v10542 = vunpack.c.h.b16 %v10302
    %v10543 = vunpack.c.l.b16 %v10303
    %v10544 = vpack.c.b16 %v10403, %v10400
    %v10545 = vpack.c.b16 %v10404, %v10401
    %v10546 = vpack.c.b16 %v10405, %v10402
    %v10547 = vpack.c.b16 %v10409, %v10406
    %v10548 = vpack.c.b16 %v10410, %v10407
    %v10549 = vpack.c.b16 %v10411, %v10408
    %v10550 = vpack.c.b16 %v10415, %v10412
    %v10551 = vpack.c.b16 %v10416, %v10413
    %v10552 = vpack.c.b16 %v10417, %v10414
    %v10553 = vpack.c.b16 %v10421, %v10418
    %v10554 = vpack.c.b16 %v10422, %v10419
    %v10555 = vpack.c.b16 %v10423, %v10420
    %v10556 = vpack.c.b16 %v10427, %v10424
    %v10557 = vpack.c.b16 %v10428, %v10425
    %v10558 = vpack.c.b16 %v10429, %v10426
    %v10559 = vpack.c.b16 %v10433, %v10430
    %v10560 = vpack.c.b16 %v10434, %v10431
    %v10561 = vpack.c.b16 %v10435, %v10432
    %v10562 = vpack.c.b16 %v10439, %v10436
    %v10563 = vpack.c.b16 %v10440, %v10437
    %v10564 = vpack.c.b16 %v10441, %v10438
    %v10565 = vpack.c.b16 %v10445, %v10442
    %v10566 = vpack.c.b16 %v10446, %v10443
    %v10567 = vpack.c.b16 %v10447, %v10444
    %v10568 = vpack.c.b16 %v10451, %v10448
    %v10569 = vpack.c.b16 %v10452, %v10449
    %v10570 = vpack.c.b16 %v10453, %v10450
    %v10571 = vpack.c.b16 %v10457, %v10454
    %v10572 = vpack.c.b16 %v10458, %v10455
    %v10573 = vpack.c.b16 %v10459, %v10456
    %v10574 = vpack.c.b16 %v10463, %v10460
    %v10575 = vpack.c.b16 %v10464, %v10461
    %v10576 = vpack.c.b16 %v10465, %v10462
    %v10577 = vpack.c.b16 %v10469, %v10466
    %v10578 = vpack.c.b16 %v10470, %v10467
    %v10579 = vpack.c.b16 %v10471, %v10468
    %v10580 = vpack.c.b16 %v10475, %v10472
    %v10581 = vpack.c.b16 %v10476, %v10473
    %v10582 = vpack.c.b16 %v10477, %v10474
    %v10583 = vpack.c.b16 %v10481, %v10478
    %v10584 = vpack.c.b16 %v10482, %v10479
    %v10585 = vpack.c.b16 %v10483, %v10480
    %v10586 = vpack.c.b16 %v10487, %v10484
    %v10587 = vpack.c.b16 %v10488, %v10485
    %v10588 = vpack.c.b16 %v10489, %v10486
    %v10589 = vpack.c.b16 %v10493, %v10490
    %v10590 = vpack.c.b16 %v10494, %v10491
    %v10591 = vpack.c.b16 %v10495, %v10492
    %v10592 = vpack.c.b16 %v10499, %v10496
    %v10593 = vpack.c.b16 %v10500, %v10497
    %v10594 = vpack.c.b16 %v10501, %v10498
    %v10595 = vpack.c.b16 %v10505, %v10502
    %v10596 = vpack.c.b16 %v10506, %v10503
    %v10597 = vpack.c.b16 %v10507, %v10504
    %v10598 = vpack.c.b16 %v10511, %v10508
    %v10599 = vpack.c.b16 %v10512, %v10509
    %v10600 = vpack.c.b16 %v10513, %v10510
    %v10601 = vpack.c.b16 %v10517, %v10514
    %v10602 = vpack.c.b16 %v10518, %v10515
    %v10603 = vpack.c.b16 %v10519, %v10516
    %v10604 = vpack.c.b16 %v10523, %v10520
    %v10605 = vpack.c.b16 %v10524, %v10521
    %v10606 = vpack.c.b16 %v10525, %v10522
    %v10607 = vpack.c.b16 %v10529, %v10526
    %v10608 = vpack.c.b16 %v10530, %v10527
    %v10609 = vpack.c.b16 %v10531, %v10528
    %v10610 = vpack.c.b16 %v10535, %v10532
    %v10611 = vpack.c.b16 %v10536, %v10533
    %v10612 = vpack.c.b16 %v10537, %v10534
    %v10613 = vpack.c.b16 %v10541, %v10538
    %v10614 = vpack.c.b16 %v10542, %v10539
    %v10615 = vpack.c.b16 %v10543, %v10540
    %10688 = vmatpush.bf16.msra.mxu0 %v10565
    %10689 = vmatpush.bf16.msra.mxu0 %v10562
    %10690 = vmatpush.bf16.msra.mxu0 %v10559
    %10691 = vmatpush.bf16.msra.mxu0 %v10556
    %10692 = vmatpush.bf16.msra.mxu0 %v10553
    %10693 = vmatpush.bf16.msra.mxu0 %v10550
    %10694 = vmatpush.bf16.msra.mxu0 %v10547
    %10695 = vmatpush.bf16.msra.mxu0 %v10544
    %10696 = vmatmul.bf16.gmra.mxu0 %v10201
    %v10697 = vpop.f32.mrf.mxu0
    %v10698 = vadd.f32 0.0, %v10697
    %v10699 = vpop.f32.mrf.mxu0
    %10700 = vdwg.mxu0
    %10701 = vmatpush.bf16.msra.mxu0 %v10589
    %10702 = vmatpush.bf16.msra.mxu0 %v10586
    %10703 = vmatpush.bf16.msra.mxu0 %v10583
    %10704 = vmatpush.bf16.msra.mxu0 %v10580
    %10705 = vmatpush.bf16.msra.mxu0 %v10577
    %10706 = vmatpush.bf16.msra.mxu0 %v10574
    %10707 = vmatpush.bf16.msra.mxu0 %v10571
    %10708 = vmatpush.bf16.msra.mxu0 %v10568
    %10709 = vmatmul.bf16.gmra.mxu0 %v10202
    %v10710 = vpop.f32.mrf.mxu0
    %v10711 = vadd.f32 %v10698, %v10710
    %v10712 = vpop.f32.mrf.mxu0
    %10713 = vdwg.mxu0
    %10714 = vmatpush.bf16.msra.mxu0 %v10613
    %10715 = vmatpush.bf16.msra.mxu0 %v10610
    %10716 = vmatpush.bf16.msra.mxu0 %v10607
    %10717 = vmatpush.bf16.msra.mxu0 %v10604
    %10718 = vmatpush.bf16.msra.mxu0 %v10601
    %10719 = vmatpush.bf16.msra.mxu0 %v10598
    %10720 = vmatpush.bf16.msra.mxu0 %v10595
    %10721 = vmatpush.bf16.msra.mxu0 %v10592
    %10722 = vmatmul.bf16.gmra.mxu0 %v10203
    %v10723 = vpop.f32.mrf.mxu0
    %v10724 = vadd.f32 %v10711, %v10723
    %v10725 = vpop.f32.mrf.mxu0
    %10726 = vdwg.mxu0
    %10727 = vmatpush.bf16.msra.mxu0 %v10566
    %10728 = vmatpush.bf16.msra.mxu0 %v10563
    %10729 = vmatpush.bf16.msra.mxu0 %v10560
    %10730 = vmatpush.bf16.msra.mxu0 %v10557
    %10731 = vmatpush.bf16.msra.mxu0 %v10554
    %10732 = vmatpush.bf16.msra.mxu0 %v10551
    %10733 = vmatpush.bf16.msra.mxu0 %v10548
    %10734 = vmatpush.bf16.msra.mxu0 %v10545
    %10735 = vmatmul.bf16.gmra.mxu0 %v10201
    %v10736 = vpop.f32.mrf.mxu0
    %v10737 = vadd.f32 0.0, %v10736
    %v10738 = vpop.f32.mrf.mxu0
    %10739 = vdwg.mxu0
    %10740 = vmatpush.bf16.msra.mxu0 %v10590
    %10741 = vmatpush.bf16.msra.mxu0 %v10587
    %10742 = vmatpush.bf16.msra.mxu0 %v10584
    %10743 = vmatpush.bf16.msra.mxu0 %v10581
    %10744 = vmatpush.bf16.msra.mxu0 %v10578
    %10745 = vmatpush.bf16.msra.mxu0 %v10575
    %10746 = vmatpush.bf16.msra.mxu0 %v10572
    %10747 = vmatpush.bf16.msra.mxu0 %v10569
    %10748 = vmatmul.bf16.gmra.mxu0 %v10202
    %v10749 = vpop.f32.mrf.mxu0
    %v10750 = vadd.f32 %v10737, %v10749
    %v10751 = vpop.f32.mrf.mxu0
    %10752 = vdwg.mxu0
    %10753 = vmatpush.bf16.msra.mxu0 %v10614
    %10754 = vmatpush.bf16.msra.mxu0 %v10611
    %10755 = vmatpush.bf16.msra.mxu0 %v10608
    %10756 = vmatpush.bf16.msra.mxu0 %v10605
    %10757 = vmatpush.bf16.msra.mxu0 %v10602
    %10758 = vmatpush.bf16.msra.mxu0 %v10599
    %10759 = vmatpush.bf16.msra.mxu0 %v10596
    %10760 = vmatpush.bf16.msra.mxu0 %v10593
    %10761 = vmatmul.bf16.gmra.mxu0 %v10203
    %v10762 = vpop.f32.mrf.mxu0
    %v10763 = vadd.f32 %v10750, %v10762
    %v10764 = vpop.f32.mrf.mxu0
    %10765 = vdwg.mxu0
    %10766 = vmatpush.bf16.msra.mxu0 %v10567
    %10767 = vmatpush.bf16.msra.mxu0 %v10564
    %10768 = vmatpush.bf16.msra.mxu0 %v10561
    %10769 = vmatpush.bf16.msra.mxu0 %v10558
    %10770 = vmatpush.bf16.msra.mxu0 %v10555
    %10771 = vmatpush.bf16.msra.mxu0 %v10552
    %10772 = vmatpush.bf16.msra.mxu0 %v10549
    %10773 = vmatpush.bf16.msra.mxu0 %v10546
    %10774 = vmatmul.bf16.gmra.mxu0 %v10201
    %v10775 = vpop.f32.mrf.mxu0
    %v10776 = vadd.f32 0.0, %v10775
    %v10777 = vpop.f32.mrf.mxu0
    %10778 = vdwg.mxu0
    %10779 = vmatpush.bf16.msra.mxu0 %v10591
    %10780 = vmatpush.bf16.msra.mxu0 %v10588
    %10781 = vmatpush.bf16.msra.mxu0 %v10585
    %10782 = vmatpush.bf16.msra.mxu0 %v10582
    %10783 = vmatpush.bf16.msra.mxu0 %v10579
    %10784 = vmatpush.bf16.msra.mxu0 %v10576
    %10785 = vmatpush.bf16.msra.mxu0 %v10573
    %10786 = vmatpush.bf16.msra.mxu0 %v10570
    %10787 = vmatmul.bf16.gmra.mxu0 %v10202
    %v10788 = vpop.f32.mrf.mxu0
    %v10789 = vadd.f32 %v10776, %v10788
    %v10790 = vpop.f32.mrf.mxu0
    %10791 = vdwg.mxu0
    %10792 = vmatpush.bf16.msra.mxu0 %v10615
    %10793 = vmatpush.bf16.msra.mxu0 %v10612
    %10794 = vmatpush.bf16.msra.mxu0 %v10609
    %10795 = vmatpush.bf16.msra.mxu0 %v10606
    %10796 = vmatpush.bf16.msra.mxu0 %v10603
    %10797 = vmatpush.bf16.msra.mxu0 %v10600
    %10798 = vmatpush.bf16.msra.mxu0 %v10597
    %10799 = vmatpush.bf16.msra.mxu0 %v10594
    %10800 = vmatmul.bf16.gmra.mxu0 %v10203
    %v10801 = vpop.f32.mrf.mxu0
    %v10802 = vadd.f32 %v10789, %v10801
    %v10803 = vpop.f32.mrf.mxu0
    %10804 = vdwg.mxu0
    %v10805 = vadd.f32 %v10204, %v10724
    %v10806 = vadd.f32 %v10205, %v10763
    %v10807 = vadd.f32 %v10206, %v10802
    %10808 = vst [vmem:[#allocation3] sm:$0xff] %v10805
    %10809 = vst [vmem:[#allocation3 + $0x8] sm:$0xff] %v10806
    %10810 = vst [vmem:[#allocation3 + $0x10] sm:$0xff] %v10807
    %v10811 = vld [vmem:[#allocation3] sm:$0xff]
    %v10812 = vld [vmem:[#allocation3 + $0x8] sm:$0xff]
    %v10813 = vld [vmem:[#allocation3 + $0x10] sm:$0xff]
    %v10814 = vmax.f32 %v10811, 0.0
    %v10815 = vmax.f32 %v10812, 0.0
    %v10816 = vmax.f32 %v10813, 0.0
    %v10817 = vpack.c.bf16 %v10814, %v10814
    %v10818 = vpack.c.bf16 %v10815, %v10815
    %v10819 = vpack.c.bf16 %v10816, %v10816
    %v10820 = vld [vmem:[#allocation17] sm:$0xf]
    %v10821 = vld [vmem:[#allocation17 + $0x4] sm:$0xf]
    %v10822 = vld [vmem:[#allocation17 + $0x8] sm:$0xf]
    %v10823 = vld [vmem:[#allocation17 + $0xc] sm:$0xf]
    %v10824 = vld [vmem:[#allocation17 + $0x10] sm:$0xf]
    %v10825 = vld [vmem:[#allocation17 + $0x14] sm:$0xf]
    %v10826 = vld [vmem:[#allocation17 + $0x18] sm:$0xf]
    %v10827 = vld [vmem:[#allocation17 + $0x1c] sm:$0xf]
    %v10828 = vld [vmem:[#allocation18] sm:$0xf]
    %v10829 = vld [vmem:[#allocation18 + $0x4] sm:$0xf]
    %v10830 = vld [vmem:[#allocation18 + $0x8] sm:$0xf]
    %v10831 = vld [vmem:[#allocation18 + $0xc] sm:$0xf]
    %v10832 = vld [vmem:[#allocation18 + $0x10] sm:$0xf]
    %v10833 = vld [vmem:[#allocation18 + $0x14] sm:$0xf]
    %v10834 = vld [vmem:[#allocation18 + $0x18] sm:$0xf]
    %v10835 = vld [vmem:[#allocation18 + $0x1c] sm:$0xf]
    %v10836 = vld [vmem:[#allocation20] sm:$0xf]
    %v10837 = vld [vmem:[#allocation20 + $0x4] sm:$0xf]
    %v10838 = vld [vmem:[#allocation20 + $0x8] sm:$0xf]
    %v10839 = vld [vmem:[#allocation20 + $0xc] sm:$0xf]
    %v10840 = vld [vmem:[#allocation20 + $0x10] sm:$0xf]
    %v10841 = vld [vmem:[#allocation20 + $0x14] sm:$0xf]
    %v10842 = vld [vmem:[#allocation20 + $0x18] sm:$0xf]
    %v10843 = vld [vmem:[#allocation20 + $0x1c] sm:$0xf]
    %v10844 = vld [vmem:[#allocation21] sm:$0x1]
    %v10846 = vperm.slane %v10844, 0
    %v10848 = vld [vmem:[#allocation23] sm:$0x1]
    %v10850 = vperm.slane %v10848, 0
    %v10852 = vld [vmem:[%s9] sm:$0xf]
    %v10853 = vld [vmem:[%s9 + $0x4] sm:$0xf]
    %v10854 = vld [vmem:[%s9 + $0x8] sm:$0xf]
    %v10855 = vld [vmem:[%s9 + $0xc] sm:$0xf]
    %v10856 = vld [vmem:[%s9 + $0x10] sm:$0xf]
    %v10857 = vld [vmem:[%s9 + $0x14] sm:$0xf]
    %v10858 = vld [vmem:[%s9 + $0x18] sm:$0xf]
    %v10859 = vld [vmem:[%s9 + $0x1c] sm:$0xf]
    %v10860 = vld [vmem:[%s9 + $0x20] sm:$0xf]
    %v10861 = vld [vmem:[%s9 + $0x24] sm:$0xf]
    %v10862 = vld [vmem:[%s9 + $0x28] sm:$0xf]
    %v10863 = vld [vmem:[%s9 + $0x2c] sm:$0xf]
    %v10864 = vld [vmem:[%s9 + $0x30] sm:$0xf]
    %v10865 = vld [vmem:[%s9 + $0x34] sm:$0xf]
    %v10866 = vld [vmem:[%s9 + $0x38] sm:$0xf]
    %v10867 = vld [vmem:[%s9 + $0x3c] sm:$0xf]
    %v10868 = vld [vmem:[%s9 + $0x40] sm:$0xf]
    %v10869 = vld [vmem:[%s9 + $0x44] sm:$0xf]
    %v10870 = vld [vmem:[%s9 + $0x48] sm:$0xf]
    %v10871 = vld [vmem:[%s9 + $0x4c] sm:$0xf]
    %v10872 = vld [vmem:[%s9 + $0x50] sm:$0xf]
    %v10873 = vld [vmem:[%s9 + $0x54] sm:$0xf]
    %v10874 = vld [vmem:[%s9 + $0x58] sm:$0xf]
    %v10875 = vld [vmem:[%s9 + $0x5c] sm:$0xf]
    %v10876 = vld [vmem:[%s9 + $0x60] sm:$0xf]
    %v10877 = vld [vmem:[%s9 + $0x64] sm:$0xf]
    %v10878 = vld [vmem:[%s9 + $0x68] sm:$0xf]
    %v10879 = vld [vmem:[%s9 + $0x6c] sm:$0xf]
    %v10880 = vld [vmem:[%s9 + $0x70] sm:$0xf]
    %v10881 = vld [vmem:[%s9 + $0x74] sm:$0xf]
    %v10882 = vld [vmem:[%s9 + $0x78] sm:$0xf]
    %v10883 = vld [vmem:[%s9 + $0x7c] sm:$0xf]
    %v10884 = vld [vmem:[%s9 + $0x80] sm:$0xf]
    %v10885 = vld [vmem:[%s9 + $0x84] sm:$0xf]
    %v10886 = vld [vmem:[%s9 + $0x88] sm:$0xf]
    %v10887 = vld [vmem:[%s9 + $0x8c] sm:$0xf]
    %v10888 = vld [vmem:[%s9 + $0x90] sm:$0xf]
    %v10889 = vld [vmem:[%s9 + $0x94] sm:$0xf]
    %v10890 = vld [vmem:[%s9 + $0x98] sm:$0xf]
    %v10891 = vld [vmem:[%s9 + $0x9c] sm:$0xf]
    %v10892 = vld [vmem:[%s9 + $0xa0] sm:$0xf]
    %v10893 = vld [vmem:[%s9 + $0xa4] sm:$0xf]
    %v10894 = vld [vmem:[%s9 + $0xa8] sm:$0xf]
    %v10895 = vld [vmem:[%s9 + $0xac] sm:$0xf]
    %v10896 = vld [vmem:[%s9 + $0xb0] sm:$0xf]
    %v10897 = vld [vmem:[%s9 + $0xb4] sm:$0xf]
    %v10898 = vld [vmem:[%s9 + $0xb8] sm:$0xf]
    %v10899 = vld [vmem:[%s9 + $0xbc] sm:$0xf]
    %v10948 = vunpack.c.l.b16 %v10852
    %v10949 = vunpack.c.l.b16 %v10853
    %v10950 = vunpack.c.l.b16 %v10854
    %v10951 = vunpack.c.l.b16 %v10855
    %v10952 = vunpack.c.l.b16 %v10856
    %v10953 = vunpack.c.l.b16 %v10857
    %v10954 = vunpack.c.l.b16 %v10858
    %v10955 = vunpack.c.l.b16 %v10859
    %v10956 = vunpack.c.l.b16 %v10860
    %v10957 = vunpack.c.l.b16 %v10861
    %v10958 = vunpack.c.l.b16 %v10862
    %v10959 = vunpack.c.l.b16 %v10863
    %v10960 = vunpack.c.l.b16 %v10864
    %v10961 = vunpack.c.l.b16 %v10865
    %v10962 = vunpack.c.l.b16 %v10866
    %v10963 = vunpack.c.l.b16 %v10867
    %v10964 = vunpack.c.l.b16 %v10868
    %v10965 = vunpack.c.l.b16 %v10869
    %v10966 = vunpack.c.l.b16 %v10870
    %v10967 = vunpack.c.l.b16 %v10871
    %v10968 = vunpack.c.l.b16 %v10872
    %v10969 = vunpack.c.l.b16 %v10873
    %v10970 = vunpack.c.l.b16 %v10874
    %v10971 = vunpack.c.l.b16 %v10875
    %v10972 = vunpack.c.l.b16 %v10876
    %v10973 = vunpack.c.l.b16 %v10877
    %v10974 = vunpack.c.l.b16 %v10878
    %v10975 = vunpack.c.l.b16 %v10879
    %v10976 = vunpack.c.l.b16 %v10880
    %v10977 = vunpack.c.l.b16 %v10881
    %v10978 = vunpack.c.l.b16 %v10882
    %v10979 = vunpack.c.l.b16 %v10883
    %v10980 = vunpack.c.l.b16 %v10884
    %v10981 = vunpack.c.l.b16 %v10885
    %v10982 = vunpack.c.l.b16 %v10886
    %v10983 = vunpack.c.l.b16 %v10887
    %v10984 = vunpack.c.l.b16 %v10888
    %v10985 = vunpack.c.l.b16 %v10889
    %v10986 = vunpack.c.l.b16 %v10890
    %v10987 = vunpack.c.l.b16 %v10891
    %v10988 = vunpack.c.l.b16 %v10892
    %v10989 = vunpack.c.l.b16 %v10893
    %v10990 = vunpack.c.l.b16 %v10894
    %v10991 = vunpack.c.l.b16 %v10895
    %v10992 = vunpack.c.l.b16 %v10896
    %v10993 = vunpack.c.l.b16 %v10897
    %v10994 = vunpack.c.l.b16 %v10898
    %v10995 = vunpack.c.l.b16 %v10899
    %v10996 = vpack.c.b16 %v10949, %v10948
    %v10997 = vpack.c.b16 %v10951, %v10950
    %v10998 = vpack.c.b16 %v10953, %v10952
    %v10999 = vpack.c.b16 %v10955, %v10954
    %v11000 = vpack.c.b16 %v10957, %v10956
    %v11001 = vpack.c.b16 %v10959, %v10958
    %v11002 = vpack.c.b16 %v10961, %v10960
    %v11003 = vpack.c.b16 %v10963, %v10962
    %v11004 = vpack.c.b16 %v10965, %v10964
    %v11005 = vpack.c.b16 %v10967, %v10966
    %v11006 = vpack.c.b16 %v10969, %v10968
    %v11007 = vpack.c.b16 %v10971, %v10970
    %v11008 = vpack.c.b16 %v10973, %v10972
    %v11009 = vpack.c.b16 %v10975, %v10974
    %v11010 = vpack.c.b16 %v10977, %v10976
    %v11011 = vpack.c.b16 %v10979, %v10978
    %v11012 = vpack.c.b16 %v10981, %v10980
    %v11013 = vpack.c.b16 %v10983, %v10982
    %v11014 = vpack.c.b16 %v10985, %v10984
    %v11015 = vpack.c.b16 %v10987, %v10986
    %v11016 = vpack.c.b16 %v10989, %v10988
    %v11017 = vpack.c.b16 %v10991, %v10990
    %v11018 = vpack.c.b16 %v10993, %v10992
    %v11019 = vpack.c.b16 %v10995, %v10994
    %11044 = vmatpush.bf16.msra.mxu0 %v11003
    %11045 = vmatpush.bf16.msra.mxu0 %v11002
    %11046 = vmatpush.bf16.msra.mxu0 %v11001
    %11047 = vmatpush.bf16.msra.mxu0 %v11000
    %11048 = vmatpush.bf16.msra.mxu0 %v10999
    %11049 = vmatpush.bf16.msra.mxu0 %v10998
    %11050 = vmatpush.bf16.msra.mxu0 %v10997
    %11051 = vmatpush.bf16.msra.mxu0 %v10996
    %11052 = vmatmul.bf16.gmra.mxu0 %v10817
    %v11053 = vpop.f32.mrf.mxu0
    %v11054 = vadd.f32 %v10846, %v11053
    %v11055 = vpop.f32.mrf.mxu0
    %11056 = vdwg.mxu0
    %11057 = vmatpush.bf16.msra.mxu0 %v11011
    %11058 = vmatpush.bf16.msra.mxu0 %v11010
    %11059 = vmatpush.bf16.msra.mxu0 %v11009
    %11060 = vmatpush.bf16.msra.mxu0 %v11008
    %11061 = vmatpush.bf16.msra.mxu0 %v11007
    %11062 = vmatpush.bf16.msra.mxu0 %v11006
    %11063 = vmatpush.bf16.msra.mxu0 %v11005
    %11064 = vmatpush.bf16.msra.mxu0 %v11004
    %11065 = vmatmul.bf16.gmra.mxu0 %v10818
    %v11066 = vpop.f32.mrf.mxu0
    %v11067 = vadd.f32 %v11054, %v11066
    %v11068 = vpop.f32.mrf.mxu0
    %11069 = vdwg.mxu0
    %11070 = vmatpush.bf16.msra.mxu0 %v11019
    %11071 = vmatpush.bf16.msra.mxu0 %v11018
    %11072 = vmatpush.bf16.msra.mxu0 %v11017
    %11073 = vmatpush.bf16.msra.mxu0 %v11016
    %11074 = vmatpush.bf16.msra.mxu0 %v11015
    %11075 = vmatpush.bf16.msra.mxu0 %v11014
    %11076 = vmatpush.bf16.msra.mxu0 %v11013
    %11077 = vmatpush.bf16.msra.mxu0 %v11012
    %11078 = vmatmul.bf16.gmra.mxu0 %v10819
    %v11079 = vpop.f32.mrf.mxu0
    %v11080 = vadd.f32 %v11067, %v11079
    %v11081 = vpop.f32.mrf.mxu0
    %11082 = vdwg.mxu0
    %s11083 = scalar_lea.vmem %s9, 192
    %v11084 = vld [vmem:[%s11083] sm:$0xf]
    %v11085 = vld [vmem:[%s11083 + $0x4] sm:$0xf]
    %v11086 = vld [vmem:[%s11083 + $0x8] sm:$0xf]
    %v11087 = vld [vmem:[%s11083 + $0xc] sm:$0xf]
    %v11088 = vld [vmem:[%s11083 + $0x10] sm:$0xf]
    %v11089 = vld [vmem:[%s11083 + $0x14] sm:$0xf]
    %v11090 = vld [vmem:[%s11083 + $0x18] sm:$0xf]
    %v11091 = vld [vmem:[%s11083 + $0x1c] sm:$0xf]
    %v11092 = vld [vmem:[%s11083 + $0x20] sm:$0xf]
    %v11093 = vld [vmem:[%s11083 + $0x24] sm:$0xf]
    %v11094 = vld [vmem:[%s11083 + $0x28] sm:$0xf]
    %v11095 = vld [vmem:[%s11083 + $0x2c] sm:$0xf]
    %v11096 = vld [vmem:[%s11083 + $0x30] sm:$0xf]
    %v11097 = vld [vmem:[%s11083 + $0x34] sm:$0xf]
    %v11098 = vld [vmem:[%s11083 + $0x38] sm:$0xf]
    %v11099 = vld [vmem:[%s11083 + $0x3c] sm:$0xf]
    %v11100 = vld [vmem:[%s11083 + $0x40] sm:$0xf]
    %v11101 = vld [vmem:[%s11083 + $0x44] sm:$0xf]
    %v11102 = vld [vmem:[%s11083 + $0x48] sm:$0xf]
    %v11103 = vld [vmem:[%s11083 + $0x4c] sm:$0xf]
    %v11104 = vld [vmem:[%s11083 + $0x50] sm:$0xf]
    %v11105 = vld [vmem:[%s11083 + $0x54] sm:$0xf]
    %v11106 = vld [vmem:[%s11083 + $0x58] sm:$0xf]
    %v11107 = vld [vmem:[%s11083 + $0x5c] sm:$0xf]
    %v11108 = vld [vmem:[%s11083 + $0x60] sm:$0xf]
    %v11109 = vld [vmem:[%s11083 + $0x64] sm:$0xf]
    %v11110 = vld [vmem:[%s11083 + $0x68] sm:$0xf]
    %v11111 = vld [vmem:[%s11083 + $0x6c] sm:$0xf]
    %v11112 = vld [vmem:[%s11083 + $0x70] sm:$0xf]
    %v11113 = vld [vmem:[%s11083 + $0x74] sm:$0xf]
    %v11114 = vld [vmem:[%s11083 + $0x78] sm:$0xf]
    %v11115 = vld [vmem:[%s11083 + $0x7c] sm:$0xf]
    %v11116 = vld [vmem:[%s11083 + $0x80] sm:$0xf]
    %v11117 = vld [vmem:[%s11083 + $0x84] sm:$0xf]
    %v11118 = vld [vmem:[%s11083 + $0x88] sm:$0xf]
    %v11119 = vld [vmem:[%s11083 + $0x8c] sm:$0xf]
    %v11120 = vld [vmem:[%s11083 + $0x90] sm:$0xf]
    %v11121 = vld [vmem:[%s11083 + $0x94] sm:$0xf]
    %v11122 = vld [vmem:[%s11083 + $0x98] sm:$0xf]
    %v11123 = vld [vmem:[%s11083 + $0x9c] sm:$0xf]
    %v11124 = vld [vmem:[%s11083 + $0xa0] sm:$0xf]
    %v11125 = vld [vmem:[%s11083 + $0xa4] sm:$0xf]
    %v11126 = vld [vmem:[%s11083 + $0xa8] sm:$0xf]
    %v11127 = vld [vmem:[%s11083 + $0xac] sm:$0xf]
    %v11128 = vld [vmem:[%s11083 + $0xb0] sm:$0xf]
    %v11129 = vld [vmem:[%s11083 + $0xb4] sm:$0xf]
    %v11130 = vld [vmem:[%s11083 + $0xb8] sm:$0xf]
    %v11131 = vld [vmem:[%s11083 + $0xbc] sm:$0xf]
    %v11180 = vunpack.c.l.b16 %v11084
    %v11181 = vunpack.c.l.b16 %v11085
    %v11182 = vunpack.c.l.b16 %v11086
    %v11183 = vunpack.c.l.b16 %v11087
    %v11184 = vunpack.c.l.b16 %v11088
    %v11185 = vunpack.c.l.b16 %v11089
    %v11186 = vunpack.c.l.b16 %v11090
    %v11187 = vunpack.c.l.b16 %v11091
    %v11188 = vunpack.c.l.b16 %v11092
    %v11189 = vunpack.c.l.b16 %v11093
    %v11190 = vunpack.c.l.b16 %v11094
    %v11191 = vunpack.c.l.b16 %v11095
    %v11192 = vunpack.c.l.b16 %v11096
    %v11193 = vunpack.c.l.b16 %v11097
    %v11194 = vunpack.c.l.b16 %v11098
    %v11195 = vunpack.c.l.b16 %v11099
    %v11196 = vunpack.c.l.b16 %v11100
    %v11197 = vunpack.c.l.b16 %v11101
    %v11198 = vunpack.c.l.b16 %v11102
    %v11199 = vunpack.c.l.b16 %v11103
    %v11200 = vunpack.c.l.b16 %v11104
    %v11201 = vunpack.c.l.b16 %v11105
    %v11202 = vunpack.c.l.b16 %v11106
    %v11203 = vunpack.c.l.b16 %v11107
    %v11204 = vunpack.c.l.b16 %v11108
    %v11205 = vunpack.c.l.b16 %v11109
    %v11206 = vunpack.c.l.b16 %v11110
    %v11207 = vunpack.c.l.b16 %v11111
    %v11208 = vunpack.c.l.b16 %v11112
    %v11209 = vunpack.c.l.b16 %v11113
    %v11210 = vunpack.c.l.b16 %v11114
    %v11211 = vunpack.c.l.b16 %v11115
    %v11212 = vunpack.c.l.b16 %v11116
    %v11213 = vunpack.c.l.b16 %v11117
    %v11214 = vunpack.c.l.b16 %v11118
    %v11215 = vunpack.c.l.b16 %v11119
    %v11216 = vunpack.c.l.b16 %v11120
    %v11217 = vunpack.c.l.b16 %v11121
    %v11218 = vunpack.c.l.b16 %v11122
    %v11219 = vunpack.c.l.b16 %v11123
    %v11220 = vunpack.c.l.b16 %v11124
    %v11221 = vunpack.c.l.b16 %v11125
    %v11222 = vunpack.c.l.b16 %v11126
    %v11223 = vunpack.c.l.b16 %v11127
    %v11224 = vunpack.c.l.b16 %v11128
    %v11225 = vunpack.c.l.b16 %v11129
    %v11226 = vunpack.c.l.b16 %v11130
    %v11227 = vunpack.c.l.b16 %v11131
    %v11228 = vpack.c.b16 %v11181, %v11180
    %v11229 = vpack.c.b16 %v11183, %v11182
    %v11230 = vpack.c.b16 %v11185, %v11184
    %v11231 = vpack.c.b16 %v11187, %v11186
    %v11232 = vpack.c.b16 %v11189, %v11188
    %v11233 = vpack.c.b16 %v11191, %v11190
    %v11234 = vpack.c.b16 %v11193, %v11192
    %v11235 = vpack.c.b16 %v11195, %v11194
    %v11236 = vpack.c.b16 %v11197, %v11196
    %v11237 = vpack.c.b16 %v11199, %v11198
    %v11238 = vpack.c.b16 %v11201, %v11200
    %v11239 = vpack.c.b16 %v11203, %v11202
    %v11240 = vpack.c.b16 %v11205, %v11204
    %v11241 = vpack.c.b16 %v11207, %v11206
    %v11242 = vpack.c.b16 %v11209, %v11208
    %v11243 = vpack.c.b16 %v11211, %v11210
    %v11244 = vpack.c.b16 %v11213, %v11212
    %v11245 = vpack.c.b16 %v11215, %v11214
    %v11246 = vpack.c.b16 %v11217, %v11216
    %v11247 = vpack.c.b16 %v11219, %v11218
    %v11248 = vpack.c.b16 %v11221, %v11220
    %v11249 = vpack.c.b16 %v11223, %v11222
    %v11250 = vpack.c.b16 %v11225, %v11224
    %v11251 = vpack.c.b16 %v11227, %v11226
    %11276 = vmatpush.bf16.msra.mxu0 %v11235
    %11277 = vmatpush.bf16.msra.mxu0 %v11234
    %11278 = vmatpush.bf16.msra.mxu0 %v11233
    %11279 = vmatpush.bf16.msra.mxu0 %v11232
    %11280 = vmatpush.bf16.msra.mxu0 %v11231
    %11281 = vmatpush.bf16.msra.mxu0 %v11230
    %11282 = vmatpush.bf16.msra.mxu0 %v11229
    %11283 = vmatpush.bf16.msra.mxu0 %v11228
    %11284 = vmatmul.bf16.gmra.mxu0 %v10817
    %v11285 = vpop.f32.mrf.mxu0
    %v11286 = vadd.f32 %v10846, %v11285
    %v11287 = vpop.f32.mrf.mxu0
    %11288 = vdwg.mxu0
    %11289 = vmatpush.bf16.msra.mxu0 %v11243
    %11290 = vmatpush.bf16.msra.mxu0 %v11242
    %11291 = vmatpush.bf16.msra.mxu0 %v11241
    %11292 = vmatpush.bf16.msra.mxu0 %v11240
    %11293 = vmatpush.bf16.msra.mxu0 %v11239
    %11294 = vmatpush.bf16.msra.mxu0 %v11238
    %11295 = vmatpush.bf16.msra.mxu0 %v11237
    %11296 = vmatpush.bf16.msra.mxu0 %v11236
    %11297 = vmatmul.bf16.gmra.mxu0 %v10818
    %v11298 = vpop.f32.mrf.mxu0
    %v11299 = vadd.f32 %v11286, %v11298
    %v11300 = vpop.f32.mrf.mxu0
    %11301 = vdwg.mxu0
    %11302 = vmatpush.bf16.msra.mxu0 %v11251
    %11303 = vmatpush.bf16.msra.mxu0 %v11250
    %11304 = vmatpush.bf16.msra.mxu0 %v11249
    %11305 = vmatpush.bf16.msra.mxu0 %v11248
    %11306 = vmatpush.bf16.msra.mxu0 %v11247
    %11307 = vmatpush.bf16.msra.mxu0 %v11246
    %11308 = vmatpush.bf16.msra.mxu0 %v11245
    %11309 = vmatpush.bf16.msra.mxu0 %v11244
    %11310 = vmatmul.bf16.gmra.mxu0 %v10819
    %v11311 = vpop.f32.mrf.mxu0
    %v11312 = vadd.f32 %v11299, %v11311
    %v11313 = vpop.f32.mrf.mxu0
    %11314 = vdwg.mxu0
    %s11315 = scalar_lea.vmem %s9, 384
    %v11316 = vld [vmem:[%s11315] sm:$0xf]
    %v11317 = vld [vmem:[%s11315 + $0x4] sm:$0xf]
    %v11318 = vld [vmem:[%s11315 + $0x8] sm:$0xf]
    %v11319 = vld [vmem:[%s11315 + $0xc] sm:$0xf]
    %v11320 = vld [vmem:[%s11315 + $0x10] sm:$0xf]
    %v11321 = vld [vmem:[%s11315 + $0x14] sm:$0xf]
    %v11322 = vld [vmem:[%s11315 + $0x18] sm:$0xf]
    %v11323 = vld [vmem:[%s11315 + $0x1c] sm:$0xf]
    %v11324 = vld [vmem:[%s11315 + $0x20] sm:$0xf]
    %v11325 = vld [vmem:[%s11315 + $0x24] sm:$0xf]
    %v11326 = vld [vmem:[%s11315 + $0x28] sm:$0xf]
    %v11327 = vld [vmem:[%s11315 + $0x2c] sm:$0xf]
    %v11328 = vld [vmem:[%s11315 + $0x30] sm:$0xf]
    %v11329 = vld [vmem:[%s11315 + $0x34] sm:$0xf]
    %v11330 = vld [vmem:[%s11315 + $0x38] sm:$0xf]
    %v11331 = vld [vmem:[%s11315 + $0x3c] sm:$0xf]
    %v11332 = vld [vmem:[%s11315 + $0x40] sm:$0xf]
    %v11333 = vld [vmem:[%s11315 + $0x44] sm:$0xf]
    %v11334 = vld [vmem:[%s11315 + $0x48] sm:$0xf]
    %v11335 = vld [vmem:[%s11315 + $0x4c] sm:$0xf]
    %v11336 = vld [vmem:[%s11315 + $0x50] sm:$0xf]
    %v11337 = vld [vmem:[%s11315 + $0x54] sm:$0xf]
    %v11338 = vld [vmem:[%s11315 + $0x58] sm:$0xf]
    %v11339 = vld [vmem:[%s11315 + $0x5c] sm:$0xf]
    %v11340 = vld [vmem:[%s11315 + $0x60] sm:$0xf]
    %v11341 = vld [vmem:[%s11315 + $0x64] sm:$0xf]
    %v11342 = vld [vmem:[%s11315 + $0x68] sm:$0xf]
    %v11343 = vld [vmem:[%s11315 + $0x6c] sm:$0xf]
    %v11344 = vld [vmem:[%s11315 + $0x70] sm:$0xf]
    %v11345 = vld [vmem:[%s11315 + $0x74] sm:$0xf]
    %v11346 = vld [vmem:[%s11315 + $0x78] sm:$0xf]
    %v11347 = vld [vmem:[%s11315 + $0x7c] sm:$0xf]
    %v11348 = vld [vmem:[%s11315 + $0x80] sm:$0xf]
    %v11349 = vld [vmem:[%s11315 + $0x84] sm:$0xf]
    %v11350 = vld [vmem:[%s11315 + $0x88] sm:$0xf]
    %v11351 = vld [vmem:[%s11315 + $0x8c] sm:$0xf]
    %v11352 = vld [vmem:[%s11315 + $0x90] sm:$0xf]
    %v11353 = vld [vmem:[%s11315 + $0x94] sm:$0xf]
    %v11354 = vld [vmem:[%s11315 + $0x98] sm:$0xf]
    %v11355 = vld [vmem:[%s11315 + $0x9c] sm:$0xf]
    %v11356 = vld [vmem:[%s11315 + $0xa0] sm:$0xf]
    %v11357 = vld [vmem:[%s11315 + $0xa4] sm:$0xf]
    %v11358 = vld [vmem:[%s11315 + $0xa8] sm:$0xf]
    %v11359 = vld [vmem:[%s11315 + $0xac] sm:$0xf]
    %v11360 = vld [vmem:[%s11315 + $0xb0] sm:$0xf]
    %v11361 = vld [vmem:[%s11315 + $0xb4] sm:$0xf]
    %v11362 = vld [vmem:[%s11315 + $0xb8] sm:$0xf]
    %v11363 = vld [vmem:[%s11315 + $0xbc] sm:$0xf]
    %v11412 = vunpack.c.l.b16 %v11316
    %v11413 = vunpack.c.l.b16 %v11317
    %v11414 = vunpack.c.l.b16 %v11318
    %v11415 = vunpack.c.l.b16 %v11319
    %v11416 = vunpack.c.l.b16 %v11320
    %v11417 = vunpack.c.l.b16 %v11321
    %v11418 = vunpack.c.l.b16 %v11322
    %v11419 = vunpack.c.l.b16 %v11323
    %v11420 = vunpack.c.l.b16 %v11324
    %v11421 = vunpack.c.l.b16 %v11325
    %v11422 = vunpack.c.l.b16 %v11326
    %v11423 = vunpack.c.l.b16 %v11327
    %v11424 = vunpack.c.l.b16 %v11328
    %v11425 = vunpack.c.l.b16 %v11329
    %v11426 = vunpack.c.l.b16 %v11330
    %v11427 = vunpack.c.l.b16 %v11331
    %v11428 = vunpack.c.l.b16 %v11332
    %v11429 = vunpack.c.l.b16 %v11333
    %v11430 = vunpack.c.l.b16 %v11334
    %v11431 = vunpack.c.l.b16 %v11335
    %v11432 = vunpack.c.l.b16 %v11336
    %v11433 = vunpack.c.l.b16 %v11337
    %v11434 = vunpack.c.l.b16 %v11338
    %v11435 = vunpack.c.l.b16 %v11339
    %v11436 = vunpack.c.l.b16 %v11340
    %v11437 = vunpack.c.l.b16 %v11341
    %v11438 = vunpack.c.l.b16 %v11342
    %v11439 = vunpack.c.l.b16 %v11343
    %v11440 = vunpack.c.l.b16 %v11344
    %v11441 = vunpack.c.l.b16 %v11345
    %v11442 = vunpack.c.l.b16 %v11346
    %v11443 = vunpack.c.l.b16 %v11347
    %v11444 = vunpack.c.l.b16 %v11348
    %v11445 = vunpack.c.l.b16 %v11349
    %v11446 = vunpack.c.l.b16 %v11350
    %v11447 = vunpack.c.l.b16 %v11351
    %v11448 = vunpack.c.l.b16 %v11352
    %v11449 = vunpack.c.l.b16 %v11353
    %v11450 = vunpack.c.l.b16 %v11354
    %v11451 = vunpack.c.l.b16 %v11355
    %v11452 = vunpack.c.l.b16 %v11356
    %v11453 = vunpack.c.l.b16 %v11357
    %v11454 = vunpack.c.l.b16 %v11358
    %v11455 = vunpack.c.l.b16 %v11359
    %v11456 = vunpack.c.l.b16 %v11360
    %v11457 = vunpack.c.l.b16 %v11361
    %v11458 = vunpack.c.l.b16 %v11362
    %v11459 = vunpack.c.l.b16 %v11363
    %v11460 = vpack.c.b16 %v11413, %v11412
    %v11461 = vpack.c.b16 %v11415, %v11414
    %v11462 = vpack.c.b16 %v11417, %v11416
    %v11463 = vpack.c.b16 %v11419, %v11418
    %v11464 = vpack.c.b16 %v11421, %v11420
    %v11465 = vpack.c.b16 %v11423, %v11422
    %v11466 = vpack.c.b16 %v11425, %v11424
    %v11467 = vpack.c.b16 %v11427, %v11426
    %v11468 = vpack.c.b16 %v11429, %v11428
    %v11469 = vpack.c.b16 %v11431, %v11430
    %v11470 = vpack.c.b16 %v11433, %v11432
    %v11471 = vpack.c.b16 %v11435, %v11434
    %v11472 = vpack.c.b16 %v11437, %v11436
    %v11473 = vpack.c.b16 %v11439, %v11438
    %v11474 = vpack.c.b16 %v11441, %v11440
    %v11475 = vpack.c.b16 %v11443, %v11442
    %v11476 = vpack.c.b16 %v11445, %v11444
    %v11477 = vpack.c.b16 %v11447, %v11446
    %v11478 = vpack.c.b16 %v11449, %v11448
    %v11479 = vpack.c.b16 %v11451, %v11450
    %v11480 = vpack.c.b16 %v11453, %v11452
    %v11481 = vpack.c.b16 %v11455, %v11454
    %v11482 = vpack.c.b16 %v11457, %v11456
    %v11483 = vpack.c.b16 %v11459, %v11458
    %11508 = vmatpush.bf16.msra.mxu0 %v11467
    %11509 = vmatpush.bf16.msra.mxu0 %v11466
    %11510 = vmatpush.bf16.msra.mxu0 %v11465
    %11511 = vmatpush.bf16.msra.mxu0 %v11464
    %11512 = vmatpush.bf16.msra.mxu0 %v11463
    %11513 = vmatpush.bf16.msra.mxu0 %v11462
    %11514 = vmatpush.bf16.msra.mxu0 %v11461
    %11515 = vmatpush.bf16.msra.mxu0 %v11460
    %11516 = vmatmul.bf16.gmra.mxu0 %v10817
    %v11517 = vpop.f32.mrf.mxu0
    %v11518 = vadd.f32 %v10846, %v11517
    %v11519 = vpop.f32.mrf.mxu0
    %11520 = vdwg.mxu0
    %11521 = vmatpush.bf16.msra.mxu0 %v11475
    %11522 = vmatpush.bf16.msra.mxu0 %v11474
    %11523 = vmatpush.bf16.msra.mxu0 %v11473
    %11524 = vmatpush.bf16.msra.mxu0 %v11472
    %11525 = vmatpush.bf16.msra.mxu0 %v11471
    %11526 = vmatpush.bf16.msra.mxu0 %v11470
    %11527 = vmatpush.bf16.msra.mxu0 %v11469
    %11528 = vmatpush.bf16.msra.mxu0 %v11468
    %11529 = vmatmul.bf16.gmra.mxu0 %v10818
    %v11530 = vpop.f32.mrf.mxu0
    %v11531 = vadd.f32 %v11518, %v11530
    %v11532 = vpop.f32.mrf.mxu0
    %11533 = vdwg.mxu0
    %11534 = vmatpush.bf16.msra.mxu0 %v11483
    %11535 = vmatpush.bf16.msra.mxu0 %v11482
    %11536 = vmatpush.bf16.msra.mxu0 %v11481
    %11537 = vmatpush.bf16.msra.mxu0 %v11480
    %11538 = vmatpush.bf16.msra.mxu0 %v11479
    %11539 = vmatpush.bf16.msra.mxu0 %v11478
    %11540 = vmatpush.bf16.msra.mxu0 %v11477
    %11541 = vmatpush.bf16.msra.mxu0 %v11476
    %11542 = vmatmul.bf16.gmra.mxu0 %v10819
    %v11543 = vpop.f32.mrf.mxu0
    %v11544 = vadd.f32 %v11531, %v11543
    %v11545 = vpop.f32.mrf.mxu0
    %11546 = vdwg.mxu0
    %s11547 = scalar_lea.vmem %s9, 576
    %v11548 = vld [vmem:[%s11547] sm:$0xf]
    %v11549 = vld [vmem:[%s11547 + $0x4] sm:$0xf]
    %v11550 = vld [vmem:[%s11547 + $0x8] sm:$0xf]
    %v11551 = vld [vmem:[%s11547 + $0xc] sm:$0xf]
    %v11552 = vld [vmem:[%s11547 + $0x10] sm:$0xf]
    %v11553 = vld [vmem:[%s11547 + $0x14] sm:$0xf]
    %v11554 = vld [vmem:[%s11547 + $0x18] sm:$0xf]
    %v11555 = vld [vmem:[%s11547 + $0x1c] sm:$0xf]
    %v11556 = vld [vmem:[%s11547 + $0x20] sm:$0xf]
    %v11557 = vld [vmem:[%s11547 + $0x24] sm:$0xf]
    %v11558 = vld [vmem:[%s11547 + $0x28] sm:$0xf]
    %v11559 = vld [vmem:[%s11547 + $0x2c] sm:$0xf]
    %v11560 = vld [vmem:[%s11547 + $0x30] sm:$0xf]
    %v11561 = vld [vmem:[%s11547 + $0x34] sm:$0xf]
    %v11562 = vld [vmem:[%s11547 + $0x38] sm:$0xf]
    %v11563 = vld [vmem:[%s11547 + $0x3c] sm:$0xf]
    %v11564 = vld [vmem:[%s11547 + $0x40] sm:$0xf]
    %v11565 = vld [vmem:[%s11547 + $0x44] sm:$0xf]
    %v11566 = vld [vmem:[%s11547 + $0x48] sm:$0xf]
    %v11567 = vld [vmem:[%s11547 + $0x4c] sm:$0xf]
    %v11568 = vld [vmem:[%s11547 + $0x50] sm:$0xf]
    %v11569 = vld [vmem:[%s11547 + $0x54] sm:$0xf]
    %v11570 = vld [vmem:[%s11547 + $0x58] sm:$0xf]
    %v11571 = vld [vmem:[%s11547 + $0x5c] sm:$0xf]
    %v11572 = vld [vmem:[%s11547 + $0x60] sm:$0xf]
    %v11573 = vld [vmem:[%s11547 + $0x64] sm:$0xf]
    %v11574 = vld [vmem:[%s11547 + $0x68] sm:$0xf]
    %v11575 = vld [vmem:[%s11547 + $0x6c] sm:$0xf]
    %v11576 = vld [vmem:[%s11547 + $0x70] sm:$0xf]
    %v11577 = vld [vmem:[%s11547 + $0x74] sm:$0xf]
    %v11578 = vld [vmem:[%s11547 + $0x78] sm:$0xf]
    %v11579 = vld [vmem:[%s11547 + $0x7c] sm:$0xf]
    %v11580 = vld [vmem:[%s11547 + $0x80] sm:$0xf]
    %v11581 = vld [vmem:[%s11547 + $0x84] sm:$0xf]
    %v11582 = vld [vmem:[%s11547 + $0x88] sm:$0xf]
    %v11583 = vld [vmem:[%s11547 + $0x8c] sm:$0xf]
    %v11584 = vld [vmem:[%s11547 + $0x90] sm:$0xf]
    %v11585 = vld [vmem:[%s11547 + $0x94] sm:$0xf]
    %v11586 = vld [vmem:[%s11547 + $0x98] sm:$0xf]
    %v11587 = vld [vmem:[%s11547 + $0x9c] sm:$0xf]
    %v11588 = vld [vmem:[%s11547 + $0xa0] sm:$0xf]
    %v11589 = vld [vmem:[%s11547 + $0xa4] sm:$0xf]
    %v11590 = vld [vmem:[%s11547 + $0xa8] sm:$0xf]
    %v11591 = vld [vmem:[%s11547 + $0xac] sm:$0xf]
    %v11592 = vld [vmem:[%s11547 + $0xb0] sm:$0xf]
    %v11593 = vld [vmem:[%s11547 + $0xb4] sm:$0xf]
    %v11594 = vld [vmem:[%s11547 + $0xb8] sm:$0xf]
    %v11595 = vld [vmem:[%s11547 + $0xbc] sm:$0xf]
    %v11644 = vunpack.c.l.b16 %v11548
    %v11645 = vunpack.c.l.b16 %v11549
    %v11646 = vunpack.c.l.b16 %v11550
    %v11647 = vunpack.c.l.b16 %v11551
    %v11648 = vunpack.c.l.b16 %v11552
    %v11649 = vunpack.c.l.b16 %v11553
    %v11650 = vunpack.c.l.b16 %v11554
    %v11651 = vunpack.c.l.b16 %v11555
    %v11652 = vunpack.c.l.b16 %v11556
    %v11653 = vunpack.c.l.b16 %v11557
    %v11654 = vunpack.c.l.b16 %v11558
    %v11655 = vunpack.c.l.b16 %v11559
    %v11656 = vunpack.c.l.b16 %v11560
    %v11657 = vunpack.c.l.b16 %v11561
    %v11658 = vunpack.c.l.b16 %v11562
    %v11659 = vunpack.c.l.b16 %v11563
    %v11660 = vunpack.c.l.b16 %v11564
    %v11661 = vunpack.c.l.b16 %v11565
    %v11662 = vunpack.c.l.b16 %v11566
    %v11663 = vunpack.c.l.b16 %v11567
    %v11664 = vunpack.c.l.b16 %v11568
    %v11665 = vunpack.c.l.b16 %v11569
    %v11666 = vunpack.c.l.b16 %v11570
    %v11667 = vunpack.c.l.b16 %v11571
    %v11668 = vunpack.c.l.b16 %v11572
    %v11669 = vunpack.c.l.b16 %v11573
    %v11670 = vunpack.c.l.b16 %v11574
    %v11671 = vunpack.c.l.b16 %v11575
    %v11672 = vunpack.c.l.b16 %v11576
    %v11673 = vunpack.c.l.b16 %v11577
    %v11674 = vunpack.c.l.b16 %v11578
    %v11675 = vunpack.c.l.b16 %v11579
    %v11676 = vunpack.c.l.b16 %v11580
    %v11677 = vunpack.c.l.b16 %v11581
    %v11678 = vunpack.c.l.b16 %v11582
    %v11679 = vunpack.c.l.b16 %v11583
    %v11680 = vunpack.c.l.b16 %v11584
    %v11681 = vunpack.c.l.b16 %v11585
    %v11682 = vunpack.c.l.b16 %v11586
    %v11683 = vunpack.c.l.b16 %v11587
    %v11684 = vunpack.c.l.b16 %v11588
    %v11685 = vunpack.c.l.b16 %v11589
    %v11686 = vunpack.c.l.b16 %v11590
    %v11687 = vunpack.c.l.b16 %v11591
    %v11688 = vunpack.c.l.b16 %v11592
    %v11689 = vunpack.c.l.b16 %v11593
    %v11690 = vunpack.c.l.b16 %v11594
    %v11691 = vunpack.c.l.b16 %v11595
    %v11692 = vpack.c.b16 %v11645, %v11644
    %v11693 = vpack.c.b16 %v11647, %v11646
    %v11694 = vpack.c.b16 %v11649, %v11648
    %v11695 = vpack.c.b16 %v11651, %v11650
    %v11696 = vpack.c.b16 %v11653, %v11652
    %v11697 = vpack.c.b16 %v11655, %v11654
    %v11698 = vpack.c.b16 %v11657, %v11656
    %v11699 = vpack.c.b16 %v11659, %v11658
    %v11700 = vpack.c.b16 %v11661, %v11660
    %v11701 = vpack.c.b16 %v11663, %v11662
    %v11702 = vpack.c.b16 %v11665, %v11664
    %v11703 = vpack.c.b16 %v11667, %v11666
    %v11704 = vpack.c.b16 %v11669, %v11668
    %v11705 = vpack.c.b16 %v11671, %v11670
    %v11706 = vpack.c.b16 %v11673, %v11672
    %v11707 = vpack.c.b16 %v11675, %v11674
    %v11708 = vpack.c.b16 %v11677, %v11676
    %v11709 = vpack.c.b16 %v11679, %v11678
    %v11710 = vpack.c.b16 %v11681, %v11680
    %v11711 = vpack.c.b16 %v11683, %v11682
    %v11712 = vpack.c.b16 %v11685, %v11684
    %v11713 = vpack.c.b16 %v11687, %v11686
    %v11714 = vpack.c.b16 %v11689, %v11688
    %v11715 = vpack.c.b16 %v11691, %v11690
    %11740 = vmatpush.bf16.msra.mxu0 %v11699
    %11741 = vmatpush.bf16.msra.mxu0 %v11698
    %11742 = vmatpush.bf16.msra.mxu0 %v11697
    %11743 = vmatpush.bf16.msra.mxu0 %v11696
    %11744 = vmatpush.bf16.msra.mxu0 %v11695
    %11745 = vmatpush.bf16.msra.mxu0 %v11694
    %11746 = vmatpush.bf16.msra.mxu0 %v11693
    %11747 = vmatpush.bf16.msra.mxu0 %v11692
    %11748 = vmatmul.bf16.gmra.mxu0 %v10817
    %v11749 = vpop.f32.mrf.mxu0
    %v11750 = vadd.f32 %v10846, %v11749
    %v11751 = vpop.f32.mrf.mxu0
    %11752 = vdwg.mxu0
    %11753 = vmatpush.bf16.msra.mxu0 %v11707
    %11754 = vmatpush.bf16.msra.mxu0 %v11706
    %11755 = vmatpush.bf16.msra.mxu0 %v11705
    %11756 = vmatpush.bf16.msra.mxu0 %v11704
    %11757 = vmatpush.bf16.msra.mxu0 %v11703
    %11758 = vmatpush.bf16.msra.mxu0 %v11702
    %11759 = vmatpush.bf16.msra.mxu0 %v11701
    %11760 = vmatpush.bf16.msra.mxu0 %v11700
    %11761 = vmatmul.bf16.gmra.mxu0 %v10818
    %v11762 = vpop.f32.mrf.mxu0
    %v11763 = vadd.f32 %v11750, %v11762
    %v11764 = vpop.f32.mrf.mxu0
    %11765 = vdwg.mxu0
    %11766 = vmatpush.bf16.msra.mxu0 %v11715
    %11767 = vmatpush.bf16.msra.mxu0 %v11714
    %11768 = vmatpush.bf16.msra.mxu0 %v11713
    %11769 = vmatpush.bf16.msra.mxu0 %v11712
    %11770 = vmatpush.bf16.msra.mxu0 %v11711
    %11771 = vmatpush.bf16.msra.mxu0 %v11710
    %11772 = vmatpush.bf16.msra.mxu0 %v11709
    %11773 = vmatpush.bf16.msra.mxu0 %v11708
    %11774 = vmatmul.bf16.gmra.mxu0 %v10819
    %v11775 = vpop.f32.mrf.mxu0
    %v11776 = vadd.f32 %v11763, %v11775
    %v11777 = vpop.f32.mrf.mxu0
    %11778 = vdwg.mxu0
    %s11779 = scalar_lea.vmem %s9, 768
    %v11780 = vld [vmem:[%s11779] sm:$0xf]
    %v11781 = vld [vmem:[%s11779 + $0x4] sm:$0xf]
    %v11782 = vld [vmem:[%s11779 + $0x8] sm:$0xf]
    %v11783 = vld [vmem:[%s11779 + $0xc] sm:$0xf]
    %v11784 = vld [vmem:[%s11779 + $0x10] sm:$0xf]
    %v11785 = vld [vmem:[%s11779 + $0x14] sm:$0xf]
    %v11786 = vld [vmem:[%s11779 + $0x18] sm:$0xf]
    %v11787 = vld [vmem:[%s11779 + $0x1c] sm:$0xf]
    %v11788 = vld [vmem:[%s11779 + $0x20] sm:$0xf]
    %v11789 = vld [vmem:[%s11779 + $0x24] sm:$0xf]
    %v11790 = vld [vmem:[%s11779 + $0x28] sm:$0xf]
    %v11791 = vld [vmem:[%s11779 + $0x2c] sm:$0xf]
    %v11792 = vld [vmem:[%s11779 + $0x30] sm:$0xf]
    %v11793 = vld [vmem:[%s11779 + $0x34] sm:$0xf]
    %v11794 = vld [vmem:[%s11779 + $0x38] sm:$0xf]
    %v11795 = vld [vmem:[%s11779 + $0x3c] sm:$0xf]
    %v11796 = vld [vmem:[%s11779 + $0x40] sm:$0xf]
    %v11797 = vld [vmem:[%s11779 + $0x44] sm:$0xf]
    %v11798 = vld [vmem:[%s11779 + $0x48] sm:$0xf]
    %v11799 = vld [vmem:[%s11779 + $0x4c] sm:$0xf]
    %v11800 = vld [vmem:[%s11779 + $0x50] sm:$0xf]
    %v11801 = vld [vmem:[%s11779 + $0x54] sm:$0xf]
    %v11802 = vld [vmem:[%s11779 + $0x58] sm:$0xf]
    %v11803 = vld [vmem:[%s11779 + $0x5c] sm:$0xf]
    %v11804 = vld [vmem:[%s11779 + $0x60] sm:$0xf]
    %v11805 = vld [vmem:[%s11779 + $0x64] sm:$0xf]
    %v11806 = vld [vmem:[%s11779 + $0x68] sm:$0xf]
    %v11807 = vld [vmem:[%s11779 + $0x6c] sm:$0xf]
    %v11808 = vld [vmem:[%s11779 + $0x70] sm:$0xf]
    %v11809 = vld [vmem:[%s11779 + $0x74] sm:$0xf]
    %v11810 = vld [vmem:[%s11779 + $0x78] sm:$0xf]
    %v11811 = vld [vmem:[%s11779 + $0x7c] sm:$0xf]
    %v11812 = vld [vmem:[%s11779 + $0x80] sm:$0xf]
    %v11813 = vld [vmem:[%s11779 + $0x84] sm:$0xf]
    %v11814 = vld [vmem:[%s11779 + $0x88] sm:$0xf]
    %v11815 = vld [vmem:[%s11779 + $0x8c] sm:$0xf]
    %v11816 = vld [vmem:[%s11779 + $0x90] sm:$0xf]
    %v11817 = vld [vmem:[%s11779 + $0x94] sm:$0xf]
    %v11818 = vld [vmem:[%s11779 + $0x98] sm:$0xf]
    %v11819 = vld [vmem:[%s11779 + $0x9c] sm:$0xf]
    %v11820 = vld [vmem:[%s11779 + $0xa0] sm:$0xf]
    %v11821 = vld [vmem:[%s11779 + $0xa4] sm:$0xf]
    %v11822 = vld [vmem:[%s11779 + $0xa8] sm:$0xf]
    %v11823 = vld [vmem:[%s11779 + $0xac] sm:$0xf]
    %v11824 = vld [vmem:[%s11779 + $0xb0] sm:$0xf]
    %v11825 = vld [vmem:[%s11779 + $0xb4] sm:$0xf]
    %v11826 = vld [vmem:[%s11779 + $0xb8] sm:$0xf]
    %v11827 = vld [vmem:[%s11779 + $0xbc] sm:$0xf]
    %v11876 = vunpack.c.l.b16 %v11780
    %v11877 = vunpack.c.l.b16 %v11781
    %v11878 = vunpack.c.l.b16 %v11782
    %v11879 = vunpack.c.l.b16 %v11783
    %v11880 = vunpack.c.l.b16 %v11784
    %v11881 = vunpack.c.l.b16 %v11785
    %v11882 = vunpack.c.l.b16 %v11786
    %v11883 = vunpack.c.l.b16 %v11787
    %v11884 = vunpack.c.l.b16 %v11788
    %v11885 = vunpack.c.l.b16 %v11789
    %v11886 = vunpack.c.l.b16 %v11790
    %v11887 = vunpack.c.l.b16 %v11791
    %v11888 = vunpack.c.l.b16 %v11792
    %v11889 = vunpack.c.l.b16 %v11793
    %v11890 = vunpack.c.l.b16 %v11794
    %v11891 = vunpack.c.l.b16 %v11795
    %v11892 = vunpack.c.l.b16 %v11796
    %v11893 = vunpack.c.l.b16 %v11797
    %v11894 = vunpack.c.l.b16 %v11798
    %v11895 = vunpack.c.l.b16 %v11799
    %v11896 = vunpack.c.l.b16 %v11800
    %v11897 = vunpack.c.l.b16 %v11801
    %v11898 = vunpack.c.l.b16 %v11802
    %v11899 = vunpack.c.l.b16 %v11803
    %v11900 = vunpack.c.l.b16 %v11804
    %v11901 = vunpack.c.l.b16 %v11805
    %v11902 = vunpack.c.l.b16 %v11806
    %v11903 = vunpack.c.l.b16 %v11807
    %v11904 = vunpack.c.l.b16 %v11808
    %v11905 = vunpack.c.l.b16 %v11809
    %v11906 = vunpack.c.l.b16 %v11810
    %v11907 = vunpack.c.l.b16 %v11811
    %v11908 = vunpack.c.l.b16 %v11812
    %v11909 = vunpack.c.l.b16 %v11813
    %v11910 = vunpack.c.l.b16 %v11814
    %v11911 = vunpack.c.l.b16 %v11815
    %v11912 = vunpack.c.l.b16 %v11816
    %v11913 = vunpack.c.l.b16 %v11817
    %v11914 = vunpack.c.l.b16 %v11818
    %v11915 = vunpack.c.l.b16 %v11819
    %v11916 = vunpack.c.l.b16 %v11820
    %v11917 = vunpack.c.l.b16 %v11821
    %v11918 = vunpack.c.l.b16 %v11822
    %v11919 = vunpack.c.l.b16 %v11823
    %v11920 = vunpack.c.l.b16 %v11824
    %v11921 = vunpack.c.l.b16 %v11825
    %v11922 = vunpack.c.l.b16 %v11826
    %v11923 = vunpack.c.l.b16 %v11827
    %v11924 = vpack.c.b16 %v11877, %v11876
    %v11925 = vpack.c.b16 %v11879, %v11878
    %v11926 = vpack.c.b16 %v11881, %v11880
    %v11927 = vpack.c.b16 %v11883, %v11882
    %v11928 = vpack.c.b16 %v11885, %v11884
    %v11929 = vpack.c.b16 %v11887, %v11886
    %v11930 = vpack.c.b16 %v11889, %v11888
    %v11931 = vpack.c.b16 %v11891, %v11890
    %v11932 = vpack.c.b16 %v11893, %v11892
    %v11933 = vpack.c.b16 %v11895, %v11894
    %v11934 = vpack.c.b16 %v11897, %v11896
    %v11935 = vpack.c.b16 %v11899, %v11898
    %v11936 = vpack.c.b16 %v11901, %v11900
    %v11937 = vpack.c.b16 %v11903, %v11902
    %v11938 = vpack.c.b16 %v11905, %v11904
    %v11939 = vpack.c.b16 %v11907, %v11906
    %v11940 = vpack.c.b16 %v11909, %v11908
    %v11941 = vpack.c.b16 %v11911, %v11910
    %v11942 = vpack.c.b16 %v11913, %v11912
    %v11943 = vpack.c.b16 %v11915, %v11914
    %v11944 = vpack.c.b16 %v11917, %v11916
    %v11945 = vpack.c.b16 %v11919, %v11918
    %v11946 = vpack.c.b16 %v11921, %v11920
    %v11947 = vpack.c.b16 %v11923, %v11922
    %11972 = vmatpush.bf16.msra.mxu0 %v11931
    %11973 = vmatpush.bf16.msra.mxu0 %v11930
    %11974 = vmatpush.bf16.msra.mxu0 %v11929
    %11975 = vmatpush.bf16.msra.mxu0 %v11928
    %11976 = vmatpush.bf16.msra.mxu0 %v11927
    %11977 = vmatpush.bf16.msra.mxu0 %v11926
    %11978 = vmatpush.bf16.msra.mxu0 %v11925
    %11979 = vmatpush.bf16.msra.mxu0 %v11924
    %11980 = vmatmul.bf16.gmra.mxu0 %v10817
    %v11981 = vpop.f32.mrf.mxu0
    %v11982 = vadd.f32 %v10846, %v11981
    %v11983 = vpop.f32.mrf.mxu0
    %11984 = vdwg.mxu0
    %11985 = vmatpush.bf16.msra.mxu0 %v11939
    %11986 = vmatpush.bf16.msra.mxu0 %v11938
    %11987 = vmatpush.bf16.msra.mxu0 %v11937
    %11988 = vmatpush.bf16.msra.mxu0 %v11936
    %11989 = vmatpush.bf16.msra.mxu0 %v11935
    %11990 = vmatpush.bf16.msra.mxu0 %v11934
    %11991 = vmatpush.bf16.msra.mxu0 %v11933
    %11992 = vmatpush.bf16.msra.mxu0 %v11932
    %11993 = vmatmul.bf16.gmra.mxu0 %v10818
    %v11994 = vpop.f32.mrf.mxu0
    %v11995 = vadd.f32 %v11982, %v11994
    %v11996 = vpop.f32.mrf.mxu0
    %11997 = vdwg.mxu0
    %11998 = vmatpush.bf16.msra.mxu0 %v11947
    %11999 = vmatpush.bf16.msra.mxu0 %v11946
    %12000 = vmatpush.bf16.msra.mxu0 %v11945
    %12001 = vmatpush.bf16.msra.mxu0 %v11944
    %12002 = vmatpush.bf16.msra.mxu0 %v11943
    %12003 = vmatpush.bf16.msra.mxu0 %v11942
    %12004 = vmatpush.bf16.msra.mxu0 %v11941
    %12005 = vmatpush.bf16.msra.mxu0 %v11940
    %12006 = vmatmul.bf16.gmra.mxu0 %v10819
    %v12007 = vpop.f32.mrf.mxu0
    %v12008 = vadd.f32 %v11995, %v12007
    %v12009 = vpop.f32.mrf.mxu0
    %12010 = vdwg.mxu0
    %v12011 = vld [vmem:[#allocation26] sm:$0x3]
    %v12013 = vperm.slane %v12011, 0
    %v12014 = vperm.slane %v12011, 1
    %v12025 = vunpack.c.l.b16 %v10820
    %v12026 = vunpack.c.l.b16 %v10821
    %v12027 = vunpack.c.l.b16 %v10822
    %v12028 = vunpack.c.l.b16 %v10823
    %v12029 = vunpack.c.l.b16 %v10824
    %v12030 = vunpack.c.l.b16 %v10825
    %v12031 = vunpack.c.l.b16 %v10826
    %v12032 = vunpack.c.l.b16 %v10827
    %v12033 = vpack.c.b16 %v12026, %v12025
    %v12034 = vpack.c.b16 %v12028, %v12027
    %v12035 = vpack.c.b16 %v12030, %v12029
    %v12036 = vpack.c.b16 %v12032, %v12031
    %v12042 = vsel %vm400, 0, 0
    %12044 = vmatpush.bf16.msra.mxu0 0
    %12045 = vmatpush.bf16.msra.mxu0 0
    %12046 = vmatpush.bf16.msra.mxu0 0
    %12047 = vmatpush.bf16.msra.mxu0 0
    %12048 = vmatpush.bf16.msra.mxu0 %v12036
    %12049 = vmatpush.bf16.msra.mxu0 %v12035
    %12050 = vmatpush.bf16.msra.mxu0 %v12034
    %12051 = vmatpush.bf16.msra.mxu0 %v12033
    %12052 = vmatmul.bf16.gmra.mxu0 %v12042
    %v12053 = vpop.f32.mrf.mxu0
    %v12054 = vadd.f32 0.0, %v12053
    %v12055 = vpop.f32.mrf.mxu0
    %12056 = vdwg.mxu0
    %v12057 = vadd.f32 %v11080, %v12054
    %v12058 = vtanh.pop %v12057
    %v12059 = vpack.c.bf16 %v12058, %v12058
    %v12061 = vsel %vm400, %v12059, 0
    %12063 = vmatpush.bf16.msra.mxu0 0
    %12064 = vmatpush.bf16.msra.mxu0 0
    %12065 = vmatpush.bf16.msra.mxu0 0
    %12066 = vmatpush.bf16.msra.mxu0 0
    %12067 = vmatpush.bf16.msra.mxu0 %v12036
    %12068 = vmatpush.bf16.msra.mxu0 %v12035
    %12069 = vmatpush.bf16.msra.mxu0 %v12034
    %12070 = vmatpush.bf16.msra.mxu0 %v12033
    %12071 = vmatmul.bf16.gmra.mxu0 %v12061
    %v12072 = vpop.f32.mrf.mxu0
    %v12073 = vadd.f32 0.0, %v12072
    %v12074 = vpop.f32.mrf.mxu0
    %12075 = vdwg.mxu0
    %v12076 = vadd.f32 %v11312, %v12073
    %v12077 = vtanh.pop %v12076
    %v12078 = vpack.c.bf16 %v12077, %v12077
    %v12087 = vunpack.c.l.b16 %v10836
    %v12088 = vunpack.c.l.b16 %v10837
    %v12089 = vunpack.c.l.b16 %v10838
    %v12090 = vunpack.c.l.b16 %v10839
    %v12091 = vunpack.c.l.b16 %v10840
    %v12092 = vunpack.c.l.b16 %v10841
    %v12093 = vunpack.c.l.b16 %v10842
    %v12094 = vunpack.c.l.b16 %v10843
    %v12095 = vpack.c.b16 %v12088, %v12087
    %v12096 = vpack.c.b16 %v12090, %v12089
    %v12097 = vpack.c.b16 %v12092, %v12091
    %v12098 = vpack.c.b16 %v12094, %v12093
    %12103 = vmatpush.bf16.msra.mxu0 0
    %12104 = vmatpush.bf16.msra.mxu0 0
    %12105 = vmatpush.bf16.msra.mxu0 0
    %12106 = vmatpush.bf16.msra.mxu0 0
    %12107 = vmatpush.bf16.msra.mxu0 %v12098
    %12108 = vmatpush.bf16.msra.mxu0 %v12097
    %12109 = vmatpush.bf16.msra.mxu0 %v12096
    %12110 = vmatpush.bf16.msra.mxu0 %v12095
    %12111 = vmatmul.bf16.gmra.mxu0 %v12042
    %v12112 = vpop.f32.mrf.mxu0
    %v12113 = vadd.f32 0.0, %v12112
    %v12114 = vpop.f32.mrf.mxu0
    %12115 = vdwg.mxu0
    %v12124 = vunpack.c.l.b16 %v10828
    %v12125 = vunpack.c.l.b16 %v10829
    %v12126 = vunpack.c.l.b16 %v10830
    %v12127 = vunpack.c.l.b16 %v10831
    %v12128 = vunpack.c.l.b16 %v10832
    %v12129 = vunpack.c.l.b16 %v10833
    %v12130 = vunpack.c.l.b16 %v10834
    %v12131 = vunpack.c.l.b16 %v10835
    %v12132 = vpack.c.b16 %v12125, %v12124
    %v12133 = vpack.c.b16 %v12127, %v12126
    %v12134 = vpack.c.b16 %v12129, %v12128
    %v12135 = vpack.c.b16 %v12131, %v12130
    %12140 = vmatpush.bf16.msra.mxu0 0
    %12141 = vmatpush.bf16.msra.mxu0 0
    %12142 = vmatpush.bf16.msra.mxu0 0
    %12143 = vmatpush.bf16.msra.mxu0 0
    %12144 = vmatpush.bf16.msra.mxu0 %v12135
    %12145 = vmatpush.bf16.msra.mxu0 %v12134
    %12146 = vmatpush.bf16.msra.mxu0 %v12133
    %12147 = vmatpush.bf16.msra.mxu0 %v12132
    %12148 = vmatmul.bf16.gmra.mxu0 %v12061
    %v12149 = vpop.f32.mrf.mxu0
    %v12150 = vadd.f32 %v12113, %v12149
    %v12151 = vpop.f32.mrf.mxu0
    %12152 = vdwg.mxu0
    %v12153 = vadd.f32 %v12150, %v10850
    %v12154 = vtanh.pop %v12153
    %v12155 = vpack.c.bf16 %v12154, %v12154
    %v12156 = vld [vmem:[#allocation24] sm:$0xff]
    %v12157 = vld [vmem:[#allocation24 + $0x8] sm:$0xff]
    %v12158 = vld [vmem:[#allocation24 + $0x10] sm:$0xff]
    %v12159 = vld [vmem:[#allocation24 + $0x18] sm:$0xff]
    %v12160 = vld [vmem:[#allocation24 + $0x20] sm:$0xff]
    %v12161 = vld [vmem:[#allocation24 + $0x28] sm:$0xff]
    %v12162 = vld [vmem:[#allocation24 + $0x30] sm:$0xff]
    %v12163 = vld [vmem:[#allocation24 + $0x38] sm:$0xff]
    %v12172 = vunpack.c.l.b16 %v12156
    %v12173 = vunpack.c.h.b16 %v12156
    %v12174 = vunpack.c.l.b16 %v12157
    %v12175 = vunpack.c.h.b16 %v12157
    %v12176 = vunpack.c.l.b16 %v12158
    %v12177 = vunpack.c.h.b16 %v12158
    %v12178 = vunpack.c.l.b16 %v12159
    %v12179 = vunpack.c.h.b16 %v12159
    %v12180 = vunpack.c.l.b16 %v12160
    %v12181 = vunpack.c.h.b16 %v12160
    %v12182 = vunpack.c.l.b16 %v12161
    %v12183 = vunpack.c.h.b16 %v12161
    %v12184 = vunpack.c.l.b16 %v12162
    %v12185 = vunpack.c.h.b16 %v12162
    %v12186 = vunpack.c.l.b16 %v12163
    %v12187 = vunpack.c.h.b16 %v12163
    %v12188 = vpack.c.b16 %v12174, %v12172
    %v12189 = vpack.c.b16 %v12175, %v12173
    %v12190 = vpack.c.b16 %v12178, %v12176
    %v12191 = vpack.c.b16 %v12179, %v12177
    %v12192 = vpack.c.b16 %v12182, %v12180
    %v12193 = vpack.c.b16 %v12183, %v12181
    %v12194 = vpack.c.b16 %v12186, %v12184
    %v12195 = vpack.c.b16 %v12187, %v12185
    %v12205 = vsel %vm400, %v12155, 0
    %12207 = vmatpush.bf16.msra.mxu0 0
    %12208 = vmatpush.bf16.msra.mxu0 0
    %12209 = vmatpush.bf16.msra.mxu0 0
    %12210 = vmatpush.bf16.msra.mxu0 0
    %12211 = vmatpush.bf16.msra.mxu0 %v12194
    %12212 = vmatpush.bf16.msra.mxu0 %v12192
    %12213 = vmatpush.bf16.msra.mxu0 %v12190
    %12214 = vmatpush.bf16.msra.mxu0 %v12188
    %12215 = vmatmul.bf16.gmra.mxu0 %v12205
    %v12216 = vpop.f32.mrf.mxu0
    %v12217 = vadd.f32 0.0, %v12216
    %v12218 = vpop.f32.mrf.mxu0
    %12219 = vdwg.mxu0
    %12220 = vmatpush.bf16.msra.mxu0 0
    %12221 = vmatpush.bf16.msra.mxu0 0
    %12222 = vmatpush.bf16.msra.mxu0 0
    %12223 = vmatpush.bf16.msra.mxu0 0
    %12224 = vmatpush.bf16.msra.mxu0 %v12195
    %12225 = vmatpush.bf16.msra.mxu0 %v12193
    %12226 = vmatpush.bf16.msra.mxu0 %v12191
    %12227 = vmatpush.bf16.msra.mxu0 %v12189
    %12228 = vmatmul.bf16.gmra.mxu0 %v12205
    %v12229 = vpop.f32.mrf.mxu0
    %v12230 = vadd.f32 0.0, %v12229
    %v12231 = vpop.f32.mrf.mxu0
    %12232 = vdwg.mxu0
    %v12233 = vadd.f32 %v12013, %v12217
    %v12234 = vadd.f32 %v12014, %v12230
    %v12236 = vsel %vm400, %v12078, 0
    %12238 = vmatpush.bf16.msra.mxu0 0
    %12239 = vmatpush.bf16.msra.mxu0 0
    %12240 = vmatpush.bf16.msra.mxu0 0
    %12241 = vmatpush.bf16.msra.mxu0 0
    %12242 = vmatpush.bf16.msra.mxu0 %v12036
    %12243 = vmatpush.bf16.msra.mxu0 %v12035
    %12244 = vmatpush.bf16.msra.mxu0 %v12034
    %12245 = vmatpush.bf16.msra.mxu0 %v12033
    %12246 = vmatmul.bf16.gmra.mxu0 %v12236
    %v12247 = vpop.f32.mrf.mxu0
    %v12248 = vadd.f32 0.0, %v12247
    %v12249 = vpop.f32.mrf.mxu0
    %12250 = vdwg.mxu0
    %v12251 = vadd.f32 %v11544, %v12248
    %v12252 = vtanh.pop %v12251
    %v12253 = vpack.c.bf16 %v12252, %v12252
    %12254 = vmatpush.bf16.msra.mxu0 0
    %12255 = vmatpush.bf16.msra.mxu0 0
    %12256 = vmatpush.bf16.msra.mxu0 0
    %12257 = vmatpush.bf16.msra.mxu0 0
    %12258 = vmatpush.bf16.msra.mxu0 %v12098
    %12259 = vmatpush.bf16.msra.mxu0 %v12097
    %12260 = vmatpush.bf16.msra.mxu0 %v12096
    %12261 = vmatpush.bf16.msra.mxu0 %v12095
    %12262 = vmatmul.bf16.gmra.mxu0 %v12205
    %v12263 = vpop.f32.mrf.mxu0
    %v12264 = vadd.f32 0.0, %v12263
    %v12265 = vpop.f32.mrf.mxu0
    %12266 = vdwg.mxu0
    %12267 = vmatpush.bf16.msra.mxu0 0
    %12268 = vmatpush.bf16.msra.mxu0 0
    %12269 = vmatpush.bf16.msra.mxu0 0
    %12270 = vmatpush.bf16.msra.mxu0 0
    %12271 = vmatpush.bf16.msra.mxu0 %v12135
    %12272 = vmatpush.bf16.msra.mxu0 %v12134
    %12273 = vmatpush.bf16.msra.mxu0 %v12133
    %12274 = vmatpush.bf16.msra.mxu0 %v12132
    %12275 = vmatmul.bf16.gmra.mxu0 %v12236
    %v12276 = vpop.f32.mrf.mxu0
    %v12277 = vadd.f32 %v12264, %v12276
    %v12278 = vpop.f32.mrf.mxu0
    %12279 = vdwg.mxu0
    %v12280 = vadd.f32 %v12277, %v10850
    %v12281 = vtanh.pop %v12280
    %v12282 = vpack.c.bf16 %v12281, %v12281
    %s12283 = scalar_lea.vmem [#allocation24], 64
    %v12284 = vld [vmem:[%s12283] sm:$0xff]
    %v12285 = vld [vmem:[%s12283 + $0x8] sm:$0xff]
    %v12286 = vld [vmem:[%s12283 + $0x10] sm:$0xff]
    %v12287 = vld [vmem:[%s12283 + $0x18] sm:$0xff]
    %v12288 = vld [vmem:[%s12283 + $0x20] sm:$0xff]
    %v12289 = vld [vmem:[%s12283 + $0x28] sm:$0xff]
    %v12290 = vld [vmem:[%s12283 + $0x30] sm:$0xff]
    %v12291 = vld [vmem:[%s12283 + $0x38] sm:$0xff]
    %v12300 = vunpack.c.l.b16 %v12284
    %v12301 = vunpack.c.h.b16 %v12284
    %v12302 = vunpack.c.l.b16 %v12285
    %v12303 = vunpack.c.h.b16 %v12285
    %v12304 = vunpack.c.l.b16 %v12286
    %v12305 = vunpack.c.h.b16 %v12286
    %v12306 = vunpack.c.l.b16 %v12287
    %v12307 = vunpack.c.h.b16 %v12287
    %v12308 = vunpack.c.l.b16 %v12288
    %v12309 = vunpack.c.h.b16 %v12288
    %v12310 = vunpack.c.l.b16 %v12289
    %v12311 = vunpack.c.h.b16 %v12289
    %v12312 = vunpack.c.l.b16 %v12290
    %v12313 = vunpack.c.h.b16 %v12290
    %v12314 = vunpack.c.l.b16 %v12291
    %v12315 = vunpack.c.h.b16 %v12291
    %v12316 = vpack.c.b16 %v12302, %v12300
    %v12317 = vpack.c.b16 %v12303, %v12301
    %v12318 = vpack.c.b16 %v12306, %v12304
    %v12319 = vpack.c.b16 %v12307, %v12305
    %v12320 = vpack.c.b16 %v12310, %v12308
    %v12321 = vpack.c.b16 %v12311, %v12309
    %v12322 = vpack.c.b16 %v12314, %v12312
    %v12323 = vpack.c.b16 %v12315, %v12313
    %v12333 = vsel %vm400, %v12282, 0
    %12335 = vmatpush.bf16.msra.mxu0 0
    %12336 = vmatpush.bf16.msra.mxu0 0
    %12337 = vmatpush.bf16.msra.mxu0 0
    %12338 = vmatpush.bf16.msra.mxu0 0
    %12339 = vmatpush.bf16.msra.mxu0 %v12322
    %12340 = vmatpush.bf16.msra.mxu0 %v12320
    %12341 = vmatpush.bf16.msra.mxu0 %v12318
    %12342 = vmatpush.bf16.msra.mxu0 %v12316
    %12343 = vmatmul.bf16.gmra.mxu0 %v12333
    %v12344 = vpop.f32.mrf.mxu0
    %v12345 = vadd.f32 0.0, %v12344
    %v12346 = vpop.f32.mrf.mxu0
    %12347 = vdwg.mxu0
    %12348 = vmatpush.bf16.msra.mxu0 0
    %12349 = vmatpush.bf16.msra.mxu0 0
    %12350 = vmatpush.bf16.msra.mxu0 0
    %12351 = vmatpush.bf16.msra.mxu0 0
    %12352 = vmatpush.bf16.msra.mxu0 %v12323
    %12353 = vmatpush.bf16.msra.mxu0 %v12321
    %12354 = vmatpush.bf16.msra.mxu0 %v12319
    %12355 = vmatpush.bf16.msra.mxu0 %v12317
    %12356 = vmatmul.bf16.gmra.mxu0 %v12333
    %v12357 = vpop.f32.mrf.mxu0
    %v12358 = vadd.f32 0.0, %v12357
    %v12359 = vpop.f32.mrf.mxu0
    %12360 = vdwg.mxu0
    %v12361 = vadd.f32 %v12233, %v12345
    %v12362 = vadd.f32 %v12234, %v12358
    %v12364 = vsel %vm400, %v12253, 0
    %12366 = vmatpush.bf16.msra.mxu0 0
    %12367 = vmatpush.bf16.msra.mxu0 0
    %12368 = vmatpush.bf16.msra.mxu0 0
    %12369 = vmatpush.bf16.msra.mxu0 0
    %12370 = vmatpush.bf16.msra.mxu0 %v12036
    %12371 = vmatpush.bf16.msra.mxu0 %v12035
    %12372 = vmatpush.bf16.msra.mxu0 %v12034
    %12373 = vmatpush.bf16.msra.mxu0 %v12033
    %12374 = vmatmul.bf16.gmra.mxu0 %v12364
    %v12375 = vpop.f32.mrf.mxu0
    %v12376 = vadd.f32 0.0, %v12375
    %v12377 = vpop.f32.mrf.mxu0
    %12378 = vdwg.mxu0
    %v12379 = vadd.f32 %v11776, %v12376
    %v12380 = vtanh.pop %v12379
    %v12381 = vpack.c.bf16 %v12380, %v12380
    %12382 = vmatpush.bf16.msra.mxu0 0
    %12383 = vmatpush.bf16.msra.mxu0 0
    %12384 = vmatpush.bf16.msra.mxu0 0
    %12385 = vmatpush.bf16.msra.mxu0 0
    %12386 = vmatpush.bf16.msra.mxu0 %v12098
    %12387 = vmatpush.bf16.msra.mxu0 %v12097
    %12388 = vmatpush.bf16.msra.mxu0 %v12096
    %12389 = vmatpush.bf16.msra.mxu0 %v12095
    %12390 = vmatmul.bf16.gmra.mxu0 %v12333
    %v12391 = vpop.f32.mrf.mxu0
    %v12392 = vadd.f32 0.0, %v12391
    %v12393 = vpop.f32.mrf.mxu0
    %12394 = vdwg.mxu0
    %12395 = vmatpush.bf16.msra.mxu0 0
    %12396 = vmatpush.bf16.msra.mxu0 0
    %12397 = vmatpush.bf16.msra.mxu0 0
    %12398 = vmatpush.bf16.msra.mxu0 0
    %12399 = vmatpush.bf16.msra.mxu0 %v12135
    %12400 = vmatpush.bf16.msra.mxu0 %v12134
    %12401 = vmatpush.bf16.msra.mxu0 %v12133
    %12402 = vmatpush.bf16.msra.mxu0 %v12132
    %12403 = vmatmul.bf16.gmra.mxu0 %v12364
    %v12404 = vpop.f32.mrf.mxu0
    %v12405 = vadd.f32 %v12392, %v12404
    %v12406 = vpop.f32.mrf.mxu0
    %12407 = vdwg.mxu0
    %v12408 = vadd.f32 %v12405, %v10850
    %v12409 = vtanh.pop %v12408
    %v12410 = vpack.c.bf16 %v12409, %v12409
    %s12411 = scalar_lea.vmem [#allocation24], 128
    %v12412 = vld [vmem:[%s12411] sm:$0xff]
    %v12413 = vld [vmem:[%s12411 + $0x8] sm:$0xff]
    %v12414 = vld [vmem:[%s12411 + $0x10] sm:$0xff]
    %v12415 = vld [vmem:[%s12411 + $0x18] sm:$0xff]
    %v12416 = vld [vmem:[%s12411 + $0x20] sm:$0xff]
    %v12417 = vld [vmem:[%s12411 + $0x28] sm:$0xff]
    %v12418 = vld [vmem:[%s12411 + $0x30] sm:$0xff]
    %v12419 = vld [vmem:[%s12411 + $0x38] sm:$0xff]
    %v12428 = vunpack.c.l.b16 %v12412
    %v12429 = vunpack.c.h.b16 %v12412
    %v12430 = vunpack.c.l.b16 %v12413
    %v12431 = vunpack.c.h.b16 %v12413
    %v12432 = vunpack.c.l.b16 %v12414
    %v12433 = vunpack.c.h.b16 %v12414
    %v12434 = vunpack.c.l.b16 %v12415
    %v12435 = vunpack.c.h.b16 %v12415
    %v12436 = vunpack.c.l.b16 %v12416
    %v12437 = vunpack.c.h.b16 %v12416
    %v12438 = vunpack.c.l.b16 %v12417
    %v12439 = vunpack.c.h.b16 %v12417
    %v12440 = vunpack.c.l.b16 %v12418
    %v12441 = vunpack.c.h.b16 %v12418
    %v12442 = vunpack.c.l.b16 %v12419
    %v12443 = vunpack.c.h.b16 %v12419
    %v12444 = vpack.c.b16 %v12430, %v12428
    %v12445 = vpack.c.b16 %v12431, %v12429
    %v12446 = vpack.c.b16 %v12434, %v12432
    %v12447 = vpack.c.b16 %v12435, %v12433
    %v12448 = vpack.c.b16 %v12438, %v12436
    %v12449 = vpack.c.b16 %v12439, %v12437
    %v12450 = vpack.c.b16 %v12442, %v12440
    %v12451 = vpack.c.b16 %v12443, %v12441
    %v12461 = vsel %vm400, %v12410, 0
    %12463 = vmatpush.bf16.msra.mxu0 0
    %12464 = vmatpush.bf16.msra.mxu0 0
    %12465 = vmatpush.bf16.msra.mxu0 0
    %12466 = vmatpush.bf16.msra.mxu0 0
    %12467 = vmatpush.bf16.msra.mxu0 %v12450
    %12468 = vmatpush.bf16.msra.mxu0 %v12448
    %12469 = vmatpush.bf16.msra.mxu0 %v12446
    %12470 = vmatpush.bf16.msra.mxu0 %v12444
    %12471 = vmatmul.bf16.gmra.mxu0 %v12461
    %v12472 = vpop.f32.mrf.mxu0
    %v12473 = vadd.f32 0.0, %v12472
    %v12474 = vpop.f32.mrf.mxu0
    %12475 = vdwg.mxu0
    %12476 = vmatpush.bf16.msra.mxu0 0
    %12477 = vmatpush.bf16.msra.mxu0 0
    %12478 = vmatpush.bf16.msra.mxu0 0
    %12479 = vmatpush.bf16.msra.mxu0 0
    %12480 = vmatpush.bf16.msra.mxu0 %v12451
    %12481 = vmatpush.bf16.msra.mxu0 %v12449
    %12482 = vmatpush.bf16.msra.mxu0 %v12447
    %12483 = vmatpush.bf16.msra.mxu0 %v12445
    %12484 = vmatmul.bf16.gmra.mxu0 %v12461
    %v12485 = vpop.f32.mrf.mxu0
    %v12486 = vadd.f32 0.0, %v12485
    %v12487 = vpop.f32.mrf.mxu0
    %12488 = vdwg.mxu0
    %v12489 = vadd.f32 %v12361, %v12473
    %v12490 = vadd.f32 %v12362, %v12486
    %v12492 = vsel %vm400, %v12381, 0
    %12494 = vmatpush.bf16.msra.mxu0 0
    %12495 = vmatpush.bf16.msra.mxu0 0
    %12496 = vmatpush.bf16.msra.mxu0 0
    %12497 = vmatpush.bf16.msra.mxu0 0
    %12498 = vmatpush.bf16.msra.mxu0 %v12036
    %12499 = vmatpush.bf16.msra.mxu0 %v12035
    %12500 = vmatpush.bf16.msra.mxu0 %v12034
    %12501 = vmatpush.bf16.msra.mxu0 %v12033
    %12502 = vmatmul.bf16.gmra.mxu0 %v12492
    %v12503 = vpop.f32.mrf.mxu0
    %v12504 = vadd.f32 0.0, %v12503
    %v12505 = vpop.f32.mrf.mxu0
    %12506 = vdwg.mxu0
    %v12507 = vadd.f32 %v12008, %v12504
    %v12508 = vtanh.pop %v12507
    %v12509 = vpack.c.bf16 %v12508, %v12508
    %12510 = vmatpush.bf16.msra.mxu0 0
    %12511 = vmatpush.bf16.msra.mxu0 0
    %12512 = vmatpush.bf16.msra.mxu0 0
    %12513 = vmatpush.bf16.msra.mxu0 0
    %12514 = vmatpush.bf16.msra.mxu0 %v12098
    %12515 = vmatpush.bf16.msra.mxu0 %v12097
    %12516 = vmatpush.bf16.msra.mxu0 %v12096
    %12517 = vmatpush.bf16.msra.mxu0 %v12095
    %12518 = vmatmul.bf16.gmra.mxu0 %v12461
    %v12519 = vpop.f32.mrf.mxu0
    %v12520 = vadd.f32 0.0, %v12519
    %v12521 = vpop.f32.mrf.mxu0
    %12522 = vdwg.mxu0
    %12523 = vmatpush.bf16.msra.mxu0 0
    %12524 = vmatpush.bf16.msra.mxu0 0
    %12525 = vmatpush.bf16.msra.mxu0 0
    %12526 = vmatpush.bf16.msra.mxu0 0
    %12527 = vmatpush.bf16.msra.mxu0 %v12135
    %12528 = vmatpush.bf16.msra.mxu0 %v12134
    %12529 = vmatpush.bf16.msra.mxu0 %v12133
    %12530 = vmatpush.bf16.msra.mxu0 %v12132
    %12531 = vmatmul.bf16.gmra.mxu0 %v12492
    %v12532 = vpop.f32.mrf.mxu0
    %v12533 = vadd.f32 %v12520, %v12532
    %v12534 = vpop.f32.mrf.mxu0
    %12535 = vdwg.mxu0
    %v12536 = vadd.f32 %v12533, %v10850
    %v12537 = vtanh.pop %v12536
    %v12538 = vpack.c.bf16 %v12537, %v12537
    %s12539 = scalar_lea.vmem [#allocation24], 192
    %v12540 = vld [vmem:[%s12539] sm:$0xff]
    %v12541 = vld [vmem:[%s12539 + $0x8] sm:$0xff]
    %v12542 = vld [vmem:[%s12539 + $0x10] sm:$0xff]
    %v12543 = vld [vmem:[%s12539 + $0x18] sm:$0xff]
    %v12544 = vld [vmem:[%s12539 + $0x20] sm:$0xff]
    %v12545 = vld [vmem:[%s12539 + $0x28] sm:$0xff]
    %v12546 = vld [vmem:[%s12539 + $0x30] sm:$0xff]
    %v12547 = vld [vmem:[%s12539 + $0x38] sm:$0xff]
    %v12556 = vunpack.c.l.b16 %v12540
    %v12557 = vunpack.c.h.b16 %v12540
    %v12558 = vunpack.c.l.b16 %v12541
    %v12559 = vunpack.c.h.b16 %v12541
    %v12560 = vunpack.c.l.b16 %v12542
    %v12561 = vunpack.c.h.b16 %v12542
    %v12562 = vunpack.c.l.b16 %v12543
    %v12563 = vunpack.c.h.b16 %v12543
    %v12564 = vunpack.c.l.b16 %v12544
    %v12565 = vunpack.c.h.b16 %v12544
    %v12566 = vunpack.c.l.b16 %v12545
    %v12567 = vunpack.c.h.b16 %v12545
    %v12568 = vunpack.c.l.b16 %v12546
    %v12569 = vunpack.c.h.b16 %v12546
    %v12570 = vunpack.c.l.b16 %v12547
    %v12571 = vunpack.c.h.b16 %v12547
    %v12572 = vpack.c.b16 %v12558, %v12556
    %v12573 = vpack.c.b16 %v12559, %v12557
    %v12574 = vpack.c.b16 %v12562, %v12560
    %v12575 = vpack.c.b16 %v12563, %v12561
    %v12576 = vpack.c.b16 %v12566, %v12564
    %v12577 = vpack.c.b16 %v12567, %v12565
    %v12578 = vpack.c.b16 %v12570, %v12568
    %v12579 = vpack.c.b16 %v12571, %v12569
    %v12589 = vsel %vm400, %v12538, 0
    %12591 = vmatpush.bf16.msra.mxu0 0
    %12592 = vmatpush.bf16.msra.mxu0 0
    %12593 = vmatpush.bf16.msra.mxu0 0
    %12594 = vmatpush.bf16.msra.mxu0 0
    %12595 = vmatpush.bf16.msra.mxu0 %v12578
    %12596 = vmatpush.bf16.msra.mxu0 %v12576
    %12597 = vmatpush.bf16.msra.mxu0 %v12574
    %12598 = vmatpush.bf16.msra.mxu0 %v12572
    %12599 = vmatmul.bf16.gmra.mxu0 %v12589
    %v12600 = vpop.f32.mrf.mxu0
    %v12601 = vadd.f32 0.0, %v12600
    %v12602 = vpop.f32.mrf.mxu0
    %12603 = vdwg.mxu0
    %12604 = vmatpush.bf16.msra.mxu0 0
    %12605 = vmatpush.bf16.msra.mxu0 0
    %12606 = vmatpush.bf16.msra.mxu0 0
    %12607 = vmatpush.bf16.msra.mxu0 0
    %12608 = vmatpush.bf16.msra.mxu0 %v12579
    %12609 = vmatpush.bf16.msra.mxu0 %v12577
    %12610 = vmatpush.bf16.msra.mxu0 %v12575
    %12611 = vmatpush.bf16.msra.mxu0 %v12573
    %12612 = vmatmul.bf16.gmra.mxu0 %v12589
    %v12613 = vpop.f32.mrf.mxu0
    %v12614 = vadd.f32 0.0, %v12613
    %v12615 = vpop.f32.mrf.mxu0
    %12616 = vdwg.mxu0
    %v12617 = vadd.f32 %v12489, %v12601
    %v12618 = vadd.f32 %v12490, %v12614
    %12619 = vmatpush.bf16.msra.mxu0 0
    %12620 = vmatpush.bf16.msra.mxu0 0
    %12621 = vmatpush.bf16.msra.mxu0 0
    %12622 = vmatpush.bf16.msra.mxu0 0
    %12623 = vmatpush.bf16.msra.mxu0 %v12098
    %12624 = vmatpush.bf16.msra.mxu0 %v12097
    %12625 = vmatpush.bf16.msra.mxu0 %v12096
    %12626 = vmatpush.bf16.msra.mxu0 %v12095
    %12627 = vmatmul.bf16.gmra.mxu0 %v12589
    %v12628 = vpop.f32.mrf.mxu0
    %v12629 = vadd.f32 0.0, %v12628
    %v12630 = vpop.f32.mrf.mxu0
    %12631 = vdwg.mxu0
    %v12633 = vsel %vm400, %v12509, 0
    %12635 = vmatpush.bf16.msra.mxu0 0
    %12636 = vmatpush.bf16.msra.mxu0 0
    %12637 = vmatpush.bf16.msra.mxu0 0
    %12638 = vmatpush.bf16.msra.mxu0 0
    %12639 = vmatpush.bf16.msra.mxu0 %v12135
    %12640 = vmatpush.bf16.msra.mxu0 %v12134
    %12641 = vmatpush.bf16.msra.mxu0 %v12133
    %12642 = vmatpush.bf16.msra.mxu0 %v12132
    %12643 = vmatmul.bf16.gmra.mxu0 %v12633
    %v12644 = vpop.f32.mrf.mxu0
    %v12645 = vadd.f32 %v12629, %v12644
    %v12646 = vpop.f32.mrf.mxu0
    %12647 = vdwg.mxu0
    %v12648 = vadd.f32 %v12645, %v10850
    %v12649 = vtanh.pop %v12648
    %v12650 = vpack.c.bf16 %v12649, %v12649
    %s12651 = scalar_lea.vmem [#allocation24], 256
    %v12652 = vld [vmem:[%s12651] sm:$0xff]
    %v12653 = vld [vmem:[%s12651 + $0x8] sm:$0xff]
    %v12654 = vld [vmem:[%s12651 + $0x10] sm:$0xff]
    %v12655 = vld [vmem:[%s12651 + $0x18] sm:$0xff]
    %v12656 = vld [vmem:[%s12651 + $0x20] sm:$0xff]
    %v12657 = vld [vmem:[%s12651 + $0x28] sm:$0xff]
    %v12658 = vld [vmem:[%s12651 + $0x30] sm:$0xff]
    %v12659 = vld [vmem:[%s12651 + $0x38] sm:$0xff]
    %v12668 = vunpack.c.l.b16 %v12652
    %v12669 = vunpack.c.h.b16 %v12652
    %v12670 = vunpack.c.l.b16 %v12653
    %v12671 = vunpack.c.h.b16 %v12653
    %v12672 = vunpack.c.l.b16 %v12654
    %v12673 = vunpack.c.h.b16 %v12654
    %v12674 = vunpack.c.l.b16 %v12655
    %v12675 = vunpack.c.h.b16 %v12655
    %v12676 = vunpack.c.l.b16 %v12656
    %v12677 = vunpack.c.h.b16 %v12656
    %v12678 = vunpack.c.l.b16 %v12657
    %v12679 = vunpack.c.h.b16 %v12657
    %v12680 = vunpack.c.l.b16 %v12658
    %v12681 = vunpack.c.h.b16 %v12658
    %v12682 = vunpack.c.l.b16 %v12659
    %v12683 = vunpack.c.h.b16 %v12659
    %v12684 = vpack.c.b16 %v12670, %v12668
    %v12685 = vpack.c.b16 %v12671, %v12669
    %v12686 = vpack.c.b16 %v12674, %v12672
    %v12687 = vpack.c.b16 %v12675, %v12673
    %v12688 = vpack.c.b16 %v12678, %v12676
    %v12689 = vpack.c.b16 %v12679, %v12677
    %v12690 = vpack.c.b16 %v12682, %v12680
    %v12691 = vpack.c.b16 %v12683, %v12681
    %v12701 = vsel %vm400, %v12650, 0
    %12703 = vmatpush.bf16.msra.mxu0 0
    %12704 = vmatpush.bf16.msra.mxu0 0
    %12705 = vmatpush.bf16.msra.mxu0 0
    %12706 = vmatpush.bf16.msra.mxu0 0
    %12707 = vmatpush.bf16.msra.mxu0 %v12690
    %12708 = vmatpush.bf16.msra.mxu0 %v12688
    %12709 = vmatpush.bf16.msra.mxu0 %v12686
    %12710 = vmatpush.bf16.msra.mxu0 %v12684
    %12711 = vmatmul.bf16.gmra.mxu0 %v12701
    %v12712 = vpop.f32.mrf.mxu0
    %v12713 = vadd.f32 0.0, %v12712
    %v12714 = vpop.f32.mrf.mxu0
    %12715 = vdwg.mxu0
    %12716 = vmatpush.bf16.msra.mxu0 0
    %12717 = vmatpush.bf16.msra.mxu0 0
    %12718 = vmatpush.bf16.msra.mxu0 0
    %12719 = vmatpush.bf16.msra.mxu0 0
    %12720 = vmatpush.bf16.msra.mxu0 %v12691
    %12721 = vmatpush.bf16.msra.mxu0 %v12689
    %12722 = vmatpush.bf16.msra.mxu0 %v12687
    %12723 = vmatpush.bf16.msra.mxu0 %v12685
    %12724 = vmatmul.bf16.gmra.mxu0 %v12701
    %v12725 = vpop.f32.mrf.mxu0
    %v12726 = vadd.f32 0.0, %v12725
    %v12727 = vpop.f32.mrf.mxu0
    %12728 = vdwg.mxu0
    %v12729 = vadd.f32 %v12617, %v12713
    %v12730 = vadd.f32 %v12618, %v12726
    %v12731 = vmax.f32 %v12729, 0.0
    %v12732 = vmax.f32 %v12730, 0.0
    %v12733 = vadd.f32 %v12731, %v12732
    %v12734 = vld [vmem:[%s17] sm:$0xff]
    %v12735 = vld [vmem:[%s17 + $0x8] sm:$0xff]
    %v12736 = vld [vmem:[%s17 + $0x10] sm:$0xff]
    %v12737 = vld [vmem:[%s17 + $0x18] sm:$0xff]
    %v12738 = vld [vmem:[%s17 + $0x20] sm:$0xff]
    %v12739 = vld [vmem:[%s17 + $0x28] sm:$0xff]
    %v12740 = vld [vmem:[%s17 + $0x30] sm:$0xff]
    %v12741 = vld [vmem:[%s17 + $0x38] sm:$0xff]
    %v12742 = vld [vmem:[%s17 + $0x40] sm:$0xff]
    %v12743 = vld [vmem:[%s17 + $0x48] sm:$0xff]
    %v12744 = vld [vmem:[%s17 + $0x50] sm:$0xff]
    %v12745 = vld [vmem:[%s17 + $0x58] sm:$0xff]
    %v12746 = vld [vmem:[%s17 + $0x60] sm:$0xff]
    %v12747 = vld [vmem:[%s17 + $0x68] sm:$0xff]
    %v12748 = vld [vmem:[%s17 + $0x70] sm:$0xff]
    %v12749 = vld [vmem:[%s17 + $0x78] sm:$0xff]
    %v12750 = vld [vmem:[#allocation27] sm:$0x1]
    %v12752 = vperm.slane %v12750, 0
    %12754 = vmatpush.msra.mxu0 %v12749
    %12755 = vmatpush.msra.mxu0 %v12748
    %12756 = vmatpush.msra.mxu0 %v12747
    %12757 = vmatpush.msra.mxu0 %v12746
    %12758 = vmatpush.msra.mxu0 %v12745
    %12759 = vmatpush.msra.mxu0 %v12744
    %12760 = vmatpush.msra.mxu0 %v12743
    %12761 = vmatpush.msra.mxu0 %v12742
    %12762 = vmatpush.msra.mxu0 %v12741
    %12763 = vmatpush.msra.mxu0 %v12740
    %12764 = vmatpush.msra.mxu0 %v12739
    %12765 = vmatpush.msra.mxu0 %v12738
    %12766 = vmatpush.msra.mxu0 %v12737
    %12767 = vmatpush.msra.mxu0 %v12736
    %12768 = vmatpush.msra.mxu0 %v12735
    %12769 = vmatpush.msra.mxu0 %v12734
    %12770 = vmatmul.f32.gmra.mxu0 %v12733
    %v12771 = vpop.f32.mrf.mxu0
    %v12772 = vadd.f32 %v12752, %v12771
    %12773 = vdwg.mxu0
    %vm12774 = vcmask 31744
    %12775 = vst.msk [vmem:[%s19] sm:$0xff] %vm12774, %v12772
    // Predicated region
    $region142: #{rrnn_forward.1} parent=1 // pred_check
      _
    $region143: #{rrnn_forward.1} parent=1 // pred_check_branch
      %12777 = sbr.rel (0) target = $region145
    $region144: #{rrnn_forward.1} parent=1 // pred_region
      _
    $region145: #{rrnn_forward.1} parent=1 // pred_fallthru
      _
    // Predicated region
    $region146: #{rrnn_forward.1} parent=1 // pred_check
      _
    $region147: #{rrnn_forward.1} parent=1 // pred_check_branch
      %12779 = sbr.rel (0) target = $region149
    $region148: #{rrnn_forward.1} parent=1 // pred_region
      _
    $region149: #{rrnn_forward.1} parent=1 // pred_fallthru
      _
    %12780 = vsyncpa [#allocation5], 1
    %12781 = vsyncpa [#allocation7], 1
    %12782 = vsyncpa [#allocation10], 1
    %12783 = vsyncpa [#allocation13], 1
    %12784 = vsyncpa [#allocation16], 1
    %12785 = vsyncpa [#allocation19], 1
    %12786 = vsyncpa [#allocation22], 1
    %12787 = vsyncpa [#allocation25], 1
    %12788 = vsyncpa [#allocation28], 1

</llo_original>
